<compile_context>
chip_gen: v5e
topology: v5e:2x2
jax: 0.10.0
libtpu: 0.0.40
codegen_flags: <defaults>
</compile_context>

<pallas_src>
import functools
import math

import jax
import jax.numpy as jnp
from jax.experimental import pallas as pl
from jax.experimental.pallas import tpu as pltpu


# -----------------------------------------------------------------------------
# Model configuration (scaled-down synthetic ViT-Huge + Decoder, lane-dense dims)
# -----------------------------------------------------------------------------
IMG = 32
PATCH = 16
IN_CH = 3
VIT_DIM = 128          # stands in for 1280
VIT_HEADS = 4
VIT_MLP = 256
VIT_LAYERS = 2
DEC_DIM = 128          # stands in for 768 (kept at 128 for lane density)
DEC_HEADS = 4
DEC_MLP = 256
DEC_LAYERS = 2
VOCAB = 128
MAX_SEQ = 16
NUM_PATCHES = (IMG // PATCH) ** 2          # 4
ENC_SEQ = NUM_PATCHES + 1                  # + cls token = 5 real tokens
ENC_SEQ_PAD = 8                            # padded to a full (8,128) tile


# -----------------------------------------------------------------------------
# In-kernel helpers (traced inside Pallas kernels)
# -----------------------------------------------------------------------------
def _layernorm(x, g, b):
    mu = jnp.mean(x, axis=-1, keepdims=True)
    var = jnp.mean((x - mu) ** 2, axis=-1, keepdims=True)
    return (x - mu) * jax.lax.rsqrt(var + 1e-5) * g + b


def _mha(q, k, v, wo_bf16, bo, num_heads, bias):
    """Multi-head attention + output projection for one batch element.

    q: (Sq, D) f32, k/v: (Sk, D) f32, wo_bf16: (D, D) bf16, bo: (1, D) f32,
    bias: (Sq, Sk) f32 additive mask.  1/sqrt(dh) is already folded into the
    Q projection weights.  Per-head outputs are concatenated into a lane-dense
    (Sq, D) tile so the output projection is a single K=D matmul.
    """
    sq, d = q.shape
    dh = d // num_heads
    q16 = q.astype(jnp.bfloat16)
    k16 = k.astype(jnp.bfloat16)
    v16 = v.astype(jnp.bfloat16)

    heads = []
    for h in range(num_heads):                         # tiny static unroll (4 heads)
        sl = slice(h * dh, (h + 1) * dh)
        # q @ k^T without materializing a transpose.
        s = jax.lax.dot_general(q16[:, sl], k16[:, sl],
                                dimension_numbers=(((1,), (1,)), ((), ())),
                                preferred_element_type=jnp.float32)
        s = s + bias                                   # f32 scores + f32 mask
        m = jnp.max(s, axis=-1, keepdims=True)
        p = jnp.exp(s - m)
        l = jnp.sum(p, axis=-1, keepdims=True)
        o_h = jnp.dot(p.astype(jnp.bfloat16), v16[:, sl],
                      preferred_element_type=jnp.float32)
        # TODO(synk): approx reciprocal (EUP) differs from exact divide at ~1e-3.
        heads.append(o_h * pl.reciprocal(l, approx=True))

    o_cat = jnp.concatenate(heads, axis=-1)            # (Sq, D), one K=D projection
    return jnp.dot(o_cat.astype(jnp.bfloat16), wo_bf16,
                   preferred_element_type=jnp.float32) + bo


# -----------------------------------------------------------------------------
# Pallas kernels (one per whole stack; grid = (B, L))
# -----------------------------------------------------------------------------
def _enc_stack_kernel(patches_ref, pw_ref, pb_ref, cls_ref, pos_ref,
                      ln_ref, wqkv_ref, bqkv_ref, wo_ref, bo_ref,
                      w1_ref, b1_ref, w2_ref, b2_ref,
                      norm_ref, projw_ref, projb_ref,
                      enc_out_ref, x_sc, *, num_heads, seq_real):
    """Fused ViT encoder: patch-embed -> L pre-LN blocks -> LN -> projection."""
    l = pl.program_id(1)

    # ---- layer 0: build initial embeddings (patch embed + cls + pos) ----------
    @pl.when(l == 0)
    def _():
        pe = jnp.dot(patches_ref[...].astype(jnp.bfloat16), pw_ref[...],
                     preferred_element_type=jnp.float32) + pb_ref[...]      # (nP, D)
        s_pad, d = pos_ref.shape
        pad = jnp.zeros((s_pad - 1 - pe.shape[0], d), jnp.float32)
        x0 = jnp.concatenate([cls_ref[...], pe, pad], axis=0) + pos_ref[...]
        x_sc[...] = x0

    x = x_sc[...]                                      # (S_pad, D) f32 carry
    d = x.shape[-1]
    s = x.shape[0]
    ln = ln_ref[...]                                   # (4, D): g1, b1, g2, b2

    # additive key-padding mask (pad tokens are never valid keys)
    ki = jax.lax.broadcasted_iota(jnp.int32, (s, s), 1)
    bias = jnp.where(ki < seq_real, jnp.float32(0.0), jnp.float32(-1e30))

    # ---- self-attention sub-block ---------------------------------------------
    h = _layernorm(x, ln[0:1, :], ln[1:2, :])
    qkv = jnp.dot(h.astype(jnp.bfloat16), wqkv_ref[...],
                  preferred_element_type=jnp.float32) + bqkv_ref[...]
    x = x + _mha(qkv[:, :d], qkv[:, d:2 * d], qkv[:, 2 * d:],
                 wo_ref[...], bo_ref[...], num_heads, bias)

    # ---- MLP sub-block ---------------------------------------------------------
    h = _layernorm(x, ln[2:3, :], ln[3:4, :])
    hid = jnp.dot(h.astype(jnp.bfloat16), w1_ref[...],
                  preferred_element_type=jnp.float32) + b1_ref[...]
    # TODO(synk): PyTorch nn.GELU default is exact erf; tanh approximation used.
    hid = jax.nn.gelu(hid, approximate=True)
    x = x + jnp.dot(hid.astype(jnp.bfloat16), w2_ref[...],
                    preferred_element_type=jnp.float32) + b2_ref[...]

    x_sc[...] = x

    # ---- last layer: fused final LayerNorm + Linear(VIT_DIM -> DEC_DIM) -------
    @pl.when(l == pl.num_programs(1) - 1)
    def _():
        nm = norm_ref[...]                              # (2, D): gamma; beta
        hf = _layernorm(x, nm[0:1, :], nm[1:2, :])
        y = jnp.dot(hf.astype(jnp.bfloat16), projw_ref[...],
                    preferred_element_type=jnp.float32) + projb_ref[...]
        enc_out_ref[...] = y.astype(enc_out_ref.dtype)


def _dec_stack_kernel(cap_ref, tok_ref, pos_ref, enc_ref,
                      ln_ref, wqkv_ref, bqkv_ref, wo_ref, bo_ref,
                      wq_ref, bq_ref, wkv_ref, bkv_ref, wxo_ref, bxo_ref,
                      w1_ref, b1_ref, w2_ref, b2_ref,
                      lnf_ref, headw_ref, headb_ref,
                      logits_ref, x_sc, *, num_heads, enc_seq_real):
    """Fused decoder: tok-emb + pos -> L (self-attn, cross-attn, MLP) -> LN -> head."""
    l = pl.program_id(1)
    enc = enc_ref[...]                                  # (Se_pad, D) f32

    # ---- layer 0: token embedding (one-hot MXU matmul) + positional add -------
    @pl.when(l == 0)
    def _():
        ids = cap_ref[...]                              # (S, 1) int32
        s, _ = ids.shape
        vocab = tok_ref.shape[0]
        col = jax.lax.broadcasted_iota(jnp.int32, (s, vocab), 1)
        onehot = (col == ids).astype(jnp.bfloat16)
        emb = jnp.dot(onehot, tok_ref[...], preferred_element_type=jnp.float32)
        x_sc[...] = emb + pos_ref[...]

    x = x_sc[...]                                       # (S, D) f32 carry
    d = x.shape[-1]
    s = x.shape[0]
    se = enc.shape[0]
    ln = ln_ref[...]                                    # (6, D)

    # causal mask for self-attention
    qi = jax.lax.broadcasted_iota(jnp.int32, (s, s), 0)
    ki = jax.lax.broadcasted_iota(jnp.int32, (s, s), 1)
    causal = jnp.where(ki <= qi, jnp.float32(0.0), jnp.float32(-1e30))
    # encoder key-padding mask for cross-attention
    eki = jax.lax.broadcasted_iota(jnp.int32, (s, se), 1)
    xbias = jnp.where(eki < enc_seq_real, jnp.float32(0.0), jnp.float32(-1e30))

    # ---- causal self-attention --------------------------------------------------
    h = _layernorm(x, ln[0:1, :], ln[1:2, :])
    qkv = jnp.dot(h.astype(jnp.bfloat16), wqkv_ref[...],
                  preferred_element_type=jnp.float32) + bqkv_ref[...]
    x = x + _mha(qkv[:, :d], qkv[:, d:2 * d], qkv[:, 2 * d:],
                 wo_ref[...], bo_ref[...], num_heads, causal)

    # ---- cross-attention over encoder features ---------------------------------
    h = _layernorm(x, ln[2:3, :], ln[3:4, :])
    q = jnp.dot(h.astype(jnp.bfloat16), wq_ref[...],
                preferred_element_type=jnp.float32) + bq_ref[...]
    kv = jnp.dot(enc.astype(jnp.bfloat16), wkv_ref[...],
                 preferred_element_type=jnp.float32) + bkv_ref[...]
    x = x + _mha(q, kv[:, :d], kv[:, d:], wxo_ref[...], bxo_ref[...],
                 num_heads, xbias)

    # ---- MLP --------------------------------------------------------------------
    h = _layernorm(x, ln[4:5, :], ln[5:6, :])
    hid = jnp.dot(h.astype(jnp.bfloat16), w1_ref[...],
                  preferred_element_type=jnp.float32) + b1_ref[...]
    hid = jax.nn.gelu(hid, approximate=True)
    x = x + jnp.dot(hid.astype(jnp.bfloat16), w2_ref[...],
                    preferred_element_type=jnp.float32) + b2_ref[...]

    x_sc[...] = x

    # ---- last layer: fused final LayerNorm + LM head ----------------------------
    @pl.when(l == pl.num_programs(1) - 1)
    def _():
        nm = lnf_ref[...]
        hf = _layernorm(x, nm[0:1, :], nm[1:2, :])
        y = jnp.dot(hf.astype(jnp.bfloat16), headw_ref[...],
                    preferred_element_type=jnp.float32) + headb_ref[...]
        logits_ref[...] = y.astype(logits_ref.dtype)


# -----------------------------------------------------------------------------
# BlockSpec helpers for the (B, L) grid
# -----------------------------------------------------------------------------
def _spec_resident(shape):
    n = len(shape)
    return pl.BlockSpec(tuple(shape), lambda b, l: (0,) * n)


def _spec_layer(shape):
    n = len(shape)
    return pl.BlockSpec((None,) + tuple(shape), lambda b, l: (l,) + (0,) * n)


def _spec_batch(shape):
    n = len(shape)
    return pl.BlockSpec((None,) + tuple(shape), lambda b, l: (b,) + (0,) * n)


_VMEM_LIMIT = 32 * 1024 * 1024   # explicit scoped-VMEM limit (review item)


# -----------------------------------------------------------------------------
# Pallas wrappers (one pallas_call for the whole encoder, one for the decoder)
# -----------------------------------------------------------------------------
def encoder_forward(vp, proj_w, proj_b, patches):
    """patches: (B, nP, patch_dim) -> projected encoder features (B, S_pad, DEC_DIM)."""
    B, nP, PD = patches.shape
    L, D, Dd = VIT_LAYERS, VIT_DIM, DEC_DIM
    Sp, H3, Hm = ENC_SEQ_PAD, 3 * VIT_DIM, VIT_MLP

    kern = functools.partial(_enc_stack_kernel, num_heads=VIT_HEADS, seq_real=ENC_SEQ)
    return pl.pallas_call(
        kern,
        out_shape=jax.ShapeDtypeStruct((B, Sp, Dd), jnp.float32),
        grid=(B, L),
        in_specs=[
            _spec_batch((nP, PD)),        # patches
            _spec_resident((PD, D)),      # patch_w (bf16)
            _spec_resident((1, D)),       # patch_b
            _spec_resident((1, D)),       # cls
            _spec_resident((Sp, D)),      # pos (zero-padded)
            _spec_layer((4, D)),          # ln (g1,b1,g2,b2)
            _spec_layer((D, H3)),         # w_qkv (bf16, Q pre-scaled)
            _spec_layer((1, H3)),         # b_qkv
            _spec_layer((D, D)),          # wo (bf16)
            _spec_layer((1, D)),          # bo
            _spec_layer((D, Hm)),         # w1 (bf16)
            _spec_layer((1, Hm)),         # b1
            _spec_layer((Hm, D)),         # w2 (bf16)
            _spec_layer((1, D)),          # b2
            _spec_resident((2, D)),       # final ViT LN (gamma; beta)
            _spec_resident((D, Dd)),      # projection weight (bf16)
            _spec_resident((1, Dd)),      # projection bias
        ],
        out_specs=pl.BlockSpec((None, Sp, Dd), lambda b, l: (b, 0, 0)),
        scratch_shapes=[pltpu.VMEM((Sp, D), jnp.float32)],   # activation carried over L
        compiler_params=pltpu.CompilerParams(
            dimension_semantics=("parallel", "arbitrary"),
            vmem_limit_bytes=_VMEM_LIMIT),
    )(patches, vp["patch_w"], vp["patch_b"], vp["cls"], vp["pos"],
      vp["ln"], vp["w_qkv"], vp["b_qkv"], vp["wo"], vp["bo"],
      vp["w1"], vp["b1"], vp["w2"], vp["b2"],
      vp["norm"], proj_w, proj_b)


def decoder_forward(dp, caption, x_enc):
    """caption: (B, S) int32; x_enc: (B, S_pad, DEC_DIM) -> logits (B, S, VOCAB)."""
    B, S = caption.shape
    L, D, V = DEC_LAYERS, DEC_DIM, VOCAB
    Sp = x_enc.shape[1]
    H3, H2, Hm = 3 * D, 2 * D, DEC_MLP
    cap = caption.astype(jnp.int32)[..., None]           # (B, S, 1)

    kern = functools.partial(_dec_stack_kernel, num_heads=DEC_HEADS,
                             enc_seq_real=ENC_SEQ)
    return pl.pallas_call(
        kern,
        out_shape=jax.ShapeDtypeStruct((B, S, V), jnp.float32),
        grid=(B, L),
        in_specs=[
            _spec_batch((S, 1)),                           # caption ids
            _spec_resident((V, D)),                        # token embedding table (bf16)
            pl.BlockSpec((S, D), lambda b, l: (0, 0)),     # first S rows of pos_emb
            _spec_batch((Sp, D)),                          # encoder features
            _spec_layer((6, D)),                           # ln (g1,b1,g2,b2,g3,b3)
            _spec_layer((D, H3)), _spec_layer((1, H3)),    # self-attn fused QKV
            _spec_layer((D, D)), _spec_layer((1, D)),      # self-attn out proj
            _spec_layer((D, D)), _spec_layer((1, D)),      # cross-attn Q (pre-scaled)
            _spec_layer((D, H2)), _spec_layer((1, H2)),    # cross-attn fused KV
            _spec_layer((D, D)), _spec_layer((1, D)),      # cross-attn out proj
            _spec_layer((D, Hm)), _spec_layer((1, Hm)),    # mlp w1
            _spec_layer((Hm, D)), _spec_layer((1, D)),     # mlp w2
            _spec_resident((2, D)),                        # final LN
            _spec_resident((D, V)),                        # LM head weight (bf16)
            _spec_resident((1, V)),                        # LM head bias
        ],
        out_specs=pl.BlockSpec((None, S, V), lambda b, l: (b, 0, 0)),
        scratch_shapes=[pltpu.VMEM((S, D), jnp.float32)],  # activation carried over L
        compiler_params=pltpu.CompilerParams(
            dimension_semantics=("parallel", "arbitrary"),
            vmem_limit_bytes=_VMEM_LIMIT),
    )(cap, dp["tok_emb"], dp["pos_emb"], x_enc,
      dp["ln"], dp["w_qkv"], dp["b_qkv"], dp["wo"], dp["bo"],
      dp["wq"], dp["bq"], dp["w_kv"], dp["b_kv"], dp["wxo"], dp["bxo"],
      dp["w1"], dp["b1"], dp["w2"], dp["b2"],
      dp["lnf"], dp["head_w"], dp["head_b"])


# -----------------------------------------------------------------------------
# Parameter initialization (deterministic, synthetic; matmul weights in bf16)
# -----------------------------------------------------------------------------
class KeyGen:
    def __init__(self, key):
        self.key = key

    def __call__(self):
        self.key, sub = jax.random.split(self.key)
        return sub


def dense_init(kg, din, dout, scale=0.02):
    w = jax.random.normal(kg(), (din, dout), jnp.float32) * scale
    b = jnp.zeros((1, dout), jnp.float32)
    return w, b


def ln_rows(n_pairs, d):
    rows = []
    for _ in range(n_pairs):
        rows.append(jnp.ones((1, d), jnp.float32))    # gamma
        rows.append(jnp.zeros((1, d), jnp.float32))   # beta
    return jnp.concatenate(rows, axis=0)              # (2*n_pairs, D)


def self_attn_init(kg, d, num_heads):
    qs = 1.0 / math.sqrt(d // num_heads)
    wq, bq = dense_init(kg, d, d)
    wk, bk = dense_init(kg, d, d)
    wv, bv = dense_init(kg, d, d)
    wo, bo = dense_init(kg, d, d)
    # 1/sqrt(dh) folded into the Q projection -> no per-score scale in-kernel.
    return {"w_qkv": jnp.concatenate([wq * qs, wk, wv], axis=1),
            "b_qkv": jnp.concatenate([bq * qs, bk, bv], axis=1),
            "wo": wo, "bo": bo}


def cross_attn_init(kg, d, num_heads):
    qs = 1.0 / math.sqrt(d // num_heads)
    wq, bq = dense_init(kg, d, d)
    wk, bk = dense_init(kg, d, d)
    wv, bv = dense_init(kg, d, d)
    wo, bo = dense_init(kg, d, d)
    return {"wq": wq * qs, "bq": bq * qs,
            "w_kv": jnp.concatenate([wk, wv], axis=1),
            "b_kv": jnp.concatenate([bk, bv], axis=1),
            "wo": wo, "bo": bo}


def enc_block_init(kg, d, mlp_h, nh):
    p = {"ln": ln_rows(2, d)}
    p.update(self_attn_init(kg, d, nh))
    p["w1"], p["b1"] = dense_init(kg, d, mlp_h)
    p["w2"], p["b2"] = dense_init(kg, mlp_h, d)
    return p


def dec_block_init(kg, d, mlp_h, nh):
    p = {"ln": ln_rows(3, d)}
    sa = self_attn_init(kg, d, nh)
    xa = cross_attn_init(kg, d, nh)
    p.update({"w_qkv": sa["w_qkv"], "b_qkv": sa["b_qkv"], "wo": sa["wo"], "bo": sa["bo"],
              "wq": xa["wq"], "bq": xa["bq"], "w_kv": xa["w_kv"], "b_kv": xa["b_kv"],
              "wxo": xa["wo"], "bxo": xa["bo"]})
    p["w1"], p["b1"] = dense_init(kg, d, mlp_h)
    p["w2"], p["b2"] = dense_init(kg, mlp_h, d)
    return p


def _stack(blocks, name, dtype=None):
    a = jnp.stack([b[name] for b in blocks], axis=0)   # leading L axis
    return a.astype(dtype) if dtype is not None else a


def init_params(key):
    kg = KeyGen(key)
    bf16 = jnp.bfloat16
    patch_dim = IN_CH * PATCH * PATCH                   # 768

    # ---- ViT encoder -----------------------------------------------------------
    pw, pb = dense_init(kg, patch_dim, VIT_DIM)
    cls = jax.random.normal(kg(), (1, VIT_DIM), jnp.float32) * 0.02
    pos = jnp.concatenate(
        [jax.random.normal(kg(), (ENC_SEQ, VIT_DIM), jnp.float32) * 0.02,
         jnp.zeros((ENC_SEQ_PAD - ENC_SEQ, VIT_DIM), jnp.float32)], axis=0)
    eb = [enc_block_init(kg, VIT_DIM, VIT_MLP, VIT_HEADS) for _ in range(VIT_LAYERS)]
    vit = {
        "patch_w": pw.astype(bf16), "patch_b": pb, "cls": cls, "pos": pos,
        "ln": _stack(eb, "ln"),
        "w_qkv": _stack(eb, "w_qkv", bf16), "b_qkv": _stack(eb, "b_qkv"),
        "wo": _stack(eb, "wo", bf16), "bo": _stack(eb, "bo"),
        "w1": _stack(eb, "w1", bf16), "b1": _stack(eb, "b1"),
        "w2": _stack(eb, "w2", bf16), "b2": _stack(eb, "b2"),
        "norm": ln_rows(1, VIT_DIM),
    }

    lw, lb = dense_init(kg, VIT_DIM, DEC_DIM)           # nn.Linear(1280, 768) analogue

    # ---- caption decoder ---------------------------------------------------------
    db = [dec_block_init(kg, DEC_DIM, DEC_MLP, DEC_HEADS) for _ in range(DEC_LAYERS)]
    hw, hb = dense_init(kg, DEC_DIM, VOCAB)
    dec = {
        "tok_emb": (jax.random.normal(kg(), (VOCAB, DEC_DIM), jnp.float32) * 0.02).astype(bf16),
        "pos_emb": jax.random.normal(kg(), (MAX_SEQ, DEC_DIM), jnp.float32) * 0.02,
        "ln": _stack(db, "ln"),
        "w_qkv": _stack(db, "w_qkv", bf16), "b_qkv": _stack(db, "b_qkv"),
        "wo": _stack(db, "wo", bf16), "bo": _stack(db, "bo"),
        "wq": _stack(db, "wq", bf16), "bq": _stack(db, "bq"),
        "w_kv": _stack(db, "w_kv", bf16), "b_kv": _stack(db, "b_kv"),
        "wxo": _stack(db, "wxo", bf16), "bxo": _stack(db, "bxo"),
        "w1": _stack(db, "w1", bf16), "b1": _stack(db, "b1"),
        "w2": _stack(db, "w2", bf16), "b2": _stack(db, "b2"),
        "lnf": ln_rows(1, DEC_DIM),
        "head_w": hw.astype(bf16), "head_b": hb,
    }
    return {"vit": vit, "proj_w": lw.astype(bf16), "proj_b": lb, "dec": dec}


# -----------------------------------------------------------------------------
# Forward pass (mirrors VLModel.forward)
# -----------------------------------------------------------------------------
def image_to_patches(image):
    # (B, C, H, W) NCHW -> (B, nP, C*P*P); equivalent to Conv2d(stride=patch) im2col.
    B, C, H, W = image.shape
    nH, nW = H // PATCH, W // PATCH
    return (image.reshape(B, C, nH, PATCH, nW, PATCH)
                 .transpose(0, 2, 4, 1, 3, 5)
                 .reshape(B, nH * nW, C * PATCH * PATCH))


def vl_model_forward(params, image, caption):
    patches = image_to_patches(image)
    # vit.forward_features + final LN + Linear(1280->768 analogue): ONE pallas_call
    x_enc = encoder_forward(params["vit"], params["proj_w"], params["proj_b"], patches)
    # decoder(caption, x_enc) incl. token/pos embedding and LM head: ONE pallas_call
    return decoder_forward(params["dec"], caption, x_enc)


# -----------------------------------------------------------------------------
if __name__ == "__main__":
    root = jax.random.PRNGKey(0)
    k_params, k_img, k_cap = jax.random.split(root, 3)

    params = init_params(k_params)
    image = jax.random.normal(k_img, (2, IN_CH, IMG, IMG), jnp.float32)   # NCHW
    caption = jax.random.randint(k_cap, (2, 8), 0, VOCAB, dtype=jnp.int32)

    logits = jax.jit(vl_model_forward)(params, image, caption)
    jax.block_until_ready(logits)

    assert logits.shape == (2, 8, VOCAB), logits.shape
    assert bool(jnp.all(jnp.isfinite(logits)))
    print("KERNEL_OK")
</pallas_src>

<mosaic_0001>
module attributes {stable_mosaic.version = 11 : i64} {
  func.func @_enc_stack_kernel(%arg0: i32, %arg1: i32, %arg2: memref<1x4x768xf32, #tpu.memory_space<vmem>>, %arg3: memref<768x128xbf16, #tpu.memory_space<vmem>>, %arg4: memref<1x128xf32, #tpu.memory_space<vmem>>, %arg5: memref<1x128xf32, #tpu.memory_space<vmem>>, %arg6: memref<8x128xf32, #tpu.memory_space<vmem>>, %arg7: memref<1x4x128xf32, #tpu.memory_space<vmem>>, %arg8: memref<1x128x384xbf16, #tpu.memory_space<vmem>>, %arg9: memref<1x1x384xf32, #tpu.memory_space<vmem>>, %arg10: memref<1x128x128xbf16, #tpu.memory_space<vmem>>, %arg11: memref<1x1x128xf32, #tpu.memory_space<vmem>>, %arg12: memref<1x128x256xbf16, #tpu.memory_space<vmem>>, %arg13: memref<1x1x256xf32, #tpu.memory_space<vmem>>, %arg14: memref<1x256x128xbf16, #tpu.memory_space<vmem>>, %arg15: memref<1x1x128xf32, #tpu.memory_space<vmem>>, %arg16: memref<2x128xf32, #tpu.memory_space<vmem>>, %arg17: memref<128x128xbf16, #tpu.memory_space<vmem>>, %arg18: memref<1x128xf32, #tpu.memory_space<vmem>>, %arg19: memref<1x8x128xf32, #tpu.memory_space<vmem>>, %arg20: memref<8x128xf32, #tpu.memory_space<vmem>>) attributes {dimension_semantics = [#tpu.dimension_semantics<parallel>, #tpu.dimension_semantics<arbitrary>], iteration_bounds = array<i64: 2, 2>, scalar_prefetch = 0 : i64, scratch_operands = 1 : i64, tpu.core_type = #tpu.core_type<tc>, window_params = [{transform_indices = @transform_0, window_bounds = array<i64: 1, 4, 768>}, {pipeline_mode = #tpu.pipeline_mode<synchronous>, transform_indices = @transform_1, window_bounds = array<i64: 768, 128>}, {pipeline_mode = #tpu.pipeline_mode<synchronous>, transform_indices = @transform_2, window_bounds = array<i64: 1, 128>}, {pipeline_mode = #tpu.pipeline_mode<synchronous>, transform_indices = @transform_3, window_bounds = array<i64: 1, 128>}, {pipeline_mode = #tpu.pipeline_mode<synchronous>, transform_indices = @transform_4, window_bounds = array<i64: 8, 128>}, {transform_indices = @transform_5, window_bounds = array<i64: 1, 4, 128>}, {transform_indices = @transform_6, window_bounds = array<i64: 1, 128, 384>}, {transform_indices = @transform_7, window_bounds = array<i64: 1, 1, 384>}, {transform_indices = @transform_8, window_bounds = array<i64: 1, 128, 128>}, {transform_indices = @transform_9, window_bounds = array<i64: 1, 1, 128>}, {transform_indices = @transform_10, window_bounds = array<i64: 1, 128, 256>}, {transform_indices = @transform_11, window_bounds = array<i64: 1, 1, 256>}, {transform_indices = @transform_12, window_bounds = array<i64: 1, 256, 128>}, {transform_indices = @transform_13, window_bounds = array<i64: 1, 1, 128>}, {pipeline_mode = #tpu.pipeline_mode<synchronous>, transform_indices = @transform_14, window_bounds = array<i64: 2, 128>}, {pipeline_mode = #tpu.pipeline_mode<synchronous>, transform_indices = @transform_15, window_bounds = array<i64: 128, 128>}, {pipeline_mode = #tpu.pipeline_mode<synchronous>, transform_indices = @transform_16, window_bounds = array<i64: 1, 128>}, {transform_indices = @transform_17, window_bounds = array<i64: 1, 8, 128>}]} {
    %c0_i32 = arith.constant 0 : i32
    %0 = arith.cmpi eq, %arg1, %c0_i32 : i32
    %1 = arith.extui %0 : i1 to i32
    %c0_i32_0 = arith.constant 0 : i32
    %2 = arith.cmpi ne, %1, %c0_i32_0 : i32
    scf.if %2 {
      %c0_67 = arith.constant 0 : index
      %c0_68 = arith.constant 0 : index
      %c0_69 = arith.constant 0 : index
      %186 = vector.load %arg2[%c0_67, %c0_68, %c0_69] : memref<1x4x768xf32, #tpu.memory_space<vmem>>, vector<1x4x768xf32>
      %187 = vector.shape_cast %186 : vector<1x4x768xf32> to vector<4x768xf32>
      %188 = arith.truncf %187 : vector<4x768xf32> to vector<4x768xbf16>
      %c0_70 = arith.constant 0 : index
      %c0_71 = arith.constant 0 : index
      %189 = vector.load %arg3[%c0_70, %c0_71] : memref<768x128xbf16, #tpu.memory_space<vmem>>, vector<768x128xbf16>
      %cst_72 = arith.constant dense<0.000000e+00> : vector<4x128xf32>
      %190 = tpu.matmul %188, %189, %cst_72 {dimension_numbers = #tpu.dot_dimension_numbers<[1], [0], [0], [1], [0, 0, 1, 1], [], []>} : vector<4x768xbf16>, vector<768x128xbf16>, vector<4x128xf32> -> vector<4x128xf32>
      %c0_73 = arith.constant 0 : index
      %c0_74 = arith.constant 0 : index
      %191 = vector.load %arg4[%c0_73, %c0_74] : memref<1x128xf32, #tpu.memory_space<vmem>>, vector<1x128xf32>
      %192 = vector.broadcast %191 : vector<1x128xf32> to vector<4x128xf32>
      %193 = arith.addf %190, %192 : vector<4x128xf32>
      %cst_75 = arith.constant 0.000000e+00 : f32
      %194 = vector.broadcast %cst_75 : f32 to vector<3x128xf32>
      %c0_76 = arith.constant 0 : index
      %c0_77 = arith.constant 0 : index
      %195 = vector.load %arg5[%c0_76, %c0_77] : memref<1x128xf32, #tpu.memory_space<vmem>>, vector<1x128xf32>
      %196 = tpu.concatenate %195, %193, %194 in 0 : vector<1x128xf32>, vector<4x128xf32>, vector<3x128xf32> -> vector<8x128xf32>
      %c0_78 = arith.constant 0 : index
      %c0_79 = arith.constant 0 : index
      %197 = vector.load %arg6[%c0_78, %c0_79] : memref<8x128xf32, #tpu.memory_space<vmem>>, vector<8x128xf32>
      %198 = arith.addf %196, %197 : vector<8x128xf32>
      %c0_80 = arith.constant 0 : index
      %c0_81 = arith.constant 0 : index
      %199 = vector.load %arg20[%c0_80, %c0_81] : memref<8x128xf32, #tpu.memory_space<vmem>>, vector<8x128xf32>
      tpu.vector_store %arg20[%c0_80, %c0_81], %198 {strides = array<i32>} : memref<8x128xf32, #tpu.memory_space<vmem>>, vector<8x128xf32>,
    } else {
    }
    %c0 = arith.constant 0 : index
    %c0_1 = arith.constant 0 : index
    %3 = vector.load %arg20[%c0, %c0_1] : memref<8x128xf32, #tpu.memory_space<vmem>>, vector<8x128xf32>
    %c0_2 = arith.constant 0 : index
    %c0_3 = arith.constant 0 : index
    %c0_4 = arith.constant 0 : index
    %4 = vector.load %arg7[%c0_2, %c0_3, %c0_4] : memref<1x4x128xf32, #tpu.memory_space<vmem>>, vector<1x4x128xf32>
    %5 = vector.shape_cast %4 : vector<1x4x128xf32> to vector<4x128xf32>
    %6 = tpu.iota {dimensions = array<i32: 1>} : vector<8x8xi32>
    %c5_i32 = arith.constant 5 : i32
    %7 = vector.broadcast %c5_i32 : i32 to vector<8x8xi32>
    %8 = arith.cmpi slt, %6, %7 : vector<8x8xi32>
    %cst = arith.constant 0.000000e+00 : f32
    %cst_5 = arith.constant -1.000000e+30 : f32
    %9 = vector.broadcast %cst : f32 to vector<8x8xf32>
    %10 = vector.broadcast %cst_5 : f32 to vector<8x8xf32>
    %11 = arith.select %8, %9, %10 : vector<8x8xi1>, vector<8x8xf32>
    %12 = vector.extract_strided_slice %5 {offsets = [0, 0], sizes = [1, 128], strides = [1, 1]} : vector<4x128xf32> to vector<1x128xf32>
    %13 = vector.extract_strided_slice %5 {offsets = [1, 0], sizes = [1, 128], strides = [1, 1]} : vector<4x128xf32> to vector<1x128xf32>
    %cst_6 = arith.constant dense<0.000000e+00> : vector<8xf32>
    %14 = vector.multi_reduction <add>, %3, %cst_6 [1] : vector<8x128xf32> to vector<8xf32>
    %15 = vector.shape_cast %14 : vector<8xf32> to vector<8x1xf32>
    %cst_7 = arith.constant 1.280000e+02 : f32
    %16 = vector.broadcast %cst_7 : f32 to vector<8x1xf32>
    %17 = arith.divf %15, %16 : vector<8x1xf32>
    %18 = vector.broadcast %17 : vector<8x1xf32> to vector<8x128xf32>
    %19 = arith.subf %3, %18 : vector<8x128xf32>
    %20 = arith.mulf %19, %19 : vector<8x128xf32>
    %cst_8 = arith.constant dense<0.000000e+00> : vector<8xf32>
    %21 = vector.multi_reduction <add>, %20, %cst_8 [1] : vector<8x128xf32> to vector<8xf32>
    %22 = vector.shape_cast %21 : vector<8xf32> to vector<8x1xf32>
    %cst_9 = arith.constant 1.280000e+02 : f32
    %23 = vector.broadcast %cst_9 : f32 to vector<8x1xf32>
    %24 = arith.divf %22, %23 : vector<8x1xf32>
    %25 = vector.broadcast %17 : vector<8x1xf32> to vector<8x128xf32>
    %26 = arith.subf %3, %25 : vector<8x128xf32>
    %cst_10 = arith.constant 9.99999974E-6 : f32
    %27 = vector.broadcast %cst_10 : f32 to vector<8x1xf32>
    %28 = arith.addf %24, %27 : vector<8x1xf32>
    %29 = math.rsqrt %28 : vector<8x1xf32>
    %30 = vector.broadcast %29 : vector<8x1xf32> to vector<8x128xf32>
    %31 = arith.mulf %26, %30 : vector<8x128xf32>
    %32 = vector.broadcast %12 : vector<1x128xf32> to vector<8x128xf32>
    %33 = arith.mulf %31, %32 : vector<8x128xf32>
    %34 = vector.broadcast %13 : vector<1x128xf32> to vector<8x128xf32>
    %35 = arith.addf %33, %34 : vector<8x128xf32>
    %36 = arith.truncf %35 : vector<8x128xf32> to vector<8x128xbf16>
    %c0_11 = arith.constant 0 : index
    %c0_12 = arith.constant 0 : index
    %c0_13 = arith.constant 0 : index
    %37 = vector.load %arg8[%c0_11, %c0_12, %c0_13] : memref<1x128x384xbf16, #tpu.memory_space<vmem>>, vector<1x128x384xbf16>
    %38 = vector.shape_cast %37 : vector<1x128x384xbf16> to vector<128x384xbf16>
    %cst_14 = arith.constant dense<0.000000e+00> : vector<8x384xf32>
    %39 = tpu.matmul %36, %38, %cst_14 {dimension_numbers = #tpu.dot_dimension_numbers<[1], [0], [0], [1], [0, 0, 1, 1], [], []>} : vector<8x128xbf16>, vector<128x384xbf16>, vector<8x384xf32> -> vector<8x384xf32>
    %c0_15 = arith.constant 0 : index
    %c0_16 = arith.constant 0 : index
    %c0_17 = arith.constant 0 : index
    %40 = vector.load %arg9[%c0_15, %c0_16, %c0_17] : memref<1x1x384xf32, #tpu.memory_space<vmem>>, vector<1x1x384xf32>
    %41 = vector.shape_cast %40 : vector<1x1x384xf32> to vector<1x384xf32>
    %42 = vector.broadcast %41 : vector<1x384xf32> to vector<8x384xf32>
    %43 = arith.addf %39, %42 : vector<8x384xf32>
    %44 = vector.extract_strided_slice %43 {offsets = [0, 0], sizes = [8, 128], strides = [1, 1]} : vector<8x384xf32> to vector<8x128xf32>
    %45 = vector.extract_strided_slice %43 {offsets = [0, 128], sizes = [8, 128], strides = [1, 1]} : vector<8x384xf32> to vector<8x128xf32>
    %46 = vector.extract_strided_slice %43 {offsets = [0, 256], sizes = [8, 128], strides = [1, 1]} : vector<8x384xf32> to vector<8x128xf32>
    %c0_18 = arith.constant 0 : index
    %c0_19 = arith.constant 0 : index
    %c0_20 = arith.constant 0 : index
    %47 = vector.load %arg10[%c0_18, %c0_19, %c0_20] : memref<1x128x128xbf16, #tpu.memory_space<vmem>>, vector<1x128x128xbf16>
    %48 = vector.shape_cast %47 : vector<1x128x128xbf16> to vector<128x128xbf16>
    %c0_21 = arith.constant 0 : index
    %c0_22 = arith.constant 0 : index
    %c0_23 = arith.constant 0 : index
    %49 = vector.load %arg11[%c0_21, %c0_22, %c0_23] : memref<1x1x128xf32, #tpu.memory_space<vmem>>, vector<1x1x128xf32>
    %50 = vector.shape_cast %49 : vector<1x1x128xf32> to vector<1x128xf32>
    %51 = arith.truncf %44 : vector<8x128xf32> to vector<8x128xbf16>
    %52 = arith.truncf %45 : vector<8x128xf32> to vector<8x128xbf16>
    %53 = arith.truncf %46 : vector<8x128xf32> to vector<8x128xbf16>
    %54 = vector.extract_strided_slice %51 {offsets = [0, 0], sizes = [8, 32], strides = [1, 1]} : vector<8x128xbf16> to vector<8x32xbf16>
    %55 = vector.extract_strided_slice %52 {offsets = [0, 0], sizes = [8, 32], strides = [1, 1]} : vector<8x128xbf16> to vector<8x32xbf16>
    %cst_24 = arith.constant dense<0.000000e+00> : vector<8x8xf32>
    %56 = tpu.matmul %54, %55, %cst_24 {dimension_numbers = #tpu.dot_dimension_numbers<[1], [1], [0], [0], [0, 0, 1, 0], [], []>} : vector<8x32xbf16>, vector<8x32xbf16>, vector<8x8xf32> -> vector<8x8xf32>
    %57 = arith.addf %56, %11 : vector<8x8xf32>
    %cst_25 = arith.constant dense<0xFF800000> : vector<8xf32>
    %58 = vector.multi_reduction <maximumf>, %57, %cst_25 [1] : vector<8x8xf32> to vector<8xf32>
    %59 = vector.shape_cast %58 : vector<8xf32> to vector<8x1xf32>
    %60 = vector.broadcast %59 : vector<8x1xf32> to vector<8x8xf32>
    %61 = arith.subf %57, %60 : vector<8x8xf32>
    %62 = math.exp %61 : vector<8x8xf32>
    %cst_26 = arith.constant dense<0.000000e+00> : vector<8xf32>
    %63 = vector.multi_reduction <add>, %62, %cst_26 [1] : vector<8x8xf32> to vector<8xf32>
    %64 = vector.shape_cast %63 : vector<8xf32> to vector<8x1xf32>
    %65 = arith.truncf %62 : vector<8x8xf32> to vector<8x8xbf16>
    %66 = vector.extract_strided_slice %53 {offsets = [0, 0], sizes = [8, 32], strides = [1, 1]} : vector<8x128xbf16> to vector<8x32xbf16>
    %cst_27 = arith.constant dense<0.000000e+00> : vector<8x32xf32>
    %67 = tpu.matmul %65, %66, %cst_27 {dimension_numbers = #tpu.dot_dimension_numbers<[1], [0], [0], [1], [0, 0, 1, 1], [], []>} : vector<8x8xbf16>, vector<8x32xbf16>, vector<8x32xf32> -> vector<8x32xf32>
    %68 = tpu.reciprocal %64 {approx = true} : vector<8x1xf32> -> vector<8x1xf32>
    %69 = vector.broadcast %68 : vector<8x1xf32> to vector<8x32xf32>
    %70 = arith.mulf %67, %69 : vector<8x32xf32>
    %71 = vector.extract_strided_slice %51 {offsets = [0, 32], sizes = [8, 32], strides = [1, 1]} : vector<8x128xbf16> to vector<8x32xbf16>
    %72 = vector.extract_strided_slice %52 {offsets = [0, 32], sizes = [8, 32], strides = [1, 1]} : vector<8x128xbf16> to vector<8x32xbf16>
    %cst_28 = arith.constant dense<0.000000e+00> : vector<8x8xf32>
    %73 = tpu.matmul %71, %72, %cst_28 {dimension_numbers = #tpu.dot_dimension_numbers<[1], [1], [0], [0], [0, 0, 1, 0], [], []>} : vector<8x32xbf16>, vector<8x32xbf16>, vector<8x8xf32> -> vector<8x8xf32>
    %74 = arith.addf %73, %11 : vector<8x8xf32>
    %cst_29 = arith.constant dense<0xFF800000> : vector<8xf32>
    %75 = vector.multi_reduction <maximumf>, %74, %cst_29 [1] : vector<8x8xf32> to vector<8xf32>
    %76 = vector.shape_cast %75 : vector<8xf32> to vector<8x1xf32>
    %77 = vector.broadcast %76 : vector<8x1xf32> to vector<8x8xf32>
    %78 = arith.subf %74, %77 : vector<8x8xf32>
    %79 = math.exp %78 : vector<8x8xf32>
    %cst_30 = arith.constant dense<0.000000e+00> : vector<8xf32>
    %80 = vector.multi_reduction <add>, %79, %cst_30 [1] : vector<8x8xf32> to vector<8xf32>
    %81 = vector.shape_cast %80 : vector<8xf32> to vector<8x1xf32>
    %82 = arith.truncf %79 : vector<8x8xf32> to vector<8x8xbf16>
    %83 = vector.extract_strided_slice %53 {offsets = [0, 32], sizes = [8, 32], strides = [1, 1]} : vector<8x128xbf16> to vector<8x32xbf16>
    %cst_31 = arith.constant dense<0.000000e+00> : vector<8x32xf32>
    %84 = tpu.matmul %82, %83, %cst_31 {dimension_numbers = #tpu.dot_dimension_numbers<[1], [0], [0], [1], [0, 0, 1, 1], [], []>} : vector<8x8xbf16>, vector<8x32xbf16>, vector<8x32xf32> -> vector<8x32xf32>
    %85 = tpu.reciprocal %81 {approx = true} : vector<8x1xf32> -> vector<8x1xf32>
    %86 = vector.broadcast %85 : vector<8x1xf32> to vector<8x32xf32>
    %87 = arith.mulf %84, %86 : vector<8x32xf32>
    %88 = vector.extract_strided_slice %51 {offsets = [0, 64], sizes = [8, 32], strides = [1, 1]} : vector<8x128xbf16> to vector<8x32xbf16>
    %89 = vector.extract_strided_slice %52 {offsets = [0, 64], sizes = [8, 32], strides = [1, 1]} : vector<8x128xbf16> to vector<8x32xbf16>
    %cst_32 = arith.constant dense<0.000000e+00> : vector<8x8xf32>
    %90 = tpu.matmul %88, %89, %cst_32 {dimension_numbers = #tpu.dot_dimension_numbers<[1], [1], [0], [0], [0, 0, 1, 0], [], []>} : vector<8x32xbf16>, vector<8x32xbf16>, vector<8x8xf32> -> vector<8x8xf32>
    %91 = arith.addf %90, %11 : vector<8x8xf32>
    %cst_33 = arith.constant dense<0xFF800000> : vector<8xf32>
    %92 = vector.multi_reduction <maximumf>, %91, %cst_33 [1] : vector<8x8xf32> to vector<8xf32>
    %93 = vector.shape_cast %92 : vector<8xf32> to vector<8x1xf32>
    %94 = vector.broadcast %93 : vector<8x1xf32> to vector<8x8xf32>
    %95 = arith.subf %91, %94 : vector<8x8xf32>
    %96 = math.exp %95 : vector<8x8xf32>
    %cst_34 = arith.constant dense<0.000000e+00> : vector<8xf32>
    %97 = vector.multi_reduction <add>, %96, %cst_34 [1] : vector<8x8xf32> to vector<8xf32>
    %98 = vector.shape_cast %97 : vector<8xf32> to vector<8x1xf32>
    %99 = arith.truncf %96 : vector<8x8xf32> to vector<8x8xbf16>
    %100 = vector.extract_strided_slice %53 {offsets = [0, 64], sizes = [8, 32], strides = [1, 1]} : vector<8x128xbf16> to vector<8x32xbf16>
    %cst_35 = arith.constant dense<0.000000e+00> : vector<8x32xf32>
    %101 = tpu.matmul %99, %100, %cst_35 {dimension_numbers = #tpu.dot_dimension_numbers<[1], [0], [0], [1], [0, 0, 1, 1], [], []>} : vector<8x8xbf16>, vector<8x32xbf16>, vector<8x32xf32> -> vector<8x32xf32>
    %102 = tpu.reciprocal %98 {approx = true} : vector<8x1xf32> -> vector<8x1xf32>
    %103 = vector.broadcast %102 : vector<8x1xf32> to vector<8x32xf32>
    %104 = arith.mulf %101, %103 : vector<8x32xf32>
    %105 = vector.extract_strided_slice %51 {offsets = [0, 96], sizes = [8, 32], strides = [1, 1]} : vector<8x128xbf16> to vector<8x32xbf16>
    %106 = vector.extract_strided_slice %52 {offsets = [0, 96], sizes = [8, 32], strides = [1, 1]} : vector<8x128xbf16> to vector<8x32xbf16>
    %cst_36 = arith.constant dense<0.000000e+00> : vector<8x8xf32>
    %107 = tpu.matmul %105, %106, %cst_36 {dimension_numbers = #tpu.dot_dimension_numbers<[1], [1], [0], [0], [0, 0, 1, 0], [], []>} : vector<8x32xbf16>, vector<8x32xbf16>, vector<8x8xf32> -> vector<8x8xf32>
    %108 = arith.addf %107, %11 : vector<8x8xf32>
    %cst_37 = arith.constant dense<0xFF800000> : vector<8xf32>
    %109 = vector.multi_reduction <maximumf>, %108, %cst_37 [1] : vector<8x8xf32> to vector<8xf32>
    %110 = vector.shape_cast %109 : vector<8xf32> to vector<8x1xf32>
    %111 = vector.broadcast %110 : vector<8x1xf32> to vector<8x8xf32>
    %112 = arith.subf %108, %111 : vector<8x8xf32>
    %113 = math.exp %112 : vector<8x8xf32>
    %cst_38 = arith.constant dense<0.000000e+00> : vector<8xf32>
    %114 = vector.multi_reduction <add>, %113, %cst_38 [1] : vector<8x8xf32> to vector<8xf32>
    %115 = vector.shape_cast %114 : vector<8xf32> to vector<8x1xf32>
    %116 = arith.truncf %113 : vector<8x8xf32> to vector<8x8xbf16>
    %117 = vector.extract_strided_slice %53 {offsets = [0, 96], sizes = [8, 32], strides = [1, 1]} : vector<8x128xbf16> to vector<8x32xbf16>
    %cst_39 = arith.constant dense<0.000000e+00> : vector<8x32xf32>
    %118 = tpu.matmul %116, %117, %cst_39 {dimension_numbers = #tpu.dot_dimension_numbers<[1], [0], [0], [1], [0, 0, 1, 1], [], []>} : vector<8x8xbf16>, vector<8x32xbf16>, vector<8x32xf32> -> vector<8x32xf32>
    %119 = tpu.reciprocal %115 {approx = true} : vector<8x1xf32> -> vector<8x1xf32>
    %120 = vector.broadcast %119 : vector<8x1xf32> to vector<8x32xf32>
    %121 = arith.mulf %118, %120 : vector<8x32xf32>
    %122 = tpu.concatenate %70, %87, %104, %121 in 1 : vector<8x32xf32>, vector<8x32xf32>, vector<8x32xf32>, vector<8x32xf32> -> vector<8x128xf32>
    %123 = arith.truncf %122 : vector<8x128xf32> to vector<8x128xbf16>
    %cst_40 = arith.constant dense<0.000000e+00> : vector<8x128xf32>
    %124 = tpu.matmul %123, %48, %cst_40 {dimension_numbers = #tpu.dot_dimension_numbers<[1], [0], [0], [1], [0, 0, 1, 1], [], []>} : vector<8x128xbf16>, vector<128x128xbf16>, vector<8x128xf32> -> vector<8x128xf32>
    %125 = vector.broadcast %50 : vector<1x128xf32> to vector<8x128xf32>
    %126 = arith.addf %124, %125 : vector<8x128xf32>
    %127 = arith.addf %3, %126 : vector<8x128xf32>
    %128 = vector.extract_strided_slice %5 {offsets = [2, 0], sizes = [1, 128], strides = [1, 1]} : vector<4x128xf32> to vector<1x128xf32>
    %129 = vector.extract_strided_slice %5 {offsets = [3, 0], sizes = [1, 128], strides = [1, 1]} : vector<4x128xf32> to vector<1x128xf32>
    %cst_41 = arith.constant dense<0.000000e+00> : vector<8xf32>
    %130 = vector.multi_reduction <add>, %127, %cst_41 [1] : vector<8x128xf32> to vector<8xf32>
    %131 = vector.shape_cast %130 : vector<8xf32> to vector<8x1xf32>
    %cst_42 = arith.constant 1.280000e+02 : f32
    %132 = vector.broadcast %cst_42 : f32 to vector<8x1xf32>
    %133 = arith.divf %131, %132 : vector<8x1xf32>
    %134 = vector.broadcast %133 : vector<8x1xf32> to vector<8x128xf32>
    %135 = arith.subf %127, %134 : vector<8x128xf32>
    %136 = arith.mulf %135, %135 : vector<8x128xf32>
    %cst_43 = arith.constant dense<0.000000e+00> : vector<8xf32>
    %137 = vector.multi_reduction <add>, %136, %cst_43 [1] : vector<8x128xf32> to vector<8xf32>
    %138 = vector.shape_cast %137 : vector<8xf32> to vector<8x1xf32>
    %cst_44 = arith.constant 1.280000e+02 : f32
    %139 = vector.broadcast %cst_44 : f32 to vector<8x1xf32>
    %140 = arith.divf %138, %139 : vector<8x1xf32>
    %141 = vector.broadcast %133 : vector<8x1xf32> to vector<8x128xf32>
    %142 = arith.subf %127, %141 : vector<8x128xf32>
    %cst_45 = arith.constant 9.99999974E-6 : f32
    %143 = vector.broadcast %cst_45 : f32 to vector<8x1xf32>
    %144 = arith.addf %140, %143 : vector<8x1xf32>
    %145 = math.rsqrt %144 : vector<8x1xf32>
    %146 = vector.broadcast %145 : vector<8x1xf32> to vector<8x128xf32>
    %147 = arith.mulf %142, %146 : vector<8x128xf32>
    %148 = vector.broadcast %128 : vector<1x128xf32> to vector<8x128xf32>
    %149 = arith.mulf %147, %148 : vector<8x128xf32>
    %150 = vector.broadcast %129 : vector<1x128xf32> to vector<8x128xf32>
    %151 = arith.addf %149, %150 : vector<8x128xf32>
    %152 = arith.truncf %151 : vector<8x128xf32> to vector<8x128xbf16>
    %c0_46 = arith.constant 0 : index
    %c0_47 = arith.constant 0 : index
    %c0_48 = arith.constant 0 : index
    %153 = vector.load %arg12[%c0_46, %c0_47, %c0_48] : memref<1x128x256xbf16, #tpu.memory_space<vmem>>, vector<1x128x256xbf16>
    %154 = vector.shape_cast %153 : vector<1x128x256xbf16> to vector<128x256xbf16>
    %cst_49 = arith.constant dense<0.000000e+00> : vector<8x256xf32>
    %155 = tpu.matmul %152, %154, %cst_49 {dimension_numbers = #tpu.dot_dimension_numbers<[1], [0], [0], [1], [0, 0, 1, 1], [], []>} : vector<8x128xbf16>, vector<128x256xbf16>, vector<8x256xf32> -> vector<8x256xf32>
    %c0_50 = arith.constant 0 : index
    %c0_51 = arith.constant 0 : index
    %c0_52 = arith.constant 0 : index
    %156 = vector.load %arg13[%c0_50, %c0_51, %c0_52] : memref<1x1x256xf32, #tpu.memory_space<vmem>>, vector<1x1x256xf32>
    %157 = vector.shape_cast %156 : vector<1x1x256xf32> to vector<1x256xf32>
    %158 = vector.broadcast %157 : vector<1x256xf32> to vector<8x256xf32>
    %159 = arith.addf %155, %158 : vector<8x256xf32>
    %160 = arith.mulf %159, %159 : vector<8x256xf32>
    %161 = arith.mulf %159, %160 : vector<8x256xf32>
    %cst_53 = arith.constant 4.471500e-02 : f32
    %162 = vector.broadcast %cst_53 : f32 to vector<8x256xf32>
    %163 = arith.mulf %162, %161 : vector<8x256xf32>
    %164 = arith.addf %159, %163 : vector<8x256xf32>
    %cst_54 = arith.constant 0.797884583 : f32
    %165 = vector.broadcast %cst_54 : f32 to vector<8x256xf32>
    %166 = arith.mulf %165, %164 : vector<8x256xf32>
    %167 = math.tanh %166 : vector<8x256xf32>
    %cst_55 = arith.constant 1.000000e+00 : f32
    %168 = vector.broadcast %cst_55 : f32 to vector<8x256xf32>
    %169 = arith.addf %168, %167 : vector<8x256xf32>
    %cst_56 = arith.constant 5.000000e-01 : f32
    %170 = vector.broadcast %cst_56 : f32 to vector<8x256xf32>
    %171 = arith.mulf %170, %169 : vector<8x256xf32>
    %172 = arith.mulf %159, %171 : vector<8x256xf32>
    %173 = arith.truncf %172 : vector<8x256xf32> to vector<8x256xbf16>
    %c0_57 = arith.constant 0 : index
    %c0_58 = arith.constant 0 : index
    %c0_59 = arith.constant 0 : index
    %174 = vector.load %arg14[%c0_57, %c0_58, %c0_59] : memref<1x256x128xbf16, #tpu.memory_space<vmem>>, vector<1x256x128xbf16>
    %175 = vector.shape_cast %174 : vector<1x256x128xbf16> to vector<256x128xbf16>
    %cst_60 = arith.constant dense<0.000000e+00> : vector<8x128xf32>
    %176 = tpu.matmul %173, %175, %cst_60 {dimension_numbers = #tpu.dot_dimension_numbers<[1], [0], [0], [1], [0, 0, 1, 1], [], []>} : vector<8x256xbf16>, vector<256x128xbf16>, vector<8x128xf32> -> vector<8x128xf32>
    %177 = arith.addf %127, %176 : vector<8x128xf32>
    %c0_61 = arith.constant 0 : index
    %c0_62 = arith.constant 0 : index
    %c0_63 = arith.constant 0 : index
    %178 = vector.load %arg15[%c0_61, %c0_62, %c0_63] : memref<1x1x128xf32, #tpu.memory_space<vmem>>, vector<1x1x128xf32>
    %179 = vector.shape_cast %178 : vector<1x1x128xf32> to vector<1x128xf32>
    %180 = vector.broadcast %179 : vector<1x128xf32> to vector<8x128xf32>
    %181 = arith.addf %177, %180 : vector<8x128xf32>
    %c0_64 = arith.constant 0 : index
    %c0_65 = arith.constant 0 : index
    %182 = vector.load %arg20[%c0_64, %c0_65] : memref<8x128xf32, #tpu.memory_space<vmem>>, vector<8x128xf32>
    tpu.vector_store %arg20[%c0_64, %c0_65], %181 {strides = array<i32>} : memref<8x128xf32, #tpu.memory_space<vmem>>, vector<8x128xf32>,
    %c1_i32 = arith.constant 1 : i32
    %183 = arith.cmpi eq, %arg1, %c1_i32 : i32
    %184 = arith.extui %183 : i1 to i32
    %c0_i32_66 = arith.constant 0 : i32
    %185 = arith.cmpi ne, %184, %c0_i32_66 : i32
    scf.if %185 {
      %c0_67 = arith.constant 0 : index
      %c0_68 = arith.constant 0 : index
      %186 = vector.load %arg16[%c0_67, %c0_68] : memref<2x128xf32, #tpu.memory_space<vmem>>, vector<2x128xf32>
      %187 = vector.extract_strided_slice %186 {offsets = [0, 0], sizes = [1, 128], strides = [1, 1]} : vector<2x128xf32> to vector<1x128xf32>
      %188 = vector.extract_strided_slice %186 {offsets = [1, 0], sizes = [1, 128], strides = [1, 1]} : vector<2x128xf32> to vector<1x128xf32>
      %cst_69 = arith.constant dense<0.000000e+00> : vector<8xf32>
      %189 = vector.multi_reduction <add>, %181, %cst_69 [1] : vector<8x128xf32> to vector<8xf32>
      %190 = vector.shape_cast %189 : vector<8xf32> to vector<8x1xf32>
      %cst_70 = arith.constant 1.280000e+02 : f32
      %191 = vector.broadcast %cst_70 : f32 to vector<8x1xf32>
      %192 = arith.divf %190, %191 : vector<8x1xf32>
      %193 = vector.broadcast %192 : vector<8x1xf32> to vector<8x128xf32>
      %194 = arith.subf %181, %193 : vector<8x128xf32>
      %195 = arith.mulf %194, %194 : vector<8x128xf32>
      %cst_71 = arith.constant dense<0.000000e+00> : vector<8xf32>
      %196 = vector.multi_reduction <add>, %195, %cst_71 [1] : vector<8x128xf32> to vector<8xf32>
      %197 = vector.shape_cast %196 : vector<8xf32> to vector<8x1xf32>
      %cst_72 = arith.constant 1.280000e+02 : f32
      %198 = vector.broadcast %cst_72 : f32 to vector<8x1xf32>
      %199 = arith.divf %197, %198 : vector<8x1xf32>
      %200 = vector.broadcast %192 : vector<8x1xf32> to vector<8x128xf32>
      %201 = arith.subf %181, %200 : vector<8x128xf32>
      %cst_73 = arith.constant 9.99999974E-6 : f32
      %202 = vector.broadcast %cst_73 : f32 to vector<8x1xf32>
      %203 = arith.addf %199, %202 : vector<8x1xf32>
      %204 = math.rsqrt %203 : vector<8x1xf32>
      %205 = vector.broadcast %204 : vector<8x1xf32> to vector<8x128xf32>
      %206 = arith.mulf %201, %205 : vector<8x128xf32>
      %207 = vector.broadcast %187 : vector<1x128xf32> to vector<8x128xf32>
      %208 = arith.mulf %206, %207 : vector<8x128xf32>
      %209 = vector.broadcast %188 : vector<1x128xf32> to vector<8x128xf32>
      %210 = arith.addf %208, %209 : vector<8x128xf32>
      %211 = arith.truncf %210 : vector<8x128xf32> to vector<8x128xbf16>
      %c0_74 = arith.constant 0 : index
      %c0_75 = arith.constant 0 : index
      %212 = vector.load %arg17[%c0_74, %c0_75] : memref<128x128xbf16, #tpu.memory_space<vmem>>, vector<128x128xbf16>
      %cst_76 = arith.constant dense<0.000000e+00> : vector<8x128xf32>
      %213 = tpu.matmul %211, %212, %cst_76 {dimension_numbers = #tpu.dot_dimension_numbers<[1], [0], [0], [1], [0, 0, 1, 1], [], []>} : vector<8x128xbf16>, vector<128x128xbf16>, vector<8x128xf32> -> vector<8x128xf32>
      %c0_77 = arith.constant 0 : index
      %c0_78 = arith.constant 0 : index
      %214 = vector.load %arg18[%c0_77, %c0_78] : memref<1x128xf32, #tpu.memory_space<vmem>>, vector<1x128xf32>
      %215 = vector.broadcast %214 : vector<1x128xf32> to vector<8x128xf32>
      %216 = arith.addf %213, %215 : vector<8x128xf32>
      %c0_79 = arith.constant 0 : index
      %c0_80 = arith.constant 0 : index
      %c0_81 = arith.constant 0 : index
      %217 = vector.load %arg19[%c0_79, %c0_80, %c0_81] : memref<1x8x128xf32, #tpu.memory_space<vmem>>, vector<1x8x128xf32>
      %218 = vector.shape_cast %217 : vector<1x8x128xf32> to vector<8x128xf32>
      %219 = vector.shape_cast %216 : vector<8x128xf32> to vector<1x8x128xf32>
      tpu.vector_store %arg19[%c0_79, %c0_80, %c0_81], %219 {strides = array<i32>} : memref<1x8x128xf32, #tpu.memory_space<vmem>>, vector<1x8x128xf32>,
    } else {
    }
    return
  }
  func.func @transform_0(%arg0: i32, %arg1: i32) -> (i32, i32, i32) {
    %c0_i32 = arith.constant 0 : i32
    %c0_i32_0 = arith.constant 0 : i32
    %c0_i32_1 = arith.constant 0 : i32
    return %arg0, %c0_i32, %c0_i32_0 : i32, i32, i32
  }
  func.func @transform_1(%arg0: i32, %arg1: i32) -> (i32, i32) {
    %c0_i32 = arith.constant 0 : i32
    %c0_i32_0 = arith.constant 0 : i32
    %c0_i32_1 = arith.constant 0 : i32
    return %c0_i32, %c0_i32_0 : i32, i32
  }
  func.func @transform_2(%arg0: i32, %arg1: i32) -> (i32, i32) {
    %c0_i32 = arith.constant 0 : i32
    %c0_i32_0 = arith.constant 0 : i32
    %c0_i32_1 = arith.constant 0 : i32
    return %c0_i32, %c0_i32_0 : i32, i32
  }
  func.func @transform_3(%arg0: i32, %arg1: i32) -> (i32, i32) {
    %c0_i32 = arith.constant 0 : i32
    %c0_i32_0 = arith.constant 0 : i32
    %c0_i32_1 = arith.constant 0 : i32
    return %c0_i32, %c0_i32_0 : i32, i32
  }
  func.func @transform_4(%arg0: i32, %arg1: i32) -> (i32, i32) {
    %c0_i32 = arith.constant 0 : i32
    %c0_i32_0 = arith.constant 0 : i32
    %c0_i32_1 = arith.constant 0 : i32
    return %c0_i32, %c0_i32_0 : i32, i32
  }
  func.func @transform_5(%arg0: i32, %arg1: i32) -> (i32, i32, i32) {
    %c0_i32 = arith.constant 0 : i32
    %c0_i32_0 = arith.constant 0 : i32
    %c0_i32_1 = arith.constant 0 : i32
    return %arg1, %c0_i32, %c0_i32_0 : i32, i32, i32
  }
  func.func @transform_6(%arg0: i32, %arg1: i32) -> (i32, i32, i32) {
    %c0_i32 = arith.constant 0 : i32
    %c0_i32_0 = arith.constant 0 : i32
    %c0_i32_1 = arith.constant 0 : i32
    return %arg1, %c0_i32, %c0_i32_0 : i32, i32, i32
  }
  func.func @transform_7(%arg0: i32, %arg1: i32) -> (i32, i32, i32) {
    %c0_i32 = arith.constant 0 : i32
    %c0_i32_0 = arith.constant 0 : i32
    %c0_i32_1 = arith.constant 0 : i32
    return %arg1, %c0_i32, %c0_i32_0 : i32, i32, i32
  }
  func.func @transform_8(%arg0: i32, %arg1: i32) -> (i32, i32, i32) {
    %c0_i32 = arith.constant 0 : i32
    %c0_i32_0 = arith.constant 0 : i32
    %c0_i32_1 = arith.constant 0 : i32
    return %arg1, %c0_i32, %c0_i32_0 : i32, i32, i32
  }
  func.func @transform_9(%arg0: i32, %arg1: i32) -> (i32, i32, i32) {
    %c0_i32 = arith.constant 0 : i32
    %c0_i32_0 = arith.constant 0 : i32
    %c0_i32_1 = arith.constant 0 : i32
    return %arg1, %c0_i32, %c0_i32_0 : i32, i32, i32
  }
  func.func @transform_10(%arg0: i32, %arg1: i32) -> (i32, i32, i32) {
    %c0_i32 = arith.constant 0 : i32
    %c0_i32_0 = arith.constant 0 : i32
    %c0_i32_1 = arith.constant 0 : i32
    return %arg1, %c0_i32, %c0_i32_0 : i32, i32, i32
  }
  func.func @transform_11(%arg0: i32, %arg1: i32) -> (i32, i32, i32) {
    %c0_i32 = arith.constant 0 : i32
    %c0_i32_0 = arith.constant 0 : i32
    %c0_i32_1 = arith.constant 0 : i32
    return %arg1, %c0_i32, %c0_i32_0 : i32, i32, i32
  }
  func.func @transform_12(%arg0: i32, %arg1: i32) -> (i32, i32, i32) {
    %c0_i32 = arith.constant 0 : i32
    %c0_i32_0 = arith.constant 0 : i32
    %c0_i32_1 = arith.constant 0 : i32
    return %arg1, %c0_i32, %c0_i32_0 : i32, i32, i32
  }
  func.func @transform_13(%arg0: i32, %arg1: i32) -> (i32, i32, i32) {
    %c0_i32 = arith.constant 0 : i32
    %c0_i32_0 = arith.constant 0 : i32
    %c0_i32_1 = arith.constant 0 : i32
    return %arg1, %c0_i32, %c0_i32_0 : i32, i32, i32
  }
  func.func @transform_14(%arg0: i32, %arg1: i32) -> (i32, i32) {
    %c0_i32 = arith.constant 0 : i32
    %c0_i32_0 = arith.constant 0 : i32
    %c0_i32_1 = arith.constant 0 : i32
    return %c0_i32, %c0_i32_0 : i32, i32
  }
  func.func @transform_15(%arg0: i32, %arg1: i32) -> (i32, i32) {
    %c0_i32 = arith.constant 0 : i32
    %c0_i32_0 = arith.constant 0 : i32
    %c0_i32_1 = arith.constant 0 : i32
    return %c0_i32, %c0_i32_0 : i32, i32
  }
  func.func @transform_16(%arg0: i32, %arg1: i32) -> (i32, i32) {
    %c0_i32 = arith.constant 0 : i32
    %c0_i32_0 = arith.constant 0 : i32
    %c0_i32_1 = arith.constant 0 : i32
    return %c0_i32, %c0_i32_0 : i32, i32
  }
  func.func @transform_17(%arg0: i32, %arg1: i32) -> (i32, i32, i32) {
    %c0_i32 = arith.constant 0 : i32
    %c0_i32_0 = arith.constant 0 : i32
    %c0_i32_1 = arith.constant 0 : i32
    return %arg0, %c0_i32, %c0_i32_0 : i32, i32, i32
  }
}

module attributes {stable_mosaic.version = 11 : i64} {
  func.func @_dec_stack_kernel(%arg0: i32, %arg1: i32, %arg2: memref<1x8x1xi32, #tpu.memory_space<vmem>>, %arg3: memref<128x128xbf16, #tpu.memory_space<vmem>>, %arg4: memref<8x128xf32, #tpu.memory_space<vmem>>, %arg5: memref<1x8x128xf32, #tpu.memory_space<vmem>>, %arg6: memref<1x6x128xf32, #tpu.memory_space<vmem>>, %arg7: memref<1x128x384xbf16, #tpu.memory_space<vmem>>, %arg8: memref<1x1x384xf32, #tpu.memory_space<vmem>>, %arg9: memref<1x128x128xbf16, #tpu.memory_space<vmem>>, %arg10: memref<1x1x128xf32, #tpu.memory_space<vmem>>, %arg11: memref<1x128x128xbf16, #tpu.memory_space<vmem>>, %arg12: memref<1x1x128xf32, #tpu.memory_space<vmem>>, %arg13: memref<1x128x256xbf16, #tpu.memory_space<vmem>>, %arg14: memref<1x1x256xf32, #tpu.memory_space<vmem>>, %arg15: memref<1x128x128xbf16, #tpu.memory_space<vmem>>, %arg16: memref<1x1x128xf32, #tpu.memory_space<vmem>>, %arg17: memref<1x128x256xbf16, #tpu.memory_space<vmem>>, %arg18: memref<1x1x256xf32, #tpu.memory_space<vmem>>, %arg19: memref<1x256x128xbf16, #tpu.memory_space<vmem>>, %arg20: memref<1x1x128xf32, #tpu.memory_space<vmem>>, %arg21: memref<2x128xf32, #tpu.memory_space<vmem>>, %arg22: memref<128x128xbf16, #tpu.memory_space<vmem>>, %arg23: memref<1x128xf32, #tpu.memory_space<vmem>>, %arg24: memref<1x8x128xf32, #tpu.memory_space<vmem>>, %arg25: memref<8x128xf32, #tpu.memory_space<vmem>>) attributes {dimension_semantics = [#tpu.dimension_semantics<parallel>, #tpu.dimension_semantics<arbitrary>], iteration_bounds = array<i64: 2, 2>, scalar_prefetch = 0 : i64, scratch_operands = 1 : i64, tpu.core_type = #tpu.core_type<tc>, window_params = [{transform_indices = @transform_0, window_bounds = array<i64: 1, 8, 1>}, {pipeline_mode = #tpu.pipeline_mode<synchronous>, transform_indices = @transform_1, window_bounds = array<i64: 128, 128>}, {transform_indices = @transform_2, window_bounds = array<i64: 8, 128>}, {transform_indices = @transform_3, window_bounds = array<i64: 1, 8, 128>}, {transform_indices = @transform_4, window_bounds = array<i64: 1, 6, 128>}, {transform_indices = @transform_5, window_bounds = array<i64: 1, 128, 384>}, {transform_indices = @transform_6, window_bounds = array<i64: 1, 1, 384>}, {transform_indices = @transform_7, window_bounds = array<i64: 1, 128, 128>}, {transform_indices = @transform_8, window_bounds = array<i64: 1, 1, 128>}, {transform_indices = @transform_9, window_bounds = array<i64: 1, 128, 128>}, {transform_indices = @transform_10, window_bounds = array<i64: 1, 1, 128>}, {transform_indices = @transform_11, window_bounds = array<i64: 1, 128, 256>}, {transform_indices = @transform_12, window_bounds = array<i64: 1, 1, 256>}, {transform_indices = @transform_13, window_bounds = array<i64: 1, 128, 128>}, {transform_indices = @transform_14, window_bounds = array<i64: 1, 1, 128>}, {transform_indices = @transform_15, window_bounds = array<i64: 1, 128, 256>}, {transform_indices = @transform_16, window_bounds = array<i64: 1, 1, 256>}, {transform_indices = @transform_17, window_bounds = array<i64: 1, 256, 128>}, {transform_indices = @transform_18, window_bounds = array<i64: 1, 1, 128>}, {pipeline_mode = #tpu.pipeline_mode<synchronous>, transform_indices = @transform_19, window_bounds = array<i64: 2, 128>}, {pipeline_mode = #tpu.pipeline_mode<synchronous>, transform_indices = @transform_20, window_bounds = array<i64: 128, 128>}, {pipeline_mode = #tpu.pipeline_mode<synchronous>, transform_indices = @transform_21, window_bounds = array<i64: 1, 128>}, {transform_indices = @transform_22, window_bounds = array<i64: 1, 8, 128>}]} {
    %c0 = arith.constant 0 : index
    %c0_0 = arith.constant 0 : index
    %c0_1 = arith.constant 0 : index
    %0 = vector.load %arg5[%c0, %c0_0, %c0_1] : memref<1x8x128xf32, #tpu.memory_space<vmem>>, vector<1x8x128xf32>
    %1 = vector.shape_cast %0 : vector<1x8x128xf32> to vector<8x128xf32>
    %c0_i32 = arith.constant 0 : i32
    %2 = arith.cmpi eq, %arg1, %c0_i32 : i32
    %3 = arith.extui %2 : i1 to i32
    %c0_i32_2 = arith.constant 0 : i32
    %4 = arith.cmpi ne, %3, %c0_i32_2 : i32
    scf.if %4 {
      %c0_114 = arith.constant 0 : index
      %c0_115 = arith.constant 0 : index
      %c0_116 = arith.constant 0 : index
      %317 = vector.load %arg2[%c0_114, %c0_115, %c0_116] : memref<1x8x1xi32, #tpu.memory_space<vmem>>, vector<1x8x1xi32>
      %318 = vector.shape_cast %317 : vector<1x8x1xi32> to vector<8x1xi32>
      %319 = tpu.iota {dimensions = array<i32: 1>} : vector<8x128xi32>
      %320 = vector.broadcast %318 : vector<8x1xi32> to vector<8x128xi32>
      %321 = arith.cmpi eq, %319, %320 : vector<8x128xi32>
      %322 = arith.extui %321 : vector<8x128xi1> to vector<8x128xi32>
      %323 = arith.sitofp %322 : vector<8x128xi32> to vector<8x128xf32>
      %324 = arith.truncf %323 : vector<8x128xf32> to vector<8x128xbf16>
      %c0_117 = arith.constant 0 : index
      %c0_118 = arith.constant 0 : index
      %325 = vector.load %arg3[%c0_117, %c0_118] : memref<128x128xbf16, #tpu.memory_space<vmem>>, vector<128x128xbf16>
      %cst_119 = arith.constant dense<0.000000e+00> : vector<8x128xf32>
      %326 = tpu.matmul %324, %325, %cst_119 {dimension_numbers = #tpu.dot_dimension_numbers<[1], [0], [0], [1], [0, 0, 1, 1], [], []>} : vector<8x128xbf16>, vector<128x128xbf16>, vector<8x128xf32> -> vector<8x128xf32>
      %c0_120 = arith.constant 0 : index
      %c0_121 = arith.constant 0 : index
      %327 = vector.load %arg4[%c0_120, %c0_121] : memref<8x128xf32, #tpu.memory_space<vmem>>, vector<8x128xf32>
      %328 = arith.addf %326, %327 : vector<8x128xf32>
      %c0_122 = arith.constant 0 : index
      %c0_123 = arith.constant 0 : index
      %329 = vector.load %arg25[%c0_122, %c0_123] : memref<8x128xf32, #tpu.memory_space<vmem>>, vector<8x128xf32>
      tpu.vector_store %arg25[%c0_122, %c0_123], %328 {strides = array<i32>} : memref<8x128xf32, #tpu.memory_space<vmem>>, vector<8x128xf32>,
    } else {
    }
    %c0_3 = arith.constant 0 : index
    %c0_4 = arith.constant 0 : index
    %5 = vector.load %arg25[%c0_3, %c0_4] : memref<8x128xf32, #tpu.memory_space<vmem>>, vector<8x128xf32>
    %c0_5 = arith.constant 0 : index
    %c0_6 = arith.constant 0 : index
    %c0_7 = arith.constant 0 : index
    %6 = vector.load %arg6[%c0_5, %c0_6, %c0_7] : memref<1x6x128xf32, #tpu.memory_space<vmem>>, vector<1x6x128xf32>
    %7 = vector.shape_cast %6 : vector<1x6x128xf32> to vector<6x128xf32>
    %8 = tpu.iota {dimensions = array<i32: 0>} : vector<8x8xi32>
    %9 = tpu.iota {dimensions = array<i32: 1>} : vector<8x8xi32>
    %10 = arith.cmpi sle, %9, %8 : vector<8x8xi32>
    %cst = arith.constant 0.000000e+00 : f32
    %cst_8 = arith.constant -1.000000e+30 : f32
    %11 = vector.broadcast %cst : f32 to vector<8x8xf32>
    %12 = vector.broadcast %cst_8 : f32 to vector<8x8xf32>
    %13 = arith.select %10, %11, %12 : vector<8x8xi1>, vector<8x8xf32>
    %14 = tpu.iota {dimensions = array<i32: 1>} : vector<8x8xi32>
    %c5_i32 = arith.constant 5 : i32
    %15 = vector.broadcast %c5_i32 : i32 to vector<8x8xi32>
    %16 = arith.cmpi slt, %14, %15 : vector<8x8xi32>
    %cst_9 = arith.constant 0.000000e+00 : f32
    %cst_10 = arith.constant -1.000000e+30 : f32
    %17 = vector.broadcast %cst_9 : f32 to vector<8x8xf32>
    %18 = vector.broadcast %cst_10 : f32 to vector<8x8xf32>
    %19 = arith.select %16, %17, %18 : vector<8x8xi1>, vector<8x8xf32>
    %20 = vector.extract_strided_slice %7 {offsets = [0, 0], sizes = [1, 128], strides = [1, 1]} : vector<6x128xf32> to vector<1x128xf32>
    %21 = vector.extract_strided_slice %7 {offsets = [1, 0], sizes = [1, 128], strides = [1, 1]} : vector<6x128xf32> to vector<1x128xf32>
    %cst_11 = arith.constant dense<0.000000e+00> : vector<8xf32>
    %22 = vector.multi_reduction <add>, %5, %cst_11 [1] : vector<8x128xf32> to vector<8xf32>
    %23 = vector.shape_cast %22 : vector<8xf32> to vector<8x1xf32>
    %cst_12 = arith.constant 1.280000e+02 : f32
    %24 = vector.broadcast %cst_12 : f32 to vector<8x1xf32>
    %25 = arith.divf %23, %24 : vector<8x1xf32>
    %26 = vector.broadcast %25 : vector<8x1xf32> to vector<8x128xf32>
    %27 = arith.subf %5, %26 : vector<8x128xf32>
    %28 = arith.mulf %27, %27 : vector<8x128xf32>
    %cst_13 = arith.constant dense<0.000000e+00> : vector<8xf32>
    %29 = vector.multi_reduction <add>, %28, %cst_13 [1] : vector<8x128xf32> to vector<8xf32>
    %30 = vector.shape_cast %29 : vector<8xf32> to vector<8x1xf32>
    %cst_14 = arith.constant 1.280000e+02 : f32
    %31 = vector.broadcast %cst_14 : f32 to vector<8x1xf32>
    %32 = arith.divf %30, %31 : vector<8x1xf32>
    %33 = vector.broadcast %25 : vector<8x1xf32> to vector<8x128xf32>
    %34 = arith.subf %5, %33 : vector<8x128xf32>
    %cst_15 = arith.constant 9.99999974E-6 : f32
    %35 = vector.broadcast %cst_15 : f32 to vector<8x1xf32>
    %36 = arith.addf %32, %35 : vector<8x1xf32>
    %37 = math.rsqrt %36 : vector<8x1xf32>
    %38 = vector.broadcast %37 : vector<8x1xf32> to vector<8x128xf32>
    %39 = arith.mulf %34, %38 : vector<8x128xf32>
    %40 = vector.broadcast %20 : vector<1x128xf32> to vector<8x128xf32>
    %41 = arith.mulf %39, %40 : vector<8x128xf32>
    %42 = vector.broadcast %21 : vector<1x128xf32> to vector<8x128xf32>
    %43 = arith.addf %41, %42 : vector<8x128xf32>
    %44 = arith.truncf %43 : vector<8x128xf32> to vector<8x128xbf16>
    %c0_16 = arith.constant 0 : index
    %c0_17 = arith.constant 0 : index
    %c0_18 = arith.constant 0 : index
    %45 = vector.load %arg7[%c0_16, %c0_17, %c0_18] : memref<1x128x384xbf16, #tpu.memory_space<vmem>>, vector<1x128x384xbf16>
    %46 = vector.shape_cast %45 : vector<1x128x384xbf16> to vector<128x384xbf16>
    %cst_19 = arith.constant dense<0.000000e+00> : vector<8x384xf32>
    %47 = tpu.matmul %44, %46, %cst_19 {dimension_numbers = #tpu.dot_dimension_numbers<[1], [0], [0], [1], [0, 0, 1, 1], [], []>} : vector<8x128xbf16>, vector<128x384xbf16>, vector<8x384xf32> -> vector<8x384xf32>
    %c0_20 = arith.constant 0 : index
    %c0_21 = arith.constant 0 : index
    %c0_22 = arith.constant 0 : index
    %48 = vector.load %arg8[%c0_20, %c0_21, %c0_22] : memref<1x1x384xf32, #tpu.memory_space<vmem>>, vector<1x1x384xf32>
    %49 = vector.shape_cast %48 : vector<1x1x384xf32> to vector<1x384xf32>
    %50 = vector.broadcast %49 : vector<1x384xf32> to vector<8x384xf32>
    %51 = arith.addf %47, %50 : vector<8x384xf32>
    %52 = vector.extract_strided_slice %51 {offsets = [0, 0], sizes = [8, 128], strides = [1, 1]} : vector<8x384xf32> to vector<8x128xf32>
    %53 = vector.extract_strided_slice %51 {offsets = [0, 128], sizes = [8, 128], strides = [1, 1]} : vector<8x384xf32> to vector<8x128xf32>
    %54 = vector.extract_strided_slice %51 {offsets = [0, 256], sizes = [8, 128], strides = [1, 1]} : vector<8x384xf32> to vector<8x128xf32>
    %c0_23 = arith.constant 0 : index
    %c0_24 = arith.constant 0 : index
    %c0_25 = arith.constant 0 : index
    %55 = vector.load %arg9[%c0_23, %c0_24, %c0_25] : memref<1x128x128xbf16, #tpu.memory_space<vmem>>, vector<1x128x128xbf16>
    %56 = vector.shape_cast %55 : vector<1x128x128xbf16> to vector<128x128xbf16>
    %c0_26 = arith.constant 0 : index
    %c0_27 = arith.constant 0 : index
    %c0_28 = arith.constant 0 : index
    %57 = vector.load %arg10[%c0_26, %c0_27, %c0_28] : memref<1x1x128xf32, #tpu.memory_space<vmem>>, vector<1x1x128xf32>
    %58 = vector.shape_cast %57 : vector<1x1x128xf32> to vector<1x128xf32>
    %59 = arith.truncf %52 : vector<8x128xf32> to vector<8x128xbf16>
    %60 = arith.truncf %53 : vector<8x128xf32> to vector<8x128xbf16>
    %61 = arith.truncf %54 : vector<8x128xf32> to vector<8x128xbf16>
    %62 = vector.extract_strided_slice %59 {offsets = [0, 0], sizes = [8, 32], strides = [1, 1]} : vector<8x128xbf16> to vector<8x32xbf16>
    %63 = vector.extract_strided_slice %60 {offsets = [0, 0], sizes = [8, 32], strides = [1, 1]} : vector<8x128xbf16> to vector<8x32xbf16>
    %cst_29 = arith.constant dense<0.000000e+00> : vector<8x8xf32>
    %64 = tpu.matmul %62, %63, %cst_29 {dimension_numbers = #tpu.dot_dimension_numbers<[1], [1], [0], [0], [0, 0, 1, 0], [], []>} : vector<8x32xbf16>, vector<8x32xbf16>, vector<8x8xf32> -> vector<8x8xf32>
    %65 = arith.addf %64, %13 : vector<8x8xf32>
    %cst_30 = arith.constant dense<0xFF800000> : vector<8xf32>
    %66 = vector.multi_reduction <maximumf>, %65, %cst_30 [1] : vector<8x8xf32> to vector<8xf32>
    %67 = vector.shape_cast %66 : vector<8xf32> to vector<8x1xf32>
    %68 = vector.broadcast %67 : vector<8x1xf32> to vector<8x8xf32>
    %69 = arith.subf %65, %68 : vector<8x8xf32>
    %70 = math.exp %69 : vector<8x8xf32>
    %cst_31 = arith.constant dense<0.000000e+00> : vector<8xf32>
    %71 = vector.multi_reduction <add>, %70, %cst_31 [1] : vector<8x8xf32> to vector<8xf32>
    %72 = vector.shape_cast %71 : vector<8xf32> to vector<8x1xf32>
    %73 = arith.truncf %70 : vector<8x8xf32> to vector<8x8xbf16>
    %74 = vector.extract_strided_slice %61 {offsets = [0, 0], sizes = [8, 32], strides = [1, 1]} : vector<8x128xbf16> to vector<8x32xbf16>
    %cst_32 = arith.constant dense<0.000000e+00> : vector<8x32xf32>
    %75 = tpu.matmul %73, %74, %cst_32 {dimension_numbers = #tpu.dot_dimension_numbers<[1], [0], [0], [1], [0, 0, 1, 1], [], []>} : vector<8x8xbf16>, vector<8x32xbf16>, vector<8x32xf32> -> vector<8x32xf32>
    %76 = tpu.reciprocal %72 {approx = true} : vector<8x1xf32> -> vector<8x1xf32>
    %77 = vector.broadcast %76 : vector<8x1xf32> to vector<8x32xf32>
    %78 = arith.mulf %75, %77 : vector<8x32xf32>
    %79 = vector.extract_strided_slice %59 {offsets = [0, 32], sizes = [8, 32], strides = [1, 1]} : vector<8x128xbf16> to vector<8x32xbf16>
    %80 = vector.extract_strided_slice %60 {offsets = [0, 32], sizes = [8, 32], strides = [1, 1]} : vector<8x128xbf16> to vector<8x32xbf16>
    %cst_33 = arith.constant dense<0.000000e+00> : vector<8x8xf32>
    %81 = tpu.matmul %79, %80, %cst_33 {dimension_numbers = #tpu.dot_dimension_numbers<[1], [1], [0], [0], [0, 0, 1, 0], [], []>} : vector<8x32xbf16>, vector<8x32xbf16>, vector<8x8xf32> -> vector<8x8xf32>
    %82 = arith.addf %81, %13 : vector<8x8xf32>
    %cst_34 = arith.constant dense<0xFF800000> : vector<8xf32>
    %83 = vector.multi_reduction <maximumf>, %82, %cst_34 [1] : vector<8x8xf32> to vector<8xf32>
    %84 = vector.shape_cast %83 : vector<8xf32> to vector<8x1xf32>
    %85 = vector.broadcast %84 : vector<8x1xf32> to vector<8x8xf32>
    %86 = arith.subf %82, %85 : vector<8x8xf32>
    %87 = math.exp %86 : vector<8x8xf32>
    %cst_35 = arith.constant dense<0.000000e+00> : vector<8xf32>
    %88 = vector.multi_reduction <add>, %87, %cst_35 [1] : vector<8x8xf32> to vector<8xf32>
    %89 = vector.shape_cast %88 : vector<8xf32> to vector<8x1xf32>
    %90 = arith.truncf %87 : vector<8x8xf32> to vector<8x8xbf16>
    %91 = vector.extract_strided_slice %61 {offsets = [0, 32], sizes = [8, 32], strides = [1, 1]} : vector<8x128xbf16> to vector<8x32xbf16>
    %cst_36 = arith.constant dense<0.000000e+00> : vector<8x32xf32>
    %92 = tpu.matmul %90, %91, %cst_36 {dimension_numbers = #tpu.dot_dimension_numbers<[1], [0], [0], [1], [0, 0, 1, 1], [], []>} : vector<8x8xbf16>, vector<8x32xbf16>, vector<8x32xf32> -> vector<8x32xf32>
    %93 = tpu.reciprocal %89 {approx = true} : vector<8x1xf32> -> vector<8x1xf32>
    %94 = vector.broadcast %93 : vector<8x1xf32> to vector<8x32xf32>
    %95 = arith.mulf %92, %94 : vector<8x32xf32>
    %96 = vector.extract_strided_slice %59 {offsets = [0, 64], sizes = [8, 32], strides = [1, 1]} : vector<8x128xbf16> to vector<8x32xbf16>
    %97 = vector.extract_strided_slice %60 {offsets = [0, 64], sizes = [8, 32], strides = [1, 1]} : vector<8x128xbf16> to vector<8x32xbf16>
    %cst_37 = arith.constant dense<0.000000e+00> : vector<8x8xf32>
    %98 = tpu.matmul %96, %97, %cst_37 {dimension_numbers = #tpu.dot_dimension_numbers<[1], [1], [0], [0], [0, 0, 1, 0], [], []>} : vector<8x32xbf16>, vector<8x32xbf16>, vector<8x8xf32> -> vector<8x8xf32>
    %99 = arith.addf %98, %13 : vector<8x8xf32>
    %cst_38 = arith.constant dense<0xFF800000> : vector<8xf32>
    %100 = vector.multi_reduction <maximumf>, %99, %cst_38 [1] : vector<8x8xf32> to vector<8xf32>
    %101 = vector.shape_cast %100 : vector<8xf32> to vector<8x1xf32>
    %102 = vector.broadcast %101 : vector<8x1xf32> to vector<8x8xf32>
    %103 = arith.subf %99, %102 : vector<8x8xf32>
    %104 = math.exp %103 : vector<8x8xf32>
    %cst_39 = arith.constant dense<0.000000e+00> : vector<8xf32>
    %105 = vector.multi_reduction <add>, %104, %cst_39 [1] : vector<8x8xf32> to vector<8xf32>
    %106 = vector.shape_cast %105 : vector<8xf32> to vector<8x1xf32>
    %107 = arith.truncf %104 : vector<8x8xf32> to vector<8x8xbf16>
    %108 = vector.extract_strided_slice %61 {offsets = [0, 64], sizes = [8, 32], strides = [1, 1]} : vector<8x128xbf16> to vector<8x32xbf16>
    %cst_40 = arith.constant dense<0.000000e+00> : vector<8x32xf32>
    %109 = tpu.matmul %107, %108, %cst_40 {dimension_numbers = #tpu.dot_dimension_numbers<[1], [0], [0], [1], [0, 0, 1, 1], [], []>} : vector<8x8xbf16>, vector<8x32xbf16>, vector<8x32xf32> -> vector<8x32xf32>
    %110 = tpu.reciprocal %106 {approx = true} : vector<8x1xf32> -> vector<8x1xf32>
    %111 = vector.broadcast %110 : vector<8x1xf32> to vector<8x32xf32>
    %112 = arith.mulf %109, %111 : vector<8x32xf32>
    %113 = vector.extract_strided_slice %59 {offsets = [0, 96], sizes = [8, 32], strides = [1, 1]} : vector<8x128xbf16> to vector<8x32xbf16>
    %114 = vector.extract_strided_slice %60 {offsets = [0, 96], sizes = [8, 32], strides = [1, 1]} : vector<8x128xbf16> to vector<8x32xbf16>
    %cst_41 = arith.constant dense<0.000000e+00> : vector<8x8xf32>
    %115 = tpu.matmul %113, %114, %cst_41 {dimension_numbers = #tpu.dot_dimension_numbers<[1], [1], [0], [0], [0, 0, 1, 0], [], []>} : vector<8x32xbf16>, vector<8x32xbf16>, vector<8x8xf32> -> vector<8x8xf32>
    %116 = arith.addf %115, %13 : vector<8x8xf32>
    %cst_42 = arith.constant dense<0xFF800000> : vector<8xf32>
    %117 = vector.multi_reduction <maximumf>, %116, %cst_42 [1] : vector<8x8xf32> to vector<8xf32>
    %118 = vector.shape_cast %117 : vector<8xf32> to vector<8x1xf32>
    %119 = vector.broadcast %118 : vector<8x1xf32> to vector<8x8xf32>
    %120 = arith.subf %116, %119 : vector<8x8xf32>
    %121 = math.exp %120 : vector<8x8xf32>
    %cst_43 = arith.constant dense<0.000000e+00> : vector<8xf32>
    %122 = vector.multi_reduction <add>, %121, %cst_43 [1] : vector<8x8xf32> to vector<8xf32>
    %123 = vector.shape_cast %122 : vector<8xf32> to vector<8x1xf32>
    %124 = arith.truncf %121 : vector<8x8xf32> to vector<8x8xbf16>
    %125 = vector.extract_strided_slice %61 {offsets = [0, 96], sizes = [8, 32], strides = [1, 1]} : vector<8x128xbf16> to vector<8x32xbf16>
    %cst_44 = arith.constant dense<0.000000e+00> : vector<8x32xf32>
    %126 = tpu.matmul %124, %125, %cst_44 {dimension_numbers = #tpu.dot_dimension_numbers<[1], [0], [0], [1], [0, 0, 1, 1], [], []>} : vector<8x8xbf16>, vector<8x32xbf16>, vector<8x32xf32> -> vector<8x32xf32>
    %127 = tpu.reciprocal %123 {approx = true} : vector<8x1xf32> -> vector<8x1xf32>
    %128 = vector.broadcast %127 : vector<8x1xf32> to vector<8x32xf32>
    %129 = arith.mulf %126, %128 : vector<8x32xf32>
    %130 = tpu.concatenate %78, %95, %112, %129 in 1 : vector<8x32xf32>, vector<8x32xf32>, vector<8x32xf32>, vector<8x32xf32> -> vector<8x128xf32>
    %131 = arith.truncf %130 : vector<8x128xf32> to vector<8x128xbf16>
    %cst_45 = arith.constant dense<0.000000e+00> : vector<8x128xf32>
    %132 = tpu.matmul %131, %56, %cst_45 {dimension_numbers = #tpu.dot_dimension_numbers<[1], [0], [0], [1], [0, 0, 1, 1], [], []>} : vector<8x128xbf16>, vector<128x128xbf16>, vector<8x128xf32> -> vector<8x128xf32>
    %133 = vector.broadcast %58 : vector<1x128xf32> to vector<8x128xf32>
    %134 = arith.addf %132, %133 : vector<8x128xf32>
    %135 = arith.addf %5, %134 : vector<8x128xf32>
    %136 = vector.extract_strided_slice %7 {offsets = [2, 0], sizes = [1, 128], strides = [1, 1]} : vector<6x128xf32> to vector<1x128xf32>
    %137 = vector.extract_strided_slice %7 {offsets = [3, 0], sizes = [1, 128], strides = [1, 1]} : vector<6x128xf32> to vector<1x128xf32>
    %cst_46 = arith.constant dense<0.000000e+00> : vector<8xf32>
    %138 = vector.multi_reduction <add>, %135, %cst_46 [1] : vector<8x128xf32> to vector<8xf32>
    %139 = vector.shape_cast %138 : vector<8xf32> to vector<8x1xf32>
    %cst_47 = arith.constant 1.280000e+02 : f32
    %140 = vector.broadcast %cst_47 : f32 to vector<8x1xf32>
    %141 = arith.divf %139, %140 : vector<8x1xf32>
    %142 = vector.broadcast %141 : vector<8x1xf32> to vector<8x128xf32>
    %143 = arith.subf %135, %142 : vector<8x128xf32>
    %144 = arith.mulf %143, %143 : vector<8x128xf32>
    %cst_48 = arith.constant dense<0.000000e+00> : vector<8xf32>
    %145 = vector.multi_reduction <add>, %144, %cst_48 [1] : vector<8x128xf32> to vector<8xf32>
    %146 = vector.shape_cast %145 : vector<8xf32> to vector<8x1xf32>
    %cst_49 = arith.constant 1.280000e+02 : f32
    %147 = vector.broadcast %cst_49 : f32 to vector<8x1xf32>
    %148 = arith.divf %146, %147 : vector<8x1xf32>
    %149 = vector.broadcast %141 : vector<8x1xf32> to vector<8x128xf32>
    %150 = arith.subf %135, %149 : vector<8x128xf32>
    %cst_50 = arith.constant 9.99999974E-6 : f32
    %151 = vector.broadcast %cst_50 : f32 to vector<8x1xf32>
    %152 = arith.addf %148, %151 : vector<8x1xf32>
    %153 = math.rsqrt %152 : vector<8x1xf32>
    %154 = vector.broadcast %153 : vector<8x1xf32> to vector<8x128xf32>
    %155 = arith.mulf %150, %154 : vector<8x128xf32>
    %156 = vector.broadcast %136 : vector<1x128xf32> to vector<8x128xf32>
    %157 = arith.mulf %155, %156 : vector<8x128xf32>
    %158 = vector.broadcast %137 : vector<1x128xf32> to vector<8x128xf32>
    %159 = arith.addf %157, %158 : vector<8x128xf32>
    %160 = arith.truncf %159 : vector<8x128xf32> to vector<8x128xbf16>
    %c0_51 = arith.constant 0 : index
    %c0_52 = arith.constant 0 : index
    %c0_53 = arith.constant 0 : index
    %161 = vector.load %arg11[%c0_51, %c0_52, %c0_53] : memref<1x128x128xbf16, #tpu.memory_space<vmem>>, vector<1x128x128xbf16>
    %162 = vector.shape_cast %161 : vector<1x128x128xbf16> to vector<128x128xbf16>
    %cst_54 = arith.constant dense<0.000000e+00> : vector<8x128xf32>
    %163 = tpu.matmul %160, %162, %cst_54 {dimension_numbers = #tpu.dot_dimension_numbers<[1], [0], [0], [1], [0, 0, 1, 1], [], []>} : vector<8x128xbf16>, vector<128x128xbf16>, vector<8x128xf32> -> vector<8x128xf32>
    %c0_55 = arith.constant 0 : index
    %c0_56 = arith.constant 0 : index
    %c0_57 = arith.constant 0 : index
    %164 = vector.load %arg12[%c0_55, %c0_56, %c0_57] : memref<1x1x128xf32, #tpu.memory_space<vmem>>, vector<1x1x128xf32>
    %165 = vector.shape_cast %164 : vector<1x1x128xf32> to vector<1x128xf32>
    %166 = vector.broadcast %165 : vector<1x128xf32> to vector<8x128xf32>
    %167 = arith.addf %163, %166 : vector<8x128xf32>
    %168 = arith.truncf %1 : vector<8x128xf32> to vector<8x128xbf16>
    %c0_58 = arith.constant 0 : index
    %c0_59 = arith.constant 0 : index
    %c0_60 = arith.constant 0 : index
    %169 = vector.load %arg13[%c0_58, %c0_59, %c0_60] : memref<1x128x256xbf16, #tpu.memory_space<vmem>>, vector<1x128x256xbf16>
    %170 = vector.shape_cast %169 : vector<1x128x256xbf16> to vector<128x256xbf16>
    %cst_61 = arith.constant dense<0.000000e+00> : vector<8x256xf32>
    %171 = tpu.matmul %168, %170, %cst_61 {dimension_numbers = #tpu.dot_dimension_numbers<[1], [0], [0], [1], [0, 0, 1, 1], [], []>} : vector<8x128xbf16>, vector<128x256xbf16>, vector<8x256xf32> -> vector<8x256xf32>
    %c0_62 = arith.constant 0 : index
    %c0_63 = arith.constant 0 : index
    %c0_64 = arith.constant 0 : index
    %172 = vector.load %arg14[%c0_62, %c0_63, %c0_64] : memref<1x1x256xf32, #tpu.memory_space<vmem>>, vector<1x1x256xf32>
    %173 = vector.shape_cast %172 : vector<1x1x256xf32> to vector<1x256xf32>
    %174 = vector.broadcast %173 : vector<1x256xf32> to vector<8x256xf32>
    %175 = arith.addf %171, %174 : vector<8x256xf32>
    %176 = vector.extract_strided_slice %175 {offsets = [0, 0], sizes = [8, 128], strides = [1, 1]} : vector<8x256xf32> to vector<8x128xf32>
    %177 = vector.extract_strided_slice %175 {offsets = [0, 128], sizes = [8, 128], strides = [1, 1]} : vector<8x256xf32> to vector<8x128xf32>
    %c0_65 = arith.constant 0 : index
    %c0_66 = arith.constant 0 : index
    %c0_67 = arith.constant 0 : index
    %178 = vector.load %arg15[%c0_65, %c0_66, %c0_67] : memref<1x128x128xbf16, #tpu.memory_space<vmem>>, vector<1x128x128xbf16>
    %179 = vector.shape_cast %178 : vector<1x128x128xbf16> to vector<128x128xbf16>
    %c0_68 = arith.constant 0 : index
    %c0_69 = arith.constant 0 : index
    %c0_70 = arith.constant 0 : index
    %180 = vector.load %arg16[%c0_68, %c0_69, %c0_70] : memref<1x1x128xf32, #tpu.memory_space<vmem>>, vector<1x1x128xf32>
    %181 = vector.shape_cast %180 : vector<1x1x128xf32> to vector<1x128xf32>
    %182 = arith.truncf %167 : vector<8x128xf32> to vector<8x128xbf16>
    %183 = arith.truncf %176 : vector<8x128xf32> to vector<8x128xbf16>
    %184 = arith.truncf %177 : vector<8x128xf32> to vector<8x128xbf16>
    %185 = vector.extract_strided_slice %182 {offsets = [0, 0], sizes = [8, 32], strides = [1, 1]} : vector<8x128xbf16> to vector<8x32xbf16>
    %186 = vector.extract_strided_slice %183 {offsets = [0, 0], sizes = [8, 32], strides = [1, 1]} : vector<8x128xbf16> to vector<8x32xbf16>
    %cst_71 = arith.constant dense<0.000000e+00> : vector<8x8xf32>
    %187 = tpu.matmul %185, %186, %cst_71 {dimension_numbers = #tpu.dot_dimension_numbers<[1], [1], [0], [0], [0, 0, 1, 0], [], []>} : vector<8x32xbf16>, vector<8x32xbf16>, vector<8x8xf32> -> vector<8x8xf32>
    %188 = arith.addf %187, %19 : vector<8x8xf32>
    %cst_72 = arith.constant dense<0xFF800000> : vector<8xf32>
    %189 = vector.multi_reduction <maximumf>, %188, %cst_72 [1] : vector<8x8xf32> to vector<8xf32>
    %190 = vector.shape_cast %189 : vector<8xf32> to vector<8x1xf32>
    %191 = vector.broadcast %190 : vector<8x1xf32> to vector<8x8xf32>
    %192 = arith.subf %188, %191 : vector<8x8xf32>
    %193 = math.exp %192 : vector<8x8xf32>
    %cst_73 = arith.constant dense<0.000000e+00> : vector<8xf32>
    %194 = vector.multi_reduction <add>, %193, %cst_73 [1] : vector<8x8xf32> to vector<8xf32>
    %195 = vector.shape_cast %194 : vector<8xf32> to vector<8x1xf32>
    %196 = arith.truncf %193 : vector<8x8xf32> to vector<8x8xbf16>
    %197 = vector.extract_strided_slice %184 {offsets = [0, 0], sizes = [8, 32], strides = [1, 1]} : vector<8x128xbf16> to vector<8x32xbf16>
    %cst_74 = arith.constant dense<0.000000e+00> : vector<8x32xf32>
    %198 = tpu.matmul %196, %197, %cst_74 {dimension_numbers = #tpu.dot_dimension_numbers<[1], [0], [0], [1], [0, 0, 1, 1], [], []>} : vector<8x8xbf16>, vector<8x32xbf16>, vector<8x32xf32> -> vector<8x32xf32>
    %199 = tpu.reciprocal %195 {approx = true} : vector<8x1xf32> -> vector<8x1xf32>
    %200 = vector.broadcast %199 : vector<8x1xf32> to vector<8x32xf32>
    %201 = arith.mulf %198, %200 : vector<8x32xf32>
    %202 = vector.extract_strided_slice %182 {offsets = [0, 32], sizes = [8, 32], strides = [1, 1]} : vector<8x128xbf16> to vector<8x32xbf16>
    %203 = vector.extract_strided_slice %183 {offsets = [0, 32], sizes = [8, 32], strides = [1, 1]} : vector<8x128xbf16> to vector<8x32xbf16>
    %cst_75 = arith.constant dense<0.000000e+00> : vector<8x8xf32>
    %204 = tpu.matmul %202, %203, %cst_75 {dimension_numbers = #tpu.dot_dimension_numbers<[1], [1], [0], [0], [0, 0, 1, 0], [], []>} : vector<8x32xbf16>, vector<8x32xbf16>, vector<8x8xf32> -> vector<8x8xf32>
    %205 = arith.addf %204, %19 : vector<8x8xf32>
    %cst_76 = arith.constant dense<0xFF800000> : vector<8xf32>
    %206 = vector.multi_reduction <maximumf>, %205, %cst_76 [1] : vector<8x8xf32> to vector<8xf32>
    %207 = vector.shape_cast %206 : vector<8xf32> to vector<8x1xf32>
    %208 = vector.broadcast %207 : vector<8x1xf32> to vector<8x8xf32>
    %209 = arith.subf %205, %208 : vector<8x8xf32>
    %210 = math.exp %209 : vector<8x8xf32>
    %cst_77 = arith.constant dense<0.000000e+00> : vector<8xf32>
    %211 = vector.multi_reduction <add>, %210, %cst_77 [1] : vector<8x8xf32> to vector<8xf32>
    %212 = vector.shape_cast %211 : vector<8xf32> to vector<8x1xf32>
    %213 = arith.truncf %210 : vector<8x8xf32> to vector<8x8xbf16>
    %214 = vector.extract_strided_slice %184 {offsets = [0, 32], sizes = [8, 32], strides = [1, 1]} : vector<8x128xbf16> to vector<8x32xbf16>
    %cst_78 = arith.constant dense<0.000000e+00> : vector<8x32xf32>
    %215 = tpu.matmul %213, %214, %cst_78 {dimension_numbers = #tpu.dot_dimension_numbers<[1], [0], [0], [1], [0, 0, 1, 1], [], []>} : vector<8x8xbf16>, vector<8x32xbf16>, vector<8x32xf32> -> vector<8x32xf32>
    %216 = tpu.reciprocal %212 {approx = true} : vector<8x1xf32> -> vector<8x1xf32>
    %217 = vector.broadcast %216 : vector<8x1xf32> to vector<8x32xf32>
    %218 = arith.mulf %215, %217 : vector<8x32xf32>
    %219 = vector.extract_strided_slice %182 {offsets = [0, 64], sizes = [8, 32], strides = [1, 1]} : vector<8x128xbf16> to vector<8x32xbf16>
    %220 = vector.extract_strided_slice %183 {offsets = [0, 64], sizes = [8, 32], strides = [1, 1]} : vector<8x128xbf16> to vector<8x32xbf16>
    %cst_79 = arith.constant dense<0.000000e+00> : vector<8x8xf32>
    %221 = tpu.matmul %219, %220, %cst_79 {dimension_numbers = #tpu.dot_dimension_numbers<[1], [1], [0], [0], [0, 0, 1, 0], [], []>} : vector<8x32xbf16>, vector<8x32xbf16>, vector<8x8xf32> -> vector<8x8xf32>
    %222 = arith.addf %221, %19 : vector<8x8xf32>
    %cst_80 = arith.constant dense<0xFF800000> : vector<8xf32>
    %223 = vector.multi_reduction <maximumf>, %222, %cst_80 [1] : vector<8x8xf32> to vector<8xf32>
    %224 = vector.shape_cast %223 : vector<8xf32> to vector<8x1xf32>
    %225 = vector.broadcast %224 : vector<8x1xf32> to vector<8x8xf32>
    %226 = arith.subf %222, %225 : vector<8x8xf32>
    %227 = math.exp %226 : vector<8x8xf32>
    %cst_81 = arith.constant dense<0.000000e+00> : vector<8xf32>
    %228 = vector.multi_reduction <add>, %227, %cst_81 [1] : vector<8x8xf32> to vector<8xf32>
    %229 = vector.shape_cast %228 : vector<8xf32> to vector<8x1xf32>
    %230 = arith.truncf %227 : vector<8x8xf32> to vector<8x8xbf16>
    %231 = vector.extract_strided_slice %184 {offsets = [0, 64], sizes = [8, 32], strides = [1, 1]} : vector<8x128xbf16> to vector<8x32xbf16>
    %cst_82 = arith.constant dense<0.000000e+00> : vector<8x32xf32>
    %232 = tpu.matmul %230, %231, %cst_82 {dimension_numbers = #tpu.dot_dimension_numbers<[1], [0], [0], [1], [0, 0, 1, 1], [], []>} : vector<8x8xbf16>, vector<8x32xbf16>, vector<8x32xf32> -> vector<8x32xf32>
    %233 = tpu.reciprocal %229 {approx = true} : vector<8x1xf32> -> vector<8x1xf32>
    %234 = vector.broadcast %233 : vector<8x1xf32> to vector<8x32xf32>
    %235 = arith.mulf %232, %234 : vector<8x32xf32>
    %236 = vector.extract_strided_slice %182 {offsets = [0, 96], sizes = [8, 32], strides = [1, 1]} : vector<8x128xbf16> to vector<8x32xbf16>
    %237 = vector.extract_strided_slice %183 {offsets = [0, 96], sizes = [8, 32], strides = [1, 1]} : vector<8x128xbf16> to vector<8x32xbf16>
    %cst_83 = arith.constant dense<0.000000e+00> : vector<8x8xf32>
    %238 = tpu.matmul %236, %237, %cst_83 {dimension_numbers = #tpu.dot_dimension_numbers<[1], [1], [0], [0], [0, 0, 1, 0], [], []>} : vector<8x32xbf16>, vector<8x32xbf16>, vector<8x8xf32> -> vector<8x8xf32>
    %239 = arith.addf %238, %19 : vector<8x8xf32>
    %cst_84 = arith.constant dense<0xFF800000> : vector<8xf32>
    %240 = vector.multi_reduction <maximumf>, %239, %cst_84 [1] : vector<8x8xf32> to vector<8xf32>
    %241 = vector.shape_cast %240 : vector<8xf32> to vector<8x1xf32>
    %242 = vector.broadcast %241 : vector<8x1xf32> to vector<8x8xf32>
    %243 = arith.subf %239, %242 : vector<8x8xf32>
    %244 = math.exp %243 : vector<8x8xf32>
    %cst_85 = arith.constant dense<0.000000e+00> : vector<8xf32>
    %245 = vector.multi_reduction <add>, %244, %cst_85 [1] : vector<8x8xf32> to vector<8xf32>
    %246 = vector.shape_cast %245 : vector<8xf32> to vector<8x1xf32>
    %247 = arith.truncf %244 : vector<8x8xf32> to vector<8x8xbf16>
    %248 = vector.extract_strided_slice %184 {offsets = [0, 96], sizes = [8, 32], strides = [1, 1]} : vector<8x128xbf16> to vector<8x32xbf16>
    %cst_86 = arith.constant dense<0.000000e+00> : vector<8x32xf32>
    %249 = tpu.matmul %247, %248, %cst_86 {dimension_numbers = #tpu.dot_dimension_numbers<[1], [0], [0], [1], [0, 0, 1, 1], [], []>} : vector<8x8xbf16>, vector<8x32xbf16>, vector<8x32xf32> -> vector<8x32xf32>
    %250 = tpu.reciprocal %246 {approx = true} : vector<8x1xf32> -> vector<8x1xf32>
    %251 = vector.broadcast %250 : vector<8x1xf32> to vector<8x32xf32>
    %252 = arith.mulf %249, %251 : vector<8x32xf32>
    %253 = tpu.concatenate %201, %218, %235, %252 in 1 : vector<8x32xf32>, vector<8x32xf32>, vector<8x32xf32>, vector<8x32xf32> -> vector<8x128xf32>
    %254 = arith.truncf %253 : vector<8x128xf32> to vector<8x128xbf16>
    %cst_87 = arith.constant dense<0.000000e+00> : vector<8x128xf32>
    %255 = tpu.matmul %254, %179, %cst_87 {dimension_numbers = #tpu.dot_dimension_numbers<[1], [0], [0], [1], [0, 0, 1, 1], [], []>} : vector<8x128xbf16>, vector<128x128xbf16>, vector<8x128xf32> -> vector<8x128xf32>
    %256 = vector.broadcast %181 : vector<1x128xf32> to vector<8x128xf32>
    %257 = arith.addf %255, %256 : vector<8x128xf32>
    %258 = arith.addf %135, %257 : vector<8x128xf32>
    %259 = vector.extract_strided_slice %7 {offsets = [4, 0], sizes = [1, 128], strides = [1, 1]} : vector<6x128xf32> to vector<1x128xf32>
    %260 = vector.extract_strided_slice %7 {offsets = [5, 0], sizes = [1, 128], strides = [1, 1]} : vector<6x128xf32> to vector<1x128xf32>
    %cst_88 = arith.constant dense<0.000000e+00> : vector<8xf32>
    %261 = vector.multi_reduction <add>, %258, %cst_88 [1] : vector<8x128xf32> to vector<8xf32>
    %262 = vector.shape_cast %261 : vector<8xf32> to vector<8x1xf32>
    %cst_89 = arith.constant 1.280000e+02 : f32
    %263 = vector.broadcast %cst_89 : f32 to vector<8x1xf32>
    %264 = arith.divf %262, %263 : vector<8x1xf32>
    %265 = vector.broadcast %264 : vector<8x1xf32> to vector<8x128xf32>
    %266 = arith.subf %258, %265 : vector<8x128xf32>
    %267 = arith.mulf %266, %266 : vector<8x128xf32>
    %cst_90 = arith.constant dense<0.000000e+00> : vector<8xf32>
    %268 = vector.multi_reduction <add>, %267, %cst_90 [1] : vector<8x128xf32> to vector<8xf32>
    %269 = vector.shape_cast %268 : vector<8xf32> to vector<8x1xf32>
    %cst_91 = arith.constant 1.280000e+02 : f32
    %270 = vector.broadcast %cst_91 : f32 to vector<8x1xf32>
    %271 = arith.divf %269, %270 : vector<8x1xf32>
    %272 = vector.broadcast %264 : vector<8x1xf32> to vector<8x128xf32>
    %273 = arith.subf %258, %272 : vector<8x128xf32>
    %cst_92 = arith.constant 9.99999974E-6 : f32
    %274 = vector.broadcast %cst_92 : f32 to vector<8x1xf32>
    %275 = arith.addf %271, %274 : vector<8x1xf32>
    %276 = math.rsqrt %275 : vector<8x1xf32>
    %277 = vector.broadcast %276 : vector<8x1xf32> to vector<8x128xf32>
    %278 = arith.mulf %273, %277 : vector<8x128xf32>
    %279 = vector.broadcast %259 : vector<1x128xf32> to vector<8x128xf32>
    %280 = arith.mulf %278, %279 : vector<8x128xf32>
    %281 = vector.broadcast %260 : vector<1x128xf32> to vector<8x128xf32>
    %282 = arith.addf %280, %281 : vector<8x128xf32>
    %283 = arith.truncf %282 : vector<8x128xf32> to vector<8x128xbf16>
    %c0_93 = arith.constant 0 : index
    %c0_94 = arith.constant 0 : index
    %c0_95 = arith.constant 0 : index
    %284 = vector.load %arg17[%c0_93, %c0_94, %c0_95] : memref<1x128x256xbf16, #tpu.memory_space<vmem>>, vector<1x128x256xbf16>
    %285 = vector.shape_cast %284 : vector<1x128x256xbf16> to vector<128x256xbf16>
    %cst_96 = arith.constant dense<0.000000e+00> : vector<8x256xf32>
    %286 = tpu.matmul %283, %285, %cst_96 {dimension_numbers = #tpu.dot_dimension_numbers<[1], [0], [0], [1], [0, 0, 1, 1], [], []>} : vector<8x128xbf16>, vector<128x256xbf16>, vector<8x256xf32> -> vector<8x256xf32>
    %c0_97 = arith.constant 0 : index
    %c0_98 = arith.constant 0 : index
    %c0_99 = arith.constant 0 : index
    %287 = vector.load %arg18[%c0_97, %c0_98, %c0_99] : memref<1x1x256xf32, #tpu.memory_space<vmem>>, vector<1x1x256xf32>
    %288 = vector.shape_cast %287 : vector<1x1x256xf32> to vector<1x256xf32>
    %289 = vector.broadcast %288 : vector<1x256xf32> to vector<8x256xf32>
    %290 = arith.addf %286, %289 : vector<8x256xf32>
    %291 = arith.mulf %290, %290 : vector<8x256xf32>
    %292 = arith.mulf %290, %291 : vector<8x256xf32>
    %cst_100 = arith.constant 4.471500e-02 : f32
    %293 = vector.broadcast %cst_100 : f32 to vector<8x256xf32>
    %294 = arith.mulf %293, %292 : vector<8x256xf32>
    %295 = arith.addf %290, %294 : vector<8x256xf32>
    %cst_101 = arith.constant 0.797884583 : f32
    %296 = vector.broadcast %cst_101 : f32 to vector<8x256xf32>
    %297 = arith.mulf %296, %295 : vector<8x256xf32>
    %298 = math.tanh %297 : vector<8x256xf32>
    %cst_102 = arith.constant 1.000000e+00 : f32
    %299 = vector.broadcast %cst_102 : f32 to vector<8x256xf32>
    %300 = arith.addf %299, %298 : vector<8x256xf32>
    %cst_103 = arith.constant 5.000000e-01 : f32
    %301 = vector.broadcast %cst_103 : f32 to vector<8x256xf32>
    %302 = arith.mulf %301, %300 : vector<8x256xf32>
    %303 = arith.mulf %290, %302 : vector<8x256xf32>
    %304 = arith.truncf %303 : vector<8x256xf32> to vector<8x256xbf16>
    %c0_104 = arith.constant 0 : index
    %c0_105 = arith.constant 0 : index
    %c0_106 = arith.constant 0 : index
    %305 = vector.load %arg19[%c0_104, %c0_105, %c0_106] : memref<1x256x128xbf16, #tpu.memory_space<vmem>>, vector<1x256x128xbf16>
    %306 = vector.shape_cast %305 : vector<1x256x128xbf16> to vector<256x128xbf16>
    %cst_107 = arith.constant dense<0.000000e+00> : vector<8x128xf32>
    %307 = tpu.matmul %304, %306, %cst_107 {dimension_numbers = #tpu.dot_dimension_numbers<[1], [0], [0], [1], [0, 0, 1, 1], [], []>} : vector<8x256xbf16>, vector<256x128xbf16>, vector<8x128xf32> -> vector<8x128xf32>
    %308 = arith.addf %258, %307 : vector<8x128xf32>
    %c0_108 = arith.constant 0 : index
    %c0_109 = arith.constant 0 : index
    %c0_110 = arith.constant 0 : index
    %309 = vector.load %arg20[%c0_108, %c0_109, %c0_110] : memref<1x1x128xf32, #tpu.memory_space<vmem>>, vector<1x1x128xf32>
    %310 = vector.shape_cast %309 : vector<1x1x128xf32> to vector<1x128xf32>
    %311 = vector.broadcast %310 : vector<1x128xf32> to vector<8x128xf32>
    %312 = arith.addf %308, %311 : vector<8x128xf32>
    %c0_111 = arith.constant 0 : index
    %c0_112 = arith.constant 0 : index
    %313 = vector.load %arg25[%c0_111, %c0_112] : memref<8x128xf32, #tpu.memory_space<vmem>>, vector<8x128xf32>
    tpu.vector_store %arg25[%c0_111, %c0_112], %312 {strides = array<i32>} : memref<8x128xf32, #tpu.memory_space<vmem>>, vector<8x128xf32>,
    %c1_i32 = arith.constant 1 : i32
    %314 = arith.cmpi eq, %arg1, %c1_i32 : i32
    %315 = arith.extui %314 : i1 to i32
    %c0_i32_113 = arith.constant 0 : i32
    %316 = arith.cmpi ne, %315, %c0_i32_113 : i32
    scf.if %316 {
      %c0_114 = arith.constant 0 : index
      %c0_115 = arith.constant 0 : index
      %317 = vector.load %arg21[%c0_114, %c0_115] : memref<2x128xf32, #tpu.memory_space<vmem>>, vector<2x128xf32>
      %318 = vector.extract_strided_slice %317 {offsets = [0, 0], sizes = [1, 128], strides = [1, 1]} : vector<2x128xf32> to vector<1x128xf32>
      %319 = vector.extract_strided_slice %317 {offsets = [1, 0], sizes = [1, 128], strides = [1, 1]} : vector<2x128xf32> to vector<1x128xf32>
      %cst_116 = arith.constant dense<0.000000e+00> : vector<8xf32>
      %320 = vector.multi_reduction <add>, %312, %cst_116 [1] : vector<8x128xf32> to vector<8xf32>
      %321 = vector.shape_cast %320 : vector<8xf32> to vector<8x1xf32>
      %cst_117 = arith.constant 1.280000e+02 : f32
      %322 = vector.broadcast %cst_117 : f32 to vector<8x1xf32>
      %323 = arith.divf %321, %322 : vector<8x1xf32>
      %324 = vector.broadcast %323 : vector<8x1xf32> to vector<8x128xf32>
      %325 = arith.subf %312, %324 : vector<8x128xf32>
      %326 = arith.mulf %325, %325 : vector<8x128xf32>
      %cst_118 = arith.constant dense<0.000000e+00> : vector<8xf32>
      %327 = vector.multi_reduction <add>, %326, %cst_118 [1] : vector<8x128xf32> to vector<8xf32>
      %328 = vector.shape_cast %327 : vector<8xf32> to vector<8x1xf32>
      %cst_119 = arith.constant 1.280000e+02 : f32
      %329 = vector.broadcast %cst_119 : f32 to vector<8x1xf32>
      %330 = arith.divf %328, %329 : vector<8x1xf32>
      %331 = vector.broadcast %323 : vector<8x1xf32> to vector<8x128xf32>
      %332 = arith.subf %312, %331 : vector<8x128xf32>
      %cst_120 = arith.constant 9.99999974E-6 : f32
      %333 = vector.broadcast %cst_120 : f32 to vector<8x1xf32>
      %334 = arith.addf %330, %333 : vector<8x1xf32>
      %335 = math.rsqrt %334 : vector<8x1xf32>
      %336 = vector.broadcast %335 : vector<8x1xf32> to vector<8x128xf32>
      %337 = arith.mulf %332, %336 : vector<8x128xf32>
      %338 = vector.broadcast %318 : vector<1x128xf32> to vector<8x128xf32>
      %339 = arith.mulf %337, %338 : vector<8x128xf32>
      %340 = vector.broadcast %319 : vector<1x128xf32> to vector<8x128xf32>
      %341 = arith.addf %339, %340 : vector<8x128xf32>
      %342 = arith.truncf %341 : vector<8x128xf32> to vector<8x128xbf16>
      %c0_121 = arith.constant 0 : index
      %c0_122 = arith.constant 0 : index
      %343 = vector.load %arg22[%c0_121, %c0_122] : memref<128x128xbf16, #tpu.memory_space<vmem>>, vector<128x128xbf16>
      %cst_123 = arith.constant dense<0.000000e+00> : vector<8x128xf32>
      %344 = tpu.matmul %342, %343, %cst_123 {dimension_numbers = #tpu.dot_dimension_numbers<[1], [0], [0], [1], [0, 0, 1, 1], [], []>} : vector<8x128xbf16>, vector<128x128xbf16>, vector<8x128xf32> -> vector<8x128xf32>
      %c0_124 = arith.constant 0 : index
      %c0_125 = arith.constant 0 : index
      %345 = vector.load %arg23[%c0_124, %c0_125] : memref<1x128xf32, #tpu.memory_space<vmem>>, vector<1x128xf32>
      %346 = vector.broadcast %345 : vector<1x128xf32> to vector<8x128xf32>
      %347 = arith.addf %344, %346 : vector<8x128xf32>
      %c0_126 = arith.constant 0 : index
      %c0_127 = arith.constant 0 : index
      %c0_128 = arith.constant 0 : index
      %348 = vector.load %arg24[%c0_126, %c0_127, %c0_128] : memref<1x8x128xf32, #tpu.memory_space<vmem>>, vector<1x8x128xf32>
      %349 = vector.shape_cast %348 : vector<1x8x128xf32> to vector<8x128xf32>
      %350 = vector.shape_cast %347 : vector<8x128xf32> to vector<1x8x128xf32>
      tpu.vector_store %arg24[%c0_126, %c0_127, %c0_128], %350 {strides = array<i32>} : memref<1x8x128xf32, #tpu.memory_space<vmem>>, vector<1x8x128xf32>,
    } else {
    }
    return
  }
  func.func @transform_0(%arg0: i32, %arg1: i32) -> (i32, i32, i32) {
    %c0_i32 = arith.constant 0 : i32
    %c0_i32_0 = arith.constant 0 : i32
    %c0_i32_1 = arith.constant 0 : i32
    return %arg0, %c0_i32, %c0_i32_0 : i32, i32, i32
  }
  func.func @transform_1(%arg0: i32, %arg1: i32) -> (i32, i32) {
    %c0_i32 = arith.constant 0 : i32
    %c0_i32_0 = arith.constant 0 : i32
    %c0_i32_1 = arith.constant 0 : i32
    return %c0_i32, %c0_i32_0 : i32, i32
  }
  func.func @transform_2(%arg0: i32, %arg1: i32) -> (i32, i32) {
    %c0_i32 = arith.constant 0 : i32
    %c0_i32_0 = arith.constant 0 : i32
    %c0_i32_1 = arith.constant 0 : i32
    return %c0_i32, %c0_i32_0 : i32, i32
  }
  func.func @transform_3(%arg0: i32, %arg1: i32) -> (i32, i32, i32) {
    %c0_i32 = arith.constant 0 : i32
    %c0_i32_0 = arith.constant 0 : i32
    %c0_i32_1 = arith.constant 0 : i32
    return %arg0, %c0_i32, %c0_i32_0 : i32, i32, i32
  }
  func.func @transform_4(%arg0: i32, %arg1: i32) -> (i32, i32, i32) {
    %c0_i32 = arith.constant 0 : i32
    %c0_i32_0 = arith.constant 0 : i32
    %c0_i32_1 = arith.constant 0 : i32
    return %arg1, %c0_i32, %c0_i32_0 : i32, i32, i32
  }
  func.func @transform_5(%arg0: i32, %arg1: i32) -> (i32, i32, i32) {
    %c0_i32 = arith.constant 0 : i32
    %c0_i32_0 = arith.constant 0 : i32
    %c0_i32_1 = arith.constant 0 : i32
    return %arg1, %c0_i32, %c0_i32_0 : i32, i32, i32
  }
  func.func @transform_6(%arg0: i32, %arg1: i32) -> (i32, i32, i32) {
    %c0_i32 = arith.constant 0 : i32
    %c0_i32_0 = arith.constant 0 : i32
    %c0_i32_1 = arith.constant 0 : i32
    return %arg1, %c0_i32, %c0_i32_0 : i32, i32, i32
  }
  func.func @transform_7(%arg0: i32, %arg1: i32) -> (i32, i32, i32) {
    %c0_i32 = arith.constant 0 : i32
    %c0_i32_0 = arith.constant 0 : i32
    %c0_i32_1 = arith.constant 0 : i32
    return %arg1, %c0_i32, %c0_i32_0 : i32, i32, i32
  }
  func.func @transform_8(%arg0: i32, %arg1: i32) -> (i32, i32, i32) {
    %c0_i32 = arith.constant 0 : i32
    %c0_i32_0 = arith.constant 0 : i32
    %c0_i32_1 = arith.constant 0 : i32
    return %arg1, %c0_i32, %c0_i32_0 : i32, i32, i32
  }
  func.func @transform_9(%arg0: i32, %arg1: i32) -> (i32, i32, i32) {
    %c0_i32 = arith.constant 0 : i32
    %c0_i32_0 = arith.constant 0 : i32
    %c0_i32_1 = arith.constant 0 : i32
    return %arg1, %c0_i32, %c0_i32_0 : i32, i32, i32
  }
  func.func @transform_10(%arg0: i32, %arg1: i32) -> (i32, i32, i32) {
    %c0_i32 = arith.constant 0 : i32
    %c0_i32_0 = arith.constant 0 : i32
    %c0_i32_1 = arith.constant 0 : i32
    return %arg1, %c0_i32, %c0_i32_0 : i32, i32, i32
  }
  func.func @transform_11(%arg0: i32, %arg1: i32) -> (i32, i32, i32) {
    %c0_i32 = arith.constant 0 : i32
    %c0_i32_0 = arith.constant 0 : i32
    %c0_i32_1 = arith.constant 0 : i32
    return %arg1, %c0_i32, %c0_i32_0 : i32, i32, i32
  }
  func.func @transform_12(%arg0: i32, %arg1: i32) -> (i32, i32, i32) {
    %c0_i32 = arith.constant 0 : i32
    %c0_i32_0 = arith.constant 0 : i32
    %c0_i32_1 = arith.constant 0 : i32
    return %arg1, %c0_i32, %c0_i32_0 : i32, i32, i32
  }
  func.func @transform_13(%arg0: i32, %arg1: i32) -> (i32, i32, i32) {
    %c0_i32 = arith.constant 0 : i32
    %c0_i32_0 = arith.constant 0 : i32
    %c0_i32_1 = arith.constant 0 : i32
    return %arg1, %c0_i32, %c0_i32_0 : i32, i32, i32
  }
  func.func @transform_14(%arg0: i32, %arg1: i32) -> (i32, i32, i32) {
    %c0_i32 = arith.constant 0 : i32
    %c0_i32_0 = arith.constant 0 : i32
    %c0_i32_1 = arith.constant 0 : i32
    return %arg1, %c0_i32, %c0_i32_0 : i32, i32, i32
  }
  func.func @transform_15(%arg0: i32, %arg1: i32) -> (i32, i32, i32) {
    %c0_i32 = arith.constant 0 : i32
    %c0_i32_0 = arith.constant 0 : i32
    %c0_i32_1 = arith.constant 0 : i32
    return %arg1, %c0_i32, %c0_i32_0 : i32, i32, i32
  }
  func.func @transform_16(%arg0: i32, %arg1: i32) -> (i32, i32, i32) {
    %c0_i32 = arith.constant 0 : i32
    %c0_i32_0 = arith.constant 0 : i32
    %c0_i32_1 = arith.constant 0 : i32
    return %arg1, %c0_i32, %c0_i32_0 : i32, i32, i32
  }
  func.func @transform_17(%arg0: i32, %arg1: i32) -> (i32, i32, i32) {
    %c0_i32 = arith.constant 0 : i32
    %c0_i32_0 = arith.constant 0 : i32
    %c0_i32_1 = arith.constant 0 : i32
    return %arg1, %c0_i32, %c0_i32_0 : i32, i32, i32
  }
  func.func @transform_18(%arg0: i32, %arg1: i32) -> (i32, i32, i32) {
    %c0_i32 = arith.constant 0 : i32
    %c0_i32_0 = arith.constant 0 : i32
    %c0_i32_1 = arith.constant 0 : i32
    return %arg1, %c0_i32, %c0_i32_0 : i32, i32, i32
  }
  func.func @transform_19(%arg0: i32, %arg1: i32) -> (i32, i32) {
    %c0_i32 = arith.constant 0 : i32
    %c0_i32_0 = arith.constant 0 : i32
    %c0_i32_1 = arith.constant 0 : i32
    return %c0_i32, %c0_i32_0 : i32, i32
  }
  func.func @transform_20(%arg0: i32, %arg1: i32) -> (i32, i32) {
    %c0_i32 = arith.constant 0 : i32
    %c0_i32_0 = arith.constant 0 : i32
    %c0_i32_1 = arith.constant 0 : i32
    return %c0_i32, %c0_i32_0 : i32, i32
  }
  func.func @transform_21(%arg0: i32, %arg1: i32) -> (i32, i32) {
    %c0_i32 = arith.constant 0 : i32
    %c0_i32_0 = arith.constant 0 : i32
    %c0_i32_1 = arith.constant 0 : i32
    return %c0_i32, %c0_i32_0 : i32, i32
  }
  func.func @transform_22(%arg0: i32, %arg1: i32) -> (i32, i32, i32) {
    %c0_i32 = arith.constant 0 : i32
    %c0_i32_0 = arith.constant 0 : i32
    %c0_i32_1 = arith.constant 0 : i32
    return %arg0, %c0_i32, %c0_i32_0 : i32, i32, i32
  }
}

</mosaic_0001>

<llo_original>
// kernel: vl_model_forward.2
$region0: #{vl_model_forward.2}
  #allocation0 [shape = 'u32[]', space=smem, size = 0x4, offset = 0x4, fixed_abs, tag = 'smem constant byte address 0x4 - core index']
  #allocation1 [shape = 'u32[72,128]{1,0:T(1,128)}', space=vmem, size = 0x9000, scoped, tag = 'internal scratch']
  #allocation2 [shape = 'f32[8,128]{1,0:T(8,128)}', space=vmem, size = 0x1000, scoped, tag = 'scratch operand']
  %s0 = inlined_call_operand.vmem [shape: f32[2,4,768], index: 0, kind: input, shape index: {}]
  %s1 = inlined_call_operand.vmem [shape: bf16[768,128], index: 1, kind: input, shape index: {}]
  %s2 = inlined_call_operand.hbm [shape: f32[1,128], index: 2, kind: input, shape index: {}]
  %s3 = inlined_call_operand.hbm [shape: f32[1,128], index: 3, kind: input, shape index: {}]
  %s4 = inlined_call_operand.hbm [shape: f32[8,128], index: 4, kind: input, shape index: {}]
  %s5 = inlined_call_operand.hbm [shape: f32[2,4,128], index: 5, kind: input, shape index: {}]
  %s6 = inlined_call_operand.vmem [shape: bf16[2,128,384], index: 6, kind: input, shape index: {}]
  %s7 = inlined_call_operand.hbm [shape: f32[2,1,384], index: 7, kind: input, shape index: {}]
  %s8 = inlined_call_operand.vmem [shape: bf16[2,128,128], index: 8, kind: input, shape index: {}]
  %s9 = inlined_call_operand.hbm [shape: f32[2,1,128], index: 9, kind: input, shape index: {}]
  %s10 = inlined_call_operand.vmem [shape: bf16[2,128,256], index: 10, kind: input, shape index: {}]
  %s11 = inlined_call_operand.hbm [shape: f32[2,1,256], index: 11, kind: input, shape index: {}]
  %s12 = inlined_call_operand.vmem [shape: bf16[2,256,128], index: 12, kind: input, shape index: {}]
  %s13 = inlined_call_operand.hbm [shape: f32[2,1,128], index: 13, kind: input, shape index: {}]
  %s14 = inlined_call_operand.hbm [shape: f32[2,128], index: 14, kind: input, shape index: {}]
  %s15 = inlined_call_operand.hbm [shape: bf16[128,128], index: 15, kind: input, shape index: {}]
  %s16 = inlined_call_operand.hbm [shape: f32[1,128], index: 16, kind: input, shape index: {}]
  %s17 = inlined_call_operand.vmem [shape: f32[2,8,128], index: 17, kind: output, shape index: {}]
  %s18 = sld [smem:[#allocation0]]
  $region153: #{vl_model_forward.2} parent=0
    _
  %s20 = ssub.s32 1, %s18
  %s21 = scalar_select 0, %s20, %s18
  $region1: #{vl_model_forward.2} parent=0
    #allocation3 [shape = 'u8[512]{0}', space=vmem, size = 0x400, scoped, tag = 'input window, operand 2, single buffered']
    #allocation4 [shape = 's32[2]{0}', space=sflag, size = 0x8, scoped, tag = 'scoped memory for vl_model_forward.2']
    #allocation5 [shape = 'u8[512]{0}', space=vmem, size = 0x400, scoped, tag = 'input window, operand 3, single buffered']
    #allocation6 [shape = 's32[1]{0}', space=sflag, size = 0x4, scoped, tag = 'scoped memory for vl_model_forward.2']
    #allocation7 [shape = 'u8[4096]{0}', space=vmem, size = 0x1000, scoped, tag = 'input window, operand 4, single buffered']
    #allocation8 [shape = 'u8[4096]{0}', space=vmem, size = 0x1000, scoped, tag = 'input window, operand 5']
    #allocation9 [shape = 's32[2]{0}', space=sflag, size = 0x8, scoped, tag = 'scoped memory for vl_model_forward.2']
    #allocation10 [shape = 'u8[3072]{0}', space=vmem, size = 0xc00, scoped, tag = 'input window, operand 7']
    #allocation11 [shape = 'u8[1024]{0}', space=vmem, size = 0x400, scoped, tag = 'input window, operand 9']
    #allocation12 [shape = 's32[2]{0}', space=sflag, size = 0x8, scoped, tag = 'scoped memory for vl_model_forward.2']
    #allocation13 [shape = 'u8[2048]{0}', space=vmem, size = 0x800, scoped, tag = 'input window, operand 11']
    #allocation14 [shape = 'u8[1024]{0}', space=vmem, size = 0x400, scoped, tag = 'input window, operand 13']
    #allocation15 [shape = 's32[2]{0}', space=sflag, size = 0x8, scoped, tag = 'scoped memory for vl_model_forward.2']
    #allocation16 [shape = 'u8[1024]{0}', space=vmem, size = 0x400, scoped, tag = 'input window, operand 14, single buffered']
    #allocation17 [shape = 'u8[32768]{0}', space=vmem, size = 0x8000, scoped, tag = 'input window, operand 15, single buffered']
    #allocation18 [shape = 's32[1]{0}', space=sflag, size = 0x4, scoped, tag = 'scoped memory for vl_model_forward.2']
    #allocation19 [shape = 'u8[512]{0}', space=vmem, size = 0x400, scoped, tag = 'input window, operand 16, single buffered']
    %22 = vsyncpa [#allocation4], 0
    %23 = vsyncpa [#allocation6], 0
    %24 = vsyncpa [#allocation9], 0
    %s25 = scalar_lea.sflag [#allocation9], 1
    %26 = vsyncpa %s25, 0
    %27 = vsyncpa [#allocation12], 0
    %s28 = scalar_lea.sflag [#allocation12], 1
    %29 = vsyncpa %s28, 0
    %30 = vsyncpa [#allocation15], 0
    %s31 = scalar_lea.sflag [#allocation15], 1
    %32 = vsyncpa %s31, 0
    %33 = vsyncpa [#allocation18], 0
    loop: start=0, step=1, limit=6
    $region2: #{vl_model_forward.2} parent=1 // loop_pre_header
      _
    $region3: #{vl_model_forward.2} parent=1 // loop_header
      %s35 = sphi 0, %s39
      %p36 = scmp.ge.s32.totalorder %s35, 6
      %s42 = sphi 0, %s54
      %s43 = sphi 0, %s50
      %s44 = sphi 0, %s42
      %s45 = sphi 0, %s43
      %s46 = sphi 0, %s44
      %s47 = sphi 0, %s45
      %s57 = sphi 0, %s59
      %s60 = sphi 0, %s57
      %s61 = sphi 0, %s60
      %s77 = sphi 0, %s61
      %s81 = sphi 0, %s81
      %s83 = sphi 0, %s81
      %s84 = sphi 0, %s83
      %s98 = sphi 0, %s84
      %s102 = sphi 0, %s102
      %s104 = sphi 0, %s102
      %s105 = sphi 0, %s104
      %s119 = sphi 0, %s105
      %s123 = sphi 0, %s123
      %s125 = sphi 0, %s123
      %s126 = sphi 0, %s125
      %s140 = sphi 0, %s126
      %s144 = sphi 0, %s144
      %s146 = sphi 0, %s144
      %s147 = sphi 0, %s146
      %s161 = sphi 0, %s147
      %s167 = sphi 0, %s169
      %s170 = sphi 0, %s167
      %s171 = sphi 0, %s170
      %s187 = sphi 0, %s171
      %s193 = sphi 0, %s195
      %s196 = sphi 0, %s193
      %s197 = sphi 0, %s196
      %s213 = sphi 0, %s197
      %s219 = sphi 0, %s221
      %s222 = sphi 0, %s219
      %s223 = sphi 0, %s222
      %s239 = sphi 0, %s223
      %s245 = sphi 0, %s247
      %s248 = sphi 0, %s245
      %s249 = sphi 0, %s248
      %s265 = sphi 0, %s249
      %s271 = sphi 0, %s273
      %s274 = sphi 0, %s271
      %s275 = sphi 0, %s274
      %s291 = sphi 0, %s275
      %s297 = sphi 0, %s299
      %s300 = sphi 0, %s297
      %s301 = sphi 0, %s300
      %s317 = sphi 0, %s301
      %s323 = sphi 0, %s325
      %s326 = sphi 0, %s323
      %s327 = sphi 0, %s326
      %s343 = sphi 0, %s327
      %s349 = sphi 0, %s351
      %s352 = sphi 0, %s349
      %s353 = sphi 0, %s352
      %s369 = sphi 0, %s353
      %s375 = sphi 0, %s377
      %s378 = sphi 0, %s375
      %s379 = sphi 0, %s378
      %s395 = sphi 0, %s379
      %s399 = sphi 0, %s399
      %s401 = sphi 0, %s399
      %s402 = sphi 0, %s401
      %s416 = sphi 0, %s402
      %s420 = sphi 0, %s420
      %s422 = sphi 0, %s420
      %s423 = sphi 0, %s422
      %s437 = sphi 0, %s423
      %s441 = sphi 0, %s441
      %s443 = sphi 0, %s441
      %s444 = sphi 0, %s443
      %s458 = sphi 0, %s444
      %s464 = sphi 0, %s466
      %s467 = sphi 0, %s464
      %s468 = sphi 0, %s467
      %s484 = sphi 0, %s468
    $region4: #{vl_model_forward.2} parent=1 // loop_header_branch
      %38 = sbr.rel (%p36) target = $region8
    $region5: #{vl_model_forward.2} parent=1 // loop_body
      %s40 = ssub.s32 %s35, 1
      %s41 = ssub.s32 %s35, 2
      %s48 = sadd.s32 1, %s43
      %p49 = scmp.ge.s32.totalorder %s48, 2
      %s50 = scalar_select %p49, 0, %s48
      %s51 = sadd.s32 1, %s42
      %s52 = scalar_select %p49, %s51, %s42
      %p53 = scmp.ge.s32.totalorder %s52, 2
      %s54 = scalar_select %p53, 0, %s52
      %s55 = ssub.s32 %s42, %s54
      %p56 = scmp.eq.s32.totalorder %s55, 0
      %s58 = sadd.s32 %s57, 1
      %s59 = scalar_select %p56, %s57, %s58
      %p62 = pneg %p56
      %p63 = scmp.eq.s32.totalorder %s35, 3
      %p64 = por %p62, %p63
      %p65 = scmp.ne.s32.totalorder %s57, %s60
      %p66 = scmp.eq.s32.totalorder %s35, 0
      %p67 = por %p65, %p66
      %p68 = scmp.ne.s32.totalorder %s57, %s60
      %p69 = scmp.eq.s32.totalorder %s40, 3
      %p70 = por %p68, %p69
      %p71 = scmp.ne.s32.totalorder %s60, %s61
      %p72 = scmp.eq.s32.totalorder %s40, 0
      %p73 = por %p71, %p72
      %p74 = scmp.ne.s32.totalorder %s60, %s61
      %p75 = scmp.eq.s32.totalorder %s41, 3
      %p76 = por %p74, %p75
      %p78 = scmp.ne.s32.totalorder %s61, %s77
      %p79 = scmp.eq.s32.totalorder %s41, 0
      %p80 = por %p78, %p79
      %s82 = sadd.s32 %s81, 1
      %p85 = scmp.eq.s32.totalorder %s35, 3
      %p86 = scmp.ne.s32.totalorder %s81, %s83
      %p87 = scmp.eq.s32.totalorder %s35, 0
      %p88 = por %p86, %p87
      %p89 = scmp.ne.s32.totalorder %s81, %s83
      %p90 = scmp.eq.s32.totalorder %s40, 3
      %p91 = por %p89, %p90
      %p92 = scmp.ne.s32.totalorder %s83, %s84
      %p93 = scmp.eq.s32.totalorder %s40, 0
      %p94 = por %p92, %p93
      %p95 = scmp.ne.s32.totalorder %s83, %s84
      %p96 = scmp.eq.s32.totalorder %s41, 3
      %p97 = por %p95, %p96
      %p99 = scmp.ne.s32.totalorder %s84, %s98
      %p100 = scmp.eq.s32.totalorder %s41, 0
      %p101 = por %p99, %p100
      %s103 = sadd.s32 %s102, 1
      %p106 = scmp.eq.s32.totalorder %s35, 3
      %p107 = scmp.ne.s32.totalorder %s102, %s104
      %p108 = scmp.eq.s32.totalorder %s35, 0
      %p109 = por %p107, %p108
      %p110 = scmp.ne.s32.totalorder %s102, %s104
      %p111 = scmp.eq.s32.totalorder %s40, 3
      %p112 = por %p110, %p111
      %p113 = scmp.ne.s32.totalorder %s104, %s105
      %p114 = scmp.eq.s32.totalorder %s40, 0
      %p115 = por %p113, %p114
      %p116 = scmp.ne.s32.totalorder %s104, %s105
      %p117 = scmp.eq.s32.totalorder %s41, 3
      %p118 = por %p116, %p117
      %p120 = scmp.ne.s32.totalorder %s105, %s119
      %p121 = scmp.eq.s32.totalorder %s41, 0
      %p122 = por %p120, %p121
      %s124 = sadd.s32 %s123, 1
      %p127 = scmp.eq.s32.totalorder %s35, 3
      %p128 = scmp.ne.s32.totalorder %s123, %s125
      %p129 = scmp.eq.s32.totalorder %s35, 0
      %p130 = por %p128, %p129
      %p131 = scmp.ne.s32.totalorder %s123, %s125
      %p132 = scmp.eq.s32.totalorder %s40, 3
      %p133 = por %p131, %p132
      %p134 = scmp.ne.s32.totalorder %s125, %s126
      %p135 = scmp.eq.s32.totalorder %s40, 0
      %p136 = por %p134, %p135
      %p137 = scmp.ne.s32.totalorder %s125, %s126
      %p138 = scmp.eq.s32.totalorder %s41, 3
      %p139 = por %p137, %p138
      %p141 = scmp.ne.s32.totalorder %s126, %s140
      %p142 = scmp.eq.s32.totalorder %s41, 0
      %p143 = por %p141, %p142
      %s145 = sadd.s32 %s144, 1
      %p148 = scmp.eq.s32.totalorder %s35, 3
      %p149 = scmp.ne.s32.totalorder %s144, %s146
      %p150 = scmp.eq.s32.totalorder %s35, 0
      %p151 = por %p149, %p150
      %p152 = scmp.ne.s32.totalorder %s144, %s146
      %p153 = scmp.eq.s32.totalorder %s40, 3
      %p154 = por %p152, %p153
      %p155 = scmp.ne.s32.totalorder %s146, %s147
      %p156 = scmp.eq.s32.totalorder %s40, 0
      %p157 = por %p155, %p156
      %p158 = scmp.ne.s32.totalorder %s146, %s147
      %p159 = scmp.eq.s32.totalorder %s41, 3
      %p160 = por %p158, %p159
      %p162 = scmp.ne.s32.totalorder %s147, %s161
      %p163 = scmp.eq.s32.totalorder %s41, 0
      %p164 = por %p162, %p163
      %s165 = ssub.s32 %s43, %s50
      %p166 = scmp.eq.s32.totalorder %s165, 0
      %s168 = sadd.s32 %s167, 1
      %s169 = scalar_select %p166, %s167, %s168
      %p172 = pneg %p166
      %p173 = scmp.eq.s32.totalorder %s35, 3
      %p174 = por %p172, %p173
      %p175 = scmp.ne.s32.totalorder %s167, %s170
      %p176 = scmp.eq.s32.totalorder %s35, 0
      %p177 = por %p175, %p176
      %p178 = scmp.ne.s32.totalorder %s167, %s170
      %p179 = scmp.eq.s32.totalorder %s40, 3
      %p180 = por %p178, %p179
      %p181 = scmp.ne.s32.totalorder %s170, %s171
      %p182 = scmp.eq.s32.totalorder %s40, 0
      %p183 = por %p181, %p182
      %p184 = scmp.ne.s32.totalorder %s170, %s171
      %p185 = scmp.eq.s32.totalorder %s41, 3
      %p186 = por %p184, %p185
      %p188 = scmp.ne.s32.totalorder %s171, %s187
      %p189 = scmp.eq.s32.totalorder %s41, 0
      %p190 = por %p188, %p189
      %s191 = ssub.s32 %s43, %s50
      %p192 = scmp.eq.s32.totalorder %s191, 0
      %s194 = sadd.s32 %s193, 1
      %s195 = scalar_select %p192, %s193, %s194
      %p198 = pneg %p192
      %p199 = scmp.eq.s32.totalorder %s35, 3
      %p200 = por %p198, %p199
      %p201 = scmp.ne.s32.totalorder %s193, %s196
      %p202 = scmp.eq.s32.totalorder %s35, 0
      %p203 = por %p201, %p202
      %p204 = scmp.ne.s32.totalorder %s193, %s196
      %p205 = scmp.eq.s32.totalorder %s40, 3
      %p206 = por %p204, %p205
      %p207 = scmp.ne.s32.totalorder %s196, %s197
      %p208 = scmp.eq.s32.totalorder %s40, 0
      %p209 = por %p207, %p208
      %p210 = scmp.ne.s32.totalorder %s196, %s197
      %p211 = scmp.eq.s32.totalorder %s41, 3
      %p212 = por %p210, %p211
      %p214 = scmp.ne.s32.totalorder %s197, %s213
      %p215 = scmp.eq.s32.totalorder %s41, 0
      %p216 = por %p214, %p215
      %s217 = ssub.s32 %s43, %s50
      %p218 = scmp.eq.s32.totalorder %s217, 0
      %s220 = sadd.s32 %s219, 1
      %s221 = scalar_select %p218, %s219, %s220
      %p224 = pneg %p218
      %p225 = scmp.eq.s32.totalorder %s35, 3
      %p226 = por %p224, %p225
      %p227 = scmp.ne.s32.totalorder %s219, %s222
      %p228 = scmp.eq.s32.totalorder %s35, 0
      %p229 = por %p227, %p228
      %p230 = scmp.ne.s32.totalorder %s219, %s222
      %p231 = scmp.eq.s32.totalorder %s40, 3
      %p232 = por %p230, %p231
      %p233 = scmp.ne.s32.totalorder %s222, %s223
      %p234 = scmp.eq.s32.totalorder %s40, 0
      %p235 = por %p233, %p234
      %p236 = scmp.ne.s32.totalorder %s222, %s223
      %p237 = scmp.eq.s32.totalorder %s41, 3
      %p238 = por %p236, %p237
      %p240 = scmp.ne.s32.totalorder %s223, %s239
      %p241 = scmp.eq.s32.totalorder %s41, 0
      %p242 = por %p240, %p241
      %s243 = ssub.s32 %s43, %s50
      %p244 = scmp.eq.s32.totalorder %s243, 0
      %s246 = sadd.s32 %s245, 1
      %s247 = scalar_select %p244, %s245, %s246
      %p250 = pneg %p244
      %p251 = scmp.eq.s32.totalorder %s35, 3
      %p252 = por %p250, %p251
      %p253 = scmp.ne.s32.totalorder %s245, %s248
      %p254 = scmp.eq.s32.totalorder %s35, 0
      %p255 = por %p253, %p254
      %p256 = scmp.ne.s32.totalorder %s245, %s248
      %p257 = scmp.eq.s32.totalorder %s40, 3
      %p258 = por %p256, %p257
      %p259 = scmp.ne.s32.totalorder %s248, %s249
      %p260 = scmp.eq.s32.totalorder %s40, 0
      %p261 = por %p259, %p260
      %p262 = scmp.ne.s32.totalorder %s248, %s249
      %p263 = scmp.eq.s32.totalorder %s41, 3
      %p264 = por %p262, %p263
      %p266 = scmp.ne.s32.totalorder %s249, %s265
      %p267 = scmp.eq.s32.totalorder %s41, 0
      %p268 = por %p266, %p267
      %s269 = ssub.s32 %s43, %s50
      %p270 = scmp.eq.s32.totalorder %s269, 0
      %s272 = sadd.s32 %s271, 1
      %s273 = scalar_select %p270, %s271, %s272
      %p276 = pneg %p270
      %p277 = scmp.eq.s32.totalorder %s35, 3
      %p278 = por %p276, %p277
      %p279 = scmp.ne.s32.totalorder %s271, %s274
      %p280 = scmp.eq.s32.totalorder %s35, 0
      %p281 = por %p279, %p280
      %p282 = scmp.ne.s32.totalorder %s271, %s274
      %p283 = scmp.eq.s32.totalorder %s40, 3
      %p284 = por %p282, %p283
      %p285 = scmp.ne.s32.totalorder %s274, %s275
      %p286 = scmp.eq.s32.totalorder %s40, 0
      %p287 = por %p285, %p286
      %p288 = scmp.ne.s32.totalorder %s274, %s275
      %p289 = scmp.eq.s32.totalorder %s41, 3
      %p290 = por %p288, %p289
      %p292 = scmp.ne.s32.totalorder %s275, %s291
      %p293 = scmp.eq.s32.totalorder %s41, 0
      %p294 = por %p292, %p293
      %s295 = ssub.s32 %s43, %s50
      %p296 = scmp.eq.s32.totalorder %s295, 0
      %s298 = sadd.s32 %s297, 1
      %s299 = scalar_select %p296, %s297, %s298
      %p302 = pneg %p296
      %p303 = scmp.eq.s32.totalorder %s35, 3
      %p304 = por %p302, %p303
      %p305 = scmp.ne.s32.totalorder %s297, %s300
      %p306 = scmp.eq.s32.totalorder %s35, 0
      %p307 = por %p305, %p306
      %p308 = scmp.ne.s32.totalorder %s297, %s300
      %p309 = scmp.eq.s32.totalorder %s40, 3
      %p310 = por %p308, %p309
      %p311 = scmp.ne.s32.totalorder %s300, %s301
      %p312 = scmp.eq.s32.totalorder %s40, 0
      %p313 = por %p311, %p312
      %p314 = scmp.ne.s32.totalorder %s300, %s301
      %p315 = scmp.eq.s32.totalorder %s41, 3
      %p316 = por %p314, %p315
      %p318 = scmp.ne.s32.totalorder %s301, %s317
      %p319 = scmp.eq.s32.totalorder %s41, 0
      %p320 = por %p318, %p319
      %s321 = ssub.s32 %s43, %s50
      %p322 = scmp.eq.s32.totalorder %s321, 0
      %s324 = sadd.s32 %s323, 1
      %s325 = scalar_select %p322, %s323, %s324
      %p328 = pneg %p322
      %p329 = scmp.eq.s32.totalorder %s35, 3
      %p330 = por %p328, %p329
      %p331 = scmp.ne.s32.totalorder %s323, %s326
      %p332 = scmp.eq.s32.totalorder %s35, 0
      %p333 = por %p331, %p332
      %p334 = scmp.ne.s32.totalorder %s323, %s326
      %p335 = scmp.eq.s32.totalorder %s40, 3
      %p336 = por %p334, %p335
      %p337 = scmp.ne.s32.totalorder %s326, %s327
      %p338 = scmp.eq.s32.totalorder %s40, 0
      %p339 = por %p337, %p338
      %p340 = scmp.ne.s32.totalorder %s326, %s327
      %p341 = scmp.eq.s32.totalorder %s41, 3
      %p342 = por %p340, %p341
      %p344 = scmp.ne.s32.totalorder %s327, %s343
      %p345 = scmp.eq.s32.totalorder %s41, 0
      %p346 = por %p344, %p345
      %s347 = ssub.s32 %s43, %s50
      %p348 = scmp.eq.s32.totalorder %s347, 0
      %s350 = sadd.s32 %s349, 1
      %s351 = scalar_select %p348, %s349, %s350
      %p354 = pneg %p348
      %p355 = scmp.eq.s32.totalorder %s35, 3
      %p356 = por %p354, %p355
      %p357 = scmp.ne.s32.totalorder %s349, %s352
      %p358 = scmp.eq.s32.totalorder %s35, 0
      %p359 = por %p357, %p358
      %p360 = scmp.ne.s32.totalorder %s349, %s352
      %p361 = scmp.eq.s32.totalorder %s40, 3
      %p362 = por %p360, %p361
      %p363 = scmp.ne.s32.totalorder %s352, %s353
      %p364 = scmp.eq.s32.totalorder %s40, 0
      %p365 = por %p363, %p364
      %p366 = scmp.ne.s32.totalorder %s352, %s353
      %p367 = scmp.eq.s32.totalorder %s41, 3
      %p368 = por %p366, %p367
      %p370 = scmp.ne.s32.totalorder %s353, %s369
      %p371 = scmp.eq.s32.totalorder %s41, 0
      %p372 = por %p370, %p371
      %s373 = ssub.s32 %s43, %s50
      %p374 = scmp.eq.s32.totalorder %s373, 0
      %s376 = sadd.s32 %s375, 1
      %s377 = scalar_select %p374, %s375, %s376
      %p380 = pneg %p374
      %p381 = scmp.eq.s32.totalorder %s35, 3
      %p382 = por %p380, %p381
      %p383 = scmp.ne.s32.totalorder %s375, %s378
      %p384 = scmp.eq.s32.totalorder %s35, 0
      %p385 = por %p383, %p384
      %p386 = scmp.ne.s32.totalorder %s375, %s378
      %p387 = scmp.eq.s32.totalorder %s40, 3
      %p388 = por %p386, %p387
      %p389 = scmp.ne.s32.totalorder %s378, %s379
      %p390 = scmp.eq.s32.totalorder %s40, 0
      %p391 = por %p389, %p390
      %p392 = scmp.ne.s32.totalorder %s378, %s379
      %p393 = scmp.eq.s32.totalorder %s41, 3
      %p394 = por %p392, %p393
      %p396 = scmp.ne.s32.totalorder %s379, %s395
      %p397 = scmp.eq.s32.totalorder %s41, 0
      %p398 = por %p396, %p397
      %s400 = sadd.s32 %s399, 1
      %p403 = scmp.eq.s32.totalorder %s35, 3
      %p404 = scmp.ne.s32.totalorder %s399, %s401
      %p405 = scmp.eq.s32.totalorder %s35, 0
      %p406 = por %p404, %p405
      %p407 = scmp.ne.s32.totalorder %s399, %s401
      %p408 = scmp.eq.s32.totalorder %s40, 3
      %p409 = por %p407, %p408
      %p410 = scmp.ne.s32.totalorder %s401, %s402
      %p411 = scmp.eq.s32.totalorder %s40, 0
      %p412 = por %p410, %p411
      %p413 = scmp.ne.s32.totalorder %s401, %s402
      %p414 = scmp.eq.s32.totalorder %s41, 3
      %p415 = por %p413, %p414
      %p417 = scmp.ne.s32.totalorder %s402, %s416
      %p418 = scmp.eq.s32.totalorder %s41, 0
      %p419 = por %p417, %p418
      %s421 = sadd.s32 %s420, 1
      %p424 = scmp.eq.s32.totalorder %s35, 3
      %p425 = scmp.ne.s32.totalorder %s420, %s422
      %p426 = scmp.eq.s32.totalorder %s35, 0
      %p427 = por %p425, %p426
      %p428 = scmp.ne.s32.totalorder %s420, %s422
      %p429 = scmp.eq.s32.totalorder %s40, 3
      %p430 = por %p428, %p429
      %p431 = scmp.ne.s32.totalorder %s422, %s423
      %p432 = scmp.eq.s32.totalorder %s40, 0
      %p433 = por %p431, %p432
      %p434 = scmp.ne.s32.totalorder %s422, %s423
      %p435 = scmp.eq.s32.totalorder %s41, 3
      %p436 = por %p434, %p435
      %p438 = scmp.ne.s32.totalorder %s423, %s437
      %p439 = scmp.eq.s32.totalorder %s41, 0
      %p440 = por %p438, %p439
      %s442 = sadd.s32 %s441, 1
      %p445 = scmp.eq.s32.totalorder %s35, 3
      %p446 = scmp.ne.s32.totalorder %s441, %s443
      %p447 = scmp.eq.s32.totalorder %s35, 0
      %p448 = por %p446, %p447
      %p449 = scmp.ne.s32.totalorder %s441, %s443
      %p450 = scmp.eq.s32.totalorder %s40, 3
      %p451 = por %p449, %p450
      %p452 = scmp.ne.s32.totalorder %s443, %s444
      %p453 = scmp.eq.s32.totalorder %s40, 0
      %p454 = por %p452, %p453
      %p455 = scmp.ne.s32.totalorder %s443, %s444
      %p456 = scmp.eq.s32.totalorder %s41, 3
      %p457 = por %p455, %p456
      %p459 = scmp.ne.s32.totalorder %s444, %s458
      %p460 = scmp.eq.s32.totalorder %s41, 0
      %p461 = por %p459, %p460
      %s462 = ssub.s32 %s42, %s54
      %p463 = scmp.eq.s32.totalorder %s462, 0
      %s465 = sadd.s32 %s464, 1
      %s466 = scalar_select %p463, %s464, %s465
      %p469 = pneg %p463
      %p470 = scmp.eq.s32.totalorder %s35, 3
      %p471 = por %p469, %p470
      %p472 = scmp.ne.s32.totalorder %s464, %s467
      %p473 = scmp.eq.s32.totalorder %s35, 0
      %p474 = por %p472, %p473
      %p475 = scmp.ne.s32.totalorder %s464, %s467
      %p476 = scmp.eq.s32.totalorder %s40, 3
      %p477 = por %p475, %p476
      %p478 = scmp.ne.s32.totalorder %s467, %s468
      %p479 = scmp.eq.s32.totalorder %s40, 0
      %p480 = por %p478, %p479
      %p481 = scmp.ne.s32.totalorder %s467, %s468
      %p482 = scmp.eq.s32.totalorder %s41, 3
      %p483 = por %p481, %p482
      %p485 = scmp.ne.s32.totalorder %s468, %s484
      %p486 = scmp.eq.s32.totalorder %s41, 0
      %p487 = por %p485, %p486
      %p488 = scmp.le.s32.totalorder 1, %s35
      %p489 = scmp.lt.s32.totalorder %s35, 5
      %p490 = pnand %p488, %p489
      %p491 = pneg %p490
      // Predicated region
      $region9: #{vl_model_forward.2} parent=5 // pred_check
        _
      $region10: #{vl_model_forward.2} parent=5 // pred_check_branch
        %493 = sbr.rel (%p490) target = $region12
      $region11: #{vl_model_forward.2} parent=5 // pred_region
        %s494 = ssub.s32 %s35, 1
        // Predicated region
        $region13: #{vl_model_forward.2} parent=11 // pred_check
          %p495 = pneg %p94
        $region14: #{vl_model_forward.2} parent=11 // pred_check_branch
          %497 = sbr.rel (%p495) target = $region16
        $region15: #{vl_model_forward.2} parent=11 // pred_region
          _
        $region16: #{vl_model_forward.2} parent=11 // pred_fallthru
          _
        // Predicated region
        $region17: #{vl_model_forward.2} parent=11 // pred_check
          %p498 = pneg %p115
        $region18: #{vl_model_forward.2} parent=11 // pred_check_branch
          %500 = sbr.rel (%p498) target = $region20
        $region19: #{vl_model_forward.2} parent=11 // pred_region
          %502 = vsyncadd [#allocation4], 0
          %s504 = sshll.u32 %s2, 4
          %s505 = int_to_ptr.hbm [resolvable:$true] %s504
          %s506 = sshll.u32 [#allocation3], 4
          %s507 = int_to_ptr.vmem [resolvable:$true] %s506
          %509 = dma.hbm_to_vmem [thread:$0]  %s505, 16, %s507, [#allocation4]
        $region20: #{vl_model_forward.2} parent=11 // pred_fallthru
          _
        // Predicated region
        $region21: #{vl_model_forward.2} parent=11 // pred_check
          %p510 = pneg %p136
        $region22: #{vl_model_forward.2} parent=11 // pred_check_branch
          %512 = sbr.rel (%p510) target = $region24
        $region23: #{vl_model_forward.2} parent=11 // pred_region
          %514 = vsyncadd [#allocation6], 0
          %s516 = sshll.u32 %s3, 4
          %s517 = int_to_ptr.hbm [resolvable:$true] %s516
          %s518 = sshll.u32 [#allocation5], 4
          %s519 = int_to_ptr.vmem [resolvable:$true] %s518
          %521 = dma.hbm_to_vmem [thread:$0]  %s517, 16, %s519, [#allocation6]
        $region24: #{vl_model_forward.2} parent=11 // pred_fallthru
          _
        // Predicated region
        $region25: #{vl_model_forward.2} parent=11 // pred_check
          %p522 = pneg %p157
        $region26: #{vl_model_forward.2} parent=11 // pred_check_branch
          %524 = sbr.rel (%p522) target = $region28
        $region27: #{vl_model_forward.2} parent=11 // pred_region
          %526 = vsyncadd [#allocation6], 0
          %s528 = sshll.u32 %s4, 4
          %s529 = int_to_ptr.hbm [resolvable:$true] %s528
          %s530 = sshll.u32 [#allocation7], 4
          %s531 = int_to_ptr.vmem [resolvable:$true] %s530
          %533 = dma.hbm_to_vmem [thread:$0]  %s529, 128, %s531, [#allocation6]
        $region28: #{vl_model_forward.2} parent=11 // pred_fallthru
          _
        // Predicated region
        $region29: #{vl_model_forward.2} parent=11 // pred_check
          %p534 = pneg %p412
        $region30: #{vl_model_forward.2} parent=11 // pred_check_branch
          %536 = sbr.rel (%p534) target = $region32
        $region31: #{vl_model_forward.2} parent=11 // pred_region
          %538 = vsyncadd [#allocation15], 0
          %s540 = sshll.u32 %s14, 4
          %s541 = int_to_ptr.hbm [resolvable:$true] %s540
          %s542 = sshll.u32 [#allocation16], 4
          %s543 = int_to_ptr.vmem [resolvable:$true] %s542
          %545 = dma.hbm_to_vmem [thread:$0]  %s541, 32, %s543, [#allocation15]
        $region32: #{vl_model_forward.2} parent=11 // pred_fallthru
          _
        // Predicated region
        $region33: #{vl_model_forward.2} parent=11 // pred_check
          %p546 = pneg %p433
        $region34: #{vl_model_forward.2} parent=11 // pred_check_branch
          %548 = sbr.rel (%p546) target = $region36
        $region35: #{vl_model_forward.2} parent=11 // pred_region
          %550 = vsyncadd [#allocation18], 0
          %s551 = sshll.u32 %s15, 4
          %s552 = int_to_ptr.hbm [resolvable:$true] %s551
          %s553 = sshll.u32 [#allocation17], 4
          %s554 = int_to_ptr.vmem [resolvable:$true] %s553
          %559 = dma.hbm_to_vmem [thread:$0]  %s552, 1024, %s554, [#allocation18], 64, 64, 4
        $region36: #{vl_model_forward.2} parent=11 // pred_fallthru
          _
        // Predicated region
        $region37: #{vl_model_forward.2} parent=11 // pred_check
          %p560 = pneg %p454
        $region38: #{vl_model_forward.2} parent=11 // pred_check_branch
          %562 = sbr.rel (%p560) target = $region40
        $region39: #{vl_model_forward.2} parent=11 // pred_region
          %564 = vsyncadd [#allocation18], 0
          %s566 = sshll.u32 %s16, 4
          %s567 = int_to_ptr.hbm [resolvable:$true] %s566
          %s568 = sshll.u32 [#allocation19], 4
          %s569 = int_to_ptr.vmem [resolvable:$true] %s568
          %571 = dma.hbm_to_vmem [thread:$0]  %s567, 16, %s569, [#allocation18]
        $region40: #{vl_model_forward.2} parent=11 // pred_fallthru
          _
      $region12: #{vl_model_forward.2} parent=5 // pred_fallthru
        _
      %p572 = scmp.lt.s32.totalorder %s35, 4
      // Predicated region
      $region41: #{vl_model_forward.2} parent=5 // pred_check
        %p573 = pneg %p572
      $region42: #{vl_model_forward.2} parent=5 // pred_check_branch
        %575 = sbr.rel (%p573) target = $region44
      $region43: #{vl_model_forward.2} parent=5 // pred_region
        // Predicated region
        $region45: #{vl_model_forward.2} parent=43 // pred_check
          %p576 = pneg %p67
        $region46: #{vl_model_forward.2} parent=43 // pred_check_branch
          %578 = sbr.rel (%p576) target = $region48
        $region47: #{vl_model_forward.2} parent=43 // pred_region
          %p579 = scmp.lt.s32.totalorder %s42, 1
          %s580 = scalar_select %p579, %s42, 1
          %s581 = smul.addr %s580, 6
          %s582 = smul.addr %s581, 4
          %s583 = scalar_lea.vmem %s0, %s582
        $region48: #{vl_model_forward.2} parent=43 // pred_fallthru
          _
        // Predicated region
        $region49: #{vl_model_forward.2} parent=43 // pred_check
          %p584 = pneg %p177
        $region50: #{vl_model_forward.2} parent=43 // pred_check_branch
          %586 = sbr.rel (%p584) target = $region52
        $region51: #{vl_model_forward.2} parent=43 // pred_region
          %s587 = sand.u32 %s35, 1
          %s588 = scalar_lea.sflag [#allocation9], %s587
          %s589 = sand.u32 %s167, 1
          %s590 = smul.addr %s589, 4
          %s591 = scalar_lea.vmem [#allocation8], %s590
          %593 = vsyncadd %s588, 0
          %s594 = smul.addr %s43, 4
          %s595 = scalar_lea.hbm %s5, %s594
          %s597 = sshll.u32 %s595, 4
          %s598 = int_to_ptr.hbm [resolvable:$true] %s597
          %s599 = sshll.u32 %s591, 4
          %s600 = int_to_ptr.vmem [resolvable:$true] %s599
          %602 = dma.hbm_to_vmem [thread:$0]  %s598, 64, %s600, %s588
        $region52: #{vl_model_forward.2} parent=43 // pred_fallthru
          _
        // Predicated region
        $region53: #{vl_model_forward.2} parent=43 // pred_check
          %p603 = pneg %p203
        $region54: #{vl_model_forward.2} parent=43 // pred_check_branch
          %605 = sbr.rel (%p603) target = $region56
        $region55: #{vl_model_forward.2} parent=43 // pred_region
          %p606 = scmp.lt.s32.totalorder %s43, 1
          %s607 = scalar_select %p606, %s43, 1
          %s608 = smul.addr %s607, 48
          %s609 = smul.addr %s608, 4
          %s610 = scalar_lea.vmem %s6, %s609
        $region56: #{vl_model_forward.2} parent=43 // pred_fallthru
          _
        // Predicated region
        $region57: #{vl_model_forward.2} parent=43 // pred_check
          %p611 = pneg %p229
        $region58: #{vl_model_forward.2} parent=43 // pred_check_branch
          %613 = sbr.rel (%p611) target = $region60
        $region59: #{vl_model_forward.2} parent=43 // pred_region
          %s614 = sand.u32 %s35, 1
          %s615 = scalar_lea.sflag [#allocation9], %s614
          %s616 = sand.u32 %s219, 1
          %s617 = smul.addr %s616, 3
          %s618 = scalar_lea.vmem [#allocation10], %s617
          %620 = vsyncadd %s615, 0
          %s621 = smul.addr %s43, 3
          %s622 = scalar_lea.hbm %s7, %s621
          %s624 = sshll.u32 %s622, 4
          %s625 = int_to_ptr.hbm [resolvable:$true] %s624
          %s626 = sshll.u32 %s618, 4
          %s627 = int_to_ptr.vmem [resolvable:$true] %s626
          %629 = dma.hbm_to_vmem [thread:$0]  %s625, 48, %s627, %s615
        $region60: #{vl_model_forward.2} parent=43 // pred_fallthru
          _
        // Predicated region
        $region61: #{vl_model_forward.2} parent=43 // pred_check
          %p630 = pneg %p255
        $region62: #{vl_model_forward.2} parent=43 // pred_check_branch
          %632 = sbr.rel (%p630) target = $region64
        $region63: #{vl_model_forward.2} parent=43 // pred_region
          %p633 = scmp.lt.s32.totalorder %s43, 1
          %s634 = scalar_select %p633, %s43, 1
          %s635 = smul.addr %s634, 16
          %s636 = smul.addr %s635, 4
          %s637 = scalar_lea.vmem %s8, %s636
        $region64: #{vl_model_forward.2} parent=43 // pred_fallthru
          _
        // Predicated region
        $region65: #{vl_model_forward.2} parent=43 // pred_check
          %p638 = pneg %p281
        $region66: #{vl_model_forward.2} parent=43 // pred_check_branch
          %640 = sbr.rel (%p638) target = $region68
        $region67: #{vl_model_forward.2} parent=43 // pred_region
          %s641 = sand.u32 %s35, 1
          %s642 = scalar_lea.sflag [#allocation12], %s641
          %s643 = sand.u32 %s271, 1
          %s644 = scalar_lea.vmem [#allocation11], %s643
          %646 = vsyncadd %s642, 0
          %s647 = scalar_lea.hbm %s9, %s43
          %s649 = sshll.u32 %s647, 4
          %s650 = int_to_ptr.hbm [resolvable:$true] %s649
          %s651 = sshll.u32 %s644, 4
          %s652 = int_to_ptr.vmem [resolvable:$true] %s651
          %654 = dma.hbm_to_vmem [thread:$0]  %s650, 16, %s652, %s642
        $region68: #{vl_model_forward.2} parent=43 // pred_fallthru
          _
        // Predicated region
        $region69: #{vl_model_forward.2} parent=43 // pred_check
          %p655 = pneg %p307
        $region70: #{vl_model_forward.2} parent=43 // pred_check_branch
          %657 = sbr.rel (%p655) target = $region72
        $region71: #{vl_model_forward.2} parent=43 // pred_region
          %p658 = scmp.lt.s32.totalorder %s43, 1
          %s659 = scalar_select %p658, %s43, 1
          %s660 = smul.addr %s659, 32
          %s661 = smul.addr %s660, 4
          %s662 = scalar_lea.vmem %s10, %s661
        $region72: #{vl_model_forward.2} parent=43 // pred_fallthru
          _
        // Predicated region
        $region73: #{vl_model_forward.2} parent=43 // pred_check
          %p663 = pneg %p333
        $region74: #{vl_model_forward.2} parent=43 // pred_check_branch
          %665 = sbr.rel (%p663) target = $region76
        $region75: #{vl_model_forward.2} parent=43 // pred_region
          %s666 = sand.u32 %s35, 1
          %s667 = scalar_lea.sflag [#allocation12], %s666
          %s668 = sand.u32 %s323, 1
          %s669 = smul.addr %s668, 2
          %s670 = scalar_lea.vmem [#allocation13], %s669
          %672 = vsyncadd %s667, 0
          %s673 = smul.addr %s43, 2
          %s674 = scalar_lea.hbm %s11, %s673
          %s676 = sshll.u32 %s674, 4
          %s677 = int_to_ptr.hbm [resolvable:$true] %s676
          %s678 = sshll.u32 %s670, 4
          %s679 = int_to_ptr.vmem [resolvable:$true] %s678
          %681 = dma.hbm_to_vmem [thread:$0]  %s677, 32, %s679, %s667
        $region76: #{vl_model_forward.2} parent=43 // pred_fallthru
          _
        // Predicated region
        $region77: #{vl_model_forward.2} parent=43 // pred_check
          %p682 = pneg %p359
        $region78: #{vl_model_forward.2} parent=43 // pred_check_branch
          %684 = sbr.rel (%p682) target = $region80
        $region79: #{vl_model_forward.2} parent=43 // pred_region
          %p685 = scmp.lt.s32.totalorder %s43, 1
          %s686 = scalar_select %p685, %s43, 1
          %s687 = smul.addr %s686, 32
          %s688 = smul.addr %s687, 4
          %s689 = scalar_lea.vmem %s12, %s688
        $region80: #{vl_model_forward.2} parent=43 // pred_fallthru
          _
        // Predicated region
        $region81: #{vl_model_forward.2} parent=43 // pred_check
          %p690 = pneg %p385
        $region82: #{vl_model_forward.2} parent=43 // pred_check_branch
          %692 = sbr.rel (%p690) target = $region84
        $region83: #{vl_model_forward.2} parent=43 // pred_region
          %s693 = sand.u32 %s35, 1
          %s694 = scalar_lea.sflag [#allocation15], %s693
          %s695 = sand.u32 %s375, 1
          %s696 = scalar_lea.vmem [#allocation14], %s695
          %698 = vsyncadd %s694, 0
          %s699 = scalar_lea.hbm %s13, %s43
          %s701 = sshll.u32 %s699, 4
          %s702 = int_to_ptr.hbm [resolvable:$true] %s701
          %s703 = sshll.u32 %s696, 4
          %s704 = int_to_ptr.vmem [resolvable:$true] %s703
          %706 = dma.hbm_to_vmem [thread:$0]  %s702, 16, %s704, %s694
        $region84: #{vl_model_forward.2} parent=43 // pred_fallthru
          _
      $region44: #{vl_model_forward.2} parent=5 // pred_fallthru
        _
      %p707 = scmp.le.s32.totalorder 1, %s35
      %p708 = scmp.lt.s32.totalorder %s35, 5
      %p709 = pnand %p707, %p708
      %p710 = pneg %p709
      // Predicated region
      $region85: #{vl_model_forward.2} parent=5 // pred_check
        _
      $region86: #{vl_model_forward.2} parent=5 // pred_check_branch
        %712 = sbr.rel (%p709) target = $region88
      $region87: #{vl_model_forward.2} parent=5 // pred_region
        %s713 = ssub.s32 %s35, 1
        // Predicated region
        $region89: #{vl_model_forward.2} parent=87 // pred_check
          %p714 = pneg %p115
        $region90: #{vl_model_forward.2} parent=87 // pred_check_branch
          %716 = sbr.rel (%p714) target = $region92
        $region91: #{vl_model_forward.2} parent=87 // pred_region
          %718 = dma.done [#allocation4], 16
        $region92: #{vl_model_forward.2} parent=87 // pred_fallthru
          _
        // Predicated region
        $region93: #{vl_model_forward.2} parent=87 // pred_check
          %p719 = pneg %p136
        $region94: #{vl_model_forward.2} parent=87 // pred_check_branch
          %721 = sbr.rel (%p719) target = $region96
        $region95: #{vl_model_forward.2} parent=87 // pred_region
          %723 = dma.done [#allocation6], 16
        $region96: #{vl_model_forward.2} parent=87 // pred_fallthru
          _
        // Predicated region
        $region97: #{vl_model_forward.2} parent=87 // pred_check
          %p724 = pneg %p157
        $region98: #{vl_model_forward.2} parent=87 // pred_check_branch
          %726 = sbr.rel (%p724) target = $region100
        $region99: #{vl_model_forward.2} parent=87 // pred_region
          %728 = dma.done [#allocation6], 128
        $region100: #{vl_model_forward.2} parent=87 // pred_fallthru
          _
        %s729 = sand.u32 %s40, 1
        %s730 = scalar_lea.sflag [#allocation9], %s729
        %s731 = sand.u32 %s170, 1
        %s732 = smul.addr %s731, 4
        %s733 = scalar_lea.vmem [#allocation8], %s732
        // Predicated region
        $region101: #{vl_model_forward.2} parent=87 // pred_check
          %p734 = pneg %p183
        $region102: #{vl_model_forward.2} parent=87 // pred_check_branch
          %736 = sbr.rel (%p734) target = $region104
        $region103: #{vl_model_forward.2} parent=87 // pred_region
          %738 = dma.done %s730, 64
        $region104: #{vl_model_forward.2} parent=87 // pred_fallthru
          _
        %s739 = sand.u32 %s40, 1
        %s740 = scalar_lea.sflag [#allocation9], %s739
        %s741 = sand.u32 %s222, 1
        %s742 = smul.addr %s741, 3
        %s743 = scalar_lea.vmem [#allocation10], %s742
        // Predicated region
        $region105: #{vl_model_forward.2} parent=87 // pred_check
          %p744 = pneg %p235
        $region106: #{vl_model_forward.2} parent=87 // pred_check_branch
          %746 = sbr.rel (%p744) target = $region108
        $region107: #{vl_model_forward.2} parent=87 // pred_region
          %748 = dma.done %s740, 48
        $region108: #{vl_model_forward.2} parent=87 // pred_fallthru
          _
        %s749 = sand.u32 %s40, 1
        %s750 = scalar_lea.sflag [#allocation12], %s749
        %s751 = sand.u32 %s274, 1
        %s752 = scalar_lea.vmem [#allocation11], %s751
        // Predicated region
        $region109: #{vl_model_forward.2} parent=87 // pred_check
          %p753 = pneg %p287
        $region110: #{vl_model_forward.2} parent=87 // pred_check_branch
          %755 = sbr.rel (%p753) target = $region112
        $region111: #{vl_model_forward.2} parent=87 // pred_region
          %757 = dma.done %s750, 16
        $region112: #{vl_model_forward.2} parent=87 // pred_fallthru
          _
        %s758 = sand.u32 %s40, 1
        %s759 = scalar_lea.sflag [#allocation12], %s758
        %s760 = sand.u32 %s326, 1
        %s761 = smul.addr %s760, 2
        %s762 = scalar_lea.vmem [#allocation13], %s761
        // Predicated region
        $region113: #{vl_model_forward.2} parent=87 // pred_check
          %p763 = pneg %p339
        $region114: #{vl_model_forward.2} parent=87 // pred_check_branch
          %765 = sbr.rel (%p763) target = $region116
        $region115: #{vl_model_forward.2} parent=87 // pred_region
          %767 = dma.done %s759, 32
        $region116: #{vl_model_forward.2} parent=87 // pred_fallthru
          _
        %s768 = sand.u32 %s40, 1
        %s769 = scalar_lea.sflag [#allocation15], %s768
        %s770 = sand.u32 %s378, 1
        %s771 = scalar_lea.vmem [#allocation14], %s770
        // Predicated region
        $region117: #{vl_model_forward.2} parent=87 // pred_check
          %p772 = pneg %p391
        $region118: #{vl_model_forward.2} parent=87 // pred_check_branch
          %774 = sbr.rel (%p772) target = $region120
        $region119: #{vl_model_forward.2} parent=87 // pred_region
          %776 = dma.done %s769, 16
        $region120: #{vl_model_forward.2} parent=87 // pred_fallthru
          _
        // Predicated region
        $region121: #{vl_model_forward.2} parent=87 // pred_check
          %p777 = pneg %p412
        $region122: #{vl_model_forward.2} parent=87 // pred_check_branch
          %779 = sbr.rel (%p777) target = $region124
        $region123: #{vl_model_forward.2} parent=87 // pred_region
          %781 = dma.done [#allocation15], 32
        $region124: #{vl_model_forward.2} parent=87 // pred_fallthru
          _
        // Predicated region
        $region125: #{vl_model_forward.2} parent=87 // pred_check
          %p782 = pneg %p433
        $region126: #{vl_model_forward.2} parent=87 // pred_check_branch
          %784 = sbr.rel (%p782) target = $region128
        $region127: #{vl_model_forward.2} parent=87 // pred_region
          %786 = dma.done [#allocation18], 1024
        $region128: #{vl_model_forward.2} parent=87 // pred_fallthru
          _
        // Predicated region
        $region129: #{vl_model_forward.2} parent=87 // pred_check
          %p787 = pneg %p454
        $region130: #{vl_model_forward.2} parent=87 // pred_check_branch
          %789 = sbr.rel (%p787) target = $region132
        $region131: #{vl_model_forward.2} parent=87 // pred_region
          %791 = dma.done [#allocation18], 16
        $region132: #{vl_model_forward.2} parent=87 // pred_fallthru
          _
        %p792 = scmp.lt.s32.totalorder %s44, 1
        %s793 = scalar_select %p792, %s44, 1
        %s794 = smul.addr %s793, 6
        %s795 = smul.addr %s794, 4
        %s796 = scalar_lea.vmem %s0, %s795
        %p797 = pneg %p73
        %p798 = pneg %p70
        %p799 = pneg %p94
        %p800 = pneg %p91
        %p801 = pneg %p115
        %p802 = pneg %p112
        %p803 = pneg %p136
        %p804 = pneg %p133
        %p805 = pneg %p157
        %p806 = pneg %p154
        %s807 = sand.u32 %s40, 1
        %s808 = scalar_lea.sflag [#allocation9], %s807
        %s809 = sand.u32 %s170, 1
        %s810 = smul.addr %s809, 4
        %s811 = scalar_lea.vmem [#allocation8], %s810
        %p812 = pneg %p183
        %p813 = pneg %p180
        %p814 = scmp.lt.s32.totalorder %s45, 1
        %s815 = scalar_select %p814, %s45, 1
        %s816 = smul.addr %s815, 48
        %s817 = smul.addr %s816, 4
        %s818 = scalar_lea.vmem %s6, %s817
        %p819 = pneg %p209
        %p820 = pneg %p206
        %s821 = sand.u32 %s40, 1
        %s822 = scalar_lea.sflag [#allocation9], %s821
        %s823 = sand.u32 %s222, 1
        %s824 = smul.addr %s823, 3
        %s825 = scalar_lea.vmem [#allocation10], %s824
        %p826 = pneg %p235
        %p827 = pneg %p232
        %p828 = scmp.lt.s32.totalorder %s45, 1
        %s829 = scalar_select %p828, %s45, 1
        %s830 = smul.addr %s829, 16
        %s831 = smul.addr %s830, 4
        %s832 = scalar_lea.vmem %s8, %s831
        %p833 = pneg %p261
        %p834 = pneg %p258
        %s835 = sand.u32 %s40, 1
        %s836 = scalar_lea.sflag [#allocation12], %s835
        %s837 = sand.u32 %s274, 1
        %s838 = scalar_lea.vmem [#allocation11], %s837
        %p839 = pneg %p287
        %p840 = pneg %p284
        %p841 = scmp.lt.s32.totalorder %s45, 1
        %s842 = scalar_select %p841, %s45, 1
        %s843 = smul.addr %s842, 32
        %s844 = smul.addr %s843, 4
        %s845 = scalar_lea.vmem %s10, %s844
        %p846 = pneg %p313
        %p847 = pneg %p310
        %s848 = sand.u32 %s40, 1
        %s849 = scalar_lea.sflag [#allocation12], %s848
        %s850 = sand.u32 %s326, 1
        %s851 = smul.addr %s850, 2
        %s852 = scalar_lea.vmem [#allocation13], %s851
        %p853 = pneg %p339
        %p854 = pneg %p336
        %p855 = scmp.lt.s32.totalorder %s45, 1
        %s856 = scalar_select %p855, %s45, 1
        %s857 = smul.addr %s856, 32
        %s858 = smul.addr %s857, 4
        %s859 = scalar_lea.vmem %s12, %s858
        %p860 = pneg %p365
        %p861 = pneg %p362
        %s862 = sand.u32 %s40, 1
        %s863 = scalar_lea.sflag [#allocation15], %s862
        %s864 = sand.u32 %s378, 1
        %s865 = scalar_lea.vmem [#allocation14], %s864
        %p866 = pneg %p391
        %p867 = pneg %p388
        %p868 = pneg %p412
        %p869 = pneg %p409
        %p870 = pneg %p433
        %p871 = pneg %p430
        %p872 = pneg %p454
        %p873 = pneg %p451
        %p874 = pneg %p480
        %p875 = pneg %p477
        %p876 = scmp.lt.s32.totalorder %s44, 1
        %s877 = scalar_select %p876, %s44, 1
        %s878 = smul.addr %s877, 8
        %s879 = scalar_lea.vmem %s17, %s878
        %p880 = scmp.lt.s32.totalorder %s44, 1
        %s881 = scalar_select %p880, %s44, 1
        %s882 = smul.addr %s881, 6
        %s883 = smul.addr %s882, 4
        %s884 = scalar_lea.vmem %s0, %s883
        %p885 = scmp.lt.s32.totalorder %s45, 1
        %s886 = scalar_select %p885, %s45, 1
        %s887 = smul.addr %s886, 48
        %s888 = smul.addr %s887, 4
        %s889 = scalar_lea.vmem %s6, %s888
        %p890 = scmp.lt.s32.totalorder %s45, 1
        %s891 = scalar_select %p890, %s45, 1
        %s892 = smul.addr %s891, 16
        %s893 = smul.addr %s892, 4
        %s894 = scalar_lea.vmem %s8, %s893
        %p895 = scmp.lt.s32.totalorder %s45, 1
        %s896 = scalar_select %p895, %s45, 1
        %s897 = smul.addr %s896, 32
        %s898 = smul.addr %s897, 4
        %s899 = scalar_lea.vmem %s10, %s898
        %p900 = scmp.lt.s32.totalorder %s45, 1
        %s901 = scalar_select %p900, %s45, 1
        %s902 = smul.addr %s901, 32
        %s903 = smul.addr %s902, 4
        %s904 = scalar_lea.vmem %s12, %s903
        %p905 = scmp.lt.s32.totalorder %s44, 1
        %s906 = scalar_select %p905, %s44, 1
        %s907 = smul.addr %s906, 8
        %s908 = scalar_lea.vmem %s17, %s907
        %p910 = scmp.eq.s32.totalorder %s45, 0
        // Predicated region
        $region133: #{vl_model_forward.2} parent=87 // pred_check
          %p911 = pneg %p910
        $region134: #{vl_model_forward.2} parent=87 // pred_check_branch
          %913 = sbr.rel (%p911) target = $region136
        $region135: #{vl_model_forward.2} parent=87 // pred_region
          %v914 = vld [vmem:[%s884] sm:$0xff]
          %v915 = vld [vmem:[%s884 + $0x8] sm:$0xff]
          %v916 = vld [vmem:[%s884 + $0x10] sm:$0xff]
          %920 = vst [vmem:[#allocation1] ss:$2 sm:$0xff] %v914
          %s921 = scalar_lea.vmem [#allocation1], 16
          %922 = vst [vmem:[%s921] ss:$2 sm:$0xff] %v915
          %s923 = scalar_lea.vmem [#allocation1], 32
          %924 = vst [vmem:[%s923] ss:$2 sm:$0xff] %v916
          %v925 = vld.sshfl [vmem:[#allocation1] sm:$0xff pattern:$0x75316420]
          %v926 = vld.sshfl [vmem:[#allocation1 + $0x8] sm:$0xff pattern:$0x75316420]
          %v927 = vld.sshfl [vmem:[#allocation1 + $0x10] sm:$0xff pattern:$0x75316420]
          %v928 = vld.sshfl [vmem:[#allocation1 + $0x18] sm:$0xff pattern:$0x75316420]
          %v929 = vld.sshfl [vmem:[#allocation1 + $0x20] sm:$0xff pattern:$0x75316420]
          %v930 = vld.sshfl [vmem:[#allocation1 + $0x28] sm:$0xff pattern:$0x75316420]
          %v937 = vpack.c.bf16 %v925, %v925
          %v938 = vpack.c.bf16 %v926, %v926
          %v939 = vpack.c.bf16 %v927, %v927
          %v940 = vpack.c.bf16 %v928, %v928
          %v941 = vpack.c.bf16 %v929, %v929
          %v942 = vpack.c.bf16 %v930, %v930
          %v943 = vld [vmem:[%s1] sm:$0xf]
          %v944 = vld [vmem:[%s1 + $0x4] sm:$0xf]
          %v945 = vld [vmem:[%s1 + $0x8] sm:$0xf]
          %v946 = vld [vmem:[%s1 + $0xc] sm:$0xf]
          %v947 = vld [vmem:[%s1 + $0x10] sm:$0xf]
          %v948 = vld [vmem:[%s1 + $0x14] sm:$0xf]
          %v949 = vld [vmem:[%s1 + $0x18] sm:$0xf]
          %v950 = vld [vmem:[%s1 + $0x1c] sm:$0xf]
          %v951 = vld [vmem:[%s1 + $0x20] sm:$0xf]
          %v952 = vld [vmem:[%s1 + $0x24] sm:$0xf]
          %v953 = vld [vmem:[%s1 + $0x28] sm:$0xf]
          %v954 = vld [vmem:[%s1 + $0x2c] sm:$0xf]
          %v955 = vld [vmem:[%s1 + $0x30] sm:$0xf]
          %v956 = vld [vmem:[%s1 + $0x34] sm:$0xf]
          %v957 = vld [vmem:[%s1 + $0x38] sm:$0xf]
          %v958 = vld [vmem:[%s1 + $0x3c] sm:$0xf]
          %v959 = vld [vmem:[%s1 + $0x40] sm:$0xf]
          %v960 = vld [vmem:[%s1 + $0x44] sm:$0xf]
          %v961 = vld [vmem:[%s1 + $0x48] sm:$0xf]
          %v962 = vld [vmem:[%s1 + $0x4c] sm:$0xf]
          %v963 = vld [vmem:[%s1 + $0x50] sm:$0xf]
          %v964 = vld [vmem:[%s1 + $0x54] sm:$0xf]
          %v965 = vld [vmem:[%s1 + $0x58] sm:$0xf]
          %v966 = vld [vmem:[%s1 + $0x5c] sm:$0xf]
          %v967 = vld [vmem:[%s1 + $0x60] sm:$0xf]
          %v968 = vld [vmem:[%s1 + $0x64] sm:$0xf]
          %v969 = vld [vmem:[%s1 + $0x68] sm:$0xf]
          %v970 = vld [vmem:[%s1 + $0x6c] sm:$0xf]
          %v971 = vld [vmem:[%s1 + $0x70] sm:$0xf]
          %v972 = vld [vmem:[%s1 + $0x74] sm:$0xf]
          %v973 = vld [vmem:[%s1 + $0x78] sm:$0xf]
          %v974 = vld [vmem:[%s1 + $0x7c] sm:$0xf]
          %v975 = vld [vmem:[%s1 + $0x80] sm:$0xf]
          %v976 = vld [vmem:[%s1 + $0x84] sm:$0xf]
          %v977 = vld [vmem:[%s1 + $0x88] sm:$0xf]
          %v978 = vld [vmem:[%s1 + $0x8c] sm:$0xf]
          %v979 = vld [vmem:[%s1 + $0x90] sm:$0xf]
          %v980 = vld [vmem:[%s1 + $0x94] sm:$0xf]
          %v981 = vld [vmem:[%s1 + $0x98] sm:$0xf]
          %v982 = vld [vmem:[%s1 + $0x9c] sm:$0xf]
          %v983 = vld [vmem:[%s1 + $0xa0] sm:$0xf]
          %v984 = vld [vmem:[%s1 + $0xa4] sm:$0xf]
          %v985 = vld [vmem:[%s1 + $0xa8] sm:$0xf]
          %v986 = vld [vmem:[%s1 + $0xac] sm:$0xf]
          %v987 = vld [vmem:[%s1 + $0xb0] sm:$0xf]
          %v988 = vld [vmem:[%s1 + $0xb4] sm:$0xf]
          %v989 = vld [vmem:[%s1 + $0xb8] sm:$0xf]
          %v990 = vld [vmem:[%s1 + $0xbc] sm:$0xf]
          %v991 = vld [vmem:[%s1 + $0xc0] sm:$0xf]
          %v992 = vld [vmem:[%s1 + $0xc4] sm:$0xf]
          %v993 = vld [vmem:[%s1 + $0xc8] sm:$0xf]
          %v994 = vld [vmem:[%s1 + $0xcc] sm:$0xf]
          %v995 = vld [vmem:[%s1 + $0xd0] sm:$0xf]
          %v996 = vld [vmem:[%s1 + $0xd4] sm:$0xf]
          %v997 = vld [vmem:[%s1 + $0xd8] sm:$0xf]
          %v998 = vld [vmem:[%s1 + $0xdc] sm:$0xf]
          %v999 = vld [vmem:[%s1 + $0xe0] sm:$0xf]
          %v1000 = vld [vmem:[%s1 + $0xe4] sm:$0xf]
          %v1001 = vld [vmem:[%s1 + $0xe8] sm:$0xf]
          %v1002 = vld [vmem:[%s1 + $0xec] sm:$0xf]
          %v1003 = vld [vmem:[%s1 + $0xf0] sm:$0xf]
          %v1004 = vld [vmem:[%s1 + $0xf4] sm:$0xf]
          %v1005 = vld [vmem:[%s1 + $0xf8] sm:$0xf]
          %v1006 = vld [vmem:[%s1 + $0xfc] sm:$0xf]
          %v1007 = vld [vmem:[%s1 + $0x100] sm:$0xf]
          %v1008 = vld [vmem:[%s1 + $0x104] sm:$0xf]
          %v1009 = vld [vmem:[%s1 + $0x108] sm:$0xf]
          %v1010 = vld [vmem:[%s1 + $0x10c] sm:$0xf]
          %v1011 = vld [vmem:[%s1 + $0x110] sm:$0xf]
          %v1012 = vld [vmem:[%s1 + $0x114] sm:$0xf]
          %v1013 = vld [vmem:[%s1 + $0x118] sm:$0xf]
          %v1014 = vld [vmem:[%s1 + $0x11c] sm:$0xf]
          %v1015 = vld [vmem:[%s1 + $0x120] sm:$0xf]
          %v1016 = vld [vmem:[%s1 + $0x124] sm:$0xf]
          %v1017 = vld [vmem:[%s1 + $0x128] sm:$0xf]
          %v1018 = vld [vmem:[%s1 + $0x12c] sm:$0xf]
          %v1019 = vld [vmem:[%s1 + $0x130] sm:$0xf]
          %v1020 = vld [vmem:[%s1 + $0x134] sm:$0xf]
          %v1021 = vld [vmem:[%s1 + $0x138] sm:$0xf]
          %v1022 = vld [vmem:[%s1 + $0x13c] sm:$0xf]
          %v1023 = vld [vmem:[%s1 + $0x140] sm:$0xf]
          %v1024 = vld [vmem:[%s1 + $0x144] sm:$0xf]
          %v1025 = vld [vmem:[%s1 + $0x148] sm:$0xf]
          %v1026 = vld [vmem:[%s1 + $0x14c] sm:$0xf]
          %v1027 = vld [vmem:[%s1 + $0x150] sm:$0xf]
          %v1028 = vld [vmem:[%s1 + $0x154] sm:$0xf]
          %v1029 = vld [vmem:[%s1 + $0x158] sm:$0xf]
          %v1030 = vld [vmem:[%s1 + $0x15c] sm:$0xf]
          %v1031 = vld [vmem:[%s1 + $0x160] sm:$0xf]
          %v1032 = vld [vmem:[%s1 + $0x164] sm:$0xf]
          %v1033 = vld [vmem:[%s1 + $0x168] sm:$0xf]
          %v1034 = vld [vmem:[%s1 + $0x16c] sm:$0xf]
          %v1035 = vld [vmem:[%s1 + $0x170] sm:$0xf]
          %v1036 = vld [vmem:[%s1 + $0x174] sm:$0xf]
          %v1037 = vld [vmem:[%s1 + $0x178] sm:$0xf]
          %v1038 = vld [vmem:[%s1 + $0x17c] sm:$0xf]
          %v1039 = vld [vmem:[#allocation3] sm:$0x1]
          %v1041 = vperm.slane %v1039, 0
          %v1139 = vunpack.c.l.b16 %v943
          %v1140 = vunpack.c.l.b16 %v944
          %v1141 = vunpack.c.l.b16 %v945
          %v1142 = vunpack.c.l.b16 %v946
          %v1143 = vunpack.c.l.b16 %v947
          %v1144 = vunpack.c.l.b16 %v948
          %v1145 = vunpack.c.l.b16 %v949
          %v1146 = vunpack.c.l.b16 %v950
          %v1147 = vunpack.c.l.b16 %v951
          %v1148 = vunpack.c.l.b16 %v952
          %v1149 = vunpack.c.l.b16 %v953
          %v1150 = vunpack.c.l.b16 %v954
          %v1151 = vunpack.c.l.b16 %v955
          %v1152 = vunpack.c.l.b16 %v956
          %v1153 = vunpack.c.l.b16 %v957
          %v1154 = vunpack.c.l.b16 %v958
          %v1155 = vunpack.c.l.b16 %v959
          %v1156 = vunpack.c.l.b16 %v960
          %v1157 = vunpack.c.l.b16 %v961
          %v1158 = vunpack.c.l.b16 %v962
          %v1159 = vunpack.c.l.b16 %v963
          %v1160 = vunpack.c.l.b16 %v964
          %v1161 = vunpack.c.l.b16 %v965
          %v1162 = vunpack.c.l.b16 %v966
          %v1163 = vunpack.c.l.b16 %v967
          %v1164 = vunpack.c.l.b16 %v968
          %v1165 = vunpack.c.l.b16 %v969
          %v1166 = vunpack.c.l.b16 %v970
          %v1167 = vunpack.c.l.b16 %v971
          %v1168 = vunpack.c.l.b16 %v972
          %v1169 = vunpack.c.l.b16 %v973
          %v1170 = vunpack.c.l.b16 %v974
          %v1171 = vunpack.c.l.b16 %v975
          %v1172 = vunpack.c.l.b16 %v976
          %v1173 = vunpack.c.l.b16 %v977
          %v1174 = vunpack.c.l.b16 %v978
          %v1175 = vunpack.c.l.b16 %v979
          %v1176 = vunpack.c.l.b16 %v980
          %v1177 = vunpack.c.l.b16 %v981
          %v1178 = vunpack.c.l.b16 %v982
          %v1179 = vunpack.c.l.b16 %v983
          %v1180 = vunpack.c.l.b16 %v984
          %v1181 = vunpack.c.l.b16 %v985
          %v1182 = vunpack.c.l.b16 %v986
          %v1183 = vunpack.c.l.b16 %v987
          %v1184 = vunpack.c.l.b16 %v988
          %v1185 = vunpack.c.l.b16 %v989
          %v1186 = vunpack.c.l.b16 %v990
          %v1187 = vunpack.c.l.b16 %v991
          %v1188 = vunpack.c.l.b16 %v992
          %v1189 = vunpack.c.l.b16 %v993
          %v1190 = vunpack.c.l.b16 %v994
          %v1191 = vunpack.c.l.b16 %v995
          %v1192 = vunpack.c.l.b16 %v996
          %v1193 = vunpack.c.l.b16 %v997
          %v1194 = vunpack.c.l.b16 %v998
          %v1195 = vunpack.c.l.b16 %v999
          %v1196 = vunpack.c.l.b16 %v1000
          %v1197 = vunpack.c.l.b16 %v1001
          %v1198 = vunpack.c.l.b16 %v1002
          %v1199 = vunpack.c.l.b16 %v1003
          %v1200 = vunpack.c.l.b16 %v1004
          %v1201 = vunpack.c.l.b16 %v1005
          %v1202 = vunpack.c.l.b16 %v1006
          %v1203 = vunpack.c.l.b16 %v1007
          %v1204 = vunpack.c.l.b16 %v1008
          %v1205 = vunpack.c.l.b16 %v1009
          %v1206 = vunpack.c.l.b16 %v1010
          %v1207 = vunpack.c.l.b16 %v1011
          %v1208 = vunpack.c.l.b16 %v1012
          %v1209 = vunpack.c.l.b16 %v1013
          %v1210 = vunpack.c.l.b16 %v1014
          %v1211 = vunpack.c.l.b16 %v1015
          %v1212 = vunpack.c.l.b16 %v1016
          %v1213 = vunpack.c.l.b16 %v1017
          %v1214 = vunpack.c.l.b16 %v1018
          %v1215 = vunpack.c.l.b16 %v1019
          %v1216 = vunpack.c.l.b16 %v1020
          %v1217 = vunpack.c.l.b16 %v1021
          %v1218 = vunpack.c.l.b16 %v1022
          %v1219 = vunpack.c.l.b16 %v1023
          %v1220 = vunpack.c.l.b16 %v1024
          %v1221 = vunpack.c.l.b16 %v1025
          %v1222 = vunpack.c.l.b16 %v1026
          %v1223 = vunpack.c.l.b16 %v1027
          %v1224 = vunpack.c.l.b16 %v1028
          %v1225 = vunpack.c.l.b16 %v1029
          %v1226 = vunpack.c.l.b16 %v1030
          %v1227 = vunpack.c.l.b16 %v1031
          %v1228 = vunpack.c.l.b16 %v1032
          %v1229 = vunpack.c.l.b16 %v1033
          %v1230 = vunpack.c.l.b16 %v1034
          %v1231 = vunpack.c.l.b16 %v1035
          %v1232 = vunpack.c.l.b16 %v1036
          %v1233 = vunpack.c.l.b16 %v1037
          %v1234 = vunpack.c.l.b16 %v1038
          %v1235 = vpack.c.b16 %v1140, %v1139
          %v1236 = vpack.c.b16 %v1142, %v1141
          %v1237 = vpack.c.b16 %v1144, %v1143
          %v1238 = vpack.c.b16 %v1146, %v1145
          %v1239 = vpack.c.b16 %v1148, %v1147
          %v1240 = vpack.c.b16 %v1150, %v1149
          %v1241 = vpack.c.b16 %v1152, %v1151
          %v1242 = vpack.c.b16 %v1154, %v1153
          %v1243 = vpack.c.b16 %v1156, %v1155
          %v1244 = vpack.c.b16 %v1158, %v1157
          %v1245 = vpack.c.b16 %v1160, %v1159
          %v1246 = vpack.c.b16 %v1162, %v1161
          %v1247 = vpack.c.b16 %v1164, %v1163
          %v1248 = vpack.c.b16 %v1166, %v1165
          %v1249 = vpack.c.b16 %v1168, %v1167
          %v1250 = vpack.c.b16 %v1170, %v1169
          %v1251 = vpack.c.b16 %v1172, %v1171
          %v1252 = vpack.c.b16 %v1174, %v1173
          %v1253 = vpack.c.b16 %v1176, %v1175
          %v1254 = vpack.c.b16 %v1178, %v1177
          %v1255 = vpack.c.b16 %v1180, %v1179
          %v1256 = vpack.c.b16 %v1182, %v1181
          %v1257 = vpack.c.b16 %v1184, %v1183
          %v1258 = vpack.c.b16 %v1186, %v1185
          %v1259 = vpack.c.b16 %v1188, %v1187
          %v1260 = vpack.c.b16 %v1190, %v1189
          %v1261 = vpack.c.b16 %v1192, %v1191
          %v1262 = vpack.c.b16 %v1194, %v1193
          %v1263 = vpack.c.b16 %v1196, %v1195
          %v1264 = vpack.c.b16 %v1198, %v1197
          %v1265 = vpack.c.b16 %v1200, %v1199
          %v1266 = vpack.c.b16 %v1202, %v1201
          %v1267 = vpack.c.b16 %v1204, %v1203
          %v1268 = vpack.c.b16 %v1206, %v1205
          %v1269 = vpack.c.b16 %v1208, %v1207
          %v1270 = vpack.c.b16 %v1210, %v1209
          %v1271 = vpack.c.b16 %v1212, %v1211
          %v1272 = vpack.c.b16 %v1214, %v1213
          %v1273 = vpack.c.b16 %v1216, %v1215
          %v1274 = vpack.c.b16 %v1218, %v1217
          %v1275 = vpack.c.b16 %v1220, %v1219
          %v1276 = vpack.c.b16 %v1222, %v1221
          %v1277 = vpack.c.b16 %v1224, %v1223
          %v1278 = vpack.c.b16 %v1226, %v1225
          %v1279 = vpack.c.b16 %v1228, %v1227
          %v1280 = vpack.c.b16 %v1230, %v1229
          %v1281 = vpack.c.b16 %v1232, %v1231
          %v1282 = vpack.c.b16 %v1234, %v1233
          %1331 = vmatpush.bf16.msra.mxu0 %v1242
          %1332 = vmatpush.bf16.msra.mxu0 %v1241
          %1333 = vmatpush.bf16.msra.mxu0 %v1240
          %1334 = vmatpush.bf16.msra.mxu0 %v1239
          %1335 = vmatpush.bf16.msra.mxu0 %v1238
          %1336 = vmatpush.bf16.msra.mxu0 %v1237
          %1337 = vmatpush.bf16.msra.mxu0 %v1236
          %1338 = vmatpush.bf16.msra.mxu0 %v1235
          %1339 = vmatmul.bf16.gmra.mxu0 %v937
          %v1340 = vpop.f32.mrf.mxu0
          %v1341 = vadd.f32 %v1041, %v1340
          %v1342 = vpop.f32.mrf.mxu0
          %1343 = vdwg.mxu0
          %1344 = vmatpush.bf16.msra.mxu0 %v1250
          %1345 = vmatpush.bf16.msra.mxu0 %v1249
          %1346 = vmatpush.bf16.msra.mxu0 %v1248
          %1347 = vmatpush.bf16.msra.mxu0 %v1247
          %1348 = vmatpush.bf16.msra.mxu0 %v1246
          %1349 = vmatpush.bf16.msra.mxu0 %v1245
          %1350 = vmatpush.bf16.msra.mxu0 %v1244
          %1351 = vmatpush.bf16.msra.mxu0 %v1243
          %1352 = vmatmul.bf16.gmra.mxu0 %v938
          %v1353 = vpop.f32.mrf.mxu0
          %v1354 = vadd.f32 %v1341, %v1353
          %v1355 = vpop.f32.mrf.mxu0
          %1356 = vdwg.mxu0
          %1357 = vmatpush.bf16.msra.mxu0 %v1258
          %1358 = vmatpush.bf16.msra.mxu0 %v1257
          %1359 = vmatpush.bf16.msra.mxu0 %v1256
          %1360 = vmatpush.bf16.msra.mxu0 %v1255
          %1361 = vmatpush.bf16.msra.mxu0 %v1254
          %1362 = vmatpush.bf16.msra.mxu0 %v1253
          %1363 = vmatpush.bf16.msra.mxu0 %v1252
          %1364 = vmatpush.bf16.msra.mxu0 %v1251
          %1365 = vmatmul.bf16.gmra.mxu0 %v939
          %v1366 = vpop.f32.mrf.mxu0
          %v1367 = vadd.f32 %v1354, %v1366
          %v1368 = vpop.f32.mrf.mxu0
          %1369 = vdwg.mxu0
          %1370 = vmatpush.bf16.msra.mxu0 %v1266
          %1371 = vmatpush.bf16.msra.mxu0 %v1265
          %1372 = vmatpush.bf16.msra.mxu0 %v1264
          %1373 = vmatpush.bf16.msra.mxu0 %v1263
          %1374 = vmatpush.bf16.msra.mxu0 %v1262
          %1375 = vmatpush.bf16.msra.mxu0 %v1261
          %1376 = vmatpush.bf16.msra.mxu0 %v1260
          %1377 = vmatpush.bf16.msra.mxu0 %v1259
          %1378 = vmatmul.bf16.gmra.mxu0 %v940
          %v1379 = vpop.f32.mrf.mxu0
          %v1380 = vadd.f32 %v1367, %v1379
          %v1381 = vpop.f32.mrf.mxu0
          %1382 = vdwg.mxu0
          %1383 = vmatpush.bf16.msra.mxu0 %v1274
          %1384 = vmatpush.bf16.msra.mxu0 %v1273
          %1385 = vmatpush.bf16.msra.mxu0 %v1272
          %1386 = vmatpush.bf16.msra.mxu0 %v1271
          %1387 = vmatpush.bf16.msra.mxu0 %v1270
          %1388 = vmatpush.bf16.msra.mxu0 %v1269
          %1389 = vmatpush.bf16.msra.mxu0 %v1268
          %1390 = vmatpush.bf16.msra.mxu0 %v1267
          %1391 = vmatmul.bf16.gmra.mxu0 %v941
          %v1392 = vpop.f32.mrf.mxu0
          %v1393 = vadd.f32 %v1380, %v1392
          %v1394 = vpop.f32.mrf.mxu0
          %1395 = vdwg.mxu0
          %1396 = vmatpush.bf16.msra.mxu0 %v1282
          %1397 = vmatpush.bf16.msra.mxu0 %v1281
          %1398 = vmatpush.bf16.msra.mxu0 %v1280
          %1399 = vmatpush.bf16.msra.mxu0 %v1279
          %1400 = vmatpush.bf16.msra.mxu0 %v1278
          %1401 = vmatpush.bf16.msra.mxu0 %v1277
          %1402 = vmatpush.bf16.msra.mxu0 %v1276
          %1403 = vmatpush.bf16.msra.mxu0 %v1275
          %1404 = vmatmul.bf16.gmra.mxu0 %v942
          %v1405 = vpop.f32.mrf.mxu0
          %v1406 = vadd.f32 %v1393, %v1405
          %v1407 = vpop.f32.mrf.mxu0
          %1408 = vdwg.mxu0
          %v1409 = vld [vmem:[#allocation5] sm:$0x1]
          %v1411 = vrot.slane %v1406, 7
          %vm1413 = vcmask 1040384
          %v1414 = vsel %vm1413, %v1409, %v1411
          %vm1415 = vcmask 1044480
          %v1416 = vsel %vm1415, %v1414, 0.0
          %v1417 = vld [vmem:[#allocation7] sm:$0xff]
          %v1418 = vadd.f32 %v1416, %v1417
          %1419 = vst [vmem:[#allocation2] sm:$0xff] %v1418
        $region136: #{vl_model_forward.2} parent=87 // pred_fallthru
          _
        %v1420 = vld [vmem:[#allocation2] sm:$0xff]
        %v1421 = vld [vmem:[%s733] sm:$0xf]
        %v1422 = vlaneseq
        %v1423 = vand.u32 %v1422, 127
        %vm1424 = vcmp.lt.s32.totalorder %v1423, 5
        %v1425 = vsel %vm1424, 0.0, -1e+30
        %1426 = vadd.xlane.f32.xlu0 %v1420
        %v1427 = vpop.xlane.xlu0 %1426
        %v1428 = vrcp.pop 128.0
        %v1429 = vmul.f32 128.0, %v1428
        %v1430 = vsub.f32 1.0, %v1429
        %v1431 = vmul.f32 %v1428, %v1430
        %v1432 = vadd.f32 %v1428, %v1431
        %vm1433 = vweird.f32 %v1428
        %v1434 = vsel %vm1433, %v1428, %v1432
        %v1435 = vmul.f32 %v1427, %v1434
        %v1436 = vsub.f32 %v1420, %v1435
        %v1437 = vmul.f32 %v1436, %v1436
        %1438 = vadd.xlane.f32.xlu0 %v1437
        %v1439 = vpop.xlane.xlu0 %1438
        %v1440 = vmul.f32 %v1439, %v1434
        %v1441 = vadd.f32 %v1440, 1e-05
        %v1442 = vrsqrt.pop %v1441
        %v1443 = vmul.f32 %v1442, %v1441
        %v1444 = vmul.f32 %v1443, %v1442
        %v1445 = vmul.f32 0.5, %v1444
        %v1446 = vsub.f32 1.5, %v1445
        %v1447 = vmul.f32 %v1442, %v1446
        %vm1448 = vweird.f32 %v1441
        %vm1449 = vweird.f32 %v1442
        %vm1450 = vmor %vm1448, %vm1449
        %v1451 = vsel %vm1450, %v1442, %v1447
        %v1452 = vmul.f32 %v1436, %v1451
        %v1453 = vperm.slane %v1421, 0
        %v1454 = vmul.f32 %v1452, %v1453
        %v1455 = vperm.slane %v1421, 1
        %v1456 = vadd.f32 %v1454, %v1455
        %v1457 = vpack.c.bf16 %v1456, %v1456
        %v1458 = vld [vmem:[%s889] sm:$0xff]
        %v1459 = vld [vmem:[%s889 + $0x8] sm:$0xf]
        %v1460 = vld [vmem:[%s889 + $0xc] sm:$0xff]
        %v1461 = vld [vmem:[%s889 + $0x14] sm:$0xf]
        %v1462 = vld [vmem:[%s889 + $0x18] sm:$0xff]
        %v1463 = vld [vmem:[%s889 + $0x20] sm:$0xf]
        %v1464 = vld [vmem:[%s889 + $0x24] sm:$0xff]
        %v1465 = vld [vmem:[%s889 + $0x2c] sm:$0xf]
        %v1466 = vld [vmem:[%s889 + $0x30] sm:$0xff]
        %v1467 = vld [vmem:[%s889 + $0x38] sm:$0xf]
        %v1468 = vld [vmem:[%s889 + $0x3c] sm:$0xff]
        %v1469 = vld [vmem:[%s889 + $0x44] sm:$0xf]
        %v1470 = vld [vmem:[%s889 + $0x48] sm:$0xff]
        %v1471 = vld [vmem:[%s889 + $0x50] sm:$0xf]
        %v1472 = vld [vmem:[%s889 + $0x54] sm:$0xff]
        %v1473 = vld [vmem:[%s889 + $0x5c] sm:$0xf]
        %v1474 = vld [vmem:[%s889 + $0x60] sm:$0xff]
        %v1475 = vld [vmem:[%s889 + $0x68] sm:$0xf]
        %v1476 = vld [vmem:[%s889 + $0x6c] sm:$0xff]
        %v1477 = vld [vmem:[%s889 + $0x74] sm:$0xf]
        %v1478 = vld [vmem:[%s889 + $0x78] sm:$0xff]
        %v1479 = vld [vmem:[%s889 + $0x80] sm:$0xf]
        %v1480 = vld [vmem:[%s889 + $0x84] sm:$0xff]
        %v1481 = vld [vmem:[%s889 + $0x8c] sm:$0xf]
        %v1482 = vld [vmem:[%s889 + $0x90] sm:$0xff]
        %v1483 = vld [vmem:[%s889 + $0x98] sm:$0xf]
        %v1484 = vld [vmem:[%s889 + $0x9c] sm:$0xff]
        %v1485 = vld [vmem:[%s889 + $0xa4] sm:$0xf]
        %v1486 = vld [vmem:[%s889 + $0xa8] sm:$0xff]
        %v1487 = vld [vmem:[%s889 + $0xb0] sm:$0xf]
        %v1488 = vld [vmem:[%s889 + $0xb4] sm:$0xff]
        %v1489 = vld [vmem:[%s889 + $0xbc] sm:$0xf]
        %v1490 = vld [vmem:[%s743] sm:$0x7]
        %v1492 = vperm.slane %v1490, 0
        %v1493 = vperm.slane %v1490, 1
        %v1494 = vperm.slane %v1490, 2
        %v1530 = vunpack.c.l.b16 %v1458
        %v1531 = vunpack.c.h.b16 %v1458
        %v1532 = vunpack.c.l.b16 %v1459
        %v1533 = vunpack.c.l.b16 %v1460
        %v1534 = vunpack.c.h.b16 %v1460
        %v1535 = vunpack.c.l.b16 %v1461
        %v1536 = vunpack.c.l.b16 %v1462
        %v1537 = vunpack.c.h.b16 %v1462
        %v1538 = vunpack.c.l.b16 %v1463
        %v1539 = vunpack.c.l.b16 %v1464
        %v1540 = vunpack.c.h.b16 %v1464
        %v1541 = vunpack.c.l.b16 %v1465
        %v1542 = vunpack.c.l.b16 %v1466
        %v1543 = vunpack.c.h.b16 %v1466
        %v1544 = vunpack.c.l.b16 %v1467
        %v1545 = vunpack.c.l.b16 %v1468
        %v1546 = vunpack.c.h.b16 %v1468
        %v1547 = vunpack.c.l.b16 %v1469
        %v1548 = vunpack.c.l.b16 %v1470
        %v1549 = vunpack.c.h.b16 %v1470
        %v1550 = vunpack.c.l.b16 %v1471
        %v1551 = vunpack.c.l.b16 %v1472
        %v1552 = vunpack.c.h.b16 %v1472
        %v1553 = vunpack.c.l.b16 %v1473
        %v1554 = vunpack.c.l.b16 %v1474
        %v1555 = vunpack.c.h.b16 %v1474
        %v1556 = vunpack.c.l.b16 %v1475
        %v1557 = vunpack.c.l.b16 %v1476
        %v1558 = vunpack.c.h.b16 %v1476
        %v1559 = vunpack.c.l.b16 %v1477
        %v1560 = vunpack.c.l.b16 %v1478
        %v1561 = vunpack.c.h.b16 %v1478
        %v1562 = vunpack.c.l.b16 %v1479
        %v1563 = vunpack.c.l.b16 %v1480
        %v1564 = vunpack.c.h.b16 %v1480
        %v1565 = vunpack.c.l.b16 %v1481
        %v1566 = vunpack.c.l.b16 %v1482
        %v1567 = vunpack.c.h.b16 %v1482
        %v1568 = vunpack.c.l.b16 %v1483
        %v1569 = vunpack.c.l.b16 %v1484
        %v1570 = vunpack.c.h.b16 %v1484
        %v1571 = vunpack.c.l.b16 %v1485
        %v1572 = vunpack.c.l.b16 %v1486
        %v1573 = vunpack.c.h.b16 %v1486
        %v1574 = vunpack.c.l.b16 %v1487
        %v1575 = vunpack.c.l.b16 %v1488
        %v1576 = vunpack.c.h.b16 %v1488
        %v1577 = vunpack.c.l.b16 %v1489
        %v1578 = vpack.c.b16 %v1533, %v1530
        %v1579 = vpack.c.b16 %v1534, %v1531
        %v1580 = vpack.c.b16 %v1535, %v1532
        %v1581 = vpack.c.b16 %v1539, %v1536
        %v1582 = vpack.c.b16 %v1540, %v1537
        %v1583 = vpack.c.b16 %v1541, %v1538
        %v1584 = vpack.c.b16 %v1545, %v1542
        %v1585 = vpack.c.b16 %v1546, %v1543
        %v1586 = vpack.c.b16 %v1547, %v1544
        %v1587 = vpack.c.b16 %v1551, %v1548
        %v1588 = vpack.c.b16 %v1552, %v1549
        %v1589 = vpack.c.b16 %v1553, %v1550
        %v1590 = vpack.c.b16 %v1557, %v1554
        %v1591 = vpack.c.b16 %v1558, %v1555
        %v1592 = vpack.c.b16 %v1559, %v1556
        %v1593 = vpack.c.b16 %v1563, %v1560
        %v1594 = vpack.c.b16 %v1564, %v1561
        %v1595 = vpack.c.b16 %v1565, %v1562
        %v1596 = vpack.c.b16 %v1569, %v1566
        %v1597 = vpack.c.b16 %v1570, %v1567
        %v1598 = vpack.c.b16 %v1571, %v1568
        %v1599 = vpack.c.b16 %v1575, %v1572
        %v1600 = vpack.c.b16 %v1576, %v1573
        %v1601 = vpack.c.b16 %v1577, %v1574
        %1626 = vmatpush.bf16.msra.mxu0 %v1599
        %1627 = vmatpush.bf16.msra.mxu0 %v1596
        %1628 = vmatpush.bf16.msra.mxu0 %v1593
        %1629 = vmatpush.bf16.msra.mxu0 %v1590
        %1630 = vmatpush.bf16.msra.mxu0 %v1587
        %1631 = vmatpush.bf16.msra.mxu0 %v1584
        %1632 = vmatpush.bf16.msra.mxu0 %v1581
        %1633 = vmatpush.bf16.msra.mxu0 %v1578
        %1634 = vmatmul.bf16.gmra.mxu0 %v1457
        %v1635 = vpop.f32.mrf.mxu0
        %v1636 = vadd.f32 %v1492, %v1635
        %v1637 = vpop.f32.mrf.mxu0
        %1638 = vdwg.mxu0
        %1639 = vmatpush.bf16.msra.mxu0 %v1600
        %1640 = vmatpush.bf16.msra.mxu0 %v1597
        %1641 = vmatpush.bf16.msra.mxu0 %v1594
        %1642 = vmatpush.bf16.msra.mxu0 %v1591
        %1643 = vmatpush.bf16.msra.mxu0 %v1588
        %1644 = vmatpush.bf16.msra.mxu0 %v1585
        %1645 = vmatpush.bf16.msra.mxu0 %v1582
        %1646 = vmatpush.bf16.msra.mxu0 %v1579
        %1647 = vmatmul.bf16.gmra.mxu0 %v1457
        %v1648 = vpop.f32.mrf.mxu0
        %v1649 = vadd.f32 %v1493, %v1648
        %v1650 = vpop.f32.mrf.mxu0
        %1651 = vdwg.mxu0
        %1652 = vmatpush.bf16.msra.mxu0 %v1601
        %1653 = vmatpush.bf16.msra.mxu0 %v1598
        %1654 = vmatpush.bf16.msra.mxu0 %v1595
        %1655 = vmatpush.bf16.msra.mxu0 %v1592
        %1656 = vmatpush.bf16.msra.mxu0 %v1589
        %1657 = vmatpush.bf16.msra.mxu0 %v1586
        %1658 = vmatpush.bf16.msra.mxu0 %v1583
        %1659 = vmatpush.bf16.msra.mxu0 %v1580
        %1660 = vmatmul.bf16.gmra.mxu0 %v1457
        %v1661 = vpop.f32.mrf.mxu0
        %v1662 = vadd.f32 %v1494, %v1661
        %v1663 = vpop.f32.mrf.mxu0
        %1664 = vdwg.mxu0
        %v1665 = vld [vmem:[%s894] sm:$0xf]
        %v1666 = vld [vmem:[%s894 + $0x4] sm:$0xf]
        %v1667 = vld [vmem:[%s894 + $0x8] sm:$0xf]
        %v1668 = vld [vmem:[%s894 + $0xc] sm:$0xf]
        %v1669 = vld [vmem:[%s894 + $0x10] sm:$0xf]
        %v1670 = vld [vmem:[%s894 + $0x14] sm:$0xf]
        %v1671 = vld [vmem:[%s894 + $0x18] sm:$0xf]
        %v1672 = vld [vmem:[%s894 + $0x1c] sm:$0xf]
        %v1673 = vld [vmem:[%s894 + $0x20] sm:$0xf]
        %v1674 = vld [vmem:[%s894 + $0x24] sm:$0xf]
        %v1675 = vld [vmem:[%s894 + $0x28] sm:$0xf]
        %v1676 = vld [vmem:[%s894 + $0x2c] sm:$0xf]
        %v1677 = vld [vmem:[%s894 + $0x30] sm:$0xf]
        %v1678 = vld [vmem:[%s894 + $0x34] sm:$0xf]
        %v1679 = vld [vmem:[%s894 + $0x38] sm:$0xf]
        %v1680 = vld [vmem:[%s894 + $0x3c] sm:$0xf]
        %v1681 = vld [vmem:[%s752] sm:$0x1]
        %v1682 = vpack.c.bf16 %v1636, %v1636
        %v1683 = vpack.c.bf16 %v1649, %v1649
        %v1684 = vpack.c.bf16 %v1662, %v1662
        %vm1685 = vcmask 261120
        %v1687 = vsel %vm1685, %v1682, 0
        %v1690 = vsel %vm1685, %v1683, 0
        %1692 = vmatpush.bf16.xpose.msra.mxu0 0
        %1693 = vmatpush.bf16.xpose.msra.mxu0 0
        %1694 = vmatpush.bf16.xpose.msra.mxu0 0
        %1695 = vmatpush.bf16.xpose.msra.mxu0 0
        %1696 = vmatpush.bf16.xpose.msra.mxu0 0
        %1697 = vmatpush.bf16.xpose.msra.mxu0 0
        %1698 = vmatpush.bf16.xpose.msra.mxu0 0
        %1699 = vmatpush.bf16.xpose.msra.mxu0 %v1690
        %1700 = vmatmul.bf16.gmra.mxu0 %v1687
        %v1701 = vpop.f32.mrf.mxu0
        %v1702 = vadd.f32 %v1425, %v1701
        %v1703 = vpop.f32.mrf.mxu0
        %1704 = vdwg.mxu0
        %vm1705 = vcmask 64512
        %v1706 = vsel %vm1705, %v1702, -inf
        %1707 = vmax.xlane.f32.xlu0 %v1706
        %v1708 = vpop.xlane.xlu0 %1707
        %v1709 = vsub.f32 %v1702, %v1708
        %v1710 = vmul.f32 %v1709, 1.442695
        %v1711 = vpow.pop %v1710
        %v1712 = vsel %vm1705, %v1711, 0.0
        %1713 = vadd.xlane.f32.xlu0 %v1712
        %v1714 = vpop.xlane.xlu0 %1713
        %v1715 = vpack.c.bf16 %v1711, %v1711
        %v1717 = vsel %vm1705, %v1715, 0
        %vm1719 = vcmask 1043456
        %v1721 = vsel %vm1719, %v1684, 0
        %1723 = vmatpush.bf16.msra.mxu0 0
        %1724 = vmatpush.bf16.msra.mxu0 0
        %1725 = vmatpush.bf16.msra.mxu0 0
        %1726 = vmatpush.bf16.msra.mxu0 0
        %1727 = vmatpush.bf16.msra.mxu0 0
        %1728 = vmatpush.bf16.msra.mxu0 0
        %1729 = vmatpush.bf16.msra.mxu0 0
        %1730 = vmatpush.bf16.msra.mxu0 %v1721
        %1731 = vmatmul.bf16.gmra.mxu0 %v1717
        %v1732 = vpop.f32.mrf.mxu0
        %v1733 = vadd.f32 0.0, %v1732
        %v1734 = vpop.f32.mrf.mxu0
        %1735 = vdwg.mxu0
        %v1736 = vrcp.pop %v1714
        %v1737 = vmul.f32 %v1733, %v1736
        %v1739 = vunpack.c.l.b16 %v1682
        %v1740 = vpack.c.b16 %v1739, %v1739
        %1741 = vrot.lane.b32.xlu0 %v1740, 96
        %v1742 = vpop.permute.xlu0 %1741
        %v1744 = vunpack.c.l.b16 %v1683
        %v1745 = vpack.c.b16 %v1744, %v1744
        %1746 = vrot.lane.b32.xlu0 %v1745, 96
        %v1747 = vpop.permute.xlu0 %1746
        %v1749 = vsel %vm1685, %v1742, 0
        %v1752 = vsel %vm1685, %v1747, 0
        %1754 = vmatpush.bf16.xpose.msra.mxu0 0
        %1755 = vmatpush.bf16.xpose.msra.mxu0 0
        %1756 = vmatpush.bf16.xpose.msra.mxu0 0
        %1757 = vmatpush.bf16.xpose.msra.mxu0 0
        %1758 = vmatpush.bf16.xpose.msra.mxu0 0
        %1759 = vmatpush.bf16.xpose.msra.mxu0 0
        %1760 = vmatpush.bf16.xpose.msra.mxu0 0
        %1761 = vmatpush.bf16.xpose.msra.mxu0 %v1752
        %1762 = vmatmul.bf16.gmra.mxu0 %v1749
        %v1763 = vpop.f32.mrf.mxu0
        %v1764 = vadd.f32 %v1425, %v1763
        %v1765 = vpop.f32.mrf.mxu0
        %1766 = vdwg.mxu0
        %v1767 = vsel %vm1705, %v1764, -inf
        %1768 = vmax.xlane.f32.xlu0 %v1767
        %v1769 = vpop.xlane.xlu0 %1768
        %v1770 = vsub.f32 %v1764, %v1769
        %v1771 = vmul.f32 %v1770, 1.442695
        %v1772 = vpow.pop %v1771
        %v1773 = vsel %vm1705, %v1772, 0.0
        %1774 = vadd.xlane.f32.xlu0 %v1773
        %v1775 = vpop.xlane.xlu0 %1774
        %v1776 = vpack.c.bf16 %v1772, %v1772
        %v1778 = vunpack.c.l.b16 %v1684
        %v1779 = vpack.c.b16 %v1778, %v1778
        %1780 = vrot.lane.b32.xlu0 %v1779, 96
        %v1781 = vpop.permute.xlu0 %1780
        %v1783 = vsel %vm1705, %v1776, 0
        %v1786 = vsel %vm1719, %v1781, 0
        %1788 = vmatpush.bf16.msra.mxu0 0
        %1789 = vmatpush.bf16.msra.mxu0 0
        %1790 = vmatpush.bf16.msra.mxu0 0
        %1791 = vmatpush.bf16.msra.mxu0 0
        %1792 = vmatpush.bf16.msra.mxu0 0
        %1793 = vmatpush.bf16.msra.mxu0 0
        %1794 = vmatpush.bf16.msra.mxu0 0
        %1795 = vmatpush.bf16.msra.mxu0 %v1786
        %1796 = vmatmul.bf16.gmra.mxu0 %v1783
        %v1797 = vpop.f32.mrf.mxu0
        %v1798 = vadd.f32 0.0, %v1797
        %v1799 = vpop.f32.mrf.mxu0
        %1800 = vdwg.mxu0
        %v1801 = vrcp.pop %v1775
        %v1802 = vmul.f32 %v1798, %v1801
        %1803 = vrot.lane.b32.xlu0 %v1740, 64
        %v1804 = vpop.permute.xlu0 %1803
        %1805 = vrot.lane.b32.xlu0 %v1745, 64
        %v1806 = vpop.permute.xlu0 %1805
        %v1808 = vsel %vm1685, %v1804, 0
        %v1811 = vsel %vm1685, %v1806, 0
        %1813 = vmatpush.bf16.xpose.msra.mxu0 0
        %1814 = vmatpush.bf16.xpose.msra.mxu0 0
        %1815 = vmatpush.bf16.xpose.msra.mxu0 0
        %1816 = vmatpush.bf16.xpose.msra.mxu0 0
        %1817 = vmatpush.bf16.xpose.msra.mxu0 0
        %1818 = vmatpush.bf16.xpose.msra.mxu0 0
        %1819 = vmatpush.bf16.xpose.msra.mxu0 0
        %1820 = vmatpush.bf16.xpose.msra.mxu0 %v1811
        %1821 = vmatmul.bf16.gmra.mxu0 %v1808
        %v1822 = vpop.f32.mrf.mxu0
        %v1823 = vadd.f32 %v1425, %v1822
        %v1824 = vpop.f32.mrf.mxu0
        %1825 = vdwg.mxu0
        %v1826 = vsel %vm1705, %v1823, -inf
        %1827 = vmax.xlane.f32.xlu0 %v1826
        %v1828 = vpop.xlane.xlu0 %1827
        %v1829 = vsub.f32 %v1823, %v1828
        %v1830 = vmul.f32 %v1829, 1.442695
        %v1831 = vpow.pop %v1830
        %v1832 = vsel %vm1705, %v1831, 0.0
        %1833 = vadd.xlane.f32.xlu0 %v1832
        %v1834 = vpop.xlane.xlu0 %1833
        %v1835 = vpack.c.bf16 %v1831, %v1831
        %1836 = vrot.lane.b32.xlu0 %v1779, 64
        %v1837 = vpop.permute.xlu0 %1836
        %v1839 = vsel %vm1705, %v1835, 0
        %v1842 = vsel %vm1719, %v1837, 0
        %1844 = vmatpush.bf16.msra.mxu0 0
        %1845 = vmatpush.bf16.msra.mxu0 0
        %1846 = vmatpush.bf16.msra.mxu0 0
        %1847 = vmatpush.bf16.msra.mxu0 0
        %1848 = vmatpush.bf16.msra.mxu0 0
        %1849 = vmatpush.bf16.msra.mxu0 0
        %1850 = vmatpush.bf16.msra.mxu0 0
        %1851 = vmatpush.bf16.msra.mxu0 %v1842
        %1852 = vmatmul.bf16.gmra.mxu0 %v1839
        %v1853 = vpop.f32.mrf.mxu0
        %v1854 = vadd.f32 0.0, %v1853
        %v1855 = vpop.f32.mrf.mxu0
        %1856 = vdwg.mxu0
        %v1857 = vrcp.pop %v1834
        %v1858 = vmul.f32 %v1854, %v1857
        %1859 = vrot.lane.b32.xlu0 %v1740, 32
        %v1860 = vpop.permute.xlu0 %1859
        %1861 = vrot.lane.b32.xlu0 %v1745, 32
        %v1862 = vpop.permute.xlu0 %1861
        %v1864 = vsel %vm1685, %v1860, 0
        %v1867 = vsel %vm1685, %v1862, 0
        %1869 = vmatpush.bf16.xpose.msra.mxu0 0
        %1870 = vmatpush.bf16.xpose.msra.mxu0 0
        %1871 = vmatpush.bf16.xpose.msra.mxu0 0
        %1872 = vmatpush.bf16.xpose.msra.mxu0 0
        %1873 = vmatpush.bf16.xpose.msra.mxu0 0
        %1874 = vmatpush.bf16.xpose.msra.mxu0 0
        %1875 = vmatpush.bf16.xpose.msra.mxu0 0
        %1876 = vmatpush.bf16.xpose.msra.mxu0 %v1867
        %1877 = vmatmul.bf16.gmra.mxu0 %v1864
        %v1878 = vpop.f32.mrf.mxu0
        %v1879 = vadd.f32 %v1425, %v1878
        %v1880 = vpop.f32.mrf.mxu0
        %1881 = vdwg.mxu0
        %v1882 = vsel %vm1705, %v1879, -inf
        %1883 = vmax.xlane.f32.xlu0 %v1882
        %v1884 = vpop.xlane.xlu0 %1883
        %v1885 = vsub.f32 %v1879, %v1884
        %v1886 = vmul.f32 %v1885, 1.442695
        %v1887 = vpow.pop %v1886
        %v1888 = vsel %vm1705, %v1887, 0.0
        %1889 = vadd.xlane.f32.xlu0 %v1888
        %v1890 = vpop.xlane.xlu0 %1889
        %v1891 = vpack.c.bf16 %v1887, %v1887
        %1892 = vrot.lane.b32.xlu0 %v1779, 32
        %v1893 = vpop.permute.xlu0 %1892
        %v1895 = vsel %vm1705, %v1891, 0
        %v1898 = vsel %vm1719, %v1893, 0
        %1900 = vmatpush.bf16.msra.mxu0 0
        %1901 = vmatpush.bf16.msra.mxu0 0
        %1902 = vmatpush.bf16.msra.mxu0 0
        %1903 = vmatpush.bf16.msra.mxu0 0
        %1904 = vmatpush.bf16.msra.mxu0 0
        %1905 = vmatpush.bf16.msra.mxu0 0
        %1906 = vmatpush.bf16.msra.mxu0 0
        %1907 = vmatpush.bf16.msra.mxu0 %v1898
        %1908 = vmatmul.bf16.gmra.mxu0 %v1895
        %v1909 = vpop.f32.mrf.mxu0
        %v1910 = vadd.f32 0.0, %v1909
        %v1911 = vpop.f32.mrf.mxu0
        %1912 = vdwg.mxu0
        %v1913 = vrcp.pop %v1890
        %v1914 = vmul.f32 %v1910, %v1913
        %1916 = vrot.lane.b32.xlu0 %v1802, 32
        %v1917 = vpop.permute.xlu0 %1916
        %1920 = vrot.lane.b32.xlu0 %v1858, 64
        %v1921 = vpop.permute.xlu0 %1920
        %1924 = vrot.lane.b32.xlu0 %v1914, 96
        %v1925 = vpop.permute.xlu0 %1924
        %v1927 = vsel %vm1685, %v1737, %v1917
        %vm1928 = vcmask 523264
        %v1929 = vsel %vm1928, %v1927, %v1921
        %vm1930 = vcmask 785408
        %v1931 = vsel %vm1930, %v1929, %v1925
        %v1932 = vpack.c.bf16 %v1931, %v1931
        %v1934 = vperm.slane %v1681, 0
        %v1952 = vunpack.c.l.b16 %v1665
        %v1953 = vunpack.c.l.b16 %v1666
        %v1954 = vunpack.c.l.b16 %v1667
        %v1955 = vunpack.c.l.b16 %v1668
        %v1956 = vunpack.c.l.b16 %v1669
        %v1957 = vunpack.c.l.b16 %v1670
        %v1958 = vunpack.c.l.b16 %v1671
        %v1959 = vunpack.c.l.b16 %v1672
        %v1960 = vunpack.c.l.b16 %v1673
        %v1961 = vunpack.c.l.b16 %v1674
        %v1962 = vunpack.c.l.b16 %v1675
        %v1963 = vunpack.c.l.b16 %v1676
        %v1964 = vunpack.c.l.b16 %v1677
        %v1965 = vunpack.c.l.b16 %v1678
        %v1966 = vunpack.c.l.b16 %v1679
        %v1967 = vunpack.c.l.b16 %v1680
        %v1968 = vpack.c.b16 %v1953, %v1952
        %v1969 = vpack.c.b16 %v1955, %v1954
        %v1970 = vpack.c.b16 %v1957, %v1956
        %v1971 = vpack.c.b16 %v1959, %v1958
        %v1972 = vpack.c.b16 %v1961, %v1960
        %v1973 = vpack.c.b16 %v1963, %v1962
        %v1974 = vpack.c.b16 %v1965, %v1964
        %v1975 = vpack.c.b16 %v1967, %v1966
        %1984 = vmatpush.bf16.msra.mxu0 %v1975
        %1985 = vmatpush.bf16.msra.mxu0 %v1974
        %1986 = vmatpush.bf16.msra.mxu0 %v1973
        %1987 = vmatpush.bf16.msra.mxu0 %v1972
        %1988 = vmatpush.bf16.msra.mxu0 %v1971
        %1989 = vmatpush.bf16.msra.mxu0 %v1970
        %1990 = vmatpush.bf16.msra.mxu0 %v1969
        %1991 = vmatpush.bf16.msra.mxu0 %v1968
        %1992 = vmatmul.bf16.gmra.mxu0 %v1932
        %v1993 = vpop.f32.mrf.mxu0
        %v1994 = vadd.f32 %v1934, %v1993
        %v1995 = vpop.f32.mrf.mxu0
        %1996 = vdwg.mxu0
        %v1997 = vadd.f32 %v1420, %v1994
        %1998 = vadd.xlane.f32.xlu0 %v1997
        %v1999 = vpop.xlane.xlu0 %1998
        %v2000 = vmul.f32 %v1999, %v1434
        %v2001 = vsub.f32 %v1997, %v2000
        %v2002 = vmul.f32 %v2001, %v2001
        %2003 = vadd.xlane.f32.xlu0 %v2002
        %v2004 = vpop.xlane.xlu0 %2003
        %v2005 = vmul.f32 %v2004, %v1434
        %v2006 = vadd.f32 %v2005, 1e-05
        %v2007 = vrsqrt.pop %v2006
        %v2008 = vmul.f32 %v2007, %v2006
        %v2009 = vmul.f32 %v2008, %v2007
        %v2010 = vmul.f32 0.5, %v2009
        %v2011 = vsub.f32 1.5, %v2010
        %v2012 = vmul.f32 %v2007, %v2011
        %vm2013 = vweird.f32 %v2006
        %vm2014 = vweird.f32 %v2007
        %vm2015 = vmor %vm2013, %vm2014
        %v2016 = vsel %vm2015, %v2007, %v2012
        %v2017 = vmul.f32 %v2001, %v2016
        %v2018 = vperm.slane %v1421, 2
        %v2019 = vmul.f32 %v2017, %v2018
        %v2020 = vperm.slane %v1421, 3
        %v2021 = vadd.f32 %v2019, %v2020
        %v2022 = vpack.c.bf16 %v2021, %v2021
        %v2023 = vld [vmem:[%s899] sm:$0xff]
        %v2024 = vld [vmem:[%s899 + $0x8] sm:$0xff]
        %v2025 = vld [vmem:[%s899 + $0x10] sm:$0xff]
        %v2026 = vld [vmem:[%s899 + $0x18] sm:$0xff]
        %v2027 = vld [vmem:[%s899 + $0x20] sm:$0xff]
        %v2028 = vld [vmem:[%s899 + $0x28] sm:$0xff]
        %v2029 = vld [vmem:[%s899 + $0x30] sm:$0xff]
        %v2030 = vld [vmem:[%s899 + $0x38] sm:$0xff]
        %v2031 = vld [vmem:[%s899 + $0x40] sm:$0xff]
        %v2032 = vld [vmem:[%s899 + $0x48] sm:$0xff]
        %v2033 = vld [vmem:[%s899 + $0x50] sm:$0xff]
        %v2034 = vld [vmem:[%s899 + $0x58] sm:$0xff]
        %v2035 = vld [vmem:[%s899 + $0x60] sm:$0xff]
        %v2036 = vld [vmem:[%s899 + $0x68] sm:$0xff]
        %v2037 = vld [vmem:[%s899 + $0x70] sm:$0xff]
        %v2038 = vld [vmem:[%s899 + $0x78] sm:$0xff]
        %v2039 = vld [vmem:[%s762] sm:$0x3]
        %v2041 = vperm.slane %v2039, 0
        %v2042 = vperm.slane %v2039, 1
        %v2061 = vunpack.c.l.b16 %v2023
        %v2062 = vunpack.c.h.b16 %v2023
        %v2063 = vunpack.c.l.b16 %v2024
        %v2064 = vunpack.c.h.b16 %v2024
        %v2065 = vunpack.c.l.b16 %v2025
        %v2066 = vunpack.c.h.b16 %v2025
        %v2067 = vunpack.c.l.b16 %v2026
        %v2068 = vunpack.c.h.b16 %v2026
        %v2069 = vunpack.c.l.b16 %v2027
        %v2070 = vunpack.c.h.b16 %v2027
        %v2071 = vunpack.c.l.b16 %v2028
        %v2072 = vunpack.c.h.b16 %v2028
        %v2073 = vunpack.c.l.b16 %v2029
        %v2074 = vunpack.c.h.b16 %v2029
        %v2075 = vunpack.c.l.b16 %v2030
        %v2076 = vunpack.c.h.b16 %v2030
        %v2077 = vunpack.c.l.b16 %v2031
        %v2078 = vunpack.c.h.b16 %v2031
        %v2079 = vunpack.c.l.b16 %v2032
        %v2080 = vunpack.c.h.b16 %v2032
        %v2081 = vunpack.c.l.b16 %v2033
        %v2082 = vunpack.c.h.b16 %v2033
        %v2083 = vunpack.c.l.b16 %v2034
        %v2084 = vunpack.c.h.b16 %v2034
        %v2085 = vunpack.c.l.b16 %v2035
        %v2086 = vunpack.c.h.b16 %v2035
        %v2087 = vunpack.c.l.b16 %v2036
        %v2088 = vunpack.c.h.b16 %v2036
        %v2089 = vunpack.c.l.b16 %v2037
        %v2090 = vunpack.c.h.b16 %v2037
        %v2091 = vunpack.c.l.b16 %v2038
        %v2092 = vunpack.c.h.b16 %v2038
        %v2093 = vpack.c.b16 %v2063, %v2061
        %v2094 = vpack.c.b16 %v2064, %v2062
        %v2095 = vpack.c.b16 %v2067, %v2065
        %v2096 = vpack.c.b16 %v2068, %v2066
        %v2097 = vpack.c.b16 %v2071, %v2069
        %v2098 = vpack.c.b16 %v2072, %v2070
        %v2099 = vpack.c.b16 %v2075, %v2073
        %v2100 = vpack.c.b16 %v2076, %v2074
        %v2101 = vpack.c.b16 %v2079, %v2077
        %v2102 = vpack.c.b16 %v2080, %v2078
        %v2103 = vpack.c.b16 %v2083, %v2081
        %v2104 = vpack.c.b16 %v2084, %v2082
        %v2105 = vpack.c.b16 %v2087, %v2085
        %v2106 = vpack.c.b16 %v2088, %v2086
        %v2107 = vpack.c.b16 %v2091, %v2089
        %v2108 = vpack.c.b16 %v2092, %v2090
        %2125 = vmatpush.bf16.msra.mxu0 %v2107
        %2126 = vmatpush.bf16.msra.mxu0 %v2105
        %2127 = vmatpush.bf16.msra.mxu0 %v2103
        %2128 = vmatpush.bf16.msra.mxu0 %v2101
        %2129 = vmatpush.bf16.msra.mxu0 %v2099
        %2130 = vmatpush.bf16.msra.mxu0 %v2097
        %2131 = vmatpush.bf16.msra.mxu0 %v2095
        %2132 = vmatpush.bf16.msra.mxu0 %v2093
        %2133 = vmatmul.bf16.gmra.mxu0 %v2022
        %v2134 = vpop.f32.mrf.mxu0
        %v2135 = vadd.f32 %v2041, %v2134
        %v2136 = vpop.f32.mrf.mxu0
        %2137 = vdwg.mxu0
        %2138 = vmatpush.bf16.msra.mxu0 %v2108
        %2139 = vmatpush.bf16.msra.mxu0 %v2106
        %2140 = vmatpush.bf16.msra.mxu0 %v2104
        %2141 = vmatpush.bf16.msra.mxu0 %v2102
        %2142 = vmatpush.bf16.msra.mxu0 %v2100
        %2143 = vmatpush.bf16.msra.mxu0 %v2098
        %2144 = vmatpush.bf16.msra.mxu0 %v2096
        %2145 = vmatpush.bf16.msra.mxu0 %v2094
        %2146 = vmatmul.bf16.gmra.mxu0 %v2022
        %v2147 = vpop.f32.mrf.mxu0
        %v2148 = vadd.f32 %v2042, %v2147
        %v2149 = vpop.f32.mrf.mxu0
        %2150 = vdwg.mxu0
        %v2151 = vmul.f32 %v2135, %v2135
        %v2152 = vmul.f32 %v2148, %v2148
        %v2153 = vmul.f32 %v2135, %v2151
        %v2154 = vmul.f32 %v2148, %v2152
        %v2155 = vmul.f32 %v2153, 0.044715
        %v2156 = vmul.f32 %v2154, 0.044715
        %v2157 = vadd.f32 %v2135, %v2155
        %v2158 = vadd.f32 %v2148, %v2156
        %v2159 = vmul.f32 %v2157, 0.7978846
        %v2160 = vmul.f32 %v2158, 0.7978846
        %v2161 = vtanh.pop %v2159
        %v2162 = vtanh.pop %v2160
        %v2163 = vadd.f32 %v2161, 1.0
        %v2164 = vadd.f32 %v2162, 1.0
        %v2165 = vmul.f32 %v2163, 0.5
        %v2166 = vmul.f32 %v2164, 0.5
        %v2167 = vmul.f32 %v2135, %v2165
        %v2168 = vmul.f32 %v2148, %v2166
        %v2169 = vpack.c.bf16 %v2167, %v2167
        %v2170 = vpack.c.bf16 %v2168, %v2168
        %v2171 = vld [vmem:[%s904] sm:$0xf]
        %v2172 = vld [vmem:[%s904 + $0x4] sm:$0xf]
        %v2173 = vld [vmem:[%s904 + $0x8] sm:$0xf]
        %v2174 = vld [vmem:[%s904 + $0xc] sm:$0xf]
        %v2175 = vld [vmem:[%s904 + $0x10] sm:$0xf]
        %v2176 = vld [vmem:[%s904 + $0x14] sm:$0xf]
        %v2177 = vld [vmem:[%s904 + $0x18] sm:$0xf]
        %v2178 = vld [vmem:[%s904 + $0x1c] sm:$0xf]
        %v2179 = vld [vmem:[%s904 + $0x20] sm:$0xf]
        %v2180 = vld [vmem:[%s904 + $0x24] sm:$0xf]
        %v2181 = vld [vmem:[%s904 + $0x28] sm:$0xf]
        %v2182 = vld [vmem:[%s904 + $0x2c] sm:$0xf]
        %v2183 = vld [vmem:[%s904 + $0x30] sm:$0xf]
        %v2184 = vld [vmem:[%s904 + $0x34] sm:$0xf]
        %v2185 = vld [vmem:[%s904 + $0x38] sm:$0xf]
        %v2186 = vld [vmem:[%s904 + $0x3c] sm:$0xf]
        %v2187 = vld [vmem:[%s904 + $0x40] sm:$0xf]
        %v2188 = vld [vmem:[%s904 + $0x44] sm:$0xf]
        %v2189 = vld [vmem:[%s904 + $0x48] sm:$0xf]
        %v2190 = vld [vmem:[%s904 + $0x4c] sm:$0xf]
        %v2191 = vld [vmem:[%s904 + $0x50] sm:$0xf]
        %v2192 = vld [vmem:[%s904 + $0x54] sm:$0xf]
        %v2193 = vld [vmem:[%s904 + $0x58] sm:$0xf]
        %v2194 = vld [vmem:[%s904 + $0x5c] sm:$0xf]
        %v2195 = vld [vmem:[%s904 + $0x60] sm:$0xf]
        %v2196 = vld [vmem:[%s904 + $0x64] sm:$0xf]
        %v2197 = vld [vmem:[%s904 + $0x68] sm:$0xf]
        %v2198 = vld [vmem:[%s904 + $0x6c] sm:$0xf]
        %v2199 = vld [vmem:[%s904 + $0x70] sm:$0xf]
        %v2200 = vld [vmem:[%s904 + $0x74] sm:$0xf]
        %v2201 = vld [vmem:[%s904 + $0x78] sm:$0xf]
        %v2202 = vld [vmem:[%s904 + $0x7c] sm:$0xf]
        %v2235 = vunpack.c.l.b16 %v2171
        %v2236 = vunpack.c.l.b16 %v2172
        %v2237 = vunpack.c.l.b16 %v2173
        %v2238 = vunpack.c.l.b16 %v2174
        %v2239 = vunpack.c.l.b16 %v2175
        %v2240 = vunpack.c.l.b16 %v2176
        %v2241 = vunpack.c.l.b16 %v2177
        %v2242 = vunpack.c.l.b16 %v2178
        %v2243 = vunpack.c.l.b16 %v2179
        %v2244 = vunpack.c.l.b16 %v2180
        %v2245 = vunpack.c.l.b16 %v2181
        %v2246 = vunpack.c.l.b16 %v2182
        %v2247 = vunpack.c.l.b16 %v2183
        %v2248 = vunpack.c.l.b16 %v2184
        %v2249 = vunpack.c.l.b16 %v2185
        %v2250 = vunpack.c.l.b16 %v2186
        %v2251 = vunpack.c.l.b16 %v2187
        %v2252 = vunpack.c.l.b16 %v2188
        %v2253 = vunpack.c.l.b16 %v2189
        %v2254 = vunpack.c.l.b16 %v2190
        %v2255 = vunpack.c.l.b16 %v2191
        %v2256 = vunpack.c.l.b16 %v2192
        %v2257 = vunpack.c.l.b16 %v2193
        %v2258 = vunpack.c.l.b16 %v2194
        %v2259 = vunpack.c.l.b16 %v2195
        %v2260 = vunpack.c.l.b16 %v2196
        %v2261 = vunpack.c.l.b16 %v2197
        %v2262 = vunpack.c.l.b16 %v2198
        %v2263 = vunpack.c.l.b16 %v2199
        %v2264 = vunpack.c.l.b16 %v2200
        %v2265 = vunpack.c.l.b16 %v2201
        %v2266 = vunpack.c.l.b16 %v2202
        %v2267 = vpack.c.b16 %v2236, %v2235
        %v2268 = vpack.c.b16 %v2238, %v2237
        %v2269 = vpack.c.b16 %v2240, %v2239
        %v2270 = vpack.c.b16 %v2242, %v2241
        %v2271 = vpack.c.b16 %v2244, %v2243
        %v2272 = vpack.c.b16 %v2246, %v2245
        %v2273 = vpack.c.b16 %v2248, %v2247
        %v2274 = vpack.c.b16 %v2250, %v2249
        %v2275 = vpack.c.b16 %v2252, %v2251
        %v2276 = vpack.c.b16 %v2254, %v2253
        %v2277 = vpack.c.b16 %v2256, %v2255
        %v2278 = vpack.c.b16 %v2258, %v2257
        %v2279 = vpack.c.b16 %v2260, %v2259
        %v2280 = vpack.c.b16 %v2262, %v2261
        %v2281 = vpack.c.b16 %v2264, %v2263
        %v2282 = vpack.c.b16 %v2266, %v2265
        %2299 = vmatpush.bf16.msra.mxu0 %v2274
        %2300 = vmatpush.bf16.msra.mxu0 %v2273
        %2301 = vmatpush.bf16.msra.mxu0 %v2272
        %2302 = vmatpush.bf16.msra.mxu0 %v2271
        %2303 = vmatpush.bf16.msra.mxu0 %v2270
        %2304 = vmatpush.bf16.msra.mxu0 %v2269
        %2305 = vmatpush.bf16.msra.mxu0 %v2268
        %2306 = vmatpush.bf16.msra.mxu0 %v2267
        %2307 = vmatmul.bf16.gmra.mxu0 %v2169
        %v2308 = vpop.f32.mrf.mxu0
        %v2309 = vadd.f32 0.0, %v2308
        %v2310 = vpop.f32.mrf.mxu0
        %2311 = vdwg.mxu0
        %2312 = vmatpush.bf16.msra.mxu0 %v2282
        %2313 = vmatpush.bf16.msra.mxu0 %v2281
        %2314 = vmatpush.bf16.msra.mxu0 %v2280
        %2315 = vmatpush.bf16.msra.mxu0 %v2279
        %2316 = vmatpush.bf16.msra.mxu0 %v2278
        %2317 = vmatpush.bf16.msra.mxu0 %v2277
        %2318 = vmatpush.bf16.msra.mxu0 %v2276
        %2319 = vmatpush.bf16.msra.mxu0 %v2275
        %2320 = vmatmul.bf16.gmra.mxu0 %v2170
        %v2321 = vpop.f32.mrf.mxu0
        %v2322 = vadd.f32 %v2309, %v2321
        %v2323 = vpop.f32.mrf.mxu0
        %2324 = vdwg.mxu0
        %v2325 = vadd.f32 %v1997, %v2322
        %v2326 = vld [vmem:[%s771] sm:$0x1]
        %v2328 = vperm.slane %v2326, 0
        %v2330 = vadd.f32 %v2325, %v2328
        %2331 = vst [vmem:[#allocation2] sm:$0xff] %v2330
        %p2332 = scmp.eq.s32.totalorder %s45, 1
        // Predicated region
        $region137: #{vl_model_forward.2} parent=87 // pred_check
          %p2333 = pneg %p2332
        $region138: #{vl_model_forward.2} parent=87 // pred_check_branch
          %2335 = sbr.rel (%p2333) target = $region140
        $region139: #{vl_model_forward.2} parent=87 // pred_region
          %v2336 = vld [vmem:[#allocation16] sm:$0x3]
          %2337 = vadd.xlane.f32.xlu0 %v2330
          %v2338 = vpop.xlane.xlu0 %2337
          %v2339 = vmul.f32 %v2338, %v1434
          %v2340 = vsub.f32 %v2330, %v2339
          %v2341 = vmul.f32 %v2340, %v2340
          %2342 = vadd.xlane.f32.xlu0 %v2341
          %v2343 = vpop.xlane.xlu0 %2342
          %v2344 = vmul.f32 %v2343, %v1434
          %v2345 = vadd.f32 %v2344, 1e-05
          %v2346 = vrsqrt.pop %v2345
          %v2347 = vmul.f32 %v2346, %v2345
          %v2348 = vmul.f32 %v2347, %v2346
          %v2349 = vmul.f32 0.5, %v2348
          %v2350 = vsub.f32 1.5, %v2349
          %v2351 = vmul.f32 %v2346, %v2350
          %vm2352 = vweird.f32 %v2345
          %vm2353 = vweird.f32 %v2346
          %vm2354 = vmor %vm2352, %vm2353
          %v2355 = vsel %vm2354, %v2346, %v2351
          %v2356 = vmul.f32 %v2340, %v2355
          %v2357 = vperm.slane %v2336, 0
          %v2358 = vmul.f32 %v2356, %v2357
          %v2359 = vperm.slane %v2336, 1
          %v2360 = vadd.f32 %v2358, %v2359
          %v2361 = vpack.c.bf16 %v2360, %v2360
          %v2362 = vld [vmem:[#allocation17] sm:$0xf]
          %v2363 = vld [vmem:[#allocation17 + $0x4] sm:$0xf]
          %v2364 = vld [vmem:[#allocation17 + $0x8] sm:$0xf]
          %v2365 = vld [vmem:[#allocation17 + $0xc] sm:$0xf]
          %v2366 = vld [vmem:[#allocation17 + $0x10] sm:$0xf]
          %v2367 = vld [vmem:[#allocation17 + $0x14] sm:$0xf]
          %v2368 = vld [vmem:[#allocation17 + $0x18] sm:$0xf]
          %v2369 = vld [vmem:[#allocation17 + $0x1c] sm:$0xf]
          %v2370 = vld [vmem:[#allocation17 + $0x20] sm:$0xf]
          %v2371 = vld [vmem:[#allocation17 + $0x24] sm:$0xf]
          %v2372 = vld [vmem:[#allocation17 + $0x28] sm:$0xf]
          %v2373 = vld [vmem:[#allocation17 + $0x2c] sm:$0xf]
          %v2374 = vld [vmem:[#allocation17 + $0x30] sm:$0xf]
          %v2375 = vld [vmem:[#allocation17 + $0x34] sm:$0xf]
          %v2376 = vld [vmem:[#allocation17 + $0x38] sm:$0xf]
          %v2377 = vld [vmem:[#allocation17 + $0x3c] sm:$0xf]
          %v2378 = vld [vmem:[#allocation19] sm:$0x1]
          %v2380 = vperm.slane %v2378, 0
          %v2398 = vunpack.c.l.b16 %v2362
          %v2399 = vunpack.c.l.b16 %v2363
          %v2400 = vunpack.c.l.b16 %v2364
          %v2401 = vunpack.c.l.b16 %v2365
          %v2402 = vunpack.c.l.b16 %v2366
          %v2403 = vunpack.c.l.b16 %v2367
          %v2404 = vunpack.c.l.b16 %v2368
          %v2405 = vunpack.c.l.b16 %v2369
          %v2406 = vunpack.c.l.b16 %v2370
          %v2407 = vunpack.c.l.b16 %v2371
          %v2408 = vunpack.c.l.b16 %v2372
          %v2409 = vunpack.c.l.b16 %v2373
          %v2410 = vunpack.c.l.b16 %v2374
          %v2411 = vunpack.c.l.b16 %v2375
          %v2412 = vunpack.c.l.b16 %v2376
          %v2413 = vunpack.c.l.b16 %v2377
          %v2414 = vpack.c.b16 %v2399, %v2398
          %v2415 = vpack.c.b16 %v2401, %v2400
          %v2416 = vpack.c.b16 %v2403, %v2402
          %v2417 = vpack.c.b16 %v2405, %v2404
          %v2418 = vpack.c.b16 %v2407, %v2406
          %v2419 = vpack.c.b16 %v2409, %v2408
          %v2420 = vpack.c.b16 %v2411, %v2410
          %v2421 = vpack.c.b16 %v2413, %v2412
          %2430 = vmatpush.bf16.msra.mxu0 %v2421
          %2431 = vmatpush.bf16.msra.mxu0 %v2420
          %2432 = vmatpush.bf16.msra.mxu0 %v2419
          %2433 = vmatpush.bf16.msra.mxu0 %v2418
          %2434 = vmatpush.bf16.msra.mxu0 %v2417
          %2435 = vmatpush.bf16.msra.mxu0 %v2416
          %2436 = vmatpush.bf16.msra.mxu0 %v2415
          %2437 = vmatpush.bf16.msra.mxu0 %v2414
          %2438 = vmatmul.bf16.gmra.mxu0 %v2361
          %v2439 = vpop.f32.mrf.mxu0
          %v2440 = vadd.f32 %v2380, %v2439
          %v2441 = vpop.f32.mrf.mxu0
          %2442 = vdwg.mxu0
          %2443 = vst [vmem:[%s908] sm:$0xff] %v2440
        $region140: #{vl_model_forward.2} parent=87 // pred_fallthru
          _
        %p2444 = scmp.lt.s32.totalorder %s44, 1
        %s2445 = scalar_select %p2444, %s44, 1
        %s2446 = smul.addr %s2445, 8
        %s2447 = scalar_lea.vmem %s17, %s2446
        // Predicated region
        $region141: #{vl_model_forward.2} parent=87 // pred_check
          %p2448 = pneg %p477
        $region142: #{vl_model_forward.2} parent=87 // pred_check_branch
          %2450 = sbr.rel (%p2448) target = $region144
        $region143: #{vl_model_forward.2} parent=87 // pred_region
          _
        $region144: #{vl_model_forward.2} parent=87 // pred_fallthru
          _
      $region88: #{vl_model_forward.2} parent=5 // pred_fallthru
        _
      %p2451 = scmp.le.s32.totalorder 2, %s35
      // Predicated region
      $region145: #{vl_model_forward.2} parent=5 // pred_check
        %p2452 = pneg %p2451
      $region146: #{vl_model_forward.2} parent=5 // pred_check_branch
        %2454 = sbr.rel (%p2452) target = $region148
      $region147: #{vl_model_forward.2} parent=5 // pred_region
        %s2455 = ssub.s32 %s35, 2
        // Predicated region
        $region149: #{vl_model_forward.2} parent=147 // pred_check
          %p2456 = pneg %p483
        $region150: #{vl_model_forward.2} parent=147 // pred_check_branch
          %2458 = sbr.rel (%p2456) target = $region152
        $region151: #{vl_model_forward.2} parent=147 // pred_region
          %p2459 = scmp.lt.s32.totalorder %s46, 1
          %s2460 = scalar_select %p2459, %s46, 1
          %s2461 = smul.addr %s2460, 8
          %s2462 = scalar_lea.vmem %s17, %s2461
        $region152: #{vl_model_forward.2} parent=147 // pred_fallthru
          _
      $region148: #{vl_model_forward.2} parent=5 // pred_fallthru
        _
    $region6: #{vl_model_forward.2} parent=1 // loop_footer
      %s39 = sadd.s32 1, %s35
    $region7: #{vl_model_forward.2} parent=1 // loop_footer_branch
      %34 = sbr.rel target = $region3
    $region8: #{vl_model_forward.2} parent=1 // loop_exit
      _
    %2463 = vsyncpa [#allocation4], 1
    %s2464 = scalar_lea.sflag [#allocation4], 1
    %2465 = vsyncpa %s2464, 1
    %2466 = vsyncpa [#allocation6], 1
    %2467 = vsyncpa [#allocation9], 1
    %s2468 = scalar_lea.sflag [#allocation9], 1
    %2469 = vsyncpa %s2468, 1
    %2470 = vsyncpa [#allocation12], 1
    %s2471 = scalar_lea.sflag [#allocation12], 1
    %2472 = vsyncpa %s2471, 1
    %2473 = vsyncpa [#allocation15], 1
    %s2474 = scalar_lea.sflag [#allocation15], 1
    %2475 = vsyncpa %s2474, 1
    %2476 = vsyncpa [#allocation18], 1

// kernel: vl_model_forward.3
$region0: #{vl_model_forward.3}
  #allocation0 [shape = 'u32[]', space=smem, size = 0x4, offset = 0x4, fixed_abs, tag = 'smem constant byte address 0x4 - core index']
  #allocation1 [shape = 'u32[72,128]{1,0:T(1,128)}', space=vmem, size = 0x9000, scoped, tag = 'internal scratch']
  #allocation2 [shape = 'f32[8,128]{1,0:T(8,128)}', space=vmem, size = 0x1000, scoped, tag = 'scratch operand']
  %s0 = inlined_call_operand.vmem [shape: s32[2,8,1], index: 0, kind: input, shape index: {}]
  %s1 = inlined_call_operand.hbm [shape: bf16[128,128], index: 1, kind: input, shape index: {}]
  %s2 = inlined_call_operand.vmem [shape: f32[16,128], index: 2, kind: input, shape index: {}]
  %s3 = inlined_call_operand.vmem [shape: f32[2,8,128], index: 3, kind: input, shape index: {}]
  %s4 = inlined_call_operand.vmem [shape: f32[2,6,128], index: 4, kind: input, shape index: {}]
  %s5 = inlined_call_operand.vmem [shape: bf16[2,128,384], index: 5, kind: input, shape index: {}]
  %s6 = inlined_call_operand.vmem [shape: f32[2,1,384], index: 6, kind: input, shape index: {}]
  %s7 = inlined_call_operand.hbm [shape: bf16[2,128,128], index: 7, kind: input, shape index: {}]
  %s8 = inlined_call_operand.vmem [shape: f32[2,1,128], index: 8, kind: input, shape index: {}]
  %s9 = inlined_call_operand.hbm [shape: bf16[2,128,128], index: 9, kind: input, shape index: {}]
  %s10 = inlined_call_operand.vmem [shape: f32[2,1,128], index: 10, kind: input, shape index: {}]
  %s11 = inlined_call_operand.hbm [shape: bf16[2,128,256], index: 11, kind: input, shape index: {}]
  %s12 = inlined_call_operand.vmem [shape: f32[2,1,256], index: 12, kind: input, shape index: {}]
  %s13 = inlined_call_operand.hbm [shape: bf16[2,128,128], index: 13, kind: input, shape index: {}]
  %s14 = inlined_call_operand.vmem [shape: f32[2,1,128], index: 14, kind: input, shape index: {}]
  %s15 = inlined_call_operand.hbm [shape: bf16[2,128,256], index: 15, kind: input, shape index: {}]
  %s16 = inlined_call_operand.vmem [shape: f32[2,1,256], index: 16, kind: input, shape index: {}]
  %s17 = inlined_call_operand.hbm [shape: bf16[2,256,128], index: 17, kind: input, shape index: {}]
  %s18 = inlined_call_operand.hbm [shape: f32[2,1,128], index: 18, kind: input, shape index: {}]
  %s19 = inlined_call_operand.hbm [shape: f32[2,128], index: 19, kind: input, shape index: {}]
  %s20 = inlined_call_operand.hbm [shape: bf16[128,128], index: 20, kind: input, shape index: {}]
  %s21 = inlined_call_operand.hbm [shape: f32[1,128], index: 21, kind: input, shape index: {}]
  %s22 = inlined_call_operand.hbm [shape: f32[2,8,128], index: 22, kind: output, shape index: {}]
  %s23 = sld [smem:[#allocation0]]
  $region173: #{vl_model_forward.3} parent=0
    _
  %s25 = ssub.s32 1, %s23
  %s26 = scalar_select 0, %s25, %s23
  $region1: #{vl_model_forward.3} parent=0
    #allocation3 [shape = 'u8[32768]{0}', space=vmem, size = 0x8000, scoped, tag = 'input window, operand 1, single buffered']
    #allocation4 [shape = 's32[2]{0}', space=sflag, size = 0x8, scoped, tag = 'scoped memory for vl_model_forward.3']
    #allocation5 [shape = 's32[2]{0}', space=sflag, size = 0x8, scoped, tag = 'scoped memory for vl_model_forward.3']
    #allocation6 [shape = 'u8[65536]{0}', space=vmem, size = 0x10000, scoped, tag = 'input window, operand 7']
    #allocation7 [shape = 's32[2]{0}', space=sflag, size = 0x8, scoped, tag = 'scoped memory for vl_model_forward.3']
    #allocation8 [shape = 'u8[65536]{0}', space=vmem, size = 0x10000, scoped, tag = 'input window, operand 9']
    #allocation9 [shape = 'u8[131072]{0}', space=vmem, size = 0x20000, scoped, tag = 'input window, operand 11']
    #allocation10 [shape = 's32[2]{0}', space=sflag, size = 0x8, scoped, tag = 'scoped memory for vl_model_forward.3']
    #allocation11 [shape = 'u8[65536]{0}', space=vmem, size = 0x10000, scoped, tag = 'input window, operand 13']
    #allocation12 [shape = 'u8[131072]{0}', space=vmem, size = 0x20000, scoped, tag = 'input window, operand 15']
    #allocation13 [shape = 's32[2]{0}', space=sflag, size = 0x8, scoped, tag = 'scoped memory for vl_model_forward.3']
    #allocation14 [shape = 'u8[131072]{0}', space=vmem, size = 0x20000, scoped, tag = 'input window, operand 17']
    #allocation15 [shape = 'u8[1024]{0}', space=vmem, size = 0x400, scoped, tag = 'input window, operand 18']
    #allocation16 [shape = 's32[2]{0}', space=sflag, size = 0x8, scoped, tag = 'scoped memory for vl_model_forward.3']
    #allocation17 [shape = 'u8[1024]{0}', space=vmem, size = 0x400, scoped, tag = 'input window, operand 19, single buffered']
    #allocation18 [shape = 'u8[32768]{0}', space=vmem, size = 0x8000, scoped, tag = 'input window, operand 20, single buffered']
    #allocation19 [shape = 's32[1]{0}', space=sflag, size = 0x4, scoped, tag = 'scoped memory for vl_model_forward.3']
    #allocation20 [shape = 'u8[512]{0}', space=vmem, size = 0x400, scoped, tag = 'input window, operand 21, single buffered']
    #allocation21 [shape = 'u8[8192]{0}', space=vmem, size = 0x2000, scoped, tag = 'output window, operand 0']
    %27 = vsyncpa [#allocation4], 0
    %28 = vsyncpa [#allocation7], 0
    %s29 = scalar_lea.sflag [#allocation7], 1
    %30 = vsyncpa %s29, 0
    %31 = vsyncpa [#allocation10], 0
    %s32 = scalar_lea.sflag [#allocation10], 1
    %33 = vsyncpa %s32, 0
    %34 = vsyncpa [#allocation13], 0
    %s35 = scalar_lea.sflag [#allocation13], 1
    %36 = vsyncpa %s35, 0
    %37 = vsyncpa [#allocation16], 0
    %s38 = scalar_lea.sflag [#allocation16], 1
    %39 = vsyncpa %s38, 0
    %40 = vsyncpa [#allocation19], 0
    %41 = vsyncpa [#allocation5], 0
    %s42 = scalar_lea.sflag [#allocation5], 1
    %43 = vsyncpa %s42, 0
    loop: start=0, step=1, limit=6
    $region2: #{vl_model_forward.3} parent=1 // loop_pre_header
      _
    $region3: #{vl_model_forward.3} parent=1 // loop_header
      %s45 = sphi 0, %s49
      %p46 = scmp.ge.s32.totalorder %s45, 6
      %s52 = sphi 0, %s64
      %s53 = sphi 0, %s60
      %s54 = sphi 0, %s52
      %s55 = sphi 0, %s53
      %s56 = sphi 0, %s54
      %s57 = sphi 0, %s55
      %s67 = sphi 0, %s69
      %s70 = sphi 0, %s67
      %s71 = sphi 0, %s70
      %s87 = sphi 0, %s71
      %s91 = sphi 0, %s91
      %s93 = sphi 0, %s91
      %s94 = sphi 0, %s93
      %s108 = sphi 0, %s94
      %s112 = sphi 0, %s112
      %s114 = sphi 0, %s112
      %s115 = sphi 0, %s114
      %s129 = sphi 0, %s115
      %s135 = sphi 0, %s137
      %s138 = sphi 0, %s135
      %s139 = sphi 0, %s138
      %s155 = sphi 0, %s139
      %s161 = sphi 0, %s163
      %s164 = sphi 0, %s161
      %s165 = sphi 0, %s164
      %s181 = sphi 0, %s165
      %s187 = sphi 0, %s189
      %s190 = sphi 0, %s187
      %s191 = sphi 0, %s190
      %s207 = sphi 0, %s191
      %s213 = sphi 0, %s215
      %s216 = sphi 0, %s213
      %s217 = sphi 0, %s216
      %s233 = sphi 0, %s217
      %s239 = sphi 0, %s241
      %s242 = sphi 0, %s239
      %s243 = sphi 0, %s242
      %s259 = sphi 0, %s243
      %s265 = sphi 0, %s267
      %s268 = sphi 0, %s265
      %s269 = sphi 0, %s268
      %s285 = sphi 0, %s269
      %s291 = sphi 0, %s293
      %s294 = sphi 0, %s291
      %s295 = sphi 0, %s294
      %s311 = sphi 0, %s295
      %s317 = sphi 0, %s319
      %s320 = sphi 0, %s317
      %s321 = sphi 0, %s320
      %s337 = sphi 0, %s321
      %s343 = sphi 0, %s345
      %s346 = sphi 0, %s343
      %s347 = sphi 0, %s346
      %s363 = sphi 0, %s347
      %s369 = sphi 0, %s371
      %s372 = sphi 0, %s369
      %s373 = sphi 0, %s372
      %s389 = sphi 0, %s373
      %s395 = sphi 0, %s397
      %s398 = sphi 0, %s395
      %s399 = sphi 0, %s398
      %s415 = sphi 0, %s399
      %s421 = sphi 0, %s423
      %s424 = sphi 0, %s421
      %s425 = sphi 0, %s424
      %s441 = sphi 0, %s425
      %s447 = sphi 0, %s449
      %s450 = sphi 0, %s447
      %s451 = sphi 0, %s450
      %s467 = sphi 0, %s451
      %s473 = sphi 0, %s475
      %s476 = sphi 0, %s473
      %s477 = sphi 0, %s476
      %s493 = sphi 0, %s477
      %s499 = sphi 0, %s501
      %s502 = sphi 0, %s499
      %s503 = sphi 0, %s502
      %s519 = sphi 0, %s503
      %s525 = sphi 0, %s527
      %s528 = sphi 0, %s525
      %s529 = sphi 0, %s528
      %s545 = sphi 0, %s529
      %s549 = sphi 0, %s549
      %s551 = sphi 0, %s549
      %s552 = sphi 0, %s551
      %s566 = sphi 0, %s552
      %s570 = sphi 0, %s570
      %s572 = sphi 0, %s570
      %s573 = sphi 0, %s572
      %s587 = sphi 0, %s573
      %s591 = sphi 0, %s591
      %s593 = sphi 0, %s591
      %s594 = sphi 0, %s593
      %s608 = sphi 0, %s594
      %s614 = sphi 0, %s616
      %s617 = sphi 0, %s614
      %s618 = sphi 0, %s617
      %s634 = sphi 0, %s618
    $region4: #{vl_model_forward.3} parent=1 // loop_header_branch
      %48 = sbr.rel (%p46) target = $region8
    $region5: #{vl_model_forward.3} parent=1 // loop_body
      %s50 = ssub.s32 %s45, 1
      %s51 = ssub.s32 %s45, 2
      %s58 = sadd.s32 1, %s53
      %p59 = scmp.ge.s32.totalorder %s58, 2
      %s60 = scalar_select %p59, 0, %s58
      %s61 = sadd.s32 1, %s52
      %s62 = scalar_select %p59, %s61, %s52
      %p63 = scmp.ge.s32.totalorder %s62, 2
      %s64 = scalar_select %p63, 0, %s62
      %s65 = ssub.s32 %s52, %s64
      %p66 = scmp.eq.s32.totalorder %s65, 0
      %s68 = sadd.s32 %s67, 1
      %s69 = scalar_select %p66, %s67, %s68
      %p72 = pneg %p66
      %p73 = scmp.eq.s32.totalorder %s45, 3
      %p74 = por %p72, %p73
      %p75 = scmp.ne.s32.totalorder %s67, %s70
      %p76 = scmp.eq.s32.totalorder %s45, 0
      %p77 = por %p75, %p76
      %p78 = scmp.ne.s32.totalorder %s67, %s70
      %p79 = scmp.eq.s32.totalorder %s50, 3
      %p80 = por %p78, %p79
      %p81 = scmp.ne.s32.totalorder %s70, %s71
      %p82 = scmp.eq.s32.totalorder %s50, 0
      %p83 = por %p81, %p82
      %p84 = scmp.ne.s32.totalorder %s70, %s71
      %p85 = scmp.eq.s32.totalorder %s51, 3
      %p86 = por %p84, %p85
      %p88 = scmp.ne.s32.totalorder %s71, %s87
      %p89 = scmp.eq.s32.totalorder %s51, 0
      %p90 = por %p88, %p89
      %s92 = sadd.s32 %s91, 1
      %p95 = scmp.eq.s32.totalorder %s45, 3
      %p96 = scmp.ne.s32.totalorder %s91, %s93
      %p97 = scmp.eq.s32.totalorder %s45, 0
      %p98 = por %p96, %p97
      %p99 = scmp.ne.s32.totalorder %s91, %s93
      %p100 = scmp.eq.s32.totalorder %s50, 3
      %p101 = por %p99, %p100
      %p102 = scmp.ne.s32.totalorder %s93, %s94
      %p103 = scmp.eq.s32.totalorder %s50, 0
      %p104 = por %p102, %p103
      %p105 = scmp.ne.s32.totalorder %s93, %s94
      %p106 = scmp.eq.s32.totalorder %s51, 3
      %p107 = por %p105, %p106
      %p109 = scmp.ne.s32.totalorder %s94, %s108
      %p110 = scmp.eq.s32.totalorder %s51, 0
      %p111 = por %p109, %p110
      %s113 = sadd.s32 %s112, 1
      %p116 = scmp.eq.s32.totalorder %s45, 3
      %p117 = scmp.ne.s32.totalorder %s112, %s114
      %p118 = scmp.eq.s32.totalorder %s45, 0
      %p119 = por %p117, %p118
      %p120 = scmp.ne.s32.totalorder %s112, %s114
      %p121 = scmp.eq.s32.totalorder %s50, 3
      %p122 = por %p120, %p121
      %p123 = scmp.ne.s32.totalorder %s114, %s115
      %p124 = scmp.eq.s32.totalorder %s50, 0
      %p125 = por %p123, %p124
      %p126 = scmp.ne.s32.totalorder %s114, %s115
      %p127 = scmp.eq.s32.totalorder %s51, 3
      %p128 = por %p126, %p127
      %p130 = scmp.ne.s32.totalorder %s115, %s129
      %p131 = scmp.eq.s32.totalorder %s51, 0
      %p132 = por %p130, %p131
      %s133 = ssub.s32 %s52, %s64
      %p134 = scmp.eq.s32.totalorder %s133, 0
      %s136 = sadd.s32 %s135, 1
      %s137 = scalar_select %p134, %s135, %s136
      %p140 = pneg %p134
      %p141 = scmp.eq.s32.totalorder %s45, 3
      %p142 = por %p140, %p141
      %p143 = scmp.ne.s32.totalorder %s135, %s138
      %p144 = scmp.eq.s32.totalorder %s45, 0
      %p145 = por %p143, %p144
      %p146 = scmp.ne.s32.totalorder %s135, %s138
      %p147 = scmp.eq.s32.totalorder %s50, 3
      %p148 = por %p146, %p147
      %p149 = scmp.ne.s32.totalorder %s138, %s139
      %p150 = scmp.eq.s32.totalorder %s50, 0
      %p151 = por %p149, %p150
      %p152 = scmp.ne.s32.totalorder %s138, %s139
      %p153 = scmp.eq.s32.totalorder %s51, 3
      %p154 = por %p152, %p153
      %p156 = scmp.ne.s32.totalorder %s139, %s155
      %p157 = scmp.eq.s32.totalorder %s51, 0
      %p158 = por %p156, %p157
      %s159 = ssub.s32 %s53, %s60
      %p160 = scmp.eq.s32.totalorder %s159, 0
      %s162 = sadd.s32 %s161, 1
      %s163 = scalar_select %p160, %s161, %s162
      %p166 = pneg %p160
      %p167 = scmp.eq.s32.totalorder %s45, 3
      %p168 = por %p166, %p167
      %p169 = scmp.ne.s32.totalorder %s161, %s164
      %p170 = scmp.eq.s32.totalorder %s45, 0
      %p171 = por %p169, %p170
      %p172 = scmp.ne.s32.totalorder %s161, %s164
      %p173 = scmp.eq.s32.totalorder %s50, 3
      %p174 = por %p172, %p173
      %p175 = scmp.ne.s32.totalorder %s164, %s165
      %p176 = scmp.eq.s32.totalorder %s50, 0
      %p177 = por %p175, %p176
      %p178 = scmp.ne.s32.totalorder %s164, %s165
      %p179 = scmp.eq.s32.totalorder %s51, 3
      %p180 = por %p178, %p179
      %p182 = scmp.ne.s32.totalorder %s165, %s181
      %p183 = scmp.eq.s32.totalorder %s51, 0
      %p184 = por %p182, %p183
      %s185 = ssub.s32 %s53, %s60
      %p186 = scmp.eq.s32.totalorder %s185, 0
      %s188 = sadd.s32 %s187, 1
      %s189 = scalar_select %p186, %s187, %s188
      %p192 = pneg %p186
      %p193 = scmp.eq.s32.totalorder %s45, 3
      %p194 = por %p192, %p193
      %p195 = scmp.ne.s32.totalorder %s187, %s190
      %p196 = scmp.eq.s32.totalorder %s45, 0
      %p197 = por %p195, %p196
      %p198 = scmp.ne.s32.totalorder %s187, %s190
      %p199 = scmp.eq.s32.totalorder %s50, 3
      %p200 = por %p198, %p199
      %p201 = scmp.ne.s32.totalorder %s190, %s191
      %p202 = scmp.eq.s32.totalorder %s50, 0
      %p203 = por %p201, %p202
      %p204 = scmp.ne.s32.totalorder %s190, %s191
      %p205 = scmp.eq.s32.totalorder %s51, 3
      %p206 = por %p204, %p205
      %p208 = scmp.ne.s32.totalorder %s191, %s207
      %p209 = scmp.eq.s32.totalorder %s51, 0
      %p210 = por %p208, %p209
      %s211 = ssub.s32 %s53, %s60
      %p212 = scmp.eq.s32.totalorder %s211, 0
      %s214 = sadd.s32 %s213, 1
      %s215 = scalar_select %p212, %s213, %s214
      %p218 = pneg %p212
      %p219 = scmp.eq.s32.totalorder %s45, 3
      %p220 = por %p218, %p219
      %p221 = scmp.ne.s32.totalorder %s213, %s216
      %p222 = scmp.eq.s32.totalorder %s45, 0
      %p223 = por %p221, %p222
      %p224 = scmp.ne.s32.totalorder %s213, %s216
      %p225 = scmp.eq.s32.totalorder %s50, 3
      %p226 = por %p224, %p225
      %p227 = scmp.ne.s32.totalorder %s216, %s217
      %p228 = scmp.eq.s32.totalorder %s50, 0
      %p229 = por %p227, %p228
      %p230 = scmp.ne.s32.totalorder %s216, %s217
      %p231 = scmp.eq.s32.totalorder %s51, 3
      %p232 = por %p230, %p231
      %p234 = scmp.ne.s32.totalorder %s217, %s233
      %p235 = scmp.eq.s32.totalorder %s51, 0
      %p236 = por %p234, %p235
      %s237 = ssub.s32 %s53, %s60
      %p238 = scmp.eq.s32.totalorder %s237, 0
      %s240 = sadd.s32 %s239, 1
      %s241 = scalar_select %p238, %s239, %s240
      %p244 = pneg %p238
      %p245 = scmp.eq.s32.totalorder %s45, 3
      %p246 = por %p244, %p245
      %p247 = scmp.ne.s32.totalorder %s239, %s242
      %p248 = scmp.eq.s32.totalorder %s45, 0
      %p249 = por %p247, %p248
      %p250 = scmp.ne.s32.totalorder %s239, %s242
      %p251 = scmp.eq.s32.totalorder %s50, 3
      %p252 = por %p250, %p251
      %p253 = scmp.ne.s32.totalorder %s242, %s243
      %p254 = scmp.eq.s32.totalorder %s50, 0
      %p255 = por %p253, %p254
      %p256 = scmp.ne.s32.totalorder %s242, %s243
      %p257 = scmp.eq.s32.totalorder %s51, 3
      %p258 = por %p256, %p257
      %p260 = scmp.ne.s32.totalorder %s243, %s259
      %p261 = scmp.eq.s32.totalorder %s51, 0
      %p262 = por %p260, %p261
      %s263 = ssub.s32 %s53, %s60
      %p264 = scmp.eq.s32.totalorder %s263, 0
      %s266 = sadd.s32 %s265, 1
      %s267 = scalar_select %p264, %s265, %s266
      %p270 = pneg %p264
      %p271 = scmp.eq.s32.totalorder %s45, 3
      %p272 = por %p270, %p271
      %p273 = scmp.ne.s32.totalorder %s265, %s268
      %p274 = scmp.eq.s32.totalorder %s45, 0
      %p275 = por %p273, %p274
      %p276 = scmp.ne.s32.totalorder %s265, %s268
      %p277 = scmp.eq.s32.totalorder %s50, 3
      %p278 = por %p276, %p277
      %p279 = scmp.ne.s32.totalorder %s268, %s269
      %p280 = scmp.eq.s32.totalorder %s50, 0
      %p281 = por %p279, %p280
      %p282 = scmp.ne.s32.totalorder %s268, %s269
      %p283 = scmp.eq.s32.totalorder %s51, 3
      %p284 = por %p282, %p283
      %p286 = scmp.ne.s32.totalorder %s269, %s285
      %p287 = scmp.eq.s32.totalorder %s51, 0
      %p288 = por %p286, %p287
      %s289 = ssub.s32 %s53, %s60
      %p290 = scmp.eq.s32.totalorder %s289, 0
      %s292 = sadd.s32 %s291, 1
      %s293 = scalar_select %p290, %s291, %s292
      %p296 = pneg %p290
      %p297 = scmp.eq.s32.totalorder %s45, 3
      %p298 = por %p296, %p297
      %p299 = scmp.ne.s32.totalorder %s291, %s294
      %p300 = scmp.eq.s32.totalorder %s45, 0
      %p301 = por %p299, %p300
      %p302 = scmp.ne.s32.totalorder %s291, %s294
      %p303 = scmp.eq.s32.totalorder %s50, 3
      %p304 = por %p302, %p303
      %p305 = scmp.ne.s32.totalorder %s294, %s295
      %p306 = scmp.eq.s32.totalorder %s50, 0
      %p307 = por %p305, %p306
      %p308 = scmp.ne.s32.totalorder %s294, %s295
      %p309 = scmp.eq.s32.totalorder %s51, 3
      %p310 = por %p308, %p309
      %p312 = scmp.ne.s32.totalorder %s295, %s311
      %p313 = scmp.eq.s32.totalorder %s51, 0
      %p314 = por %p312, %p313
      %s315 = ssub.s32 %s53, %s60
      %p316 = scmp.eq.s32.totalorder %s315, 0
      %s318 = sadd.s32 %s317, 1
      %s319 = scalar_select %p316, %s317, %s318
      %p322 = pneg %p316
      %p323 = scmp.eq.s32.totalorder %s45, 3
      %p324 = por %p322, %p323
      %p325 = scmp.ne.s32.totalorder %s317, %s320
      %p326 = scmp.eq.s32.totalorder %s45, 0
      %p327 = por %p325, %p326
      %p328 = scmp.ne.s32.totalorder %s317, %s320
      %p329 = scmp.eq.s32.totalorder %s50, 3
      %p330 = por %p328, %p329
      %p331 = scmp.ne.s32.totalorder %s320, %s321
      %p332 = scmp.eq.s32.totalorder %s50, 0
      %p333 = por %p331, %p332
      %p334 = scmp.ne.s32.totalorder %s320, %s321
      %p335 = scmp.eq.s32.totalorder %s51, 3
      %p336 = por %p334, %p335
      %p338 = scmp.ne.s32.totalorder %s321, %s337
      %p339 = scmp.eq.s32.totalorder %s51, 0
      %p340 = por %p338, %p339
      %s341 = ssub.s32 %s53, %s60
      %p342 = scmp.eq.s32.totalorder %s341, 0
      %s344 = sadd.s32 %s343, 1
      %s345 = scalar_select %p342, %s343, %s344
      %p348 = pneg %p342
      %p349 = scmp.eq.s32.totalorder %s45, 3
      %p350 = por %p348, %p349
      %p351 = scmp.ne.s32.totalorder %s343, %s346
      %p352 = scmp.eq.s32.totalorder %s45, 0
      %p353 = por %p351, %p352
      %p354 = scmp.ne.s32.totalorder %s343, %s346
      %p355 = scmp.eq.s32.totalorder %s50, 3
      %p356 = por %p354, %p355
      %p357 = scmp.ne.s32.totalorder %s346, %s347
      %p358 = scmp.eq.s32.totalorder %s50, 0
      %p359 = por %p357, %p358
      %p360 = scmp.ne.s32.totalorder %s346, %s347
      %p361 = scmp.eq.s32.totalorder %s51, 3
      %p362 = por %p360, %p361
      %p364 = scmp.ne.s32.totalorder %s347, %s363
      %p365 = scmp.eq.s32.totalorder %s51, 0
      %p366 = por %p364, %p365
      %s367 = ssub.s32 %s53, %s60
      %p368 = scmp.eq.s32.totalorder %s367, 0
      %s370 = sadd.s32 %s369, 1
      %s371 = scalar_select %p368, %s369, %s370
      %p374 = pneg %p368
      %p375 = scmp.eq.s32.totalorder %s45, 3
      %p376 = por %p374, %p375
      %p377 = scmp.ne.s32.totalorder %s369, %s372
      %p378 = scmp.eq.s32.totalorder %s45, 0
      %p379 = por %p377, %p378
      %p380 = scmp.ne.s32.totalorder %s369, %s372
      %p381 = scmp.eq.s32.totalorder %s50, 3
      %p382 = por %p380, %p381
      %p383 = scmp.ne.s32.totalorder %s372, %s373
      %p384 = scmp.eq.s32.totalorder %s50, 0
      %p385 = por %p383, %p384
      %p386 = scmp.ne.s32.totalorder %s372, %s373
      %p387 = scmp.eq.s32.totalorder %s51, 3
      %p388 = por %p386, %p387
      %p390 = scmp.ne.s32.totalorder %s373, %s389
      %p391 = scmp.eq.s32.totalorder %s51, 0
      %p392 = por %p390, %p391
      %s393 = ssub.s32 %s53, %s60
      %p394 = scmp.eq.s32.totalorder %s393, 0
      %s396 = sadd.s32 %s395, 1
      %s397 = scalar_select %p394, %s395, %s396
      %p400 = pneg %p394
      %p401 = scmp.eq.s32.totalorder %s45, 3
      %p402 = por %p400, %p401
      %p403 = scmp.ne.s32.totalorder %s395, %s398
      %p404 = scmp.eq.s32.totalorder %s45, 0
      %p405 = por %p403, %p404
      %p406 = scmp.ne.s32.totalorder %s395, %s398
      %p407 = scmp.eq.s32.totalorder %s50, 3
      %p408 = por %p406, %p407
      %p409 = scmp.ne.s32.totalorder %s398, %s399
      %p410 = scmp.eq.s32.totalorder %s50, 0
      %p411 = por %p409, %p410
      %p412 = scmp.ne.s32.totalorder %s398, %s399
      %p413 = scmp.eq.s32.totalorder %s51, 3
      %p414 = por %p412, %p413
      %p416 = scmp.ne.s32.totalorder %s399, %s415
      %p417 = scmp.eq.s32.totalorder %s51, 0
      %p418 = por %p416, %p417
      %s419 = ssub.s32 %s53, %s60
      %p420 = scmp.eq.s32.totalorder %s419, 0
      %s422 = sadd.s32 %s421, 1
      %s423 = scalar_select %p420, %s421, %s422
      %p426 = pneg %p420
      %p427 = scmp.eq.s32.totalorder %s45, 3
      %p428 = por %p426, %p427
      %p429 = scmp.ne.s32.totalorder %s421, %s424
      %p430 = scmp.eq.s32.totalorder %s45, 0
      %p431 = por %p429, %p430
      %p432 = scmp.ne.s32.totalorder %s421, %s424
      %p433 = scmp.eq.s32.totalorder %s50, 3
      %p434 = por %p432, %p433
      %p435 = scmp.ne.s32.totalorder %s424, %s425
      %p436 = scmp.eq.s32.totalorder %s50, 0
      %p437 = por %p435, %p436
      %p438 = scmp.ne.s32.totalorder %s424, %s425
      %p439 = scmp.eq.s32.totalorder %s51, 3
      %p440 = por %p438, %p439
      %p442 = scmp.ne.s32.totalorder %s425, %s441
      %p443 = scmp.eq.s32.totalorder %s51, 0
      %p444 = por %p442, %p443
      %s445 = ssub.s32 %s53, %s60
      %p446 = scmp.eq.s32.totalorder %s445, 0
      %s448 = sadd.s32 %s447, 1
      %s449 = scalar_select %p446, %s447, %s448
      %p452 = pneg %p446
      %p453 = scmp.eq.s32.totalorder %s45, 3
      %p454 = por %p452, %p453
      %p455 = scmp.ne.s32.totalorder %s447, %s450
      %p456 = scmp.eq.s32.totalorder %s45, 0
      %p457 = por %p455, %p456
      %p458 = scmp.ne.s32.totalorder %s447, %s450
      %p459 = scmp.eq.s32.totalorder %s50, 3
      %p460 = por %p458, %p459
      %p461 = scmp.ne.s32.totalorder %s450, %s451
      %p462 = scmp.eq.s32.totalorder %s50, 0
      %p463 = por %p461, %p462
      %p464 = scmp.ne.s32.totalorder %s450, %s451
      %p465 = scmp.eq.s32.totalorder %s51, 3
      %p466 = por %p464, %p465
      %p468 = scmp.ne.s32.totalorder %s451, %s467
      %p469 = scmp.eq.s32.totalorder %s51, 0
      %p470 = por %p468, %p469
      %s471 = ssub.s32 %s53, %s60
      %p472 = scmp.eq.s32.totalorder %s471, 0
      %s474 = sadd.s32 %s473, 1
      %s475 = scalar_select %p472, %s473, %s474
      %p478 = pneg %p472
      %p479 = scmp.eq.s32.totalorder %s45, 3
      %p480 = por %p478, %p479
      %p481 = scmp.ne.s32.totalorder %s473, %s476
      %p482 = scmp.eq.s32.totalorder %s45, 0
      %p483 = por %p481, %p482
      %p484 = scmp.ne.s32.totalorder %s473, %s476
      %p485 = scmp.eq.s32.totalorder %s50, 3
      %p486 = por %p484, %p485
      %p487 = scmp.ne.s32.totalorder %s476, %s477
      %p488 = scmp.eq.s32.totalorder %s50, 0
      %p489 = por %p487, %p488
      %p490 = scmp.ne.s32.totalorder %s476, %s477
      %p491 = scmp.eq.s32.totalorder %s51, 3
      %p492 = por %p490, %p491
      %p494 = scmp.ne.s32.totalorder %s477, %s493
      %p495 = scmp.eq.s32.totalorder %s51, 0
      %p496 = por %p494, %p495
      %s497 = ssub.s32 %s53, %s60
      %p498 = scmp.eq.s32.totalorder %s497, 0
      %s500 = sadd.s32 %s499, 1
      %s501 = scalar_select %p498, %s499, %s500
      %p504 = pneg %p498
      %p505 = scmp.eq.s32.totalorder %s45, 3
      %p506 = por %p504, %p505
      %p507 = scmp.ne.s32.totalorder %s499, %s502
      %p508 = scmp.eq.s32.totalorder %s45, 0
      %p509 = por %p507, %p508
      %p510 = scmp.ne.s32.totalorder %s499, %s502
      %p511 = scmp.eq.s32.totalorder %s50, 3
      %p512 = por %p510, %p511
      %p513 = scmp.ne.s32.totalorder %s502, %s503
      %p514 = scmp.eq.s32.totalorder %s50, 0
      %p515 = por %p513, %p514
      %p516 = scmp.ne.s32.totalorder %s502, %s503
      %p517 = scmp.eq.s32.totalorder %s51, 3
      %p518 = por %p516, %p517
      %p520 = scmp.ne.s32.totalorder %s503, %s519
      %p521 = scmp.eq.s32.totalorder %s51, 0
      %p522 = por %p520, %p521
      %s523 = ssub.s32 %s53, %s60
      %p524 = scmp.eq.s32.totalorder %s523, 0
      %s526 = sadd.s32 %s525, 1
      %s527 = scalar_select %p524, %s525, %s526
      %p530 = pneg %p524
      %p531 = scmp.eq.s32.totalorder %s45, 3
      %p532 = por %p530, %p531
      %p533 = scmp.ne.s32.totalorder %s525, %s528
      %p534 = scmp.eq.s32.totalorder %s45, 0
      %p535 = por %p533, %p534
      %p536 = scmp.ne.s32.totalorder %s525, %s528
      %p537 = scmp.eq.s32.totalorder %s50, 3
      %p538 = por %p536, %p537
      %p539 = scmp.ne.s32.totalorder %s528, %s529
      %p540 = scmp.eq.s32.totalorder %s50, 0
      %p541 = por %p539, %p540
      %p542 = scmp.ne.s32.totalorder %s528, %s529
      %p543 = scmp.eq.s32.totalorder %s51, 3
      %p544 = por %p542, %p543
      %p546 = scmp.ne.s32.totalorder %s529, %s545
      %p547 = scmp.eq.s32.totalorder %s51, 0
      %p548 = por %p546, %p547
      %s550 = sadd.s32 %s549, 1
      %p553 = scmp.eq.s32.totalorder %s45, 3
      %p554 = scmp.ne.s32.totalorder %s549, %s551
      %p555 = scmp.eq.s32.totalorder %s45, 0
      %p556 = por %p554, %p555
      %p557 = scmp.ne.s32.totalorder %s549, %s551
      %p558 = scmp.eq.s32.totalorder %s50, 3
      %p559 = por %p557, %p558
      %p560 = scmp.ne.s32.totalorder %s551, %s552
      %p561 = scmp.eq.s32.totalorder %s50, 0
      %p562 = por %p560, %p561
      %p563 = scmp.ne.s32.totalorder %s551, %s552
      %p564 = scmp.eq.s32.totalorder %s51, 3
      %p565 = por %p563, %p564
      %p567 = scmp.ne.s32.totalorder %s552, %s566
      %p568 = scmp.eq.s32.totalorder %s51, 0
      %p569 = por %p567, %p568
      %s571 = sadd.s32 %s570, 1
      %p574 = scmp.eq.s32.totalorder %s45, 3
      %p575 = scmp.ne.s32.totalorder %s570, %s572
      %p576 = scmp.eq.s32.totalorder %s45, 0
      %p577 = por %p575, %p576
      %p578 = scmp.ne.s32.totalorder %s570, %s572
      %p579 = scmp.eq.s32.totalorder %s50, 3
      %p580 = por %p578, %p579
      %p581 = scmp.ne.s32.totalorder %s572, %s573
      %p582 = scmp.eq.s32.totalorder %s50, 0
      %p583 = por %p581, %p582
      %p584 = scmp.ne.s32.totalorder %s572, %s573
      %p585 = scmp.eq.s32.totalorder %s51, 3
      %p586 = por %p584, %p585
      %p588 = scmp.ne.s32.totalorder %s573, %s587
      %p589 = scmp.eq.s32.totalorder %s51, 0
      %p590 = por %p588, %p589
      %s592 = sadd.s32 %s591, 1
      %p595 = scmp.eq.s32.totalorder %s45, 3
      %p596 = scmp.ne.s32.totalorder %s591, %s593
      %p597 = scmp.eq.s32.totalorder %s45, 0
      %p598 = por %p596, %p597
      %p599 = scmp.ne.s32.totalorder %s591, %s593
      %p600 = scmp.eq.s32.totalorder %s50, 3
      %p601 = por %p599, %p600
      %p602 = scmp.ne.s32.totalorder %s593, %s594
      %p603 = scmp.eq.s32.totalorder %s50, 0
      %p604 = por %p602, %p603
      %p605 = scmp.ne.s32.totalorder %s593, %s594
      %p606 = scmp.eq.s32.totalorder %s51, 3
      %p607 = por %p605, %p606
      %p609 = scmp.ne.s32.totalorder %s594, %s608
      %p610 = scmp.eq.s32.totalorder %s51, 0
      %p611 = por %p609, %p610
      %s612 = ssub.s32 %s52, %s64
      %p613 = scmp.eq.s32.totalorder %s612, 0
      %s615 = sadd.s32 %s614, 1
      %s616 = scalar_select %p613, %s614, %s615
      %p619 = pneg %p613
      %p620 = scmp.eq.s32.totalorder %s45, 3
      %p621 = por %p619, %p620
      %p622 = scmp.ne.s32.totalorder %s614, %s617
      %p623 = scmp.eq.s32.totalorder %s45, 0
      %p624 = por %p622, %p623
      %p625 = scmp.ne.s32.totalorder %s614, %s617
      %p626 = scmp.eq.s32.totalorder %s50, 3
      %p627 = por %p625, %p626
      %p628 = scmp.ne.s32.totalorder %s617, %s618
      %p629 = scmp.eq.s32.totalorder %s50, 0
      %p630 = por %p628, %p629
      %p631 = scmp.ne.s32.totalorder %s617, %s618
      %p632 = scmp.eq.s32.totalorder %s51, 3
      %p633 = por %p631, %p632
      %p635 = scmp.ne.s32.totalorder %s618, %s634
      %p636 = scmp.eq.s32.totalorder %s51, 0
      %p637 = por %p635, %p636
      %p638 = scmp.le.s32.totalorder 1, %s45
      %p639 = scmp.lt.s32.totalorder %s45, 5
      %p640 = pnand %p638, %p639
      %p641 = pneg %p640
      // Predicated region
      $region9: #{vl_model_forward.3} parent=5 // pred_check
        _
      $region10: #{vl_model_forward.3} parent=5 // pred_check_branch
        %643 = sbr.rel (%p640) target = $region12
      $region11: #{vl_model_forward.3} parent=5 // pred_region
        %s644 = ssub.s32 %s45, 1
        // Predicated region
        $region13: #{vl_model_forward.3} parent=11 // pred_check
          %p645 = pneg %p104
        $region14: #{vl_model_forward.3} parent=11 // pred_check_branch
          %647 = sbr.rel (%p645) target = $region16
        $region15: #{vl_model_forward.3} parent=11 // pred_region
          %649 = vsyncadd [#allocation4], 0
          %s650 = sshll.u32 %s1, 4
          %s651 = int_to_ptr.hbm [resolvable:$true] %s650
          %s652 = sshll.u32 [#allocation3], 4
          %s653 = int_to_ptr.vmem [resolvable:$true] %s652
          %658 = dma.hbm_to_vmem [thread:$0]  %s651, 1024, %s653, [#allocation4], 64, 64, 4
        $region16: #{vl_model_forward.3} parent=11 // pred_fallthru
          _
        // Predicated region
        $region17: #{vl_model_forward.3} parent=11 // pred_check
          %p659 = pneg %p125
        $region18: #{vl_model_forward.3} parent=11 // pred_check_branch
          %661 = sbr.rel (%p659) target = $region20
        $region19: #{vl_model_forward.3} parent=11 // pred_region
          _
        $region20: #{vl_model_forward.3} parent=11 // pred_fallthru
          _
        // Predicated region
        $region21: #{vl_model_forward.3} parent=11 // pred_check
          %p662 = pneg %p562
        $region22: #{vl_model_forward.3} parent=11 // pred_check_branch
          %664 = sbr.rel (%p662) target = $region24
        $region23: #{vl_model_forward.3} parent=11 // pred_region
          %666 = vsyncadd [#allocation16], 0
          %s668 = sshll.u32 %s19, 4
          %s669 = int_to_ptr.hbm [resolvable:$true] %s668
          %s670 = sshll.u32 [#allocation17], 4
          %s671 = int_to_ptr.vmem [resolvable:$true] %s670
          %673 = dma.hbm_to_vmem [thread:$0]  %s669, 32, %s671, [#allocation16]
        $region24: #{vl_model_forward.3} parent=11 // pred_fallthru
          _
        // Predicated region
        $region25: #{vl_model_forward.3} parent=11 // pred_check
          %p674 = pneg %p583
        $region26: #{vl_model_forward.3} parent=11 // pred_check_branch
          %676 = sbr.rel (%p674) target = $region28
        $region27: #{vl_model_forward.3} parent=11 // pred_region
          %678 = vsyncadd [#allocation19], 0
          %s679 = sshll.u32 %s20, 4
          %s680 = int_to_ptr.hbm [resolvable:$true] %s679
          %s681 = sshll.u32 [#allocation18], 4
          %s682 = int_to_ptr.vmem [resolvable:$true] %s681
          %687 = dma.hbm_to_vmem [thread:$0]  %s680, 1024, %s682, [#allocation19], 64, 64, 4
        $region28: #{vl_model_forward.3} parent=11 // pred_fallthru
          _
        // Predicated region
        $region29: #{vl_model_forward.3} parent=11 // pred_check
          %p688 = pneg %p604
        $region30: #{vl_model_forward.3} parent=11 // pred_check_branch
          %690 = sbr.rel (%p688) target = $region32
        $region31: #{vl_model_forward.3} parent=11 // pred_region
          %692 = vsyncadd [#allocation19], 0
          %s694 = sshll.u32 %s21, 4
          %s695 = int_to_ptr.hbm [resolvable:$true] %s694
          %s696 = sshll.u32 [#allocation20], 4
          %s697 = int_to_ptr.vmem [resolvable:$true] %s696
          %699 = dma.hbm_to_vmem [thread:$0]  %s695, 16, %s697, [#allocation19]
        $region32: #{vl_model_forward.3} parent=11 // pred_fallthru
          _
      $region12: #{vl_model_forward.3} parent=5 // pred_fallthru
        _
      %p700 = scmp.lt.s32.totalorder %s45, 4
      // Predicated region
      $region33: #{vl_model_forward.3} parent=5 // pred_check
        %p701 = pneg %p700
      $region34: #{vl_model_forward.3} parent=5 // pred_check_branch
        %703 = sbr.rel (%p701) target = $region36
      $region35: #{vl_model_forward.3} parent=5 // pred_region
        // Predicated region
        $region37: #{vl_model_forward.3} parent=35 // pred_check
          %p704 = pneg %p77
        $region38: #{vl_model_forward.3} parent=35 // pred_check_branch
          %706 = sbr.rel (%p704) target = $region40
        $region39: #{vl_model_forward.3} parent=35 // pred_region
          %p707 = scmp.lt.s32.totalorder %s52, 1
          %s708 = scalar_select %p707, %s52, 1
          %s709 = smul.addr %s708, 8
          %s710 = scalar_lea.vmem %s0, %s709
        $region40: #{vl_model_forward.3} parent=35 // pred_fallthru
          _
        // Predicated region
        $region41: #{vl_model_forward.3} parent=35 // pred_check
          %p711 = pneg %p145
        $region42: #{vl_model_forward.3} parent=35 // pred_check_branch
          %713 = sbr.rel (%p711) target = $region44
        $region43: #{vl_model_forward.3} parent=35 // pred_region
          %p714 = scmp.lt.s32.totalorder %s52, 1
          %s715 = scalar_select %p714, %s52, 1
          %s716 = smul.addr %s715, 8
          %s717 = scalar_lea.vmem %s3, %s716
        $region44: #{vl_model_forward.3} parent=35 // pred_fallthru
          _
        // Predicated region
        $region45: #{vl_model_forward.3} parent=35 // pred_check
          %p718 = pneg %p171
        $region46: #{vl_model_forward.3} parent=35 // pred_check_branch
          %720 = sbr.rel (%p718) target = $region48
        $region47: #{vl_model_forward.3} parent=35 // pred_region
          %p721 = scmp.lt.s32.totalorder %s53, 1
          %s722 = scalar_select %p721, %s53, 1
          %s723 = smul.addr %s722, 8
          %s724 = scalar_lea.vmem %s4, %s723
        $region48: #{vl_model_forward.3} parent=35 // pred_fallthru
          _
        // Predicated region
        $region49: #{vl_model_forward.3} parent=35 // pred_check
          %p725 = pneg %p197
        $region50: #{vl_model_forward.3} parent=35 // pred_check_branch
          %727 = sbr.rel (%p725) target = $region52
        $region51: #{vl_model_forward.3} parent=35 // pred_region
          %p728 = scmp.lt.s32.totalorder %s53, 1
          %s729 = scalar_select %p728, %s53, 1
          %s730 = smul.addr %s729, 48
          %s731 = smul.addr %s730, 4
          %s732 = scalar_lea.vmem %s5, %s731
        $region52: #{vl_model_forward.3} parent=35 // pred_fallthru
          _
        // Predicated region
        $region53: #{vl_model_forward.3} parent=35 // pred_check
          %p733 = pneg %p223
        $region54: #{vl_model_forward.3} parent=35 // pred_check_branch
          %735 = sbr.rel (%p733) target = $region56
        $region55: #{vl_model_forward.3} parent=35 // pred_region
          %p736 = scmp.lt.s32.totalorder %s53, 1
          %s737 = scalar_select %p736, %s53, 1
          %s738 = smul.addr %s737, 3
          %s739 = scalar_lea.vmem %s6, %s738
        $region56: #{vl_model_forward.3} parent=35 // pred_fallthru
          _
        // Predicated region
        $region57: #{vl_model_forward.3} parent=35 // pred_check
          %p740 = pneg %p249
        $region58: #{vl_model_forward.3} parent=35 // pred_check_branch
          %742 = sbr.rel (%p740) target = $region60
        $region59: #{vl_model_forward.3} parent=35 // pred_region
          %s743 = sand.u32 %s45, 1
          %s744 = scalar_lea.sflag [#allocation7], %s743
          %s745 = sand.u32 %s239, 1
          %s746 = smul.addr %s745, 64
          %s747 = scalar_lea.vmem [#allocation6], %s746
          %749 = vsyncadd %s744, 0
          %s750 = smul.addr %s53, 16
          %s751 = smul.addr %s750, 4
          %s752 = scalar_lea.hbm %s7, %s751
          %s753 = sshll.u32 %s752, 4
          %s754 = int_to_ptr.hbm [resolvable:$true] %s753
          %s755 = sshll.u32 %s747, 4
          %s756 = int_to_ptr.vmem [resolvable:$true] %s755
          %761 = dma.hbm_to_vmem [thread:$0]  %s754, 1024, %s756, %s744, 64, 64, 4
        $region60: #{vl_model_forward.3} parent=35 // pred_fallthru
          _
        // Predicated region
        $region61: #{vl_model_forward.3} parent=35 // pred_check
          %p762 = pneg %p275
        $region62: #{vl_model_forward.3} parent=35 // pred_check_branch
          %764 = sbr.rel (%p762) target = $region64
        $region63: #{vl_model_forward.3} parent=35 // pred_region
          %p765 = scmp.lt.s32.totalorder %s53, 1
          %s766 = scalar_select %p765, %s53, 1
          %s767 = scalar_lea.vmem %s8, %s766
        $region64: #{vl_model_forward.3} parent=35 // pred_fallthru
          _
        // Predicated region
        $region65: #{vl_model_forward.3} parent=35 // pred_check
          %p768 = pneg %p301
        $region66: #{vl_model_forward.3} parent=35 // pred_check_branch
          %770 = sbr.rel (%p768) target = $region68
        $region67: #{vl_model_forward.3} parent=35 // pred_region
          %s771 = sand.u32 %s45, 1
          %s772 = scalar_lea.sflag [#allocation7], %s771
          %s773 = sand.u32 %s291, 1
          %s774 = smul.addr %s773, 64
          %s775 = scalar_lea.vmem [#allocation8], %s774
          %777 = vsyncadd %s772, 0
          %s778 = smul.addr %s53, 16
          %s779 = smul.addr %s778, 4
          %s780 = scalar_lea.hbm %s9, %s779
          %s781 = sshll.u32 %s780, 4
          %s782 = int_to_ptr.hbm [resolvable:$true] %s781
          %s783 = sshll.u32 %s775, 4
          %s784 = int_to_ptr.vmem [resolvable:$true] %s783
          %789 = dma.hbm_to_vmem [thread:$0]  %s782, 1024, %s784, %s772, 64, 64, 4
        $region68: #{vl_model_forward.3} parent=35 // pred_fallthru
          _
        // Predicated region
        $region69: #{vl_model_forward.3} parent=35 // pred_check
          %p790 = pneg %p327
        $region70: #{vl_model_forward.3} parent=35 // pred_check_branch
          %792 = sbr.rel (%p790) target = $region72
        $region71: #{vl_model_forward.3} parent=35 // pred_region
          %p793 = scmp.lt.s32.totalorder %s53, 1
          %s794 = scalar_select %p793, %s53, 1
          %s795 = scalar_lea.vmem %s10, %s794
        $region72: #{vl_model_forward.3} parent=35 // pred_fallthru
          _
        // Predicated region
        $region73: #{vl_model_forward.3} parent=35 // pred_check
          %p796 = pneg %p353
        $region74: #{vl_model_forward.3} parent=35 // pred_check_branch
          %798 = sbr.rel (%p796) target = $region76
        $region75: #{vl_model_forward.3} parent=35 // pred_region
          %s799 = sand.u32 %s45, 1
          %s800 = scalar_lea.sflag [#allocation10], %s799
          %s801 = sand.u32 %s343, 1
          %s802 = smul.addr %s801, 128
          %s803 = scalar_lea.vmem [#allocation9], %s802
          %805 = vsyncadd %s800, 0
          %s806 = smul.addr %s53, 32
          %s807 = smul.addr %s806, 4
          %s808 = scalar_lea.hbm %s11, %s807
          %s809 = sshll.u32 %s808, 4
          %s810 = int_to_ptr.hbm [resolvable:$true] %s809
          %s811 = sshll.u32 %s803, 4
          %s812 = int_to_ptr.vmem [resolvable:$true] %s811
          %817 = dma.hbm_to_vmem [thread:$0]  %s810, 2048, %s812, %s800, 128, 128, 8
        $region76: #{vl_model_forward.3} parent=35 // pred_fallthru
          _
        // Predicated region
        $region77: #{vl_model_forward.3} parent=35 // pred_check
          %p818 = pneg %p379
        $region78: #{vl_model_forward.3} parent=35 // pred_check_branch
          %820 = sbr.rel (%p818) target = $region80
        $region79: #{vl_model_forward.3} parent=35 // pred_region
          %p821 = scmp.lt.s32.totalorder %s53, 1
          %s822 = scalar_select %p821, %s53, 1
          %s823 = smul.addr %s822, 2
          %s824 = scalar_lea.vmem %s12, %s823
        $region80: #{vl_model_forward.3} parent=35 // pred_fallthru
          _
        // Predicated region
        $region81: #{vl_model_forward.3} parent=35 // pred_check
          %p825 = pneg %p405
        $region82: #{vl_model_forward.3} parent=35 // pred_check_branch
          %827 = sbr.rel (%p825) target = $region84
        $region83: #{vl_model_forward.3} parent=35 // pred_region
          %s828 = sand.u32 %s45, 1
          %s829 = scalar_lea.sflag [#allocation10], %s828
          %s830 = sand.u32 %s395, 1
          %s831 = smul.addr %s830, 64
          %s832 = scalar_lea.vmem [#allocation11], %s831
          %834 = vsyncadd %s829, 0
          %s835 = smul.addr %s53, 16
          %s836 = smul.addr %s835, 4
          %s837 = scalar_lea.hbm %s13, %s836
          %s838 = sshll.u32 %s837, 4
          %s839 = int_to_ptr.hbm [resolvable:$true] %s838
          %s840 = sshll.u32 %s832, 4
          %s841 = int_to_ptr.vmem [resolvable:$true] %s840
          %846 = dma.hbm_to_vmem [thread:$0]  %s839, 1024, %s841, %s829, 64, 64, 4
        $region84: #{vl_model_forward.3} parent=35 // pred_fallthru
          _
        // Predicated region
        $region85: #{vl_model_forward.3} parent=35 // pred_check
          %p847 = pneg %p431
        $region86: #{vl_model_forward.3} parent=35 // pred_check_branch
          %849 = sbr.rel (%p847) target = $region88
        $region87: #{vl_model_forward.3} parent=35 // pred_region
          %p850 = scmp.lt.s32.totalorder %s53, 1
          %s851 = scalar_select %p850, %s53, 1
          %s852 = scalar_lea.vmem %s14, %s851
        $region88: #{vl_model_forward.3} parent=35 // pred_fallthru
          _
        // Predicated region
        $region89: #{vl_model_forward.3} parent=35 // pred_check
          %p853 = pneg %p457
        $region90: #{vl_model_forward.3} parent=35 // pred_check_branch
          %855 = sbr.rel (%p853) target = $region92
        $region91: #{vl_model_forward.3} parent=35 // pred_region
          %s856 = sand.u32 %s45, 1
          %s857 = scalar_lea.sflag [#allocation13], %s856
          %s858 = sand.u32 %s447, 1
          %s859 = smul.addr %s858, 128
          %s860 = scalar_lea.vmem [#allocation12], %s859
          %862 = vsyncadd %s857, 0
          %s863 = smul.addr %s53, 32
          %s864 = smul.addr %s863, 4
          %s865 = scalar_lea.hbm %s15, %s864
          %s866 = sshll.u32 %s865, 4
          %s867 = int_to_ptr.hbm [resolvable:$true] %s866
          %s868 = sshll.u32 %s860, 4
          %s869 = int_to_ptr.vmem [resolvable:$true] %s868
          %874 = dma.hbm_to_vmem [thread:$0]  %s867, 2048, %s869, %s857, 128, 128, 8
        $region92: #{vl_model_forward.3} parent=35 // pred_fallthru
          _
        // Predicated region
        $region93: #{vl_model_forward.3} parent=35 // pred_check
          %p875 = pneg %p483
        $region94: #{vl_model_forward.3} parent=35 // pred_check_branch
          %877 = sbr.rel (%p875) target = $region96
        $region95: #{vl_model_forward.3} parent=35 // pred_region
          %p878 = scmp.lt.s32.totalorder %s53, 1
          %s879 = scalar_select %p878, %s53, 1
          %s880 = smul.addr %s879, 2
          %s881 = scalar_lea.vmem %s16, %s880
        $region96: #{vl_model_forward.3} parent=35 // pred_fallthru
          _
        // Predicated region
        $region97: #{vl_model_forward.3} parent=35 // pred_check
          %p882 = pneg %p509
        $region98: #{vl_model_forward.3} parent=35 // pred_check_branch
          %884 = sbr.rel (%p882) target = $region100
        $region99: #{vl_model_forward.3} parent=35 // pred_region
          %s885 = sand.u32 %s45, 1
          %s886 = scalar_lea.sflag [#allocation13], %s885
          %s887 = sand.u32 %s499, 1
          %s888 = smul.addr %s887, 128
          %s889 = scalar_lea.vmem [#allocation14], %s888
          %891 = vsyncadd %s886, 0
          %s892 = smul.addr %s53, 32
          %s893 = smul.addr %s892, 4
          %s894 = scalar_lea.hbm %s17, %s893
          %s895 = sshll.u32 %s894, 4
          %s896 = int_to_ptr.hbm [resolvable:$true] %s895
          %s897 = sshll.u32 %s889, 4
          %s898 = int_to_ptr.vmem [resolvable:$true] %s897
          %903 = dma.hbm_to_vmem [thread:$0]  %s896, 2048, %s898, %s886, 64, 64, 4
        $region100: #{vl_model_forward.3} parent=35 // pred_fallthru
          _
        // Predicated region
        $region101: #{vl_model_forward.3} parent=35 // pred_check
          %p904 = pneg %p535
        $region102: #{vl_model_forward.3} parent=35 // pred_check_branch
          %906 = sbr.rel (%p904) target = $region104
        $region103: #{vl_model_forward.3} parent=35 // pred_region
          %s907 = sand.u32 %s45, 1
          %s908 = scalar_lea.sflag [#allocation16], %s907
          %s909 = sand.u32 %s525, 1
          %s910 = scalar_lea.vmem [#allocation15], %s909
          %912 = vsyncadd %s908, 0
          %s913 = scalar_lea.hbm %s18, %s53
          %s915 = sshll.u32 %s913, 4
          %s916 = int_to_ptr.hbm [resolvable:$true] %s915
          %s917 = sshll.u32 %s910, 4
          %s918 = int_to_ptr.vmem [resolvable:$true] %s917
          %920 = dma.hbm_to_vmem [thread:$0]  %s916, 16, %s918, %s908
        $region104: #{vl_model_forward.3} parent=35 // pred_fallthru
          _
      $region36: #{vl_model_forward.3} parent=5 // pred_fallthru
        _
      %p921 = scmp.le.s32.totalorder 1, %s45
      %p922 = scmp.lt.s32.totalorder %s45, 5
      %p923 = pnand %p921, %p922
      %p924 = pneg %p923
      // Predicated region
      $region105: #{vl_model_forward.3} parent=5 // pred_check
        _
      $region106: #{vl_model_forward.3} parent=5 // pred_check_branch
        %926 = sbr.rel (%p923) target = $region108
      $region107: #{vl_model_forward.3} parent=5 // pred_region
        %s927 = ssub.s32 %s45, 1
        // Predicated region
        $region109: #{vl_model_forward.3} parent=107 // pred_check
          %p928 = pneg %p104
        $region110: #{vl_model_forward.3} parent=107 // pred_check_branch
          %930 = sbr.rel (%p928) target = $region112
        $region111: #{vl_model_forward.3} parent=107 // pred_region
          %932 = dma.done [#allocation4], 1024
        $region112: #{vl_model_forward.3} parent=107 // pred_fallthru
          _
        %s933 = sand.u32 %s50, 1
        %s934 = scalar_lea.sflag [#allocation7], %s933
        %s935 = sand.u32 %s242, 1
        %s936 = smul.addr %s935, 64
        %s937 = scalar_lea.vmem [#allocation6], %s936
        // Predicated region
        $region113: #{vl_model_forward.3} parent=107 // pred_check
          %p938 = pneg %p255
        $region114: #{vl_model_forward.3} parent=107 // pred_check_branch
          %940 = sbr.rel (%p938) target = $region116
        $region115: #{vl_model_forward.3} parent=107 // pred_region
          %942 = dma.done %s934, 1024
        $region116: #{vl_model_forward.3} parent=107 // pred_fallthru
          _
        %s943 = sand.u32 %s50, 1
        %s944 = scalar_lea.sflag [#allocation7], %s943
        %s945 = sand.u32 %s294, 1
        %s946 = smul.addr %s945, 64
        %s947 = scalar_lea.vmem [#allocation8], %s946
        // Predicated region
        $region117: #{vl_model_forward.3} parent=107 // pred_check
          %p948 = pneg %p307
        $region118: #{vl_model_forward.3} parent=107 // pred_check_branch
          %950 = sbr.rel (%p948) target = $region120
        $region119: #{vl_model_forward.3} parent=107 // pred_region
          %952 = dma.done %s944, 1024
        $region120: #{vl_model_forward.3} parent=107 // pred_fallthru
          _
        %s953 = sand.u32 %s50, 1
        %s954 = scalar_lea.sflag [#allocation10], %s953
        %s955 = sand.u32 %s346, 1
        %s956 = smul.addr %s955, 128
        %s957 = scalar_lea.vmem [#allocation9], %s956
        // Predicated region
        $region121: #{vl_model_forward.3} parent=107 // pred_check
          %p958 = pneg %p359
        $region122: #{vl_model_forward.3} parent=107 // pred_check_branch
          %960 = sbr.rel (%p958) target = $region124
        $region123: #{vl_model_forward.3} parent=107 // pred_region
          %962 = dma.done %s954, 2048
        $region124: #{vl_model_forward.3} parent=107 // pred_fallthru
          _
        %s963 = sand.u32 %s50, 1
        %s964 = scalar_lea.sflag [#allocation10], %s963
        %s965 = sand.u32 %s398, 1
        %s966 = smul.addr %s965, 64
        %s967 = scalar_lea.vmem [#allocation11], %s966
        // Predicated region
        $region125: #{vl_model_forward.3} parent=107 // pred_check
          %p968 = pneg %p411
        $region126: #{vl_model_forward.3} parent=107 // pred_check_branch
          %970 = sbr.rel (%p968) target = $region128
        $region127: #{vl_model_forward.3} parent=107 // pred_region
          %972 = dma.done %s964, 1024
        $region128: #{vl_model_forward.3} parent=107 // pred_fallthru
          _
        %s973 = sand.u32 %s50, 1
        %s974 = scalar_lea.sflag [#allocation13], %s973
        %s975 = sand.u32 %s450, 1
        %s976 = smul.addr %s975, 128
        %s977 = scalar_lea.vmem [#allocation12], %s976
        // Predicated region
        $region129: #{vl_model_forward.3} parent=107 // pred_check
          %p978 = pneg %p463
        $region130: #{vl_model_forward.3} parent=107 // pred_check_branch
          %980 = sbr.rel (%p978) target = $region132
        $region131: #{vl_model_forward.3} parent=107 // pred_region
          %982 = dma.done %s974, 2048
        $region132: #{vl_model_forward.3} parent=107 // pred_fallthru
          _
        %s983 = sand.u32 %s50, 1
        %s984 = scalar_lea.sflag [#allocation13], %s983
        %s985 = sand.u32 %s502, 1
        %s986 = smul.addr %s985, 128
        %s987 = scalar_lea.vmem [#allocation14], %s986
        // Predicated region
        $region133: #{vl_model_forward.3} parent=107 // pred_check
          %p988 = pneg %p515
        $region134: #{vl_model_forward.3} parent=107 // pred_check_branch
          %990 = sbr.rel (%p988) target = $region136
        $region135: #{vl_model_forward.3} parent=107 // pred_region
          %992 = dma.done %s984, 2048
        $region136: #{vl_model_forward.3} parent=107 // pred_fallthru
          _
        %s993 = sand.u32 %s50, 1
        %s994 = scalar_lea.sflag [#allocation16], %s993
        %s995 = sand.u32 %s528, 1
        %s996 = scalar_lea.vmem [#allocation15], %s995
        // Predicated region
        $region137: #{vl_model_forward.3} parent=107 // pred_check
          %p997 = pneg %p541
        $region138: #{vl_model_forward.3} parent=107 // pred_check_branch
          %999 = sbr.rel (%p997) target = $region140
        $region139: #{vl_model_forward.3} parent=107 // pred_region
          %1001 = dma.done %s994, 16
        $region140: #{vl_model_forward.3} parent=107 // pred_fallthru
          _
        // Predicated region
        $region141: #{vl_model_forward.3} parent=107 // pred_check
          %p1002 = pneg %p562
        $region142: #{vl_model_forward.3} parent=107 // pred_check_branch
          %1004 = sbr.rel (%p1002) target = $region144
        $region143: #{vl_model_forward.3} parent=107 // pred_region
          %1006 = dma.done [#allocation16], 32
        $region144: #{vl_model_forward.3} parent=107 // pred_fallthru
          _
        // Predicated region
        $region145: #{vl_model_forward.3} parent=107 // pred_check
          %p1007 = pneg %p583
        $region146: #{vl_model_forward.3} parent=107 // pred_check_branch
          %1009 = sbr.rel (%p1007) target = $region148
        $region147: #{vl_model_forward.3} parent=107 // pred_region
          %1011 = dma.done [#allocation19], 1024
        $region148: #{vl_model_forward.3} parent=107 // pred_fallthru
          _
        // Predicated region
        $region149: #{vl_model_forward.3} parent=107 // pred_check
          %p1012 = pneg %p604
        $region150: #{vl_model_forward.3} parent=107 // pred_check_branch
          %1014 = sbr.rel (%p1012) target = $region152
        $region151: #{vl_model_forward.3} parent=107 // pred_region
          %1016 = dma.done [#allocation19], 16
        $region152: #{vl_model_forward.3} parent=107 // pred_fallthru
          _
        %p1017 = scmp.lt.s32.totalorder %s54, 1
        %s1018 = scalar_select %p1017, %s54, 1
        %s1019 = smul.addr %s1018, 8
        %s1020 = scalar_lea.vmem %s0, %s1019
        %p1021 = pneg %p83
        %p1022 = pneg %p80
        %p1023 = pneg %p104
        %p1024 = pneg %p101
        %p1025 = pneg %p125
        %p1026 = pneg %p122
        %p1027 = scmp.lt.s32.totalorder %s54, 1
        %s1028 = scalar_select %p1027, %s54, 1
        %s1029 = smul.addr %s1028, 8
        %s1030 = scalar_lea.vmem %s3, %s1029
        %p1031 = pneg %p151
        %p1032 = pneg %p148
        %p1033 = scmp.lt.s32.totalorder %s55, 1
        %s1034 = scalar_select %p1033, %s55, 1
        %s1035 = smul.addr %s1034, 8
        %s1036 = scalar_lea.vmem %s4, %s1035
        %p1037 = pneg %p177
        %p1038 = pneg %p174
        %p1039 = scmp.lt.s32.totalorder %s55, 1
        %s1040 = scalar_select %p1039, %s55, 1
        %s1041 = smul.addr %s1040, 48
        %s1042 = smul.addr %s1041, 4
        %s1043 = scalar_lea.vmem %s5, %s1042
        %p1044 = pneg %p203
        %p1045 = pneg %p200
        %p1046 = scmp.lt.s32.totalorder %s55, 1
        %s1047 = scalar_select %p1046, %s55, 1
        %s1048 = smul.addr %s1047, 3
        %s1049 = scalar_lea.vmem %s6, %s1048
        %p1050 = pneg %p229
        %p1051 = pneg %p226
        %s1052 = sand.u32 %s50, 1
        %s1053 = scalar_lea.sflag [#allocation7], %s1052
        %s1054 = sand.u32 %s242, 1
        %s1055 = smul.addr %s1054, 64
        %s1056 = scalar_lea.vmem [#allocation6], %s1055
        %p1057 = pneg %p255
        %p1058 = pneg %p252
        %p1059 = scmp.lt.s32.totalorder %s55, 1
        %s1060 = scalar_select %p1059, %s55, 1
        %s1061 = scalar_lea.vmem %s8, %s1060
        %p1062 = pneg %p281
        %p1063 = pneg %p278
        %s1064 = sand.u32 %s50, 1
        %s1065 = scalar_lea.sflag [#allocation7], %s1064
        %s1066 = sand.u32 %s294, 1
        %s1067 = smul.addr %s1066, 64
        %s1068 = scalar_lea.vmem [#allocation8], %s1067
        %p1069 = pneg %p307
        %p1070 = pneg %p304
        %p1071 = scmp.lt.s32.totalorder %s55, 1
        %s1072 = scalar_select %p1071, %s55, 1
        %s1073 = scalar_lea.vmem %s10, %s1072
        %p1074 = pneg %p333
        %p1075 = pneg %p330
        %s1076 = sand.u32 %s50, 1
        %s1077 = scalar_lea.sflag [#allocation10], %s1076
        %s1078 = sand.u32 %s346, 1
        %s1079 = smul.addr %s1078, 128
        %s1080 = scalar_lea.vmem [#allocation9], %s1079
        %p1081 = pneg %p359
        %p1082 = pneg %p356
        %p1083 = scmp.lt.s32.totalorder %s55, 1
        %s1084 = scalar_select %p1083, %s55, 1
        %s1085 = smul.addr %s1084, 2
        %s1086 = scalar_lea.vmem %s12, %s1085
        %p1087 = pneg %p385
        %p1088 = pneg %p382
        %s1089 = sand.u32 %s50, 1
        %s1090 = scalar_lea.sflag [#allocation10], %s1089
        %s1091 = sand.u32 %s398, 1
        %s1092 = smul.addr %s1091, 64
        %s1093 = scalar_lea.vmem [#allocation11], %s1092
        %p1094 = pneg %p411
        %p1095 = pneg %p408
        %p1096 = scmp.lt.s32.totalorder %s55, 1
        %s1097 = scalar_select %p1096, %s55, 1
        %s1098 = scalar_lea.vmem %s14, %s1097
        %p1099 = pneg %p437
        %p1100 = pneg %p434
        %s1101 = sand.u32 %s50, 1
        %s1102 = scalar_lea.sflag [#allocation13], %s1101
        %s1103 = sand.u32 %s450, 1
        %s1104 = smul.addr %s1103, 128
        %s1105 = scalar_lea.vmem [#allocation12], %s1104
        %p1106 = pneg %p463
        %p1107 = pneg %p460
        %p1108 = scmp.lt.s32.totalorder %s55, 1
        %s1109 = scalar_select %p1108, %s55, 1
        %s1110 = smul.addr %s1109, 2
        %s1111 = scalar_lea.vmem %s16, %s1110
        %p1112 = pneg %p489
        %p1113 = pneg %p486
        %s1114 = sand.u32 %s50, 1
        %s1115 = scalar_lea.sflag [#allocation13], %s1114
        %s1116 = sand.u32 %s502, 1
        %s1117 = smul.addr %s1116, 128
        %s1118 = scalar_lea.vmem [#allocation14], %s1117
        %p1119 = pneg %p515
        %p1120 = pneg %p512
        %s1121 = sand.u32 %s50, 1
        %s1122 = scalar_lea.sflag [#allocation16], %s1121
        %s1123 = sand.u32 %s528, 1
        %s1124 = scalar_lea.vmem [#allocation15], %s1123
        %p1125 = pneg %p541
        %p1126 = pneg %p538
        %p1127 = pneg %p562
        %p1128 = pneg %p559
        %p1129 = pneg %p583
        %p1130 = pneg %p580
        %p1131 = pneg %p604
        %p1132 = pneg %p601
        %p1133 = pneg %p630
        %p1134 = pneg %p627
        %s1135 = sand.u32 %s617, 1
        %s1136 = scalar_lea.sflag [#allocation5], %s1135
        %s1137 = sand.u32 %s617, 1
        %s1138 = smul.addr %s1137, 8
        %s1139 = scalar_lea.vmem [#allocation21], %s1138
        %p1140 = scmp.lt.s32.totalorder %s54, 1
        %s1141 = scalar_select %p1140, %s54, 1
        %s1142 = smul.addr %s1141, 8
        %s1143 = scalar_lea.vmem %s0, %s1142
        %p1144 = scmp.lt.s32.totalorder %s54, 1
        %s1145 = scalar_select %p1144, %s54, 1
        %s1146 = smul.addr %s1145, 8
        %s1147 = scalar_lea.vmem %s3, %s1146
        %p1148 = scmp.lt.s32.totalorder %s55, 1
        %s1149 = scalar_select %p1148, %s55, 1
        %s1150 = smul.addr %s1149, 8
        %s1151 = scalar_lea.vmem %s4, %s1150
        %p1152 = scmp.lt.s32.totalorder %s55, 1
        %s1153 = scalar_select %p1152, %s55, 1
        %s1154 = smul.addr %s1153, 48
        %s1155 = smul.addr %s1154, 4
        %s1156 = scalar_lea.vmem %s5, %s1155
        %p1157 = scmp.lt.s32.totalorder %s55, 1
        %s1158 = scalar_select %p1157, %s55, 1
        %s1159 = smul.addr %s1158, 3
        %s1160 = scalar_lea.vmem %s6, %s1159
        %p1161 = scmp.lt.s32.totalorder %s55, 1
        %s1162 = scalar_select %p1161, %s55, 1
        %s1163 = scalar_lea.vmem %s8, %s1162
        %p1164 = scmp.lt.s32.totalorder %s55, 1
        %s1165 = scalar_select %p1164, %s55, 1
        %s1166 = scalar_lea.vmem %s10, %s1165
        %p1167 = scmp.lt.s32.totalorder %s55, 1
        %s1168 = scalar_select %p1167, %s55, 1
        %s1169 = smul.addr %s1168, 2
        %s1170 = scalar_lea.vmem %s12, %s1169
        %p1171 = scmp.lt.s32.totalorder %s55, 1
        %s1172 = scalar_select %p1171, %s55, 1
        %s1173 = scalar_lea.vmem %s14, %s1172
        %p1174 = scmp.lt.s32.totalorder %s55, 1
        %s1175 = scalar_select %p1174, %s55, 1
        %s1176 = smul.addr %s1175, 2
        %s1177 = scalar_lea.vmem %s16, %s1176
        %v1179 = vld [vmem:[%s1147] sm:$0xff]
        %p1180 = scmp.eq.s32.totalorder %s55, 0
        // Predicated region
        $region153: #{vl_model_forward.3} parent=107 // pred_check
          %p1181 = pneg %p1180
        $region154: #{vl_model_forward.3} parent=107 // pred_check_branch
          %1183 = sbr.rel (%p1181) target = $region156
        $region155: #{vl_model_forward.3} parent=107 // pred_region
          %v1184 = vld [vmem:[%s1143] sm:$0xff]
          %v1185 = vlaneseq
          %v1186 = vand.u32 %v1185, 127
          %1187 = vset.pattern.permute.xlu0 0
          %1188 = vperm.xlu0 %1187, %v1184
          %v1189 = vpop.permute.xlu0 %1188
          %vm1190 = vcmp.eq.s32.totalorder %v1186, %v1189
          %v1191 = vsel %vm1190, 1, 0
          %v1192 = vcvt.s32.f32 %v1191
          %v1193 = vpack.c.bf16 %v1192, %v1192
          %v1194 = vld [vmem:[#allocation3] sm:$0xf]
          %v1195 = vld [vmem:[#allocation3 + $0x4] sm:$0xf]
          %v1196 = vld [vmem:[#allocation3 + $0x8] sm:$0xf]
          %v1197 = vld [vmem:[#allocation3 + $0xc] sm:$0xf]
          %v1198 = vld [vmem:[#allocation3 + $0x10] sm:$0xf]
          %v1199 = vld [vmem:[#allocation3 + $0x14] sm:$0xf]
          %v1200 = vld [vmem:[#allocation3 + $0x18] sm:$0xf]
          %v1201 = vld [vmem:[#allocation3 + $0x1c] sm:$0xf]
          %v1202 = vld [vmem:[#allocation3 + $0x20] sm:$0xf]
          %v1203 = vld [vmem:[#allocation3 + $0x24] sm:$0xf]
          %v1204 = vld [vmem:[#allocation3 + $0x28] sm:$0xf]
          %v1205 = vld [vmem:[#allocation3 + $0x2c] sm:$0xf]
          %v1206 = vld [vmem:[#allocation3 + $0x30] sm:$0xf]
          %v1207 = vld [vmem:[#allocation3 + $0x34] sm:$0xf]
          %v1208 = vld [vmem:[#allocation3 + $0x38] sm:$0xf]
          %v1209 = vld [vmem:[#allocation3 + $0x3c] sm:$0xf]
          %v1210 = vld [vmem:[%s2] sm:$0xff]
          %v1227 = vunpack.c.l.b16 %v1194
          %v1228 = vunpack.c.l.b16 %v1195
          %v1229 = vunpack.c.l.b16 %v1196
          %v1230 = vunpack.c.l.b16 %v1197
          %v1231 = vunpack.c.l.b16 %v1198
          %v1232 = vunpack.c.l.b16 %v1199
          %v1233 = vunpack.c.l.b16 %v1200
          %v1234 = vunpack.c.l.b16 %v1201
          %v1235 = vunpack.c.l.b16 %v1202
          %v1236 = vunpack.c.l.b16 %v1203
          %v1237 = vunpack.c.l.b16 %v1204
          %v1238 = vunpack.c.l.b16 %v1205
          %v1239 = vunpack.c.l.b16 %v1206
          %v1240 = vunpack.c.l.b16 %v1207
          %v1241 = vunpack.c.l.b16 %v1208
          %v1242 = vunpack.c.l.b16 %v1209
          %v1243 = vpack.c.b16 %v1228, %v1227
          %v1244 = vpack.c.b16 %v1230, %v1229
          %v1245 = vpack.c.b16 %v1232, %v1231
          %v1246 = vpack.c.b16 %v1234, %v1233
          %v1247 = vpack.c.b16 %v1236, %v1235
          %v1248 = vpack.c.b16 %v1238, %v1237
          %v1249 = vpack.c.b16 %v1240, %v1239
          %v1250 = vpack.c.b16 %v1242, %v1241
          %1259 = vmatpush.bf16.msra.mxu0 %v1250
          %1260 = vmatpush.bf16.msra.mxu0 %v1249
          %1261 = vmatpush.bf16.msra.mxu0 %v1248
          %1262 = vmatpush.bf16.msra.mxu0 %v1247
          %1263 = vmatpush.bf16.msra.mxu0 %v1246
          %1264 = vmatpush.bf16.msra.mxu0 %v1245
          %1265 = vmatpush.bf16.msra.mxu0 %v1244
          %1266 = vmatpush.bf16.msra.mxu0 %v1243
          %1267 = vmatmul.bf16.gmra.mxu0 %v1193
          %v1268 = vpop.f32.mrf.mxu0
          %v1269 = vadd.f32 %v1210, %v1268
          %v1270 = vpop.f32.mrf.mxu0
          %1271 = vdwg.mxu0
          %1272 = vst [vmem:[#allocation2] sm:$0xff] %v1269
        $region156: #{vl_model_forward.3} parent=107 // pred_fallthru
          _
        %v1273 = vld [vmem:[#allocation2] sm:$0xff]
        %v1274 = vld [vmem:[%s1151] sm:$0x3f]
        %v1275 = vlaneseq
        %v1276 = vshrl.u32 %v1275, 7
        %v1277 = vlaneseq
        %v1278 = vand.u32 %v1277, 127
        %vm1279 = vcmp.le.s32.totalorder %v1278, %v1276
        %v1280 = vsel %vm1279, 0.0, -1e+30
        %vm1281 = vcmp.lt.s32.totalorder %v1278, 5
        %v1282 = vsel %vm1281, 0.0, -1e+30
        %1283 = vadd.xlane.f32.xlu0 %v1273
        %v1284 = vpop.xlane.xlu0 %1283
        %v1285 = vrcp.pop 128.0
        %v1286 = vmul.f32 128.0, %v1285
        %v1287 = vsub.f32 1.0, %v1286
        %v1288 = vmul.f32 %v1285, %v1287
        %v1289 = vadd.f32 %v1285, %v1288
        %vm1290 = vweird.f32 %v1285
        %v1291 = vsel %vm1290, %v1285, %v1289
        %v1292 = vmul.f32 %v1284, %v1291
        %v1293 = vsub.f32 %v1273, %v1292
        %v1294 = vmul.f32 %v1293, %v1293
        %1295 = vadd.xlane.f32.xlu0 %v1294
        %v1296 = vpop.xlane.xlu0 %1295
        %v1297 = vmul.f32 %v1296, %v1291
        %v1298 = vadd.f32 %v1297, 1e-05
        %v1299 = vrsqrt.pop %v1298
        %v1300 = vmul.f32 %v1299, %v1298
        %v1301 = vmul.f32 %v1300, %v1299
        %v1302 = vmul.f32 0.5, %v1301
        %v1303 = vsub.f32 1.5, %v1302
        %v1304 = vmul.f32 %v1299, %v1303
        %vm1305 = vweird.f32 %v1298
        %vm1306 = vweird.f32 %v1299
        %vm1307 = vmor %vm1305, %vm1306
        %v1308 = vsel %vm1307, %v1299, %v1304
        %v1309 = vmul.f32 %v1293, %v1308
        %v1310 = vperm.slane %v1274, 0
        %v1311 = vmul.f32 %v1309, %v1310
        %v1312 = vperm.slane %v1274, 1
        %v1313 = vadd.f32 %v1311, %v1312
        %v1314 = vpack.c.bf16 %v1313, %v1313
        %v1315 = vld [vmem:[%s1156] sm:$0xff]
        %v1316 = vld [vmem:[%s1156 + $0x8] sm:$0xf]
        %v1317 = vld [vmem:[%s1156 + $0xc] sm:$0xff]
        %v1318 = vld [vmem:[%s1156 + $0x14] sm:$0xf]
        %v1319 = vld [vmem:[%s1156 + $0x18] sm:$0xff]
        %v1320 = vld [vmem:[%s1156 + $0x20] sm:$0xf]
        %v1321 = vld [vmem:[%s1156 + $0x24] sm:$0xff]
        %v1322 = vld [vmem:[%s1156 + $0x2c] sm:$0xf]
        %v1323 = vld [vmem:[%s1156 + $0x30] sm:$0xff]
        %v1324 = vld [vmem:[%s1156 + $0x38] sm:$0xf]
        %v1325 = vld [vmem:[%s1156 + $0x3c] sm:$0xff]
        %v1326 = vld [vmem:[%s1156 + $0x44] sm:$0xf]
        %v1327 = vld [vmem:[%s1156 + $0x48] sm:$0xff]
        %v1328 = vld [vmem:[%s1156 + $0x50] sm:$0xf]
        %v1329 = vld [vmem:[%s1156 + $0x54] sm:$0xff]
        %v1330 = vld [vmem:[%s1156 + $0x5c] sm:$0xf]
        %v1331 = vld [vmem:[%s1156 + $0x60] sm:$0xff]
        %v1332 = vld [vmem:[%s1156 + $0x68] sm:$0xf]
        %v1333 = vld [vmem:[%s1156 + $0x6c] sm:$0xff]
        %v1334 = vld [vmem:[%s1156 + $0x74] sm:$0xf]
        %v1335 = vld [vmem:[%s1156 + $0x78] sm:$0xff]
        %v1336 = vld [vmem:[%s1156 + $0x80] sm:$0xf]
        %v1337 = vld [vmem:[%s1156 + $0x84] sm:$0xff]
        %v1338 = vld [vmem:[%s1156 + $0x8c] sm:$0xf]
        %v1339 = vld [vmem:[%s1156 + $0x90] sm:$0xff]
        %v1340 = vld [vmem:[%s1156 + $0x98] sm:$0xf]
        %v1341 = vld [vmem:[%s1156 + $0x9c] sm:$0xff]
        %v1342 = vld [vmem:[%s1156 + $0xa4] sm:$0xf]
        %v1343 = vld [vmem:[%s1156 + $0xa8] sm:$0xff]
        %v1344 = vld [vmem:[%s1156 + $0xb0] sm:$0xf]
        %v1345 = vld [vmem:[%s1156 + $0xb4] sm:$0xff]
        %v1346 = vld [vmem:[%s1156 + $0xbc] sm:$0xf]
        %v1347 = vld [vmem:[%s1160] sm:$0x7]
        %v1349 = vperm.slane %v1347, 0
        %v1350 = vperm.slane %v1347, 1
        %v1351 = vperm.slane %v1347, 2
        %v1387 = vunpack.c.l.b16 %v1315
        %v1388 = vunpack.c.h.b16 %v1315
        %v1389 = vunpack.c.l.b16 %v1316
        %v1390 = vunpack.c.l.b16 %v1317
        %v1391 = vunpack.c.h.b16 %v1317
        %v1392 = vunpack.c.l.b16 %v1318
        %v1393 = vunpack.c.l.b16 %v1319
        %v1394 = vunpack.c.h.b16 %v1319
        %v1395 = vunpack.c.l.b16 %v1320
        %v1396 = vunpack.c.l.b16 %v1321
        %v1397 = vunpack.c.h.b16 %v1321
        %v1398 = vunpack.c.l.b16 %v1322
        %v1399 = vunpack.c.l.b16 %v1323
        %v1400 = vunpack.c.h.b16 %v1323
        %v1401 = vunpack.c.l.b16 %v1324
        %v1402 = vunpack.c.l.b16 %v1325
        %v1403 = vunpack.c.h.b16 %v1325
        %v1404 = vunpack.c.l.b16 %v1326
        %v1405 = vunpack.c.l.b16 %v1327
        %v1406 = vunpack.c.h.b16 %v1327
        %v1407 = vunpack.c.l.b16 %v1328
        %v1408 = vunpack.c.l.b16 %v1329
        %v1409 = vunpack.c.h.b16 %v1329
        %v1410 = vunpack.c.l.b16 %v1330
        %v1411 = vunpack.c.l.b16 %v1331
        %v1412 = vunpack.c.h.b16 %v1331
        %v1413 = vunpack.c.l.b16 %v1332
        %v1414 = vunpack.c.l.b16 %v1333
        %v1415 = vunpack.c.h.b16 %v1333
        %v1416 = vunpack.c.l.b16 %v1334
        %v1417 = vunpack.c.l.b16 %v1335
        %v1418 = vunpack.c.h.b16 %v1335
        %v1419 = vunpack.c.l.b16 %v1336
        %v1420 = vunpack.c.l.b16 %v1337
        %v1421 = vunpack.c.h.b16 %v1337
        %v1422 = vunpack.c.l.b16 %v1338
        %v1423 = vunpack.c.l.b16 %v1339
        %v1424 = vunpack.c.h.b16 %v1339
        %v1425 = vunpack.c.l.b16 %v1340
        %v1426 = vunpack.c.l.b16 %v1341
        %v1427 = vunpack.c.h.b16 %v1341
        %v1428 = vunpack.c.l.b16 %v1342
        %v1429 = vunpack.c.l.b16 %v1343
        %v1430 = vunpack.c.h.b16 %v1343
        %v1431 = vunpack.c.l.b16 %v1344
        %v1432 = vunpack.c.l.b16 %v1345
        %v1433 = vunpack.c.h.b16 %v1345
        %v1434 = vunpack.c.l.b16 %v1346
        %v1435 = vpack.c.b16 %v1390, %v1387
        %v1436 = vpack.c.b16 %v1391, %v1388
        %v1437 = vpack.c.b16 %v1392, %v1389
        %v1438 = vpack.c.b16 %v1396, %v1393
        %v1439 = vpack.c.b16 %v1397, %v1394
        %v1440 = vpack.c.b16 %v1398, %v1395
        %v1441 = vpack.c.b16 %v1402, %v1399
        %v1442 = vpack.c.b16 %v1403, %v1400
        %v1443 = vpack.c.b16 %v1404, %v1401
        %v1444 = vpack.c.b16 %v1408, %v1405
        %v1445 = vpack.c.b16 %v1409, %v1406
        %v1446 = vpack.c.b16 %v1410, %v1407
        %v1447 = vpack.c.b16 %v1414, %v1411
        %v1448 = vpack.c.b16 %v1415, %v1412
        %v1449 = vpack.c.b16 %v1416, %v1413
        %v1450 = vpack.c.b16 %v1420, %v1417
        %v1451 = vpack.c.b16 %v1421, %v1418
        %v1452 = vpack.c.b16 %v1422, %v1419
        %v1453 = vpack.c.b16 %v1426, %v1423
        %v1454 = vpack.c.b16 %v1427, %v1424
        %v1455 = vpack.c.b16 %v1428, %v1425
        %v1456 = vpack.c.b16 %v1432, %v1429
        %v1457 = vpack.c.b16 %v1433, %v1430
        %v1458 = vpack.c.b16 %v1434, %v1431
        %1483 = vmatpush.bf16.msra.mxu0 %v1456
        %1484 = vmatpush.bf16.msra.mxu0 %v1453
        %1485 = vmatpush.bf16.msra.mxu0 %v1450
        %1486 = vmatpush.bf16.msra.mxu0 %v1447
        %1487 = vmatpush.bf16.msra.mxu0 %v1444
        %1488 = vmatpush.bf16.msra.mxu0 %v1441
        %1489 = vmatpush.bf16.msra.mxu0 %v1438
        %1490 = vmatpush.bf16.msra.mxu0 %v1435
        %1491 = vmatmul.bf16.gmra.mxu0 %v1314
        %v1492 = vpop.f32.mrf.mxu0
        %v1493 = vadd.f32 %v1349, %v1492
        %v1494 = vpop.f32.mrf.mxu0
        %1495 = vdwg.mxu0
        %1496 = vmatpush.bf16.msra.mxu0 %v1457
        %1497 = vmatpush.bf16.msra.mxu0 %v1454
        %1498 = vmatpush.bf16.msra.mxu0 %v1451
        %1499 = vmatpush.bf16.msra.mxu0 %v1448
        %1500 = vmatpush.bf16.msra.mxu0 %v1445
        %1501 = vmatpush.bf16.msra.mxu0 %v1442
        %1502 = vmatpush.bf16.msra.mxu0 %v1439
        %1503 = vmatpush.bf16.msra.mxu0 %v1436
        %1504 = vmatmul.bf16.gmra.mxu0 %v1314
        %v1505 = vpop.f32.mrf.mxu0
        %v1506 = vadd.f32 %v1350, %v1505
        %v1507 = vpop.f32.mrf.mxu0
        %1508 = vdwg.mxu0
        %1509 = vmatpush.bf16.msra.mxu0 %v1458
        %1510 = vmatpush.bf16.msra.mxu0 %v1455
        %1511 = vmatpush.bf16.msra.mxu0 %v1452
        %1512 = vmatpush.bf16.msra.mxu0 %v1449
        %1513 = vmatpush.bf16.msra.mxu0 %v1446
        %1514 = vmatpush.bf16.msra.mxu0 %v1443
        %1515 = vmatpush.bf16.msra.mxu0 %v1440
        %1516 = vmatpush.bf16.msra.mxu0 %v1437
        %1517 = vmatmul.bf16.gmra.mxu0 %v1314
        %v1518 = vpop.f32.mrf.mxu0
        %v1519 = vadd.f32 %v1351, %v1518
        %v1520 = vpop.f32.mrf.mxu0
        %1521 = vdwg.mxu0
        %v1522 = vld [vmem:[%s937] sm:$0xf]
        %v1523 = vld [vmem:[%s937 + $0x4] sm:$0xf]
        %v1524 = vld [vmem:[%s937 + $0x8] sm:$0xf]
        %v1525 = vld [vmem:[%s937 + $0xc] sm:$0xf]
        %v1526 = vld [vmem:[%s937 + $0x10] sm:$0xf]
        %v1527 = vld [vmem:[%s937 + $0x14] sm:$0xf]
        %v1528 = vld [vmem:[%s937 + $0x18] sm:$0xf]
        %v1529 = vld [vmem:[%s937 + $0x1c] sm:$0xf]
        %v1530 = vld [vmem:[%s937 + $0x20] sm:$0xf]
        %v1531 = vld [vmem:[%s937 + $0x24] sm:$0xf]
        %v1532 = vld [vmem:[%s937 + $0x28] sm:$0xf]
        %v1533 = vld [vmem:[%s937 + $0x2c] sm:$0xf]
        %v1534 = vld [vmem:[%s937 + $0x30] sm:$0xf]
        %v1535 = vld [vmem:[%s937 + $0x34] sm:$0xf]
        %v1536 = vld [vmem:[%s937 + $0x38] sm:$0xf]
        %v1537 = vld [vmem:[%s937 + $0x3c] sm:$0xf]
        %v1538 = vld [vmem:[%s1163] sm:$0x1]
        %v1539 = vpack.c.bf16 %v1493, %v1493
        %v1540 = vpack.c.bf16 %v1506, %v1506
        %v1541 = vpack.c.bf16 %v1519, %v1519
        %vm1542 = vcmask 261120
        %v1544 = vsel %vm1542, %v1539, 0
        %v1547 = vsel %vm1542, %v1540, 0
        %1549 = vmatpush.bf16.xpose.msra.mxu0 0
        %1550 = vmatpush.bf16.xpose.msra.mxu0 0
        %1551 = vmatpush.bf16.xpose.msra.mxu0 0
        %1552 = vmatpush.bf16.xpose.msra.mxu0 0
        %1553 = vmatpush.bf16.xpose.msra.mxu0 0
        %1554 = vmatpush.bf16.xpose.msra.mxu0 0
        %1555 = vmatpush.bf16.xpose.msra.mxu0 0
        %1556 = vmatpush.bf16.xpose.msra.mxu0 %v1547
        %1557 = vmatmul.bf16.gmra.mxu0 %v1544
        %v1558 = vpop.f32.mrf.mxu0
        %v1559 = vadd.f32 %v1280, %v1558
        %v1560 = vpop.f32.mrf.mxu0
        %1561 = vdwg.mxu0
        %vm1562 = vcmask 64512
        %v1563 = vsel %vm1562, %v1559, -inf
        %1564 = vmax.xlane.f32.xlu0 %v1563
        %v1565 = vpop.xlane.xlu0 %1564
        %v1566 = vsub.f32 %v1559, %v1565
        %v1567 = vmul.f32 %v1566, 1.442695
        %v1568 = vpow.pop %v1567
        %v1569 = vsel %vm1562, %v1568, 0.0
        %1570 = vadd.xlane.f32.xlu0 %v1569
        %v1571 = vpop.xlane.xlu0 %1570
        %v1572 = vpack.c.bf16 %v1568, %v1568
        %v1574 = vsel %vm1562, %v1572, 0
        %vm1576 = vcmask 1043456
        %v1578 = vsel %vm1576, %v1541, 0
        %1580 = vmatpush.bf16.msra.mxu0 0
        %1581 = vmatpush.bf16.msra.mxu0 0
        %1582 = vmatpush.bf16.msra.mxu0 0
        %1583 = vmatpush.bf16.msra.mxu0 0
        %1584 = vmatpush.bf16.msra.mxu0 0
        %1585 = vmatpush.bf16.msra.mxu0 0
        %1586 = vmatpush.bf16.msra.mxu0 0
        %1587 = vmatpush.bf16.msra.mxu0 %v1578
        %1588 = vmatmul.bf16.gmra.mxu0 %v1574
        %v1589 = vpop.f32.mrf.mxu0
        %v1590 = vadd.f32 0.0, %v1589
        %v1591 = vpop.f32.mrf.mxu0
        %1592 = vdwg.mxu0
        %v1593 = vrcp.pop %v1571
        %v1594 = vmul.f32 %v1590, %v1593
        %v1596 = vunpack.c.l.b16 %v1539
        %v1597 = vpack.c.b16 %v1596, %v1596
        %1598 = vrot.lane.b32.xlu0 %v1597, 96
        %v1599 = vpop.permute.xlu0 %1598
        %v1601 = vunpack.c.l.b16 %v1540
        %v1602 = vpack.c.b16 %v1601, %v1601
        %1603 = vrot.lane.b32.xlu0 %v1602, 96
        %v1604 = vpop.permute.xlu0 %1603
        %v1606 = vsel %vm1542, %v1599, 0
        %v1609 = vsel %vm1542, %v1604, 0
        %1611 = vmatpush.bf16.xpose.msra.mxu0 0
        %1612 = vmatpush.bf16.xpose.msra.mxu0 0
        %1613 = vmatpush.bf16.xpose.msra.mxu0 0
        %1614 = vmatpush.bf16.xpose.msra.mxu0 0
        %1615 = vmatpush.bf16.xpose.msra.mxu0 0
        %1616 = vmatpush.bf16.xpose.msra.mxu0 0
        %1617 = vmatpush.bf16.xpose.msra.mxu0 0
        %1618 = vmatpush.bf16.xpose.msra.mxu0 %v1609
        %1619 = vmatmul.bf16.gmra.mxu0 %v1606
        %v1620 = vpop.f32.mrf.mxu0
        %v1621 = vadd.f32 %v1280, %v1620
        %v1622 = vpop.f32.mrf.mxu0
        %1623 = vdwg.mxu0
        %v1624 = vsel %vm1562, %v1621, -inf
        %1625 = vmax.xlane.f32.xlu0 %v1624
        %v1626 = vpop.xlane.xlu0 %1625
        %v1627 = vsub.f32 %v1621, %v1626
        %v1628 = vmul.f32 %v1627, 1.442695
        %v1629 = vpow.pop %v1628
        %v1630 = vsel %vm1562, %v1629, 0.0
        %1631 = vadd.xlane.f32.xlu0 %v1630
        %v1632 = vpop.xlane.xlu0 %1631
        %v1633 = vpack.c.bf16 %v1629, %v1629
        %v1635 = vunpack.c.l.b16 %v1541
        %v1636 = vpack.c.b16 %v1635, %v1635
        %1637 = vrot.lane.b32.xlu0 %v1636, 96
        %v1638 = vpop.permute.xlu0 %1637
        %v1640 = vsel %vm1562, %v1633, 0
        %v1643 = vsel %vm1576, %v1638, 0
        %1645 = vmatpush.bf16.msra.mxu0 0
        %1646 = vmatpush.bf16.msra.mxu0 0
        %1647 = vmatpush.bf16.msra.mxu0 0
        %1648 = vmatpush.bf16.msra.mxu0 0
        %1649 = vmatpush.bf16.msra.mxu0 0
        %1650 = vmatpush.bf16.msra.mxu0 0
        %1651 = vmatpush.bf16.msra.mxu0 0
        %1652 = vmatpush.bf16.msra.mxu0 %v1643
        %1653 = vmatmul.bf16.gmra.mxu0 %v1640
        %v1654 = vpop.f32.mrf.mxu0
        %v1655 = vadd.f32 0.0, %v1654
        %v1656 = vpop.f32.mrf.mxu0
        %1657 = vdwg.mxu0
        %v1658 = vrcp.pop %v1632
        %v1659 = vmul.f32 %v1655, %v1658
        %1660 = vrot.lane.b32.xlu0 %v1597, 64
        %v1661 = vpop.permute.xlu0 %1660
        %1662 = vrot.lane.b32.xlu0 %v1602, 64
        %v1663 = vpop.permute.xlu0 %1662
        %v1665 = vsel %vm1542, %v1661, 0
        %v1668 = vsel %vm1542, %v1663, 0
        %1670 = vmatpush.bf16.xpose.msra.mxu0 0
        %1671 = vmatpush.bf16.xpose.msra.mxu0 0
        %1672 = vmatpush.bf16.xpose.msra.mxu0 0
        %1673 = vmatpush.bf16.xpose.msra.mxu0 0
        %1674 = vmatpush.bf16.xpose.msra.mxu0 0
        %1675 = vmatpush.bf16.xpose.msra.mxu0 0
        %1676 = vmatpush.bf16.xpose.msra.mxu0 0
        %1677 = vmatpush.bf16.xpose.msra.mxu0 %v1668
        %1678 = vmatmul.bf16.gmra.mxu0 %v1665
        %v1679 = vpop.f32.mrf.mxu0
        %v1680 = vadd.f32 %v1280, %v1679
        %v1681 = vpop.f32.mrf.mxu0
        %1682 = vdwg.mxu0
        %v1683 = vsel %vm1562, %v1680, -inf
        %1684 = vmax.xlane.f32.xlu0 %v1683
        %v1685 = vpop.xlane.xlu0 %1684
        %v1686 = vsub.f32 %v1680, %v1685
        %v1687 = vmul.f32 %v1686, 1.442695
        %v1688 = vpow.pop %v1687
        %v1689 = vsel %vm1562, %v1688, 0.0
        %1690 = vadd.xlane.f32.xlu0 %v1689
        %v1691 = vpop.xlane.xlu0 %1690
        %v1692 = vpack.c.bf16 %v1688, %v1688
        %1693 = vrot.lane.b32.xlu0 %v1636, 64
        %v1694 = vpop.permute.xlu0 %1693
        %v1696 = vsel %vm1562, %v1692, 0
        %v1699 = vsel %vm1576, %v1694, 0
        %1701 = vmatpush.bf16.msra.mxu0 0
        %1702 = vmatpush.bf16.msra.mxu0 0
        %1703 = vmatpush.bf16.msra.mxu0 0
        %1704 = vmatpush.bf16.msra.mxu0 0
        %1705 = vmatpush.bf16.msra.mxu0 0
        %1706 = vmatpush.bf16.msra.mxu0 0
        %1707 = vmatpush.bf16.msra.mxu0 0
        %1708 = vmatpush.bf16.msra.mxu0 %v1699
        %1709 = vmatmul.bf16.gmra.mxu0 %v1696
        %v1710 = vpop.f32.mrf.mxu0
        %v1711 = vadd.f32 0.0, %v1710
        %v1712 = vpop.f32.mrf.mxu0
        %1713 = vdwg.mxu0
        %v1714 = vrcp.pop %v1691
        %v1715 = vmul.f32 %v1711, %v1714
        %1716 = vrot.lane.b32.xlu0 %v1597, 32
        %v1717 = vpop.permute.xlu0 %1716
        %1718 = vrot.lane.b32.xlu0 %v1602, 32
        %v1719 = vpop.permute.xlu0 %1718
        %v1721 = vsel %vm1542, %v1717, 0
        %v1724 = vsel %vm1542, %v1719, 0
        %1726 = vmatpush.bf16.xpose.msra.mxu0 0
        %1727 = vmatpush.bf16.xpose.msra.mxu0 0
        %1728 = vmatpush.bf16.xpose.msra.mxu0 0
        %1729 = vmatpush.bf16.xpose.msra.mxu0 0
        %1730 = vmatpush.bf16.xpose.msra.mxu0 0
        %1731 = vmatpush.bf16.xpose.msra.mxu0 0
        %1732 = vmatpush.bf16.xpose.msra.mxu0 0
        %1733 = vmatpush.bf16.xpose.msra.mxu0 %v1724
        %1734 = vmatmul.bf16.gmra.mxu0 %v1721
        %v1735 = vpop.f32.mrf.mxu0
        %v1736 = vadd.f32 %v1280, %v1735
        %v1737 = vpop.f32.mrf.mxu0
        %1738 = vdwg.mxu0
        %v1739 = vsel %vm1562, %v1736, -inf
        %1740 = vmax.xlane.f32.xlu0 %v1739
        %v1741 = vpop.xlane.xlu0 %1740
        %v1742 = vsub.f32 %v1736, %v1741
        %v1743 = vmul.f32 %v1742, 1.442695
        %v1744 = vpow.pop %v1743
        %v1745 = vsel %vm1562, %v1744, 0.0
        %1746 = vadd.xlane.f32.xlu0 %v1745
        %v1747 = vpop.xlane.xlu0 %1746
        %v1748 = vpack.c.bf16 %v1744, %v1744
        %1749 = vrot.lane.b32.xlu0 %v1636, 32
        %v1750 = vpop.permute.xlu0 %1749
        %v1752 = vsel %vm1562, %v1748, 0
        %v1755 = vsel %vm1576, %v1750, 0
        %1757 = vmatpush.bf16.msra.mxu0 0
        %1758 = vmatpush.bf16.msra.mxu0 0
        %1759 = vmatpush.bf16.msra.mxu0 0
        %1760 = vmatpush.bf16.msra.mxu0 0
        %1761 = vmatpush.bf16.msra.mxu0 0
        %1762 = vmatpush.bf16.msra.mxu0 0
        %1763 = vmatpush.bf16.msra.mxu0 0
        %1764 = vmatpush.bf16.msra.mxu0 %v1755
        %1765 = vmatmul.bf16.gmra.mxu0 %v1752
        %v1766 = vpop.f32.mrf.mxu0
        %v1767 = vadd.f32 0.0, %v1766
        %v1768 = vpop.f32.mrf.mxu0
        %1769 = vdwg.mxu0
        %v1770 = vrcp.pop %v1747
        %v1771 = vmul.f32 %v1767, %v1770
        %1773 = vrot.lane.b32.xlu0 %v1659, 32
        %v1774 = vpop.permute.xlu0 %1773
        %1777 = vrot.lane.b32.xlu0 %v1715, 64
        %v1778 = vpop.permute.xlu0 %1777
        %1781 = vrot.lane.b32.xlu0 %v1771, 96
        %v1782 = vpop.permute.xlu0 %1781
        %v1784 = vsel %vm1542, %v1594, %v1774
        %vm1785 = vcmask 523264
        %v1786 = vsel %vm1785, %v1784, %v1778
        %vm1787 = vcmask 785408
        %v1788 = vsel %vm1787, %v1786, %v1782
        %v1789 = vpack.c.bf16 %v1788, %v1788
        %v1791 = vperm.slane %v1538, 0
        %v1809 = vunpack.c.l.b16 %v1522
        %v1810 = vunpack.c.l.b16 %v1523
        %v1811 = vunpack.c.l.b16 %v1524
        %v1812 = vunpack.c.l.b16 %v1525
        %v1813 = vunpack.c.l.b16 %v1526
        %v1814 = vunpack.c.l.b16 %v1527
        %v1815 = vunpack.c.l.b16 %v1528
        %v1816 = vunpack.c.l.b16 %v1529
        %v1817 = vunpack.c.l.b16 %v1530
        %v1818 = vunpack.c.l.b16 %v1531
        %v1819 = vunpack.c.l.b16 %v1532
        %v1820 = vunpack.c.l.b16 %v1533
        %v1821 = vunpack.c.l.b16 %v1534
        %v1822 = vunpack.c.l.b16 %v1535
        %v1823 = vunpack.c.l.b16 %v1536
        %v1824 = vunpack.c.l.b16 %v1537
        %v1825 = vpack.c.b16 %v1810, %v1809
        %v1826 = vpack.c.b16 %v1812, %v1811
        %v1827 = vpack.c.b16 %v1814, %v1813
        %v1828 = vpack.c.b16 %v1816, %v1815
        %v1829 = vpack.c.b16 %v1818, %v1817
        %v1830 = vpack.c.b16 %v1820, %v1819
        %v1831 = vpack.c.b16 %v1822, %v1821
        %v1832 = vpack.c.b16 %v1824, %v1823
        %1841 = vmatpush.bf16.msra.mxu0 %v1832
        %1842 = vmatpush.bf16.msra.mxu0 %v1831
        %1843 = vmatpush.bf16.msra.mxu0 %v1830
        %1844 = vmatpush.bf16.msra.mxu0 %v1829
        %1845 = vmatpush.bf16.msra.mxu0 %v1828
        %1846 = vmatpush.bf16.msra.mxu0 %v1827
        %1847 = vmatpush.bf16.msra.mxu0 %v1826
        %1848 = vmatpush.bf16.msra.mxu0 %v1825
        %1849 = vmatmul.bf16.gmra.mxu0 %v1789
        %v1850 = vpop.f32.mrf.mxu0
        %v1851 = vadd.f32 %v1791, %v1850
        %v1852 = vpop.f32.mrf.mxu0
        %1853 = vdwg.mxu0
        %v1854 = vadd.f32 %v1273, %v1851
        %1855 = vadd.xlane.f32.xlu0 %v1854
        %v1856 = vpop.xlane.xlu0 %1855
        %v1857 = vmul.f32 %v1856, %v1291
        %v1858 = vsub.f32 %v1854, %v1857
        %v1859 = vmul.f32 %v1858, %v1858
        %1860 = vadd.xlane.f32.xlu0 %v1859
        %v1861 = vpop.xlane.xlu0 %1860
        %v1862 = vmul.f32 %v1861, %v1291
        %v1863 = vadd.f32 %v1862, 1e-05
        %v1864 = vrsqrt.pop %v1863
        %v1865 = vmul.f32 %v1864, %v1863
        %v1866 = vmul.f32 %v1865, %v1864
        %v1867 = vmul.f32 0.5, %v1866
        %v1868 = vsub.f32 1.5, %v1867
        %v1869 = vmul.f32 %v1864, %v1868
        %vm1870 = vweird.f32 %v1863
        %vm1871 = vweird.f32 %v1864
        %vm1872 = vmor %vm1870, %vm1871
        %v1873 = vsel %vm1872, %v1864, %v1869
        %v1874 = vmul.f32 %v1858, %v1873
        %v1875 = vperm.slane %v1274, 2
        %v1876 = vmul.f32 %v1874, %v1875
        %v1877 = vperm.slane %v1274, 3
        %v1878 = vadd.f32 %v1876, %v1877
        %v1879 = vpack.c.bf16 %v1878, %v1878
        %v1880 = vld [vmem:[%s947] sm:$0xf]
        %v1881 = vld [vmem:[%s947 + $0x4] sm:$0xf]
        %v1882 = vld [vmem:[%s947 + $0x8] sm:$0xf]
        %v1883 = vld [vmem:[%s947 + $0xc] sm:$0xf]
        %v1884 = vld [vmem:[%s947 + $0x10] sm:$0xf]
        %v1885 = vld [vmem:[%s947 + $0x14] sm:$0xf]
        %v1886 = vld [vmem:[%s947 + $0x18] sm:$0xf]
        %v1887 = vld [vmem:[%s947 + $0x1c] sm:$0xf]
        %v1888 = vld [vmem:[%s947 + $0x20] sm:$0xf]
        %v1889 = vld [vmem:[%s947 + $0x24] sm:$0xf]
        %v1890 = vld [vmem:[%s947 + $0x28] sm:$0xf]
        %v1891 = vld [vmem:[%s947 + $0x2c] sm:$0xf]
        %v1892 = vld [vmem:[%s947 + $0x30] sm:$0xf]
        %v1893 = vld [vmem:[%s947 + $0x34] sm:$0xf]
        %v1894 = vld [vmem:[%s947 + $0x38] sm:$0xf]
        %v1895 = vld [vmem:[%s947 + $0x3c] sm:$0xf]
        %v1896 = vld [vmem:[%s1166] sm:$0x1]
        %v1898 = vperm.slane %v1896, 0
        %v1916 = vunpack.c.l.b16 %v1880
        %v1917 = vunpack.c.l.b16 %v1881
        %v1918 = vunpack.c.l.b16 %v1882
        %v1919 = vunpack.c.l.b16 %v1883
        %v1920 = vunpack.c.l.b16 %v1884
        %v1921 = vunpack.c.l.b16 %v1885
        %v1922 = vunpack.c.l.b16 %v1886
        %v1923 = vunpack.c.l.b16 %v1887
        %v1924 = vunpack.c.l.b16 %v1888
        %v1925 = vunpack.c.l.b16 %v1889
        %v1926 = vunpack.c.l.b16 %v1890
        %v1927 = vunpack.c.l.b16 %v1891
        %v1928 = vunpack.c.l.b16 %v1892
        %v1929 = vunpack.c.l.b16 %v1893
        %v1930 = vunpack.c.l.b16 %v1894
        %v1931 = vunpack.c.l.b16 %v1895
        %v1932 = vpack.c.b16 %v1917, %v1916
        %v1933 = vpack.c.b16 %v1919, %v1918
        %v1934 = vpack.c.b16 %v1921, %v1920
        %v1935 = vpack.c.b16 %v1923, %v1922
        %v1936 = vpack.c.b16 %v1925, %v1924
        %v1937 = vpack.c.b16 %v1927, %v1926
        %v1938 = vpack.c.b16 %v1929, %v1928
        %v1939 = vpack.c.b16 %v1931, %v1930
        %1948 = vmatpush.bf16.msra.mxu0 %v1939
        %1949 = vmatpush.bf16.msra.mxu0 %v1938
        %1950 = vmatpush.bf16.msra.mxu0 %v1937
        %1951 = vmatpush.bf16.msra.mxu0 %v1936
        %1952 = vmatpush.bf16.msra.mxu0 %v1935
        %1953 = vmatpush.bf16.msra.mxu0 %v1934
        %1954 = vmatpush.bf16.msra.mxu0 %v1933
        %1955 = vmatpush.bf16.msra.mxu0 %v1932
        %1956 = vmatmul.bf16.gmra.mxu0 %v1879
        %v1957 = vpop.f32.mrf.mxu0
        %v1958 = vadd.f32 %v1898, %v1957
        %v1959 = vpop.f32.mrf.mxu0
        %1960 = vdwg.mxu0
        %v1961 = vpack.c.bf16 %v1179, %v1179
        %v1962 = vld [vmem:[%s957] sm:$0xff]
        %v1963 = vld [vmem:[%s957 + $0x8] sm:$0xff]
        %v1964 = vld [vmem:[%s957 + $0x10] sm:$0xff]
        %v1965 = vld [vmem:[%s957 + $0x18] sm:$0xff]
        %v1966 = vld [vmem:[%s957 + $0x20] sm:$0xff]
        %v1967 = vld [vmem:[%s957 + $0x28] sm:$0xff]
        %v1968 = vld [vmem:[%s957 + $0x30] sm:$0xff]
        %v1969 = vld [vmem:[%s957 + $0x38] sm:$0xff]
        %v1970 = vld [vmem:[%s957 + $0x40] sm:$0xff]
        %v1971 = vld [vmem:[%s957 + $0x48] sm:$0xff]
        %v1972 = vld [vmem:[%s957 + $0x50] sm:$0xff]
        %v1973 = vld [vmem:[%s957 + $0x58] sm:$0xff]
        %v1974 = vld [vmem:[%s957 + $0x60] sm:$0xff]
        %v1975 = vld [vmem:[%s957 + $0x68] sm:$0xff]
        %v1976 = vld [vmem:[%s957 + $0x70] sm:$0xff]
        %v1977 = vld [vmem:[%s957 + $0x78] sm:$0xff]
        %v1978 = vld [vmem:[%s1170] sm:$0x3]
        %v1980 = vperm.slane %v1978, 0
        %v1981 = vperm.slane %v1978, 1
        %v2000 = vunpack.c.l.b16 %v1962
        %v2001 = vunpack.c.h.b16 %v1962
        %v2002 = vunpack.c.l.b16 %v1963
        %v2003 = vunpack.c.h.b16 %v1963
        %v2004 = vunpack.c.l.b16 %v1964
        %v2005 = vunpack.c.h.b16 %v1964
        %v2006 = vunpack.c.l.b16 %v1965
        %v2007 = vunpack.c.h.b16 %v1965
        %v2008 = vunpack.c.l.b16 %v1966
        %v2009 = vunpack.c.h.b16 %v1966
        %v2010 = vunpack.c.l.b16 %v1967
        %v2011 = vunpack.c.h.b16 %v1967
        %v2012 = vunpack.c.l.b16 %v1968
        %v2013 = vunpack.c.h.b16 %v1968
        %v2014 = vunpack.c.l.b16 %v1969
        %v2015 = vunpack.c.h.b16 %v1969
        %v2016 = vunpack.c.l.b16 %v1970
        %v2017 = vunpack.c.h.b16 %v1970
        %v2018 = vunpack.c.l.b16 %v1971
        %v2019 = vunpack.c.h.b16 %v1971
        %v2020 = vunpack.c.l.b16 %v1972
        %v2021 = vunpack.c.h.b16 %v1972
        %v2022 = vunpack.c.l.b16 %v1973
        %v2023 = vunpack.c.h.b16 %v1973
        %v2024 = vunpack.c.l.b16 %v1974
        %v2025 = vunpack.c.h.b16 %v1974
        %v2026 = vunpack.c.l.b16 %v1975
        %v2027 = vunpack.c.h.b16 %v1975
        %v2028 = vunpack.c.l.b16 %v1976
        %v2029 = vunpack.c.h.b16 %v1976
        %v2030 = vunpack.c.l.b16 %v1977
        %v2031 = vunpack.c.h.b16 %v1977
        %v2032 = vpack.c.b16 %v2002, %v2000
        %v2033 = vpack.c.b16 %v2003, %v2001
        %v2034 = vpack.c.b16 %v2006, %v2004
        %v2035 = vpack.c.b16 %v2007, %v2005
        %v2036 = vpack.c.b16 %v2010, %v2008
        %v2037 = vpack.c.b16 %v2011, %v2009
        %v2038 = vpack.c.b16 %v2014, %v2012
        %v2039 = vpack.c.b16 %v2015, %v2013
        %v2040 = vpack.c.b16 %v2018, %v2016
        %v2041 = vpack.c.b16 %v2019, %v2017
        %v2042 = vpack.c.b16 %v2022, %v2020
        %v2043 = vpack.c.b16 %v2023, %v2021
        %v2044 = vpack.c.b16 %v2026, %v2024
        %v2045 = vpack.c.b16 %v2027, %v2025
        %v2046 = vpack.c.b16 %v2030, %v2028
        %v2047 = vpack.c.b16 %v2031, %v2029
        %2064 = vmatpush.bf16.msra.mxu0 %v2046
        %2065 = vmatpush.bf16.msra.mxu0 %v2044
        %2066 = vmatpush.bf16.msra.mxu0 %v2042
        %2067 = vmatpush.bf16.msra.mxu0 %v2040
        %2068 = vmatpush.bf16.msra.mxu0 %v2038
        %2069 = vmatpush.bf16.msra.mxu0 %v2036
        %2070 = vmatpush.bf16.msra.mxu0 %v2034
        %2071 = vmatpush.bf16.msra.mxu0 %v2032
        %2072 = vmatmul.bf16.gmra.mxu0 %v1961
        %v2073 = vpop.f32.mrf.mxu0
        %v2074 = vadd.f32 %v1980, %v2073
        %v2075 = vpop.f32.mrf.mxu0
        %2076 = vdwg.mxu0
        %2077 = vmatpush.bf16.msra.mxu0 %v2047
        %2078 = vmatpush.bf16.msra.mxu0 %v2045
        %2079 = vmatpush.bf16.msra.mxu0 %v2043
        %2080 = vmatpush.bf16.msra.mxu0 %v2041
        %2081 = vmatpush.bf16.msra.mxu0 %v2039
        %2082 = vmatpush.bf16.msra.mxu0 %v2037
        %2083 = vmatpush.bf16.msra.mxu0 %v2035
        %2084 = vmatpush.bf16.msra.mxu0 %v2033
        %2085 = vmatmul.bf16.gmra.mxu0 %v1961
        %v2086 = vpop.f32.mrf.mxu0
        %v2087 = vadd.f32 %v1981, %v2086
        %v2088 = vpop.f32.mrf.mxu0
        %2089 = vdwg.mxu0
        %v2090 = vld [vmem:[%s967] sm:$0xf]
        %v2091 = vld [vmem:[%s967 + $0x4] sm:$0xf]
        %v2092 = vld [vmem:[%s967 + $0x8] sm:$0xf]
        %v2093 = vld [vmem:[%s967 + $0xc] sm:$0xf]
        %v2094 = vld [vmem:[%s967 + $0x10] sm:$0xf]
        %v2095 = vld [vmem:[%s967 + $0x14] sm:$0xf]
        %v2096 = vld [vmem:[%s967 + $0x18] sm:$0xf]
        %v2097 = vld [vmem:[%s967 + $0x1c] sm:$0xf]
        %v2098 = vld [vmem:[%s967 + $0x20] sm:$0xf]
        %v2099 = vld [vmem:[%s967 + $0x24] sm:$0xf]
        %v2100 = vld [vmem:[%s967 + $0x28] sm:$0xf]
        %v2101 = vld [vmem:[%s967 + $0x2c] sm:$0xf]
        %v2102 = vld [vmem:[%s967 + $0x30] sm:$0xf]
        %v2103 = vld [vmem:[%s967 + $0x34] sm:$0xf]
        %v2104 = vld [vmem:[%s967 + $0x38] sm:$0xf]
        %v2105 = vld [vmem:[%s967 + $0x3c] sm:$0xf]
        %v2106 = vld [vmem:[%s1173] sm:$0x1]
        %v2107 = vpack.c.bf16 %v1958, %v1958
        %v2108 = vpack.c.bf16 %v2074, %v2074
        %v2109 = vpack.c.bf16 %v2087, %v2087
        %v2111 = vsel %vm1542, %v2107, 0
        %v2114 = vsel %vm1542, %v2108, 0
        %2116 = vmatpush.bf16.xpose.msra.mxu0 0
        %2117 = vmatpush.bf16.xpose.msra.mxu0 0
        %2118 = vmatpush.bf16.xpose.msra.mxu0 0
        %2119 = vmatpush.bf16.xpose.msra.mxu0 0
        %2120 = vmatpush.bf16.xpose.msra.mxu0 0
        %2121 = vmatpush.bf16.xpose.msra.mxu0 0
        %2122 = vmatpush.bf16.xpose.msra.mxu0 0
        %2123 = vmatpush.bf16.xpose.msra.mxu0 %v2114
        %2124 = vmatmul.bf16.gmra.mxu0 %v2111
        %v2125 = vpop.f32.mrf.mxu0
        %v2126 = vadd.f32 %v1282, %v2125
        %v2127 = vpop.f32.mrf.mxu0
        %2128 = vdwg.mxu0
        %v2129 = vsel %vm1562, %v2126, -inf
        %2130 = vmax.xlane.f32.xlu0 %v2129
        %v2131 = vpop.xlane.xlu0 %2130
        %v2132 = vsub.f32 %v2126, %v2131
        %v2133 = vmul.f32 %v2132, 1.442695
        %v2134 = vpow.pop %v2133
        %v2135 = vsel %vm1562, %v2134, 0.0
        %2136 = vadd.xlane.f32.xlu0 %v2135
        %v2137 = vpop.xlane.xlu0 %2136
        %v2138 = vpack.c.bf16 %v2134, %v2134
        %v2140 = vsel %vm1562, %v2138, 0
        %v2143 = vsel %vm1576, %v2109, 0
        %2145 = vmatpush.bf16.msra.mxu0 0
        %2146 = vmatpush.bf16.msra.mxu0 0
        %2147 = vmatpush.bf16.msra.mxu0 0
        %2148 = vmatpush.bf16.msra.mxu0 0
        %2149 = vmatpush.bf16.msra.mxu0 0
        %2150 = vmatpush.bf16.msra.mxu0 0
        %2151 = vmatpush.bf16.msra.mxu0 0
        %2152 = vmatpush.bf16.msra.mxu0 %v2143
        %2153 = vmatmul.bf16.gmra.mxu0 %v2140
        %v2154 = vpop.f32.mrf.mxu0
        %v2155 = vadd.f32 0.0, %v2154
        %v2156 = vpop.f32.mrf.mxu0
        %2157 = vdwg.mxu0
        %v2158 = vrcp.pop %v2137
        %v2159 = vmul.f32 %v2155, %v2158
        %v2161 = vunpack.c.l.b16 %v2107
        %v2162 = vpack.c.b16 %v2161, %v2161
        %2163 = vrot.lane.b32.xlu0 %v2162, 96
        %v2164 = vpop.permute.xlu0 %2163
        %v2166 = vunpack.c.l.b16 %v2108
        %v2167 = vpack.c.b16 %v2166, %v2166
        %2168 = vrot.lane.b32.xlu0 %v2167, 96
        %v2169 = vpop.permute.xlu0 %2168
        %v2171 = vsel %vm1542, %v2164, 0
        %v2174 = vsel %vm1542, %v2169, 0
        %2176 = vmatpush.bf16.xpose.msra.mxu0 0
        %2177 = vmatpush.bf16.xpose.msra.mxu0 0
        %2178 = vmatpush.bf16.xpose.msra.mxu0 0
        %2179 = vmatpush.bf16.xpose.msra.mxu0 0
        %2180 = vmatpush.bf16.xpose.msra.mxu0 0
        %2181 = vmatpush.bf16.xpose.msra.mxu0 0
        %2182 = vmatpush.bf16.xpose.msra.mxu0 0
        %2183 = vmatpush.bf16.xpose.msra.mxu0 %v2174
        %2184 = vmatmul.bf16.gmra.mxu0 %v2171
        %v2185 = vpop.f32.mrf.mxu0
        %v2186 = vadd.f32 %v1282, %v2185
        %v2187 = vpop.f32.mrf.mxu0
        %2188 = vdwg.mxu0
        %v2189 = vsel %vm1562, %v2186, -inf
        %2190 = vmax.xlane.f32.xlu0 %v2189
        %v2191 = vpop.xlane.xlu0 %2190
        %v2192 = vsub.f32 %v2186, %v2191
        %v2193 = vmul.f32 %v2192, 1.442695
        %v2194 = vpow.pop %v2193
        %v2195 = vsel %vm1562, %v2194, 0.0
        %2196 = vadd.xlane.f32.xlu0 %v2195
        %v2197 = vpop.xlane.xlu0 %2196
        %v2198 = vpack.c.bf16 %v2194, %v2194
        %v2200 = vunpack.c.l.b16 %v2109
        %v2201 = vpack.c.b16 %v2200, %v2200
        %2202 = vrot.lane.b32.xlu0 %v2201, 96
        %v2203 = vpop.permute.xlu0 %2202
        %v2205 = vsel %vm1562, %v2198, 0
        %v2208 = vsel %vm1576, %v2203, 0
        %2210 = vmatpush.bf16.msra.mxu0 0
        %2211 = vmatpush.bf16.msra.mxu0 0
        %2212 = vmatpush.bf16.msra.mxu0 0
        %2213 = vmatpush.bf16.msra.mxu0 0
        %2214 = vmatpush.bf16.msra.mxu0 0
        %2215 = vmatpush.bf16.msra.mxu0 0
        %2216 = vmatpush.bf16.msra.mxu0 0
        %2217 = vmatpush.bf16.msra.mxu0 %v2208
        %2218 = vmatmul.bf16.gmra.mxu0 %v2205
        %v2219 = vpop.f32.mrf.mxu0
        %v2220 = vadd.f32 0.0, %v2219
        %v2221 = vpop.f32.mrf.mxu0
        %2222 = vdwg.mxu0
        %v2223 = vrcp.pop %v2197
        %v2224 = vmul.f32 %v2220, %v2223
        %2225 = vrot.lane.b32.xlu0 %v2162, 64
        %v2226 = vpop.permute.xlu0 %2225
        %2227 = vrot.lane.b32.xlu0 %v2167, 64
        %v2228 = vpop.permute.xlu0 %2227
        %v2230 = vsel %vm1542, %v2226, 0
        %v2233 = vsel %vm1542, %v2228, 0
        %2235 = vmatpush.bf16.xpose.msra.mxu0 0
        %2236 = vmatpush.bf16.xpose.msra.mxu0 0
        %2237 = vmatpush.bf16.xpose.msra.mxu0 0
        %2238 = vmatpush.bf16.xpose.msra.mxu0 0
        %2239 = vmatpush.bf16.xpose.msra.mxu0 0
        %2240 = vmatpush.bf16.xpose.msra.mxu0 0
        %2241 = vmatpush.bf16.xpose.msra.mxu0 0
        %2242 = vmatpush.bf16.xpose.msra.mxu0 %v2233
        %2243 = vmatmul.bf16.gmra.mxu0 %v2230
        %v2244 = vpop.f32.mrf.mxu0
        %v2245 = vadd.f32 %v1282, %v2244
        %v2246 = vpop.f32.mrf.mxu0
        %2247 = vdwg.mxu0
        %v2248 = vsel %vm1562, %v2245, -inf
        %2249 = vmax.xlane.f32.xlu0 %v2248
        %v2250 = vpop.xlane.xlu0 %2249
        %v2251 = vsub.f32 %v2245, %v2250
        %v2252 = vmul.f32 %v2251, 1.442695
        %v2253 = vpow.pop %v2252
        %v2254 = vsel %vm1562, %v2253, 0.0
        %2255 = vadd.xlane.f32.xlu0 %v2254
        %v2256 = vpop.xlane.xlu0 %2255
        %v2257 = vpack.c.bf16 %v2253, %v2253
        %2258 = vrot.lane.b32.xlu0 %v2201, 64
        %v2259 = vpop.permute.xlu0 %2258
        %v2261 = vsel %vm1562, %v2257, 0
        %v2264 = vsel %vm1576, %v2259, 0
        %2266 = vmatpush.bf16.msra.mxu0 0
        %2267 = vmatpush.bf16.msra.mxu0 0
        %2268 = vmatpush.bf16.msra.mxu0 0
        %2269 = vmatpush.bf16.msra.mxu0 0
        %2270 = vmatpush.bf16.msra.mxu0 0
        %2271 = vmatpush.bf16.msra.mxu0 0
        %2272 = vmatpush.bf16.msra.mxu0 0
        %2273 = vmatpush.bf16.msra.mxu0 %v2264
        %2274 = vmatmul.bf16.gmra.mxu0 %v2261
        %v2275 = vpop.f32.mrf.mxu0
        %v2276 = vadd.f32 0.0, %v2275
        %v2277 = vpop.f32.mrf.mxu0
        %2278 = vdwg.mxu0
        %v2279 = vrcp.pop %v2256
        %v2280 = vmul.f32 %v2276, %v2279
        %2281 = vrot.lane.b32.xlu0 %v2162, 32
        %v2282 = vpop.permute.xlu0 %2281
        %2283 = vrot.lane.b32.xlu0 %v2167, 32
        %v2284 = vpop.permute.xlu0 %2283
        %v2286 = vsel %vm1542, %v2282, 0
        %v2289 = vsel %vm1542, %v2284, 0
        %2291 = vmatpush.bf16.xpose.msra.mxu0 0
        %2292 = vmatpush.bf16.xpose.msra.mxu0 0
        %2293 = vmatpush.bf16.xpose.msra.mxu0 0
        %2294 = vmatpush.bf16.xpose.msra.mxu0 0
        %2295 = vmatpush.bf16.xpose.msra.mxu0 0
        %2296 = vmatpush.bf16.xpose.msra.mxu0 0
        %2297 = vmatpush.bf16.xpose.msra.mxu0 0
        %2298 = vmatpush.bf16.xpose.msra.mxu0 %v2289
        %2299 = vmatmul.bf16.gmra.mxu0 %v2286
        %v2300 = vpop.f32.mrf.mxu0
        %v2301 = vadd.f32 %v1282, %v2300
        %v2302 = vpop.f32.mrf.mxu0
        %2303 = vdwg.mxu0
        %v2304 = vsel %vm1562, %v2301, -inf
        %2305 = vmax.xlane.f32.xlu0 %v2304
        %v2306 = vpop.xlane.xlu0 %2305
        %v2307 = vsub.f32 %v2301, %v2306
        %v2308 = vmul.f32 %v2307, 1.442695
        %v2309 = vpow.pop %v2308
        %v2310 = vsel %vm1562, %v2309, 0.0
        %2311 = vadd.xlane.f32.xlu0 %v2310
        %v2312 = vpop.xlane.xlu0 %2311
        %v2313 = vpack.c.bf16 %v2309, %v2309
        %2314 = vrot.lane.b32.xlu0 %v2201, 32
        %v2315 = vpop.permute.xlu0 %2314
        %v2317 = vsel %vm1562, %v2313, 0
        %v2320 = vsel %vm1576, %v2315, 0
        %2322 = vmatpush.bf16.msra.mxu0 0
        %2323 = vmatpush.bf16.msra.mxu0 0
        %2324 = vmatpush.bf16.msra.mxu0 0
        %2325 = vmatpush.bf16.msra.mxu0 0
        %2326 = vmatpush.bf16.msra.mxu0 0
        %2327 = vmatpush.bf16.msra.mxu0 0
        %2328 = vmatpush.bf16.msra.mxu0 0
        %2329 = vmatpush.bf16.msra.mxu0 %v2320
        %2330 = vmatmul.bf16.gmra.mxu0 %v2317
        %v2331 = vpop.f32.mrf.mxu0
        %v2332 = vadd.f32 0.0, %v2331
        %v2333 = vpop.f32.mrf.mxu0
        %2334 = vdwg.mxu0
        %v2335 = vrcp.pop %v2312
        %v2336 = vmul.f32 %v2332, %v2335
        %2338 = vrot.lane.b32.xlu0 %v2224, 32
        %v2339 = vpop.permute.xlu0 %2338
        %2342 = vrot.lane.b32.xlu0 %v2280, 64
        %v2343 = vpop.permute.xlu0 %2342
        %2346 = vrot.lane.b32.xlu0 %v2336, 96
        %v2347 = vpop.permute.xlu0 %2346
        %v2349 = vsel %vm1542, %v2159, %v2339
        %v2350 = vsel %vm1785, %v2349, %v2343
        %v2351 = vsel %vm1787, %v2350, %v2347
        %v2352 = vpack.c.bf16 %v2351, %v2351
        %v2354 = vperm.slane %v2106, 0
        %v2372 = vunpack.c.l.b16 %v2090
        %v2373 = vunpack.c.l.b16 %v2091
        %v2374 = vunpack.c.l.b16 %v2092
        %v2375 = vunpack.c.l.b16 %v2093
        %v2376 = vunpack.c.l.b16 %v2094
        %v2377 = vunpack.c.l.b16 %v2095
        %v2378 = vunpack.c.l.b16 %v2096
        %v2379 = vunpack.c.l.b16 %v2097
        %v2380 = vunpack.c.l.b16 %v2098
        %v2381 = vunpack.c.l.b16 %v2099
        %v2382 = vunpack.c.l.b16 %v2100
        %v2383 = vunpack.c.l.b16 %v2101
        %v2384 = vunpack.c.l.b16 %v2102
        %v2385 = vunpack.c.l.b16 %v2103
        %v2386 = vunpack.c.l.b16 %v2104
        %v2387 = vunpack.c.l.b16 %v2105
        %v2388 = vpack.c.b16 %v2373, %v2372
        %v2389 = vpack.c.b16 %v2375, %v2374
        %v2390 = vpack.c.b16 %v2377, %v2376
        %v2391 = vpack.c.b16 %v2379, %v2378
        %v2392 = vpack.c.b16 %v2381, %v2380
        %v2393 = vpack.c.b16 %v2383, %v2382
        %v2394 = vpack.c.b16 %v2385, %v2384
        %v2395 = vpack.c.b16 %v2387, %v2386
        %2404 = vmatpush.bf16.msra.mxu0 %v2395
        %2405 = vmatpush.bf16.msra.mxu0 %v2394
        %2406 = vmatpush.bf16.msra.mxu0 %v2393
        %2407 = vmatpush.bf16.msra.mxu0 %v2392
        %2408 = vmatpush.bf16.msra.mxu0 %v2391
        %2409 = vmatpush.bf16.msra.mxu0 %v2390
        %2410 = vmatpush.bf16.msra.mxu0 %v2389
        %2411 = vmatpush.bf16.msra.mxu0 %v2388
        %2412 = vmatmul.bf16.gmra.mxu0 %v2352
        %v2413 = vpop.f32.mrf.mxu0
        %v2414 = vadd.f32 %v2354, %v2413
        %v2415 = vpop.f32.mrf.mxu0
        %2416 = vdwg.mxu0
        %v2417 = vadd.f32 %v1854, %v2414
        %2418 = vadd.xlane.f32.xlu0 %v2417
        %v2419 = vpop.xlane.xlu0 %2418
        %v2420 = vmul.f32 %v2419, %v1291
        %v2421 = vsub.f32 %v2417, %v2420
        %v2422 = vmul.f32 %v2421, %v2421
        %2423 = vadd.xlane.f32.xlu0 %v2422
        %v2424 = vpop.xlane.xlu0 %2423
        %v2425 = vmul.f32 %v2424, %v1291
        %v2426 = vadd.f32 %v2425, 1e-05
        %v2427 = vrsqrt.pop %v2426
        %v2428 = vmul.f32 %v2427, %v2426
        %v2429 = vmul.f32 %v2428, %v2427
        %v2430 = vmul.f32 0.5, %v2429
        %v2431 = vsub.f32 1.5, %v2430
        %v2432 = vmul.f32 %v2427, %v2431
        %vm2433 = vweird.f32 %v2426
        %vm2434 = vweird.f32 %v2427
        %vm2435 = vmor %vm2433, %vm2434
        %v2436 = vsel %vm2435, %v2427, %v2432
        %v2437 = vmul.f32 %v2421, %v2436
        %v2438 = vperm.slane %v1274, 4
        %v2439 = vmul.f32 %v2437, %v2438
        %v2440 = vperm.slane %v1274, 5
        %v2441 = vadd.f32 %v2439, %v2440
        %v2442 = vpack.c.bf16 %v2441, %v2441
        %v2443 = vld [vmem:[%s977] sm:$0xff]
        %v2444 = vld [vmem:[%s977 + $0x8] sm:$0xff]
        %v2445 = vld [vmem:[%s977 + $0x10] sm:$0xff]
        %v2446 = vld [vmem:[%s977 + $0x18] sm:$0xff]
        %v2447 = vld [vmem:[%s977 + $0x20] sm:$0xff]
        %v2448 = vld [vmem:[%s977 + $0x28] sm:$0xff]
        %v2449 = vld [vmem:[%s977 + $0x30] sm:$0xff]
        %v2450 = vld [vmem:[%s977 + $0x38] sm:$0xff]
        %v2451 = vld [vmem:[%s977 + $0x40] sm:$0xff]
        %v2452 = vld [vmem:[%s977 + $0x48] sm:$0xff]
        %v2453 = vld [vmem:[%s977 + $0x50] sm:$0xff]
        %v2454 = vld [vmem:[%s977 + $0x58] sm:$0xff]
        %v2455 = vld [vmem:[%s977 + $0x60] sm:$0xff]
        %v2456 = vld [vmem:[%s977 + $0x68] sm:$0xff]
        %v2457 = vld [vmem:[%s977 + $0x70] sm:$0xff]
        %v2458 = vld [vmem:[%s977 + $0x78] sm:$0xff]
        %v2459 = vld [vmem:[%s1177] sm:$0x3]
        %v2461 = vperm.slane %v2459, 0
        %v2462 = vperm.slane %v2459, 1
        %v2481 = vunpack.c.l.b16 %v2443
        %v2482 = vunpack.c.h.b16 %v2443
        %v2483 = vunpack.c.l.b16 %v2444
        %v2484 = vunpack.c.h.b16 %v2444
        %v2485 = vunpack.c.l.b16 %v2445
        %v2486 = vunpack.c.h.b16 %v2445
        %v2487 = vunpack.c.l.b16 %v2446
        %v2488 = vunpack.c.h.b16 %v2446
        %v2489 = vunpack.c.l.b16 %v2447
        %v2490 = vunpack.c.h.b16 %v2447
        %v2491 = vunpack.c.l.b16 %v2448
        %v2492 = vunpack.c.h.b16 %v2448
        %v2493 = vunpack.c.l.b16 %v2449
        %v2494 = vunpack.c.h.b16 %v2449
        %v2495 = vunpack.c.l.b16 %v2450
        %v2496 = vunpack.c.h.b16 %v2450
        %v2497 = vunpack.c.l.b16 %v2451
        %v2498 = vunpack.c.h.b16 %v2451
        %v2499 = vunpack.c.l.b16 %v2452
        %v2500 = vunpack.c.h.b16 %v2452
        %v2501 = vunpack.c.l.b16 %v2453
        %v2502 = vunpack.c.h.b16 %v2453
        %v2503 = vunpack.c.l.b16 %v2454
        %v2504 = vunpack.c.h.b16 %v2454
        %v2505 = vunpack.c.l.b16 %v2455
        %v2506 = vunpack.c.h.b16 %v2455
        %v2507 = vunpack.c.l.b16 %v2456
        %v2508 = vunpack.c.h.b16 %v2456
        %v2509 = vunpack.c.l.b16 %v2457
        %v2510 = vunpack.c.h.b16 %v2457
        %v2511 = vunpack.c.l.b16 %v2458
        %v2512 = vunpack.c.h.b16 %v2458
        %v2513 = vpack.c.b16 %v2483, %v2481
        %v2514 = vpack.c.b16 %v2484, %v2482
        %v2515 = vpack.c.b16 %v2487, %v2485
        %v2516 = vpack.c.b16 %v2488, %v2486
        %v2517 = vpack.c.b16 %v2491, %v2489
        %v2518 = vpack.c.b16 %v2492, %v2490
        %v2519 = vpack.c.b16 %v2495, %v2493
        %v2520 = vpack.c.b16 %v2496, %v2494
        %v2521 = vpack.c.b16 %v2499, %v2497
        %v2522 = vpack.c.b16 %v2500, %v2498
        %v2523 = vpack.c.b16 %v2503, %v2501
        %v2524 = vpack.c.b16 %v2504, %v2502
        %v2525 = vpack.c.b16 %v2507, %v2505
        %v2526 = vpack.c.b16 %v2508, %v2506
        %v2527 = vpack.c.b16 %v2511, %v2509
        %v2528 = vpack.c.b16 %v2512, %v2510
        %2545 = vmatpush.bf16.msra.mxu0 %v2527
        %2546 = vmatpush.bf16.msra.mxu0 %v2525
        %2547 = vmatpush.bf16.msra.mxu0 %v2523
        %2548 = vmatpush.bf16.msra.mxu0 %v2521
        %2549 = vmatpush.bf16.msra.mxu0 %v2519
        %2550 = vmatpush.bf16.msra.mxu0 %v2517
        %2551 = vmatpush.bf16.msra.mxu0 %v2515
        %2552 = vmatpush.bf16.msra.mxu0 %v2513
        %2553 = vmatmul.bf16.gmra.mxu0 %v2442
        %v2554 = vpop.f32.mrf.mxu0
        %v2555 = vadd.f32 %v2461, %v2554
        %v2556 = vpop.f32.mrf.mxu0
        %2557 = vdwg.mxu0
        %2558 = vmatpush.bf16.msra.mxu0 %v2528
        %2559 = vmatpush.bf16.msra.mxu0 %v2526
        %2560 = vmatpush.bf16.msra.mxu0 %v2524
        %2561 = vmatpush.bf16.msra.mxu0 %v2522
        %2562 = vmatpush.bf16.msra.mxu0 %v2520
        %2563 = vmatpush.bf16.msra.mxu0 %v2518
        %2564 = vmatpush.bf16.msra.mxu0 %v2516
        %2565 = vmatpush.bf16.msra.mxu0 %v2514
        %2566 = vmatmul.bf16.gmra.mxu0 %v2442
        %v2567 = vpop.f32.mrf.mxu0
        %v2568 = vadd.f32 %v2462, %v2567
        %v2569 = vpop.f32.mrf.mxu0
        %2570 = vdwg.mxu0
        %v2571 = vmul.f32 %v2555, %v2555
        %v2572 = vmul.f32 %v2568, %v2568
        %v2573 = vmul.f32 %v2555, %v2571
        %v2574 = vmul.f32 %v2568, %v2572
        %v2575 = vmul.f32 %v2573, 0.044715
        %v2576 = vmul.f32 %v2574, 0.044715
        %v2577 = vadd.f32 %v2555, %v2575
        %v2578 = vadd.f32 %v2568, %v2576
        %v2579 = vmul.f32 %v2577, 0.7978846
        %v2580 = vmul.f32 %v2578, 0.7978846
        %v2581 = vtanh.pop %v2579
        %v2582 = vtanh.pop %v2580
        %v2583 = vadd.f32 %v2581, 1.0
        %v2584 = vadd.f32 %v2582, 1.0
        %v2585 = vmul.f32 %v2583, 0.5
        %v2586 = vmul.f32 %v2584, 0.5
        %v2587 = vmul.f32 %v2555, %v2585
        %v2588 = vmul.f32 %v2568, %v2586
        %v2589 = vpack.c.bf16 %v2587, %v2587
        %v2590 = vpack.c.bf16 %v2588, %v2588
        %v2591 = vld [vmem:[%s987] sm:$0xf]
        %v2592 = vld [vmem:[%s987 + $0x4] sm:$0xf]
        %v2593 = vld [vmem:[%s987 + $0x8] sm:$0xf]
        %v2594 = vld [vmem:[%s987 + $0xc] sm:$0xf]
        %v2595 = vld [vmem:[%s987 + $0x10] sm:$0xf]
        %v2596 = vld [vmem:[%s987 + $0x14] sm:$0xf]
        %v2597 = vld [vmem:[%s987 + $0x18] sm:$0xf]
        %v2598 = vld [vmem:[%s987 + $0x1c] sm:$0xf]
        %v2599 = vld [vmem:[%s987 + $0x20] sm:$0xf]
        %v2600 = vld [vmem:[%s987 + $0x24] sm:$0xf]
        %v2601 = vld [vmem:[%s987 + $0x28] sm:$0xf]
        %v2602 = vld [vmem:[%s987 + $0x2c] sm:$0xf]
        %v2603 = vld [vmem:[%s987 + $0x30] sm:$0xf]
        %v2604 = vld [vmem:[%s987 + $0x34] sm:$0xf]
        %v2605 = vld [vmem:[%s987 + $0x38] sm:$0xf]
        %v2606 = vld [vmem:[%s987 + $0x3c] sm:$0xf]
        %v2607 = vld [vmem:[%s987 + $0x40] sm:$0xf]
        %v2608 = vld [vmem:[%s987 + $0x44] sm:$0xf]
        %v2609 = vld [vmem:[%s987 + $0x48] sm:$0xf]
        %v2610 = vld [vmem:[%s987 + $0x4c] sm:$0xf]
        %v2611 = vld [vmem:[%s987 + $0x50] sm:$0xf]
        %v2612 = vld [vmem:[%s987 + $0x54] sm:$0xf]
        %v2613 = vld [vmem:[%s987 + $0x58] sm:$0xf]
        %v2614 = vld [vmem:[%s987 + $0x5c] sm:$0xf]
        %v2615 = vld [vmem:[%s987 + $0x60] sm:$0xf]
        %v2616 = vld [vmem:[%s987 + $0x64] sm:$0xf]
        %v2617 = vld [vmem:[%s987 + $0x68] sm:$0xf]
        %v2618 = vld [vmem:[%s987 + $0x6c] sm:$0xf]
        %v2619 = vld [vmem:[%s987 + $0x70] sm:$0xf]
        %v2620 = vld [vmem:[%s987 + $0x74] sm:$0xf]
        %v2621 = vld [vmem:[%s987 + $0x78] sm:$0xf]
        %v2622 = vld [vmem:[%s987 + $0x7c] sm:$0xf]
        %v2655 = vunpack.c.l.b16 %v2591
        %v2656 = vunpack.c.l.b16 %v2592
        %v2657 = vunpack.c.l.b16 %v2593
        %v2658 = vunpack.c.l.b16 %v2594
        %v2659 = vunpack.c.l.b16 %v2595
        %v2660 = vunpack.c.l.b16 %v2596
        %v2661 = vunpack.c.l.b16 %v2597
        %v2662 = vunpack.c.l.b16 %v2598
        %v2663 = vunpack.c.l.b16 %v2599
        %v2664 = vunpack.c.l.b16 %v2600
        %v2665 = vunpack.c.l.b16 %v2601
        %v2666 = vunpack.c.l.b16 %v2602
        %v2667 = vunpack.c.l.b16 %v2603
        %v2668 = vunpack.c.l.b16 %v2604
        %v2669 = vunpack.c.l.b16 %v2605
        %v2670 = vunpack.c.l.b16 %v2606
        %v2671 = vunpack.c.l.b16 %v2607
        %v2672 = vunpack.c.l.b16 %v2608
        %v2673 = vunpack.c.l.b16 %v2609
        %v2674 = vunpack.c.l.b16 %v2610
        %v2675 = vunpack.c.l.b16 %v2611
        %v2676 = vunpack.c.l.b16 %v2612
        %v2677 = vunpack.c.l.b16 %v2613
        %v2678 = vunpack.c.l.b16 %v2614
        %v2679 = vunpack.c.l.b16 %v2615
        %v2680 = vunpack.c.l.b16 %v2616
        %v2681 = vunpack.c.l.b16 %v2617
        %v2682 = vunpack.c.l.b16 %v2618
        %v2683 = vunpack.c.l.b16 %v2619
        %v2684 = vunpack.c.l.b16 %v2620
        %v2685 = vunpack.c.l.b16 %v2621
        %v2686 = vunpack.c.l.b16 %v2622
        %v2687 = vpack.c.b16 %v2656, %v2655
        %v2688 = vpack.c.b16 %v2658, %v2657
        %v2689 = vpack.c.b16 %v2660, %v2659
        %v2690 = vpack.c.b16 %v2662, %v2661
        %v2691 = vpack.c.b16 %v2664, %v2663
        %v2692 = vpack.c.b16 %v2666, %v2665
        %v2693 = vpack.c.b16 %v2668, %v2667
        %v2694 = vpack.c.b16 %v2670, %v2669
        %v2695 = vpack.c.b16 %v2672, %v2671
        %v2696 = vpack.c.b16 %v2674, %v2673
        %v2697 = vpack.c.b16 %v2676, %v2675
        %v2698 = vpack.c.b16 %v2678, %v2677
        %v2699 = vpack.c.b16 %v2680, %v2679
        %v2700 = vpack.c.b16 %v2682, %v2681
        %v2701 = vpack.c.b16 %v2684, %v2683
        %v2702 = vpack.c.b16 %v2686, %v2685
        %2719 = vmatpush.bf16.msra.mxu0 %v2694
        %2720 = vmatpush.bf16.msra.mxu0 %v2693
        %2721 = vmatpush.bf16.msra.mxu0 %v2692
        %2722 = vmatpush.bf16.msra.mxu0 %v2691
        %2723 = vmatpush.bf16.msra.mxu0 %v2690
        %2724 = vmatpush.bf16.msra.mxu0 %v2689
        %2725 = vmatpush.bf16.msra.mxu0 %v2688
        %2726 = vmatpush.bf16.msra.mxu0 %v2687
        %2727 = vmatmul.bf16.gmra.mxu0 %v2589
        %v2728 = vpop.f32.mrf.mxu0
        %v2729 = vadd.f32 0.0, %v2728
        %v2730 = vpop.f32.mrf.mxu0
        %2731 = vdwg.mxu0
        %2732 = vmatpush.bf16.msra.mxu0 %v2702
        %2733 = vmatpush.bf16.msra.mxu0 %v2701
        %2734 = vmatpush.bf16.msra.mxu0 %v2700
        %2735 = vmatpush.bf16.msra.mxu0 %v2699
        %2736 = vmatpush.bf16.msra.mxu0 %v2698
        %2737 = vmatpush.bf16.msra.mxu0 %v2697
        %2738 = vmatpush.bf16.msra.mxu0 %v2696
        %2739 = vmatpush.bf16.msra.mxu0 %v2695
        %2740 = vmatmul.bf16.gmra.mxu0 %v2590
        %v2741 = vpop.f32.mrf.mxu0
        %v2742 = vadd.f32 %v2729, %v2741
        %v2743 = vpop.f32.mrf.mxu0
        %2744 = vdwg.mxu0
        %v2745 = vadd.f32 %v2417, %v2742
        %v2746 = vld [vmem:[%s996] sm:$0x1]
        %v2748 = vperm.slane %v2746, 0
        %v2750 = vadd.f32 %v2745, %v2748
        %2751 = vst [vmem:[#allocation2] sm:$0xff] %v2750
        %p2752 = scmp.eq.s32.totalorder %s55, 1
        // Predicated region
        $region157: #{vl_model_forward.3} parent=107 // pred_check
          %p2753 = pneg %p2752
        $region158: #{vl_model_forward.3} parent=107 // pred_check_branch
          %2755 = sbr.rel (%p2753) target = $region160
        $region159: #{vl_model_forward.3} parent=107 // pred_region
          %v2756 = vld [vmem:[#allocation17] sm:$0x3]
          %2757 = vadd.xlane.f32.xlu0 %v2750
          %v2758 = vpop.xlane.xlu0 %2757
          %v2759 = vmul.f32 %v2758, %v1291
          %v2760 = vsub.f32 %v2750, %v2759
          %v2761 = vmul.f32 %v2760, %v2760
          %2762 = vadd.xlane.f32.xlu0 %v2761
          %v2763 = vpop.xlane.xlu0 %2762
          %v2764 = vmul.f32 %v2763, %v1291
          %v2765 = vadd.f32 %v2764, 1e-05
          %v2766 = vrsqrt.pop %v2765
          %v2767 = vmul.f32 %v2766, %v2765
          %v2768 = vmul.f32 %v2767, %v2766
          %v2769 = vmul.f32 0.5, %v2768
          %v2770 = vsub.f32 1.5, %v2769
          %v2771 = vmul.f32 %v2766, %v2770
          %vm2772 = vweird.f32 %v2765
          %vm2773 = vweird.f32 %v2766
          %vm2774 = vmor %vm2772, %vm2773
          %v2775 = vsel %vm2774, %v2766, %v2771
          %v2776 = vmul.f32 %v2760, %v2775
          %v2777 = vperm.slane %v2756, 0
          %v2778 = vmul.f32 %v2776, %v2777
          %v2779 = vperm.slane %v2756, 1
          %v2780 = vadd.f32 %v2778, %v2779
          %v2781 = vpack.c.bf16 %v2780, %v2780
          %v2782 = vld [vmem:[#allocation18] sm:$0xf]
          %v2783 = vld [vmem:[#allocation18 + $0x4] sm:$0xf]
          %v2784 = vld [vmem:[#allocation18 + $0x8] sm:$0xf]
          %v2785 = vld [vmem:[#allocation18 + $0xc] sm:$0xf]
          %v2786 = vld [vmem:[#allocation18 + $0x10] sm:$0xf]
          %v2787 = vld [vmem:[#allocation18 + $0x14] sm:$0xf]
          %v2788 = vld [vmem:[#allocation18 + $0x18] sm:$0xf]
          %v2789 = vld [vmem:[#allocation18 + $0x1c] sm:$0xf]
          %v2790 = vld [vmem:[#allocation18 + $0x20] sm:$0xf]
          %v2791 = vld [vmem:[#allocation18 + $0x24] sm:$0xf]
          %v2792 = vld [vmem:[#allocation18 + $0x28] sm:$0xf]
          %v2793 = vld [vmem:[#allocation18 + $0x2c] sm:$0xf]
          %v2794 = vld [vmem:[#allocation18 + $0x30] sm:$0xf]
          %v2795 = vld [vmem:[#allocation18 + $0x34] sm:$0xf]
          %v2796 = vld [vmem:[#allocation18 + $0x38] sm:$0xf]
          %v2797 = vld [vmem:[#allocation18 + $0x3c] sm:$0xf]
          %v2798 = vld [vmem:[#allocation20] sm:$0x1]
          %v2800 = vperm.slane %v2798, 0
          %v2818 = vunpack.c.l.b16 %v2782
          %v2819 = vunpack.c.l.b16 %v2783
          %v2820 = vunpack.c.l.b16 %v2784
          %v2821 = vunpack.c.l.b16 %v2785
          %v2822 = vunpack.c.l.b16 %v2786
          %v2823 = vunpack.c.l.b16 %v2787
          %v2824 = vunpack.c.l.b16 %v2788
          %v2825 = vunpack.c.l.b16 %v2789
          %v2826 = vunpack.c.l.b16 %v2790
          %v2827 = vunpack.c.l.b16 %v2791
          %v2828 = vunpack.c.l.b16 %v2792
          %v2829 = vunpack.c.l.b16 %v2793
          %v2830 = vunpack.c.l.b16 %v2794
          %v2831 = vunpack.c.l.b16 %v2795
          %v2832 = vunpack.c.l.b16 %v2796
          %v2833 = vunpack.c.l.b16 %v2797
          %v2834 = vpack.c.b16 %v2819, %v2818
          %v2835 = vpack.c.b16 %v2821, %v2820
          %v2836 = vpack.c.b16 %v2823, %v2822
          %v2837 = vpack.c.b16 %v2825, %v2824
          %v2838 = vpack.c.b16 %v2827, %v2826
          %v2839 = vpack.c.b16 %v2829, %v2828
          %v2840 = vpack.c.b16 %v2831, %v2830
          %v2841 = vpack.c.b16 %v2833, %v2832
          %2850 = vmatpush.bf16.msra.mxu0 %v2841
          %2851 = vmatpush.bf16.msra.mxu0 %v2840
          %2852 = vmatpush.bf16.msra.mxu0 %v2839
          %2853 = vmatpush.bf16.msra.mxu0 %v2838
          %2854 = vmatpush.bf16.msra.mxu0 %v2837
          %2855 = vmatpush.bf16.msra.mxu0 %v2836
          %2856 = vmatpush.bf16.msra.mxu0 %v2835
          %2857 = vmatpush.bf16.msra.mxu0 %v2834
          %2858 = vmatmul.bf16.gmra.mxu0 %v2781
          %v2859 = vpop.f32.mrf.mxu0
          %v2860 = vadd.f32 %v2800, %v2859
          %v2861 = vpop.f32.mrf.mxu0
          %2862 = vdwg.mxu0
          %2863 = vst [vmem:[%s1139] sm:$0xff] %v2860
        $region160: #{vl_model_forward.3} parent=107 // pred_fallthru
          _
        %s2864 = sand.u32 %s617, 1
        %s2865 = scalar_lea.sflag [#allocation5], %s2864
        %s2866 = sand.u32 %s617, 1
        %s2867 = smul.addr %s2866, 8
        %s2868 = scalar_lea.vmem [#allocation21], %s2867
        // Predicated region
        $region161: #{vl_model_forward.3} parent=107 // pred_check
          %p2869 = pneg %p627
        $region162: #{vl_model_forward.3} parent=107 // pred_check_branch
          %2871 = sbr.rel (%p2869) target = $region164
        $region163: #{vl_model_forward.3} parent=107 // pred_region
          %2873 = vsyncadd %s2865, 0
          %s2874 = smul.addr %s54, 8
          %s2875 = scalar_lea.hbm %s22, %s2874
          %s2877 = sshll.u32 %s2868, 4
          %s2878 = int_to_ptr.vmem [resolvable:$true] %s2877
          %s2879 = sshll.u32 %s2875, 4
          %s2880 = int_to_ptr.hbm [resolvable:$true] %s2879
          %2882 = dma.vmem_to_hbm [thread:$0]  %s2878, 128, %s2880, %s2865
        $region164: #{vl_model_forward.3} parent=107 // pred_fallthru
          _
      $region108: #{vl_model_forward.3} parent=5 // pred_fallthru
        _
      %p2883 = scmp.le.s32.totalorder 2, %s45
      // Predicated region
      $region165: #{vl_model_forward.3} parent=5 // pred_check
        %p2884 = pneg %p2883
      $region166: #{vl_model_forward.3} parent=5 // pred_check_branch
        %2886 = sbr.rel (%p2884) target = $region168
      $region167: #{vl_model_forward.3} parent=5 // pred_region
        %s2887 = ssub.s32 %s45, 2
        // Predicated region
        $region169: #{vl_model_forward.3} parent=167 // pred_check
          %p2888 = pneg %p633
        $region170: #{vl_model_forward.3} parent=167 // pred_check_branch
          %2890 = sbr.rel (%p2888) target = $region172
        $region171: #{vl_model_forward.3} parent=167 // pred_region
          %s2891 = sand.u32 %s618, 1
          %s2892 = scalar_lea.sflag [#allocation5], %s2891
          %s2893 = sand.u32 %s618, 1
          %s2894 = smul.addr %s2893, 8
          %s2895 = scalar_lea.vmem [#allocation21], %s2894
          %2897 = dma.done %s2892, 128
        $region172: #{vl_model_forward.3} parent=167 // pred_fallthru
          _
      $region168: #{vl_model_forward.3} parent=5 // pred_fallthru
        _
    $region6: #{vl_model_forward.3} parent=1 // loop_footer
      %s49 = sadd.s32 1, %s45
    $region7: #{vl_model_forward.3} parent=1 // loop_footer_branch
      %44 = sbr.rel target = $region3
    $region8: #{vl_model_forward.3} parent=1 // loop_exit
      _
    %2898 = vsyncpa [#allocation4], 1
    %s2899 = scalar_lea.sflag [#allocation4], 1
    %2900 = vsyncpa %s2899, 1
    %2901 = vsyncpa [#allocation7], 1
    %s2902 = scalar_lea.sflag [#allocation7], 1
    %2903 = vsyncpa %s2902, 1
    %2904 = vsyncpa [#allocation10], 1
    %s2905 = scalar_lea.sflag [#allocation10], 1
    %2906 = vsyncpa %s2905, 1
    %2907 = vsyncpa [#allocation13], 1
    %s2908 = scalar_lea.sflag [#allocation13], 1
    %2909 = vsyncpa %s2908, 1
    %2910 = vsyncpa [#allocation16], 1
    %s2911 = scalar_lea.sflag [#allocation16], 1
    %2912 = vsyncpa %s2911, 1
    %2913 = vsyncpa [#allocation19], 1
    %2914 = vsyncpa [#allocation5], 1
    %s2915 = scalar_lea.sflag [#allocation5], 1
    %2916 = vsyncpa %s2915, 1

</llo_original>
